<compile_context>
chip_gen: v7x
topology: tpu7x:2x2x1
jax: 0.10.0
libtpu: 0.0.40
codegen_flags: <defaults>
</compile_context>

<pallas_src>
import jax
import jax.numpy as jnp
from jax.experimental import pallas as pl
from jax.experimental.pallas import tpu as pltpu

CHARACTER_SIZE = 251
OUTPUT_DIM = 11
HIDDEN1 = 200
HIDDEN2 = 100

# Padded, (8,128)-friendly sizes used inside the kernel (zero padding, math unchanged).
VOCAB_PAD = 256
HIDDEN1_PAD = 256
HIDDEN2_PAD = 128
OUTPUT_PAD = 128
SUBLANE = 8
MAX_BATCH_TILE = 256


def fused_classifier_kernel(tok_ref, w1f_ref, w23_ref, b_ref, o_ref):
    # tok_ref : (L, bt, 1)  int32   token ids, token-position-major
    # w1f_ref : (L, 256, 256) bf16  embedding table folded into fc1
    # w23_ref : (384, 128)  bf16    rows [0:256) = W2, rows [256:384) = W3
    # b_ref   : (3, 256)    f32     rows = b1 | b2 | b3 (zero padded)
    # o_ref   : (bt, 128)   f32     padded logits
    L = tok_ref.shape[0]
    bt = tok_ref.shape[1]
    vpad = w1f_ref.shape[1]
    h1p = w1f_ref.shape[2]

    # Lane-id plane reused by every per-position one-hot (hoisted: traced once).
    v_ids = jax.lax.broadcasted_iota(jnp.int32, (bt, vpad), 1)

    # ---- fc1 with folded embedding table -------------------------------------
    # Per token position l: one-hot(token_l) @ w1f[l] on the MXU (K=256, N=256).
    # One-hot is generated per position (chunked) so only a handful of vregs are
    # live around each dot, and the accumulation is a pure `h1 += dot` chain.
    h1 = jnp.zeros((bt, h1p), jnp.float32)
    for l in range(L):                                   # static unroll (L small)
        onehot_l = (tok_ref[l] == v_ids).astype(jnp.bfloat16)       # (bt, 256)
        h1 = h1 + jnp.dot(onehot_l, w1f_ref[l],
                          preferred_element_type=jnp.float32)
    h1 = jnp.maximum(h1 + b_ref[0:1, :], 0.0)            # f32 bias + ReLU

    # ---- fc2 + relu (W2 = top block of the stacked slab) ----------------------
    h2 = jnp.dot(h1.astype(jnp.bfloat16), w23_ref[:HIDDEN1_PAD, :],
                 preferred_element_type=jnp.float32)
    h2 = jnp.maximum(h2 + b_ref[1:2, :HIDDEN2_PAD], 0.0)

    # ---- fc3: lane-dense padded logits (sliced back to 11 in the wrapper) -----
    o_ref[...] = (jnp.dot(h2.astype(jnp.bfloat16),
                          w23_ref[HIDDEN1_PAD:HIDDEN1_PAD + HIDDEN2_PAD, :],
                          preferred_element_type=jnp.float32)
                  + b_ref[2:3, :OUTPUT_PAD])


def _pad_to(x, rows, cols):
    r, c = x.shape
    return jnp.pad(x, ((0, rows - r), (0, cols - c)))


def init_params(key, embedding_dim, max_length):
    """Deterministic synthetic parameters matching the torch module's shapes.

    Weights stored transposed as (in, out) so y = x @ W + b.
    """
    ks = jax.random.split(key, 7)
    in_dim = max_length * embedding_dim

    def lin(kw, kb, fan_in, fan_out):
        bound = 1.0 / jnp.sqrt(fan_in)
        w = jax.random.uniform(kw, (fan_in, fan_out), jnp.float32, -bound, bound)
        b = jax.random.uniform(kb, (1, fan_out), jnp.float32, -bound, bound)
        return w, b

    emb = jax.random.normal(ks[0], (CHARACTER_SIZE, embedding_dim), jnp.float32)
    w1, b1 = lin(ks[1], ks[2], in_dim, HIDDEN1)
    w2, b2 = lin(ks[3], ks[4], HIDDEN1, HIDDEN2)
    w3, b3 = lin(ks[5], ks[6], HIDDEN2, OUTPUT_DIM)
    return {"embeddings": emb, "w1": w1, "b1": b1,
            "w2": w2, "b2": b2, "w3": w3, "b3": b3}


def pack_params(params, embedding_dim, max_length):
    """Fold embeddings into fc1, pad to MXU/lane-friendly sizes, fuse small inputs.

    Folding (done once, in f32, then cast to bf16):
        h1 = sum_l onehot(tok[:, l]) @ (table @ W1[l*E:(l+1)*E, :]) + b1
    Vocab rows >= 251 of the table are zero, so the padding is inert.
    """
    E, L = embedding_dim, max_length
    table = _pad_to(params["embeddings"], VOCAB_PAD, E)               # f32
    w1 = params["w1"].reshape(L, E, HIDDEN1)                          # (L, E, 200)
    w1f = jnp.einsum("ve,leh->lvh", table, w1)                        # (L, 256, 200)
    w1f = jnp.pad(w1f, ((0, 0), (0, 0), (0, HIDDEN1_PAD - HIDDEN1)))
    w1f = w1f.astype(jnp.bfloat16)                                    # ~4 MiB

    w2 = _pad_to(params["w2"], HIDDEN1_PAD, HIDDEN2_PAD).astype(jnp.bfloat16)
    w3 = _pad_to(params["w3"], HIDDEN2_PAD, OUTPUT_PAD).astype(jnp.bfloat16)
    w23 = jnp.concatenate([w2, w3], axis=0)                           # (384, 128)

    b1 = _pad_to(params["b1"], 1, HIDDEN1_PAD)
    b2 = _pad_to(params["b2"], 1, HIDDEN1_PAD)
    b3 = _pad_to(params["b3"], 1, HIDDEN1_PAD)
    biases = jnp.concatenate([b1, b2, b3], axis=0)                    # (3, 256) f32

    return {"w1f": w1f, "w23": w23, "biases": biases}


def classification_forward(tokens, packed, batch_tile=MAX_BATCH_TILE):
    """tokens: (B, L) int indices in [0, 251). Returns (B, 11) f32 logits."""
    B, L = tokens.shape

    B8 = ((B + SUBLANE - 1) // SUBLANE) * SUBLANE
    bt = min(batch_tile, B8)
    bt = ((bt + SUBLANE - 1) // SUBLANE) * SUBLANE
    B_pad = ((B8 + bt - 1) // bt) * bt
    n_tiles = B_pad // bt

    tok = tokens.astype(jnp.int32)
    if B_pad != B:
        tok = jnp.pad(tok, ((0, B_pad - B), (0, 0)))
    # Token-position-major 3-D layout: per-batch-tile BlockSpec stays a plain
    # rectangle and each position slice is a sublane-aligned (bt, 1) view.
    tok3 = tok.T.reshape(L, B_pad, 1)

    flops = 2 * B_pad * (L * VOCAB_PAD * HIDDEN1_PAD
                         + HIDDEN1_PAD * HIDDEN2_PAD
                         + HIDDEN2_PAD * OUTPUT_PAD)
    bytes_accessed = int(tok3.size) * 4 + B_pad * OUTPUT_PAD * 4
    bytes_accessed += sum(int(v.size) * v.dtype.itemsize for v in packed.values())
    ce = pl.CostEstimate(flops=int(flops), transcendentals=0,
                         bytes_accessed=int(bytes_accessed))

    # Weights (w1f, w23, biases) use constant index_maps so they stay
    # VMEM-resident across batch tiles; the batch axis is "parallel" so v7x's
    # two TensorCores split the tiles.  Total weight footprint ~4.1 MiB bf16,
    # well under every generation's VMEM (v7x: 64 MiB/TC).
    # TODO(synk): for a serving loop at tiny batch, keep w1f resident across
    # calls (cross-pallas_call prefetch) so only tokens/logits move per call.
    out = pl.pallas_call(
        fused_classifier_kernel,
        out_shape=jax.ShapeDtypeStruct((B_pad, OUTPUT_PAD), jnp.float32),
        grid=(n_tiles,),
        in_specs=[
            pl.BlockSpec((L, bt, 1), lambda i: (0, i, 0)),
            pl.BlockSpec((L, VOCAB_PAD, HIDDEN1_PAD), lambda i: (0, 0, 0)),
            pl.BlockSpec((HIDDEN1_PAD + HIDDEN2_PAD, HIDDEN2_PAD), lambda i: (0, 0)),
            pl.BlockSpec((3, HIDDEN1_PAD), lambda i: (0, 0)),
        ],
        out_specs=pl.BlockSpec((bt, OUTPUT_PAD), lambda i: (i, 0)),
        compiler_params=pltpu.CompilerParams(
            dimension_semantics=("parallel",)),
        cost_estimate=ce,
    )(tok3, packed["w1f"], packed["w23"], packed["biases"])
    return out[:B, :OUTPUT_DIM]


if __name__ == "__main__":
    embedding_dim = 16
    max_length = 32
    batch = 4

    key = jax.random.PRNGKey(0)
    k_param, k_tok = jax.random.split(key)
    params = init_params(k_param, embedding_dim, max_length)
    packed = pack_params(params, embedding_dim, max_length)
    tokens = jax.random.randint(k_tok, (batch, max_length), 0,
                                CHARACTER_SIZE, jnp.int32)

    logits = classification_forward(tokens, packed)
    logits = jax.block_until_ready(logits)
    assert logits.shape == (batch, OUTPUT_DIM)

    # Reference 1: identical folded-bf16 / f32-accumulate math as the kernel
    # (a one-hot MXU row-pick is exact, so only trivial ordering differences).
    w1f = packed["w1f"]
    b = packed["biases"]
    h1 = jnp.zeros((batch, HIDDEN1_PAD), jnp.float32)
    for l in range(max_length):
        h1 = h1 + w1f[l][tokens[:, l]].astype(jnp.float32)
    h1 = jnp.maximum(h1 + b[0:1, :], 0.0)
    w2 = packed["w23"][:HIDDEN1_PAD]
    w3 = packed["w23"][HIDDEN1_PAD:]
    h2 = jnp.maximum(
        jnp.dot(h1.astype(jnp.bfloat16), w2, preferred_element_type=jnp.float32)
        + b[1:2, :HIDDEN2_PAD], 0.0)
    ref_bf = (jnp.dot(h2.astype(jnp.bfloat16), w3, preferred_element_type=jnp.float32)
              + b[2:3, :OUTPUT_PAD])[:, :OUTPUT_DIM]
    assert jnp.allclose(logits, ref_bf, atol=2e-2, rtol=2e-2)

    # Reference 2: full-f32 torch-semantics forward (loose tolerance covers the
    # intentional bf16 quantization of the folded MXU weights).
    x32 = params["embeddings"][tokens].reshape(batch, -1)
    h32 = jnp.maximum(x32 @ params["w1"] + params["b1"], 0.0)
    h32 = jnp.maximum(h32 @ params["w2"] + params["b2"], 0.0)
    ref32 = h32 @ params["w3"] + params["b3"]
    assert jnp.allclose(logits, ref32, atol=0.15, rtol=0.15)

    print("KERNEL_OK")
</pallas_src>

<mosaic_0001>
module attributes {stable_mosaic.version = 11 : i64} {
  func.func @fused_classifier_kernel(%arg0: i32, %arg1: memref<32x8x1xi32, #tpu.memory_space<vmem>>, %arg2: memref<32x256x256xbf16, #tpu.memory_space<vmem>>, %arg3: memref<384x128xbf16, #tpu.memory_space<vmem>>, %arg4: memref<3x256xf32, #tpu.memory_space<vmem>>, %arg5: memref<8x128xf32, #tpu.memory_space<vmem>>) attributes {dimension_semantics = [#tpu.dimension_semantics<parallel>], iteration_bounds = array<i64: 1>, scalar_prefetch = 0 : i64, scratch_operands = 0 : i64, tpu.core_type = #tpu.core_type<tc>, window_params = [{transform_indices = @transform_0, window_bounds = array<i64: 32, 8, 1>}, {pipeline_mode = #tpu.pipeline_mode<synchronous>, transform_indices = @transform_1, window_bounds = array<i64: 32, 256, 256>}, {pipeline_mode = #tpu.pipeline_mode<synchronous>, transform_indices = @transform_2, window_bounds = array<i64: 384, 128>}, {pipeline_mode = #tpu.pipeline_mode<synchronous>, transform_indices = @transform_3, window_bounds = array<i64: 3, 256>}, {transform_indices = @transform_4, window_bounds = array<i64: 8, 128>}]} {
    %0 = tpu.iota {dimensions = array<i32: 1>} : vector<8x256xi32>
    %cst = arith.constant 0.000000e+00 : f32
    %1 = vector.broadcast %cst : f32 to vector<8x256xf32>
    %c0 = arith.constant 0 : index
    %c0_0 = arith.constant 0 : index
    %c0_1 = arith.constant 0 : index
    %2 = vector.load %arg1[%c0, %c0_0, %c0_1] : memref<32x8x1xi32, #tpu.memory_space<vmem>>, vector<1x8x1xi32>
    %3 = vector.shape_cast %2 : vector<1x8x1xi32> to vector<8x1xi32>
    %4 = vector.broadcast %3 : vector<8x1xi32> to vector<8x256xi32>
    %5 = arith.cmpi eq, %4, %0 : vector<8x256xi32>
    %6 = arith.extui %5 : vector<8x256xi1> to vector<8x256xi32>
    %7 = arith.sitofp %6 : vector<8x256xi32> to vector<8x256xf32>
    %8 = arith.truncf %7 : vector<8x256xf32> to vector<8x256xbf16>
    %c0_2 = arith.constant 0 : index
    %c0_3 = arith.constant 0 : index
    %c0_4 = arith.constant 0 : index
    %9 = vector.load %arg2[%c0_2, %c0_3, %c0_4] : memref<32x256x256xbf16, #tpu.memory_space<vmem>>, vector<1x256x256xbf16>
    %10 = vector.shape_cast %9 : vector<1x256x256xbf16> to vector<256x256xbf16>
    %cst_5 = arith.constant dense<0.000000e+00> : vector<8x256xf32>
    %11 = tpu.matmul %8, %10, %cst_5 {dimension_numbers = #tpu.dot_dimension_numbers<[1], [0], [0], [1], [0, 0, 1, 1], [], []>} : vector<8x256xbf16>, vector<256x256xbf16>, vector<8x256xf32> -> vector<8x256xf32>
    %12 = arith.addf %1, %11 : vector<8x256xf32>
    %c1 = arith.constant 1 : index
    %c0_6 = arith.constant 0 : index
    %c0_7 = arith.constant 0 : index
    %13 = vector.load %arg1[%c1, %c0_6, %c0_7] : memref<32x8x1xi32, #tpu.memory_space<vmem>>, vector<1x8x1xi32>
    %14 = vector.shape_cast %13 : vector<1x8x1xi32> to vector<8x1xi32>
    %15 = vector.broadcast %14 : vector<8x1xi32> to vector<8x256xi32>
    %16 = arith.cmpi eq, %15, %0 : vector<8x256xi32>
    %17 = arith.extui %16 : vector<8x256xi1> to vector<8x256xi32>
    %18 = arith.sitofp %17 : vector<8x256xi32> to vector<8x256xf32>
    %19 = arith.truncf %18 : vector<8x256xf32> to vector<8x256xbf16>
    %c1_8 = arith.constant 1 : index
    %c0_9 = arith.constant 0 : index
    %c0_10 = arith.constant 0 : index
    %20 = vector.load %arg2[%c1_8, %c0_9, %c0_10] : memref<32x256x256xbf16, #tpu.memory_space<vmem>>, vector<1x256x256xbf16>
    %21 = vector.shape_cast %20 : vector<1x256x256xbf16> to vector<256x256xbf16>
    %cst_11 = arith.constant dense<0.000000e+00> : vector<8x256xf32>
    %22 = tpu.matmul %19, %21, %cst_11 {dimension_numbers = #tpu.dot_dimension_numbers<[1], [0], [0], [1], [0, 0, 1, 1], [], []>} : vector<8x256xbf16>, vector<256x256xbf16>, vector<8x256xf32> -> vector<8x256xf32>
    %23 = arith.addf %12, %22 : vector<8x256xf32>
    %c2 = arith.constant 2 : index
    %c0_12 = arith.constant 0 : index
    %c0_13 = arith.constant 0 : index
    %24 = vector.load %arg1[%c2, %c0_12, %c0_13] : memref<32x8x1xi32, #tpu.memory_space<vmem>>, vector<1x8x1xi32>
    %25 = vector.shape_cast %24 : vector<1x8x1xi32> to vector<8x1xi32>
    %26 = vector.broadcast %25 : vector<8x1xi32> to vector<8x256xi32>
    %27 = arith.cmpi eq, %26, %0 : vector<8x256xi32>
    %28 = arith.extui %27 : vector<8x256xi1> to vector<8x256xi32>
    %29 = arith.sitofp %28 : vector<8x256xi32> to vector<8x256xf32>
    %30 = arith.truncf %29 : vector<8x256xf32> to vector<8x256xbf16>
    %c2_14 = arith.constant 2 : index
    %c0_15 = arith.constant 0 : index
    %c0_16 = arith.constant 0 : index
    %31 = vector.load %arg2[%c2_14, %c0_15, %c0_16] : memref<32x256x256xbf16, #tpu.memory_space<vmem>>, vector<1x256x256xbf16>
    %32 = vector.shape_cast %31 : vector<1x256x256xbf16> to vector<256x256xbf16>
    %cst_17 = arith.constant dense<0.000000e+00> : vector<8x256xf32>
    %33 = tpu.matmul %30, %32, %cst_17 {dimension_numbers = #tpu.dot_dimension_numbers<[1], [0], [0], [1], [0, 0, 1, 1], [], []>} : vector<8x256xbf16>, vector<256x256xbf16>, vector<8x256xf32> -> vector<8x256xf32>
    %34 = arith.addf %23, %33 : vector<8x256xf32>
    %c3 = arith.constant 3 : index
    %c0_18 = arith.constant 0 : index
    %c0_19 = arith.constant 0 : index
    %35 = vector.load %arg1[%c3, %c0_18, %c0_19] : memref<32x8x1xi32, #tpu.memory_space<vmem>>, vector<1x8x1xi32>
    %36 = vector.shape_cast %35 : vector<1x8x1xi32> to vector<8x1xi32>
    %37 = vector.broadcast %36 : vector<8x1xi32> to vector<8x256xi32>
    %38 = arith.cmpi eq, %37, %0 : vector<8x256xi32>
    %39 = arith.extui %38 : vector<8x256xi1> to vector<8x256xi32>
    %40 = arith.sitofp %39 : vector<8x256xi32> to vector<8x256xf32>
    %41 = arith.truncf %40 : vector<8x256xf32> to vector<8x256xbf16>
    %c3_20 = arith.constant 3 : index
    %c0_21 = arith.constant 0 : index
    %c0_22 = arith.constant 0 : index
    %42 = vector.load %arg2[%c3_20, %c0_21, %c0_22] : memref<32x256x256xbf16, #tpu.memory_space<vmem>>, vector<1x256x256xbf16>
    %43 = vector.shape_cast %42 : vector<1x256x256xbf16> to vector<256x256xbf16>
    %cst_23 = arith.constant dense<0.000000e+00> : vector<8x256xf32>
    %44 = tpu.matmul %41, %43, %cst_23 {dimension_numbers = #tpu.dot_dimension_numbers<[1], [0], [0], [1], [0, 0, 1, 1], [], []>} : vector<8x256xbf16>, vector<256x256xbf16>, vector<8x256xf32> -> vector<8x256xf32>
    %45 = arith.addf %34, %44 : vector<8x256xf32>
    %c4 = arith.constant 4 : index
    %c0_24 = arith.constant 0 : index
    %c0_25 = arith.constant 0 : index
    %46 = vector.load %arg1[%c4, %c0_24, %c0_25] : memref<32x8x1xi32, #tpu.memory_space<vmem>>, vector<1x8x1xi32>
    %47 = vector.shape_cast %46 : vector<1x8x1xi32> to vector<8x1xi32>
    %48 = vector.broadcast %47 : vector<8x1xi32> to vector<8x256xi32>
    %49 = arith.cmpi eq, %48, %0 : vector<8x256xi32>
    %50 = arith.extui %49 : vector<8x256xi1> to vector<8x256xi32>
    %51 = arith.sitofp %50 : vector<8x256xi32> to vector<8x256xf32>
    %52 = arith.truncf %51 : vector<8x256xf32> to vector<8x256xbf16>
    %c4_26 = arith.constant 4 : index
    %c0_27 = arith.constant 0 : index
    %c0_28 = arith.constant 0 : index
    %53 = vector.load %arg2[%c4_26, %c0_27, %c0_28] : memref<32x256x256xbf16, #tpu.memory_space<vmem>>, vector<1x256x256xbf16>
    %54 = vector.shape_cast %53 : vector<1x256x256xbf16> to vector<256x256xbf16>
    %cst_29 = arith.constant dense<0.000000e+00> : vector<8x256xf32>
    %55 = tpu.matmul %52, %54, %cst_29 {dimension_numbers = #tpu.dot_dimension_numbers<[1], [0], [0], [1], [0, 0, 1, 1], [], []>} : vector<8x256xbf16>, vector<256x256xbf16>, vector<8x256xf32> -> vector<8x256xf32>
    %56 = arith.addf %45, %55 : vector<8x256xf32>
    %c5 = arith.constant 5 : index
    %c0_30 = arith.constant 0 : index
    %c0_31 = arith.constant 0 : index
    %57 = vector.load %arg1[%c5, %c0_30, %c0_31] : memref<32x8x1xi32, #tpu.memory_space<vmem>>, vector<1x8x1xi32>
    %58 = vector.shape_cast %57 : vector<1x8x1xi32> to vector<8x1xi32>
    %59 = vector.broadcast %58 : vector<8x1xi32> to vector<8x256xi32>
    %60 = arith.cmpi eq, %59, %0 : vector<8x256xi32>
    %61 = arith.extui %60 : vector<8x256xi1> to vector<8x256xi32>
    %62 = arith.sitofp %61 : vector<8x256xi32> to vector<8x256xf32>
    %63 = arith.truncf %62 : vector<8x256xf32> to vector<8x256xbf16>
    %c5_32 = arith.constant 5 : index
    %c0_33 = arith.constant 0 : index
    %c0_34 = arith.constant 0 : index
    %64 = vector.load %arg2[%c5_32, %c0_33, %c0_34] : memref<32x256x256xbf16, #tpu.memory_space<vmem>>, vector<1x256x256xbf16>
    %65 = vector.shape_cast %64 : vector<1x256x256xbf16> to vector<256x256xbf16>
    %cst_35 = arith.constant dense<0.000000e+00> : vector<8x256xf32>
    %66 = tpu.matmul %63, %65, %cst_35 {dimension_numbers = #tpu.dot_dimension_numbers<[1], [0], [0], [1], [0, 0, 1, 1], [], []>} : vector<8x256xbf16>, vector<256x256xbf16>, vector<8x256xf32> -> vector<8x256xf32>
    %67 = arith.addf %56, %66 : vector<8x256xf32>
    %c6 = arith.constant 6 : index
    %c0_36 = arith.constant 0 : index
    %c0_37 = arith.constant 0 : index
    %68 = vector.load %arg1[%c6, %c0_36, %c0_37] : memref<32x8x1xi32, #tpu.memory_space<vmem>>, vector<1x8x1xi32>
    %69 = vector.shape_cast %68 : vector<1x8x1xi32> to vector<8x1xi32>
    %70 = vector.broadcast %69 : vector<8x1xi32> to vector<8x256xi32>
    %71 = arith.cmpi eq, %70, %0 : vector<8x256xi32>
    %72 = arith.extui %71 : vector<8x256xi1> to vector<8x256xi32>
    %73 = arith.sitofp %72 : vector<8x256xi32> to vector<8x256xf32>
    %74 = arith.truncf %73 : vector<8x256xf32> to vector<8x256xbf16>
    %c6_38 = arith.constant 6 : index
    %c0_39 = arith.constant 0 : index
    %c0_40 = arith.constant 0 : index
    %75 = vector.load %arg2[%c6_38, %c0_39, %c0_40] : memref<32x256x256xbf16, #tpu.memory_space<vmem>>, vector<1x256x256xbf16>
    %76 = vector.shape_cast %75 : vector<1x256x256xbf16> to vector<256x256xbf16>
    %cst_41 = arith.constant dense<0.000000e+00> : vector<8x256xf32>
    %77 = tpu.matmul %74, %76, %cst_41 {dimension_numbers = #tpu.dot_dimension_numbers<[1], [0], [0], [1], [0, 0, 1, 1], [], []>} : vector<8x256xbf16>, vector<256x256xbf16>, vector<8x256xf32> -> vector<8x256xf32>
    %78 = arith.addf %67, %77 : vector<8x256xf32>
    %c7 = arith.constant 7 : index
    %c0_42 = arith.constant 0 : index
    %c0_43 = arith.constant 0 : index
    %79 = vector.load %arg1[%c7, %c0_42, %c0_43] : memref<32x8x1xi32, #tpu.memory_space<vmem>>, vector<1x8x1xi32>
    %80 = vector.shape_cast %79 : vector<1x8x1xi32> to vector<8x1xi32>
    %81 = vector.broadcast %80 : vector<8x1xi32> to vector<8x256xi32>
    %82 = arith.cmpi eq, %81, %0 : vector<8x256xi32>
    %83 = arith.extui %82 : vector<8x256xi1> to vector<8x256xi32>
    %84 = arith.sitofp %83 : vector<8x256xi32> to vector<8x256xf32>
    %85 = arith.truncf %84 : vector<8x256xf32> to vector<8x256xbf16>
    %c7_44 = arith.constant 7 : index
    %c0_45 = arith.constant 0 : index
    %c0_46 = arith.constant 0 : index
    %86 = vector.load %arg2[%c7_44, %c0_45, %c0_46] : memref<32x256x256xbf16, #tpu.memory_space<vmem>>, vector<1x256x256xbf16>
    %87 = vector.shape_cast %86 : vector<1x256x256xbf16> to vector<256x256xbf16>
    %cst_47 = arith.constant dense<0.000000e+00> : vector<8x256xf32>
    %88 = tpu.matmul %85, %87, %cst_47 {dimension_numbers = #tpu.dot_dimension_numbers<[1], [0], [0], [1], [0, 0, 1, 1], [], []>} : vector<8x256xbf16>, vector<256x256xbf16>, vector<8x256xf32> -> vector<8x256xf32>
    %89 = arith.addf %78, %88 : vector<8x256xf32>
    %c8 = arith.constant 8 : index
    %c0_48 = arith.constant 0 : index
    %c0_49 = arith.constant 0 : index
    %90 = vector.load %arg1[%c8, %c0_48, %c0_49] : memref<32x8x1xi32, #tpu.memory_space<vmem>>, vector<1x8x1xi32>
    %91 = vector.shape_cast %90 : vector<1x8x1xi32> to vector<8x1xi32>
    %92 = vector.broadcast %91 : vector<8x1xi32> to vector<8x256xi32>
    %93 = arith.cmpi eq, %92, %0 : vector<8x256xi32>
    %94 = arith.extui %93 : vector<8x256xi1> to vector<8x256xi32>
    %95 = arith.sitofp %94 : vector<8x256xi32> to vector<8x256xf32>
    %96 = arith.truncf %95 : vector<8x256xf32> to vector<8x256xbf16>
    %c8_50 = arith.constant 8 : index
    %c0_51 = arith.constant 0 : index
    %c0_52 = arith.constant 0 : index
    %97 = vector.load %arg2[%c8_50, %c0_51, %c0_52] : memref<32x256x256xbf16, #tpu.memory_space<vmem>>, vector<1x256x256xbf16>
    %98 = vector.shape_cast %97 : vector<1x256x256xbf16> to vector<256x256xbf16>
    %cst_53 = arith.constant dense<0.000000e+00> : vector<8x256xf32>
    %99 = tpu.matmul %96, %98, %cst_53 {dimension_numbers = #tpu.dot_dimension_numbers<[1], [0], [0], [1], [0, 0, 1, 1], [], []>} : vector<8x256xbf16>, vector<256x256xbf16>, vector<8x256xf32> -> vector<8x256xf32>
    %100 = arith.addf %89, %99 : vector<8x256xf32>
    %c9 = arith.constant 9 : index
    %c0_54 = arith.constant 0 : index
    %c0_55 = arith.constant 0 : index
    %101 = vector.load %arg1[%c9, %c0_54, %c0_55] : memref<32x8x1xi32, #tpu.memory_space<vmem>>, vector<1x8x1xi32>
    %102 = vector.shape_cast %101 : vector<1x8x1xi32> to vector<8x1xi32>
    %103 = vector.broadcast %102 : vector<8x1xi32> to vector<8x256xi32>
    %104 = arith.cmpi eq, %103, %0 : vector<8x256xi32>
    %105 = arith.extui %104 : vector<8x256xi1> to vector<8x256xi32>
    %106 = arith.sitofp %105 : vector<8x256xi32> to vector<8x256xf32>
    %107 = arith.truncf %106 : vector<8x256xf32> to vector<8x256xbf16>
    %c9_56 = arith.constant 9 : index
    %c0_57 = arith.constant 0 : index
    %c0_58 = arith.constant 0 : index
    %108 = vector.load %arg2[%c9_56, %c0_57, %c0_58] : memref<32x256x256xbf16, #tpu.memory_space<vmem>>, vector<1x256x256xbf16>
    %109 = vector.shape_cast %108 : vector<1x256x256xbf16> to vector<256x256xbf16>
    %cst_59 = arith.constant dense<0.000000e+00> : vector<8x256xf32>
    %110 = tpu.matmul %107, %109, %cst_59 {dimension_numbers = #tpu.dot_dimension_numbers<[1], [0], [0], [1], [0, 0, 1, 1], [], []>} : vector<8x256xbf16>, vector<256x256xbf16>, vector<8x256xf32> -> vector<8x256xf32>
    %111 = arith.addf %100, %110 : vector<8x256xf32>
    %c10 = arith.constant 10 : index
    %c0_60 = arith.constant 0 : index
    %c0_61 = arith.constant 0 : index
    %112 = vector.load %arg1[%c10, %c0_60, %c0_61] : memref<32x8x1xi32, #tpu.memory_space<vmem>>, vector<1x8x1xi32>
    %113 = vector.shape_cast %112 : vector<1x8x1xi32> to vector<8x1xi32>
    %114 = vector.broadcast %113 : vector<8x1xi32> to vector<8x256xi32>
    %115 = arith.cmpi eq, %114, %0 : vector<8x256xi32>
    %116 = arith.extui %115 : vector<8x256xi1> to vector<8x256xi32>
    %117 = arith.sitofp %116 : vector<8x256xi32> to vector<8x256xf32>
    %118 = arith.truncf %117 : vector<8x256xf32> to vector<8x256xbf16>
    %c10_62 = arith.constant 10 : index
    %c0_63 = arith.constant 0 : index
    %c0_64 = arith.constant 0 : index
    %119 = vector.load %arg2[%c10_62, %c0_63, %c0_64] : memref<32x256x256xbf16, #tpu.memory_space<vmem>>, vector<1x256x256xbf16>
    %120 = vector.shape_cast %119 : vector<1x256x256xbf16> to vector<256x256xbf16>
    %cst_65 = arith.constant dense<0.000000e+00> : vector<8x256xf32>
    %121 = tpu.matmul %118, %120, %cst_65 {dimension_numbers = #tpu.dot_dimension_numbers<[1], [0], [0], [1], [0, 0, 1, 1], [], []>} : vector<8x256xbf16>, vector<256x256xbf16>, vector<8x256xf32> -> vector<8x256xf32>
    %122 = arith.addf %111, %121 : vector<8x256xf32>
    %c11 = arith.constant 11 : index
    %c0_66 = arith.constant 0 : index
    %c0_67 = arith.constant 0 : index
    %123 = vector.load %arg1[%c11, %c0_66, %c0_67] : memref<32x8x1xi32, #tpu.memory_space<vmem>>, vector<1x8x1xi32>
    %124 = vector.shape_cast %123 : vector<1x8x1xi32> to vector<8x1xi32>
    %125 = vector.broadcast %124 : vector<8x1xi32> to vector<8x256xi32>
    %126 = arith.cmpi eq, %125, %0 : vector<8x256xi32>
    %127 = arith.extui %126 : vector<8x256xi1> to vector<8x256xi32>
    %128 = arith.sitofp %127 : vector<8x256xi32> to vector<8x256xf32>
    %129 = arith.truncf %128 : vector<8x256xf32> to vector<8x256xbf16>
    %c11_68 = arith.constant 11 : index
    %c0_69 = arith.constant 0 : index
    %c0_70 = arith.constant 0 : index
    %130 = vector.load %arg2[%c11_68, %c0_69, %c0_70] : memref<32x256x256xbf16, #tpu.memory_space<vmem>>, vector<1x256x256xbf16>
    %131 = vector.shape_cast %130 : vector<1x256x256xbf16> to vector<256x256xbf16>
    %cst_71 = arith.constant dense<0.000000e+00> : vector<8x256xf32>
    %132 = tpu.matmul %129, %131, %cst_71 {dimension_numbers = #tpu.dot_dimension_numbers<[1], [0], [0], [1], [0, 0, 1, 1], [], []>} : vector<8x256xbf16>, vector<256x256xbf16>, vector<8x256xf32> -> vector<8x256xf32>
    %133 = arith.addf %122, %132 : vector<8x256xf32>
    %c12 = arith.constant 12 : index
    %c0_72 = arith.constant 0 : index
    %c0_73 = arith.constant 0 : index
    %134 = vector.load %arg1[%c12, %c0_72, %c0_73] : memref<32x8x1xi32, #tpu.memory_space<vmem>>, vector<1x8x1xi32>
    %135 = vector.shape_cast %134 : vector<1x8x1xi32> to vector<8x1xi32>
    %136 = vector.broadcast %135 : vector<8x1xi32> to vector<8x256xi32>
    %137 = arith.cmpi eq, %136, %0 : vector<8x256xi32>
    %138 = arith.extui %137 : vector<8x256xi1> to vector<8x256xi32>
    %139 = arith.sitofp %138 : vector<8x256xi32> to vector<8x256xf32>
    %140 = arith.truncf %139 : vector<8x256xf32> to vector<8x256xbf16>
    %c12_74 = arith.constant 12 : index
    %c0_75 = arith.constant 0 : index
    %c0_76 = arith.constant 0 : index
    %141 = vector.load %arg2[%c12_74, %c0_75, %c0_76] : memref<32x256x256xbf16, #tpu.memory_space<vmem>>, vector<1x256x256xbf16>
    %142 = vector.shape_cast %141 : vector<1x256x256xbf16> to vector<256x256xbf16>
    %cst_77 = arith.constant dense<0.000000e+00> : vector<8x256xf32>
    %143 = tpu.matmul %140, %142, %cst_77 {dimension_numbers = #tpu.dot_dimension_numbers<[1], [0], [0], [1], [0, 0, 1, 1], [], []>} : vector<8x256xbf16>, vector<256x256xbf16>, vector<8x256xf32> -> vector<8x256xf32>
    %144 = arith.addf %133, %143 : vector<8x256xf32>
    %c13 = arith.constant 13 : index
    %c0_78 = arith.constant 0 : index
    %c0_79 = arith.constant 0 : index
    %145 = vector.load %arg1[%c13, %c0_78, %c0_79] : memref<32x8x1xi32, #tpu.memory_space<vmem>>, vector<1x8x1xi32>
    %146 = vector.shape_cast %145 : vector<1x8x1xi32> to vector<8x1xi32>
    %147 = vector.broadcast %146 : vector<8x1xi32> to vector<8x256xi32>
    %148 = arith.cmpi eq, %147, %0 : vector<8x256xi32>
    %149 = arith.extui %148 : vector<8x256xi1> to vector<8x256xi32>
    %150 = arith.sitofp %149 : vector<8x256xi32> to vector<8x256xf32>
    %151 = arith.truncf %150 : vector<8x256xf32> to vector<8x256xbf16>
    %c13_80 = arith.constant 13 : index
    %c0_81 = arith.constant 0 : index
    %c0_82 = arith.constant 0 : index
    %152 = vector.load %arg2[%c13_80, %c0_81, %c0_82] : memref<32x256x256xbf16, #tpu.memory_space<vmem>>, vector<1x256x256xbf16>
    %153 = vector.shape_cast %152 : vector<1x256x256xbf16> to vector<256x256xbf16>
    %cst_83 = arith.constant dense<0.000000e+00> : vector<8x256xf32>
    %154 = tpu.matmul %151, %153, %cst_83 {dimension_numbers = #tpu.dot_dimension_numbers<[1], [0], [0], [1], [0, 0, 1, 1], [], []>} : vector<8x256xbf16>, vector<256x256xbf16>, vector<8x256xf32> -> vector<8x256xf32>
    %155 = arith.addf %144, %154 : vector<8x256xf32>
    %c14 = arith.constant 14 : index
    %c0_84 = arith.constant 0 : index
    %c0_85 = arith.constant 0 : index
    %156 = vector.load %arg1[%c14, %c0_84, %c0_85] : memref<32x8x1xi32, #tpu.memory_space<vmem>>, vector<1x8x1xi32>
    %157 = vector.shape_cast %156 : vector<1x8x1xi32> to vector<8x1xi32>
    %158 = vector.broadcast %157 : vector<8x1xi32> to vector<8x256xi32>
    %159 = arith.cmpi eq, %158, %0 : vector<8x256xi32>
    %160 = arith.extui %159 : vector<8x256xi1> to vector<8x256xi32>
    %161 = arith.sitofp %160 : vector<8x256xi32> to vector<8x256xf32>
    %162 = arith.truncf %161 : vector<8x256xf32> to vector<8x256xbf16>
    %c14_86 = arith.constant 14 : index
    %c0_87 = arith.constant 0 : index
    %c0_88 = arith.constant 0 : index
    %163 = vector.load %arg2[%c14_86, %c0_87, %c0_88] : memref<32x256x256xbf16, #tpu.memory_space<vmem>>, vector<1x256x256xbf16>
    %164 = vector.shape_cast %163 : vector<1x256x256xbf16> to vector<256x256xbf16>
    %cst_89 = arith.constant dense<0.000000e+00> : vector<8x256xf32>
    %165 = tpu.matmul %162, %164, %cst_89 {dimension_numbers = #tpu.dot_dimension_numbers<[1], [0], [0], [1], [0, 0, 1, 1], [], []>} : vector<8x256xbf16>, vector<256x256xbf16>, vector<8x256xf32> -> vector<8x256xf32>
    %166 = arith.addf %155, %165 : vector<8x256xf32>
    %c15 = arith.constant 15 : index
    %c0_90 = arith.constant 0 : index
    %c0_91 = arith.constant 0 : index
    %167 = vector.load %arg1[%c15, %c0_90, %c0_91] : memref<32x8x1xi32, #tpu.memory_space<vmem>>, vector<1x8x1xi32>
    %168 = vector.shape_cast %167 : vector<1x8x1xi32> to vector<8x1xi32>
    %169 = vector.broadcast %168 : vector<8x1xi32> to vector<8x256xi32>
    %170 = arith.cmpi eq, %169, %0 : vector<8x256xi32>
    %171 = arith.extui %170 : vector<8x256xi1> to vector<8x256xi32>
    %172 = arith.sitofp %171 : vector<8x256xi32> to vector<8x256xf32>
    %173 = arith.truncf %172 : vector<8x256xf32> to vector<8x256xbf16>
    %c15_92 = arith.constant 15 : index
    %c0_93 = arith.constant 0 : index
    %c0_94 = arith.constant 0 : index
    %174 = vector.load %arg2[%c15_92, %c0_93, %c0_94] : memref<32x256x256xbf16, #tpu.memory_space<vmem>>, vector<1x256x256xbf16>
    %175 = vector.shape_cast %174 : vector<1x256x256xbf16> to vector<256x256xbf16>
    %cst_95 = arith.constant dense<0.000000e+00> : vector<8x256xf32>
    %176 = tpu.matmul %173, %175, %cst_95 {dimension_numbers = #tpu.dot_dimension_numbers<[1], [0], [0], [1], [0, 0, 1, 1], [], []>} : vector<8x256xbf16>, vector<256x256xbf16>, vector<8x256xf32> -> vector<8x256xf32>
    %177 = arith.addf %166, %176 : vector<8x256xf32>
    %c16 = arith.constant 16 : index
    %c0_96 = arith.constant 0 : index
    %c0_97 = arith.constant 0 : index
    %178 = vector.load %arg1[%c16, %c0_96, %c0_97] : memref<32x8x1xi32, #tpu.memory_space<vmem>>, vector<1x8x1xi32>
    %179 = vector.shape_cast %178 : vector<1x8x1xi32> to vector<8x1xi32>
    %180 = vector.broadcast %179 : vector<8x1xi32> to vector<8x256xi32>
    %181 = arith.cmpi eq, %180, %0 : vector<8x256xi32>
    %182 = arith.extui %181 : vector<8x256xi1> to vector<8x256xi32>
    %183 = arith.sitofp %182 : vector<8x256xi32> to vector<8x256xf32>
    %184 = arith.truncf %183 : vector<8x256xf32> to vector<8x256xbf16>
    %c16_98 = arith.constant 16 : index
    %c0_99 = arith.constant 0 : index
    %c0_100 = arith.constant 0 : index
    %185 = vector.load %arg2[%c16_98, %c0_99, %c0_100] : memref<32x256x256xbf16, #tpu.memory_space<vmem>>, vector<1x256x256xbf16>
    %186 = vector.shape_cast %185 : vector<1x256x256xbf16> to vector<256x256xbf16>
    %cst_101 = arith.constant dense<0.000000e+00> : vector<8x256xf32>
    %187 = tpu.matmul %184, %186, %cst_101 {dimension_numbers = #tpu.dot_dimension_numbers<[1], [0], [0], [1], [0, 0, 1, 1], [], []>} : vector<8x256xbf16>, vector<256x256xbf16>, vector<8x256xf32> -> vector<8x256xf32>
    %188 = arith.addf %177, %187 : vector<8x256xf32>
    %c17 = arith.constant 17 : index
    %c0_102 = arith.constant 0 : index
    %c0_103 = arith.constant 0 : index
    %189 = vector.load %arg1[%c17, %c0_102, %c0_103] : memref<32x8x1xi32, #tpu.memory_space<vmem>>, vector<1x8x1xi32>
    %190 = vector.shape_cast %189 : vector<1x8x1xi32> to vector<8x1xi32>
    %191 = vector.broadcast %190 : vector<8x1xi32> to vector<8x256xi32>
    %192 = arith.cmpi eq, %191, %0 : vector<8x256xi32>
    %193 = arith.extui %192 : vector<8x256xi1> to vector<8x256xi32>
    %194 = arith.sitofp %193 : vector<8x256xi32> to vector<8x256xf32>
    %195 = arith.truncf %194 : vector<8x256xf32> to vector<8x256xbf16>
    %c17_104 = arith.constant 17 : index
    %c0_105 = arith.constant 0 : index
    %c0_106 = arith.constant 0 : index
    %196 = vector.load %arg2[%c17_104, %c0_105, %c0_106] : memref<32x256x256xbf16, #tpu.memory_space<vmem>>, vector<1x256x256xbf16>
    %197 = vector.shape_cast %196 : vector<1x256x256xbf16> to vector<256x256xbf16>
    %cst_107 = arith.constant dense<0.000000e+00> : vector<8x256xf32>
    %198 = tpu.matmul %195, %197, %cst_107 {dimension_numbers = #tpu.dot_dimension_numbers<[1], [0], [0], [1], [0, 0, 1, 1], [], []>} : vector<8x256xbf16>, vector<256x256xbf16>, vector<8x256xf32> -> vector<8x256xf32>
    %199 = arith.addf %188, %198 : vector<8x256xf32>
    %c18 = arith.constant 18 : index
    %c0_108 = arith.constant 0 : index
    %c0_109 = arith.constant 0 : index
    %200 = vector.load %arg1[%c18, %c0_108, %c0_109] : memref<32x8x1xi32, #tpu.memory_space<vmem>>, vector<1x8x1xi32>
    %201 = vector.shape_cast %200 : vector<1x8x1xi32> to vector<8x1xi32>
    %202 = vector.broadcast %201 : vector<8x1xi32> to vector<8x256xi32>
    %203 = arith.cmpi eq, %202, %0 : vector<8x256xi32>
    %204 = arith.extui %203 : vector<8x256xi1> to vector<8x256xi32>
    %205 = arith.sitofp %204 : vector<8x256xi32> to vector<8x256xf32>
    %206 = arith.truncf %205 : vector<8x256xf32> to vector<8x256xbf16>
    %c18_110 = arith.constant 18 : index
    %c0_111 = arith.constant 0 : index
    %c0_112 = arith.constant 0 : index
    %207 = vector.load %arg2[%c18_110, %c0_111, %c0_112] : memref<32x256x256xbf16, #tpu.memory_space<vmem>>, vector<1x256x256xbf16>
    %208 = vector.shape_cast %207 : vector<1x256x256xbf16> to vector<256x256xbf16>
    %cst_113 = arith.constant dense<0.000000e+00> : vector<8x256xf32>
    %209 = tpu.matmul %206, %208, %cst_113 {dimension_numbers = #tpu.dot_dimension_numbers<[1], [0], [0], [1], [0, 0, 1, 1], [], []>} : vector<8x256xbf16>, vector<256x256xbf16>, vector<8x256xf32> -> vector<8x256xf32>
    %210 = arith.addf %199, %209 : vector<8x256xf32>
    %c19 = arith.constant 19 : index
    %c0_114 = arith.constant 0 : index
    %c0_115 = arith.constant 0 : index
    %211 = vector.load %arg1[%c19, %c0_114, %c0_115] : memref<32x8x1xi32, #tpu.memory_space<vmem>>, vector<1x8x1xi32>
    %212 = vector.shape_cast %211 : vector<1x8x1xi32> to vector<8x1xi32>
    %213 = vector.broadcast %212 : vector<8x1xi32> to vector<8x256xi32>
    %214 = arith.cmpi eq, %213, %0 : vector<8x256xi32>
    %215 = arith.extui %214 : vector<8x256xi1> to vector<8x256xi32>
    %216 = arith.sitofp %215 : vector<8x256xi32> to vector<8x256xf32>
    %217 = arith.truncf %216 : vector<8x256xf32> to vector<8x256xbf16>
    %c19_116 = arith.constant 19 : index
    %c0_117 = arith.constant 0 : index
    %c0_118 = arith.constant 0 : index
    %218 = vector.load %arg2[%c19_116, %c0_117, %c0_118] : memref<32x256x256xbf16, #tpu.memory_space<vmem>>, vector<1x256x256xbf16>
    %219 = vector.shape_cast %218 : vector<1x256x256xbf16> to vector<256x256xbf16>
    %cst_119 = arith.constant dense<0.000000e+00> : vector<8x256xf32>
    %220 = tpu.matmul %217, %219, %cst_119 {dimension_numbers = #tpu.dot_dimension_numbers<[1], [0], [0], [1], [0, 0, 1, 1], [], []>} : vector<8x256xbf16>, vector<256x256xbf16>, vector<8x256xf32> -> vector<8x256xf32>
    %221 = arith.addf %210, %220 : vector<8x256xf32>
    %c20 = arith.constant 20 : index
    %c0_120 = arith.constant 0 : index
    %c0_121 = arith.constant 0 : index
    %222 = vector.load %arg1[%c20, %c0_120, %c0_121] : memref<32x8x1xi32, #tpu.memory_space<vmem>>, vector<1x8x1xi32>
    %223 = vector.shape_cast %222 : vector<1x8x1xi32> to vector<8x1xi32>
    %224 = vector.broadcast %223 : vector<8x1xi32> to vector<8x256xi32>
    %225 = arith.cmpi eq, %224, %0 : vector<8x256xi32>
    %226 = arith.extui %225 : vector<8x256xi1> to vector<8x256xi32>
    %227 = arith.sitofp %226 : vector<8x256xi32> to vector<8x256xf32>
    %228 = arith.truncf %227 : vector<8x256xf32> to vector<8x256xbf16>
    %c20_122 = arith.constant 20 : index
    %c0_123 = arith.constant 0 : index
    %c0_124 = arith.constant 0 : index
    %229 = vector.load %arg2[%c20_122, %c0_123, %c0_124] : memref<32x256x256xbf16, #tpu.memory_space<vmem>>, vector<1x256x256xbf16>
    %230 = vector.shape_cast %229 : vector<1x256x256xbf16> to vector<256x256xbf16>
    %cst_125 = arith.constant dense<0.000000e+00> : vector<8x256xf32>
    %231 = tpu.matmul %228, %230, %cst_125 {dimension_numbers = #tpu.dot_dimension_numbers<[1], [0], [0], [1], [0, 0, 1, 1], [], []>} : vector<8x256xbf16>, vector<256x256xbf16>, vector<8x256xf32> -> vector<8x256xf32>
    %232 = arith.addf %221, %231 : vector<8x256xf32>
    %c21 = arith.constant 21 : index
    %c0_126 = arith.constant 0 : index
    %c0_127 = arith.constant 0 : index
    %233 = vector.load %arg1[%c21, %c0_126, %c0_127] : memref<32x8x1xi32, #tpu.memory_space<vmem>>, vector<1x8x1xi32>
    %234 = vector.shape_cast %233 : vector<1x8x1xi32> to vector<8x1xi32>
    %235 = vector.broadcast %234 : vector<8x1xi32> to vector<8x256xi32>
    %236 = arith.cmpi eq, %235, %0 : vector<8x256xi32>
    %237 = arith.extui %236 : vector<8x256xi1> to vector<8x256xi32>
    %238 = arith.sitofp %237 : vector<8x256xi32> to vector<8x256xf32>
    %239 = arith.truncf %238 : vector<8x256xf32> to vector<8x256xbf16>
    %c21_128 = arith.constant 21 : index
    %c0_129 = arith.constant 0 : index
    %c0_130 = arith.constant 0 : index
    %240 = vector.load %arg2[%c21_128, %c0_129, %c0_130] : memref<32x256x256xbf16, #tpu.memory_space<vmem>>, vector<1x256x256xbf16>
    %241 = vector.shape_cast %240 : vector<1x256x256xbf16> to vector<256x256xbf16>
    %cst_131 = arith.constant dense<0.000000e+00> : vector<8x256xf32>
    %242 = tpu.matmul %239, %241, %cst_131 {dimension_numbers = #tpu.dot_dimension_numbers<[1], [0], [0], [1], [0, 0, 1, 1], [], []>} : vector<8x256xbf16>, vector<256x256xbf16>, vector<8x256xf32> -> vector<8x256xf32>
    %243 = arith.addf %232, %242 : vector<8x256xf32>
    %c22 = arith.constant 22 : index
    %c0_132 = arith.constant 0 : index
    %c0_133 = arith.constant 0 : index
    %244 = vector.load %arg1[%c22, %c0_132, %c0_133] : memref<32x8x1xi32, #tpu.memory_space<vmem>>, vector<1x8x1xi32>
    %245 = vector.shape_cast %244 : vector<1x8x1xi32> to vector<8x1xi32>
    %246 = vector.broadcast %245 : vector<8x1xi32> to vector<8x256xi32>
    %247 = arith.cmpi eq, %246, %0 : vector<8x256xi32>
    %248 = arith.extui %247 : vector<8x256xi1> to vector<8x256xi32>
    %249 = arith.sitofp %248 : vector<8x256xi32> to vector<8x256xf32>
    %250 = arith.truncf %249 : vector<8x256xf32> to vector<8x256xbf16>
    %c22_134 = arith.constant 22 : index
    %c0_135 = arith.constant 0 : index
    %c0_136 = arith.constant 0 : index
    %251 = vector.load %arg2[%c22_134, %c0_135, %c0_136] : memref<32x256x256xbf16, #tpu.memory_space<vmem>>, vector<1x256x256xbf16>
    %252 = vector.shape_cast %251 : vector<1x256x256xbf16> to vector<256x256xbf16>
    %cst_137 = arith.constant dense<0.000000e+00> : vector<8x256xf32>
    %253 = tpu.matmul %250, %252, %cst_137 {dimension_numbers = #tpu.dot_dimension_numbers<[1], [0], [0], [1], [0, 0, 1, 1], [], []>} : vector<8x256xbf16>, vector<256x256xbf16>, vector<8x256xf32> -> vector<8x256xf32>
    %254 = arith.addf %243, %253 : vector<8x256xf32>
    %c23 = arith.constant 23 : index
    %c0_138 = arith.constant 0 : index
    %c0_139 = arith.constant 0 : index
    %255 = vector.load %arg1[%c23, %c0_138, %c0_139] : memref<32x8x1xi32, #tpu.memory_space<vmem>>, vector<1x8x1xi32>
    %256 = vector.shape_cast %255 : vector<1x8x1xi32> to vector<8x1xi32>
    %257 = vector.broadcast %256 : vector<8x1xi32> to vector<8x256xi32>
    %258 = arith.cmpi eq, %257, %0 : vector<8x256xi32>
    %259 = arith.extui %258 : vector<8x256xi1> to vector<8x256xi32>
    %260 = arith.sitofp %259 : vector<8x256xi32> to vector<8x256xf32>
    %261 = arith.truncf %260 : vector<8x256xf32> to vector<8x256xbf16>
    %c23_140 = arith.constant 23 : index
    %c0_141 = arith.constant 0 : index
    %c0_142 = arith.constant 0 : index
    %262 = vector.load %arg2[%c23_140, %c0_141, %c0_142] : memref<32x256x256xbf16, #tpu.memory_space<vmem>>, vector<1x256x256xbf16>
    %263 = vector.shape_cast %262 : vector<1x256x256xbf16> to vector<256x256xbf16>
    %cst_143 = arith.constant dense<0.000000e+00> : vector<8x256xf32>
    %264 = tpu.matmul %261, %263, %cst_143 {dimension_numbers = #tpu.dot_dimension_numbers<[1], [0], [0], [1], [0, 0, 1, 1], [], []>} : vector<8x256xbf16>, vector<256x256xbf16>, vector<8x256xf32> -> vector<8x256xf32>
    %265 = arith.addf %254, %264 : vector<8x256xf32>
    %c24 = arith.constant 24 : index
    %c0_144 = arith.constant 0 : index
    %c0_145 = arith.constant 0 : index
    %266 = vector.load %arg1[%c24, %c0_144, %c0_145] : memref<32x8x1xi32, #tpu.memory_space<vmem>>, vector<1x8x1xi32>
    %267 = vector.shape_cast %266 : vector<1x8x1xi32> to vector<8x1xi32>
    %268 = vector.broadcast %267 : vector<8x1xi32> to vector<8x256xi32>
    %269 = arith.cmpi eq, %268, %0 : vector<8x256xi32>
    %270 = arith.extui %269 : vector<8x256xi1> to vector<8x256xi32>
    %271 = arith.sitofp %270 : vector<8x256xi32> to vector<8x256xf32>
    %272 = arith.truncf %271 : vector<8x256xf32> to vector<8x256xbf16>
    %c24_146 = arith.constant 24 : index
    %c0_147 = arith.constant 0 : index
    %c0_148 = arith.constant 0 : index
    %273 = vector.load %arg2[%c24_146, %c0_147, %c0_148] : memref<32x256x256xbf16, #tpu.memory_space<vmem>>, vector<1x256x256xbf16>
    %274 = vector.shape_cast %273 : vector<1x256x256xbf16> to vector<256x256xbf16>
    %cst_149 = arith.constant dense<0.000000e+00> : vector<8x256xf32>
    %275 = tpu.matmul %272, %274, %cst_149 {dimension_numbers = #tpu.dot_dimension_numbers<[1], [0], [0], [1], [0, 0, 1, 1], [], []>} : vector<8x256xbf16>, vector<256x256xbf16>, vector<8x256xf32> -> vector<8x256xf32>
    %276 = arith.addf %265, %275 : vector<8x256xf32>
    %c25 = arith.constant 25 : index
    %c0_150 = arith.constant 0 : index
    %c0_151 = arith.constant 0 : index
    %277 = vector.load %arg1[%c25, %c0_150, %c0_151] : memref<32x8x1xi32, #tpu.memory_space<vmem>>, vector<1x8x1xi32>
    %278 = vector.shape_cast %277 : vector<1x8x1xi32> to vector<8x1xi32>
    %279 = vector.broadcast %278 : vector<8x1xi32> to vector<8x256xi32>
    %280 = arith.cmpi eq, %279, %0 : vector<8x256xi32>
    %281 = arith.extui %280 : vector<8x256xi1> to vector<8x256xi32>
    %282 = arith.sitofp %281 : vector<8x256xi32> to vector<8x256xf32>
    %283 = arith.truncf %282 : vector<8x256xf32> to vector<8x256xbf16>
    %c25_152 = arith.constant 25 : index
    %c0_153 = arith.constant 0 : index
    %c0_154 = arith.constant 0 : index
    %284 = vector.load %arg2[%c25_152, %c0_153, %c0_154] : memref<32x256x256xbf16, #tpu.memory_space<vmem>>, vector<1x256x256xbf16>
    %285 = vector.shape_cast %284 : vector<1x256x256xbf16> to vector<256x256xbf16>
    %cst_155 = arith.constant dense<0.000000e+00> : vector<8x256xf32>
    %286 = tpu.matmul %283, %285, %cst_155 {dimension_numbers = #tpu.dot_dimension_numbers<[1], [0], [0], [1], [0, 0, 1, 1], [], []>} : vector<8x256xbf16>, vector<256x256xbf16>, vector<8x256xf32> -> vector<8x256xf32>
    %287 = arith.addf %276, %286 : vector<8x256xf32>
    %c26 = arith.constant 26 : index
    %c0_156 = arith.constant 0 : index
    %c0_157 = arith.constant 0 : index
    %288 = vector.load %arg1[%c26, %c0_156, %c0_157] : memref<32x8x1xi32, #tpu.memory_space<vmem>>, vector<1x8x1xi32>
    %289 = vector.shape_cast %288 : vector<1x8x1xi32> to vector<8x1xi32>
    %290 = vector.broadcast %289 : vector<8x1xi32> to vector<8x256xi32>
    %291 = arith.cmpi eq, %290, %0 : vector<8x256xi32>
    %292 = arith.extui %291 : vector<8x256xi1> to vector<8x256xi32>
    %293 = arith.sitofp %292 : vector<8x256xi32> to vector<8x256xf32>
    %294 = arith.truncf %293 : vector<8x256xf32> to vector<8x256xbf16>
    %c26_158 = arith.constant 26 : index
    %c0_159 = arith.constant 0 : index
    %c0_160 = arith.constant 0 : index
    %295 = vector.load %arg2[%c26_158, %c0_159, %c0_160] : memref<32x256x256xbf16, #tpu.memory_space<vmem>>, vector<1x256x256xbf16>
    %296 = vector.shape_cast %295 : vector<1x256x256xbf16> to vector<256x256xbf16>
    %cst_161 = arith.constant dense<0.000000e+00> : vector<8x256xf32>
    %297 = tpu.matmul %294, %296, %cst_161 {dimension_numbers = #tpu.dot_dimension_numbers<[1], [0], [0], [1], [0, 0, 1, 1], [], []>} : vector<8x256xbf16>, vector<256x256xbf16>, vector<8x256xf32> -> vector<8x256xf32>
    %298 = arith.addf %287, %297 : vector<8x256xf32>
    %c27 = arith.constant 27 : index
    %c0_162 = arith.constant 0 : index
    %c0_163 = arith.constant 0 : index
    %299 = vector.load %arg1[%c27, %c0_162, %c0_163] : memref<32x8x1xi32, #tpu.memory_space<vmem>>, vector<1x8x1xi32>
    %300 = vector.shape_cast %299 : vector<1x8x1xi32> to vector<8x1xi32>
    %301 = vector.broadcast %300 : vector<8x1xi32> to vector<8x256xi32>
    %302 = arith.cmpi eq, %301, %0 : vector<8x256xi32>
    %303 = arith.extui %302 : vector<8x256xi1> to vector<8x256xi32>
    %304 = arith.sitofp %303 : vector<8x256xi32> to vector<8x256xf32>
    %305 = arith.truncf %304 : vector<8x256xf32> to vector<8x256xbf16>
    %c27_164 = arith.constant 27 : index
    %c0_165 = arith.constant 0 : index
    %c0_166 = arith.constant 0 : index
    %306 = vector.load %arg2[%c27_164, %c0_165, %c0_166] : memref<32x256x256xbf16, #tpu.memory_space<vmem>>, vector<1x256x256xbf16>
    %307 = vector.shape_cast %306 : vector<1x256x256xbf16> to vector<256x256xbf16>
    %cst_167 = arith.constant dense<0.000000e+00> : vector<8x256xf32>
    %308 = tpu.matmul %305, %307, %cst_167 {dimension_numbers = #tpu.dot_dimension_numbers<[1], [0], [0], [1], [0, 0, 1, 1], [], []>} : vector<8x256xbf16>, vector<256x256xbf16>, vector<8x256xf32> -> vector<8x256xf32>
    %309 = arith.addf %298, %308 : vector<8x256xf32>
    %c28 = arith.constant 28 : index
    %c0_168 = arith.constant 0 : index
    %c0_169 = arith.constant 0 : index
    %310 = vector.load %arg1[%c28, %c0_168, %c0_169] : memref<32x8x1xi32, #tpu.memory_space<vmem>>, vector<1x8x1xi32>
    %311 = vector.shape_cast %310 : vector<1x8x1xi32> to vector<8x1xi32>
    %312 = vector.broadcast %311 : vector<8x1xi32> to vector<8x256xi32>
    %313 = arith.cmpi eq, %312, %0 : vector<8x256xi32>
    %314 = arith.extui %313 : vector<8x256xi1> to vector<8x256xi32>
    %315 = arith.sitofp %314 : vector<8x256xi32> to vector<8x256xf32>
    %316 = arith.truncf %315 : vector<8x256xf32> to vector<8x256xbf16>
    %c28_170 = arith.constant 28 : index
    %c0_171 = arith.constant 0 : index
    %c0_172 = arith.constant 0 : index
    %317 = vector.load %arg2[%c28_170, %c0_171, %c0_172] : memref<32x256x256xbf16, #tpu.memory_space<vmem>>, vector<1x256x256xbf16>
    %318 = vector.shape_cast %317 : vector<1x256x256xbf16> to vector<256x256xbf16>
    %cst_173 = arith.constant dense<0.000000e+00> : vector<8x256xf32>
    %319 = tpu.matmul %316, %318, %cst_173 {dimension_numbers = #tpu.dot_dimension_numbers<[1], [0], [0], [1], [0, 0, 1, 1], [], []>} : vector<8x256xbf16>, vector<256x256xbf16>, vector<8x256xf32> -> vector<8x256xf32>
    %320 = arith.addf %309, %319 : vector<8x256xf32>
    %c29 = arith.constant 29 : index
    %c0_174 = arith.constant 0 : index
    %c0_175 = arith.constant 0 : index
    %321 = vector.load %arg1[%c29, %c0_174, %c0_175] : memref<32x8x1xi32, #tpu.memory_space<vmem>>, vector<1x8x1xi32>
    %322 = vector.shape_cast %321 : vector<1x8x1xi32> to vector<8x1xi32>
    %323 = vector.broadcast %322 : vector<8x1xi32> to vector<8x256xi32>
    %324 = arith.cmpi eq, %323, %0 : vector<8x256xi32>
    %325 = arith.extui %324 : vector<8x256xi1> to vector<8x256xi32>
    %326 = arith.sitofp %325 : vector<8x256xi32> to vector<8x256xf32>
    %327 = arith.truncf %326 : vector<8x256xf32> to vector<8x256xbf16>
    %c29_176 = arith.constant 29 : index
    %c0_177 = arith.constant 0 : index
    %c0_178 = arith.constant 0 : index
    %328 = vector.load %arg2[%c29_176, %c0_177, %c0_178] : memref<32x256x256xbf16, #tpu.memory_space<vmem>>, vector<1x256x256xbf16>
    %329 = vector.shape_cast %328 : vector<1x256x256xbf16> to vector<256x256xbf16>
    %cst_179 = arith.constant dense<0.000000e+00> : vector<8x256xf32>
    %330 = tpu.matmul %327, %329, %cst_179 {dimension_numbers = #tpu.dot_dimension_numbers<[1], [0], [0], [1], [0, 0, 1, 1], [], []>} : vector<8x256xbf16>, vector<256x256xbf16>, vector<8x256xf32> -> vector<8x256xf32>
    %331 = arith.addf %320, %330 : vector<8x256xf32>
    %c30 = arith.constant 30 : index
    %c0_180 = arith.constant 0 : index
    %c0_181 = arith.constant 0 : index
    %332 = vector.load %arg1[%c30, %c0_180, %c0_181] : memref<32x8x1xi32, #tpu.memory_space<vmem>>, vector<1x8x1xi32>
    %333 = vector.shape_cast %332 : vector<1x8x1xi32> to vector<8x1xi32>
    %334 = vector.broadcast %333 : vector<8x1xi32> to vector<8x256xi32>
    %335 = arith.cmpi eq, %334, %0 : vector<8x256xi32>
    %336 = arith.extui %335 : vector<8x256xi1> to vector<8x256xi32>
    %337 = arith.sitofp %336 : vector<8x256xi32> to vector<8x256xf32>
    %338 = arith.truncf %337 : vector<8x256xf32> to vector<8x256xbf16>
    %c30_182 = arith.constant 30 : index
    %c0_183 = arith.constant 0 : index
    %c0_184 = arith.constant 0 : index
    %339 = vector.load %arg2[%c30_182, %c0_183, %c0_184] : memref<32x256x256xbf16, #tpu.memory_space<vmem>>, vector<1x256x256xbf16>
    %340 = vector.shape_cast %339 : vector<1x256x256xbf16> to vector<256x256xbf16>
    %cst_185 = arith.constant dense<0.000000e+00> : vector<8x256xf32>
    %341 = tpu.matmul %338, %340, %cst_185 {dimension_numbers = #tpu.dot_dimension_numbers<[1], [0], [0], [1], [0, 0, 1, 1], [], []>} : vector<8x256xbf16>, vector<256x256xbf16>, vector<8x256xf32> -> vector<8x256xf32>
    %342 = arith.addf %331, %341 : vector<8x256xf32>
    %c31 = arith.constant 31 : index
    %c0_186 = arith.constant 0 : index
    %c0_187 = arith.constant 0 : index
    %343 = vector.load %arg1[%c31, %c0_186, %c0_187] : memref<32x8x1xi32, #tpu.memory_space<vmem>>, vector<1x8x1xi32>
    %344 = vector.shape_cast %343 : vector<1x8x1xi32> to vector<8x1xi32>
    %345 = vector.broadcast %344 : vector<8x1xi32> to vector<8x256xi32>
    %346 = arith.cmpi eq, %345, %0 : vector<8x256xi32>
    %347 = arith.extui %346 : vector<8x256xi1> to vector<8x256xi32>
    %348 = arith.sitofp %347 : vector<8x256xi32> to vector<8x256xf32>
    %349 = arith.truncf %348 : vector<8x256xf32> to vector<8x256xbf16>
    %c31_188 = arith.constant 31 : index
    %c0_189 = arith.constant 0 : index
    %c0_190 = arith.constant 0 : index
    %350 = vector.load %arg2[%c31_188, %c0_189, %c0_190] : memref<32x256x256xbf16, #tpu.memory_space<vmem>>, vector<1x256x256xbf16>
    %351 = vector.shape_cast %350 : vector<1x256x256xbf16> to vector<256x256xbf16>
    %cst_191 = arith.constant dense<0.000000e+00> : vector<8x256xf32>
    %352 = tpu.matmul %349, %351, %cst_191 {dimension_numbers = #tpu.dot_dimension_numbers<[1], [0], [0], [1], [0, 0, 1, 1], [], []>} : vector<8x256xbf16>, vector<256x256xbf16>, vector<8x256xf32> -> vector<8x256xf32>
    %353 = arith.addf %342, %352 : vector<8x256xf32>
    %c0_192 = arith.constant 0 : index
    %c0_193 = arith.constant 0 : index
    %354 = vector.load %arg4[%c0_192, %c0_193] : memref<3x256xf32, #tpu.memory_space<vmem>>, vector<1x256xf32>
    %355 = vector.broadcast %354 : vector<1x256xf32> to vector<8x256xf32>
    %356 = arith.addf %353, %355 : vector<8x256xf32>
    %cst_194 = arith.constant 0.000000e+00 : f32
    %357 = vector.broadcast %cst_194 : f32 to vector<8x256xf32>
    %358 = arith.maximumf %356, %357 : vector<8x256xf32>
    %359 = arith.truncf %358 : vector<8x256xf32> to vector<8x256xbf16>
    %c0_195 = arith.constant 0 : index
    %c0_196 = arith.constant 0 : index
    %360 = vector.load %arg3[%c0_195, %c0_196] : memref<384x128xbf16, #tpu.memory_space<vmem>>, vector<256x128xbf16>
    %cst_197 = arith.constant dense<0.000000e+00> : vector<8x128xf32>
    %361 = tpu.matmul %359, %360, %cst_197 {dimension_numbers = #tpu.dot_dimension_numbers<[1], [0], [0], [1], [0, 0, 1, 1], [], []>} : vector<8x256xbf16>, vector<256x128xbf16>, vector<8x128xf32> -> vector<8x128xf32>
    %c1_198 = arith.constant 1 : index
    %c0_199 = arith.constant 0 : index
    %362 = vector.load %arg4[%c1_198, %c0_199] : memref<3x256xf32, #tpu.memory_space<vmem>>, vector<1x128xf32>
    %363 = vector.broadcast %362 : vector<1x128xf32> to vector<8x128xf32>
    %364 = arith.addf %361, %363 : vector<8x128xf32>
    %cst_200 = arith.constant 0.000000e+00 : f32
    %365 = vector.broadcast %cst_200 : f32 to vector<8x128xf32>
    %366 = arith.maximumf %364, %365 : vector<8x128xf32>
    %367 = arith.truncf %366 : vector<8x128xf32> to vector<8x128xbf16>
    %c256 = arith.constant 256 : index
    %c0_201 = arith.constant 0 : index
    %368 = vector.load %arg3[%c256, %c0_201] : memref<384x128xbf16, #tpu.memory_space<vmem>>, vector<128x128xbf16>
    %cst_202 = arith.constant dense<0.000000e+00> : vector<8x128xf32>
    %369 = tpu.matmul %367, %368, %cst_202 {dimension_numbers = #tpu.dot_dimension_numbers<[1], [0], [0], [1], [0, 0, 1, 1], [], []>} : vector<8x128xbf16>, vector<128x128xbf16>, vector<8x128xf32> -> vector<8x128xf32>
    %c2_203 = arith.constant 2 : index
    %c0_204 = arith.constant 0 : index
    %370 = vector.load %arg4[%c2_203, %c0_204] : memref<3x256xf32, #tpu.memory_space<vmem>>, vector<1x128xf32>
    %371 = vector.broadcast %370 : vector<1x128xf32> to vector<8x128xf32>
    %372 = arith.addf %369, %371 : vector<8x128xf32>
    %c0_205 = arith.constant 0 : index
    %c0_206 = arith.constant 0 : index
    %373 = vector.load %arg5[%c0_205, %c0_206] : memref<8x128xf32, #tpu.memory_space<vmem>>, vector<8x128xf32>
    tpu.vector_store %arg5[%c0_205, %c0_206], %372 {strides = array<i32>} : memref<8x128xf32, #tpu.memory_space<vmem>>, vector<8x128xf32>,
    return
  }
  func.func @transform_0(%arg0: i32) -> (i32, i32, i32) {
    %c0_i32 = arith.constant 0 : i32
    %c0_i32_0 = arith.constant 0 : i32
    %c0_i32_1 = arith.constant 0 : i32
    return %c0_i32, %arg0, %c0_i32_0 : i32, i32, i32
  }
  func.func @transform_1(%arg0: i32) -> (i32, i32, i32) {
    %c0_i32 = arith.constant 0 : i32
    %c0_i32_0 = arith.constant 0 : i32
    %c0_i32_1 = arith.constant 0 : i32
    %c0_i32_2 = arith.constant 0 : i32
    return %c0_i32, %c0_i32_0, %c0_i32_1 : i32, i32, i32
  }
  func.func @transform_2(%arg0: i32) -> (i32, i32) {
    %c0_i32 = arith.constant 0 : i32
    %c0_i32_0 = arith.constant 0 : i32
    %c0_i32_1 = arith.constant 0 : i32
    return %c0_i32, %c0_i32_0 : i32, i32
  }
  func.func @transform_3(%arg0: i32) -> (i32, i32) {
    %c0_i32 = arith.constant 0 : i32
    %c0_i32_0 = arith.constant 0 : i32
    %c0_i32_1 = arith.constant 0 : i32
    return %c0_i32, %c0_i32_0 : i32, i32
  }
  func.func @transform_4(%arg0: i32) -> (i32, i32) {
    %c0_i32 = arith.constant 0 : i32
    %c0_i32_0 = arith.constant 0 : i32
    return %arg0, %c0_i32 : i32, i32
  }
}

</mosaic_0001>

<llo_original>
// kernel: tpu_custom_call.1
$region0: #{tpu_custom_call.1}
  #allocation0 [shape = 'u32[]', space=smem, size = 0x4, offset = 0x4, fixed_abs, tag = 'smem constant byte address 0x4 - core index']
  #allocation1 [shape = 'u32[144,128]{1,0:T(1,128)}', space=vmem, size = 0x12000, scoped, tag = 'internal scratch']
  %s0 = inlined_call_operand.vmem [shape: s32[32,8,1], index: 0, kind: input, shape index: {}]
  %s1 = inlined_call_operand.hbm [shape: bf16[32,256,256], index: 1, kind: input, shape index: {}]
  %s2 = inlined_call_operand.hbm [shape: bf16[384,128], index: 2, kind: input, shape index: {}]
  %s3 = inlined_call_operand.hbm [shape: f32[3,256], index: 3, kind: input, shape index: {}]
  %s4 = inlined_call_operand.hbm [shape: f32[8,128], index: 4, kind: output, shape index: {}]
  %s5 = sld [smem:[#allocation0]]
  $region38: #{tpu_custom_call.1} parent=0
    _
  %s7 = ssub.s32 1, %s5
  %s8 = scalar_select 0, %s7, %s5
  $region1: #{tpu_custom_call.1} parent=0
    #allocation2 [shape = 'u8[4194304]{0}', space=vmem, size = 0x400000, scoped, tag = 'input window, operand 1, single buffered']
    #allocation3 [shape = 's32[1]{0}', space=sflag, size = 0x4, scoped, tag = 'scoped memory for tpu_custom_call.1']
    #allocation4 [shape = 's32[1]{0}', space=sflag, size = 0x4, scoped, tag = 'scoped memory for tpu_custom_call.1']
    #allocation5 [shape = 'u8[98304]{0}', space=vmem, size = 0x18000, scoped, tag = 'input window, operand 2, single buffered']
    #allocation6 [shape = 's32[1]{0}', space=sflag, size = 0x4, scoped, tag = 'scoped memory for tpu_custom_call.1']
    #allocation7 [shape = 'u8[4096]{0}', space=vmem, size = 0x1000, scoped, tag = 'input window, operand 3, single buffered']
    #allocation8 [shape = 'u8[4096]{0}', space=vmem, size = 0x1000, scoped, tag = 'output window, operand 0, single buffered']
    %9 = vsyncpa [#allocation3], 0
    %10 = vsyncpa [#allocation6], 0
    %11 = vsyncpa [#allocation4], 0
    // Predicated region
    $region2: #{tpu_custom_call.1} parent=1 // pred_check
      _
    $region3: #{tpu_custom_call.1} parent=1 // pred_check_branch
      %13 = sbr.rel (0) target = $region5
    $region4: #{tpu_custom_call.1} parent=1 // pred_region
      _
    $region5: #{tpu_custom_call.1} parent=1 // pred_fallthru
      _
    // Predicated region
    $region6: #{tpu_custom_call.1} parent=1 // pred_check
      _
    $region7: #{tpu_custom_call.1} parent=1 // pred_check_branch
      %15 = sbr.rel (0) target = $region9
    $region8: #{tpu_custom_call.1} parent=1 // pred_region
      %s17 = ssub.s32 131072, 131072
      %18 = vsyncadd [#allocation3], %s17
      %s19 = sshll.u32 [#allocation2], 4
      %s20 = int_to_ptr.vmem [resolvable:$true] %s19
      %25 = dma.hbm_to_vmem [thread:$0]  %s1, 131072, %s20, [#allocation3], 128, 128, 8
    $region9: #{tpu_custom_call.1} parent=1 // pred_fallthru
      _
    // Predicated region
    $region10: #{tpu_custom_call.1} parent=1 // pred_check
      _
    $region11: #{tpu_custom_call.1} parent=1 // pred_check_branch
      %27 = sbr.rel (0) target = $region13
    $region12: #{tpu_custom_call.1} parent=1 // pred_region
      %s29 = ssub.s32 3072, 3072
      %30 = vsyncadd [#allocation6], %s29
      %s31 = sshll.u32 [#allocation5], 4
      %s32 = int_to_ptr.vmem [resolvable:$true] %s31
      %37 = dma.hbm_to_vmem [thread:$0]  %s2, 3072, %s32, [#allocation6], 64, 64, 4
    $region13: #{tpu_custom_call.1} parent=1 // pred_fallthru
      _
    // Predicated region
    $region14: #{tpu_custom_call.1} parent=1 // pred_check
      _
    $region15: #{tpu_custom_call.1} parent=1 // pred_check_branch
      %39 = sbr.rel (0) target = $region17
    $region16: #{tpu_custom_call.1} parent=1 // pred_region
      %s41 = ssub.s32 128, 128
      %42 = vsyncadd [#allocation6], %s41
      %s44 = sshll.u32 [#allocation7], 4
      %s45 = int_to_ptr.vmem [resolvable:$true] %s44
      %47 = dma.hbm_to_vmem [thread:$0]  %s3, 128, %s45, [#allocation6]
    $region17: #{tpu_custom_call.1} parent=1 // pred_fallthru
      _
    // Predicated region
    $region18: #{tpu_custom_call.1} parent=1 // pred_check
      _
    $region19: #{tpu_custom_call.1} parent=1 // pred_check_branch
      %49 = sbr.rel (0) target = $region21
    $region20: #{tpu_custom_call.1} parent=1 // pred_region
      %50 = dma.done [#allocation3], 131072
    $region21: #{tpu_custom_call.1} parent=1 // pred_fallthru
      _
    // Predicated region
    $region22: #{tpu_custom_call.1} parent=1 // pred_check
      _
    $region23: #{tpu_custom_call.1} parent=1 // pred_check_branch
      %52 = sbr.rel (0) target = $region25
    $region24: #{tpu_custom_call.1} parent=1 // pred_region
      %53 = dma.done [#allocation6], 3072
    $region25: #{tpu_custom_call.1} parent=1 // pred_fallthru
      _
    // Predicated region
    $region26: #{tpu_custom_call.1} parent=1 // pred_check
      _
    $region27: #{tpu_custom_call.1} parent=1 // pred_check_branch
      %55 = sbr.rel (0) target = $region29
    $region28: #{tpu_custom_call.1} parent=1 // pred_region
      %56 = dma.done [#allocation6], 128
    $region29: #{tpu_custom_call.1} parent=1 // pred_fallthru
      _
    %v58 = vlaneseq
    %v59 = vand.u32 %v58, 127
    %v60 = vadd.s32 %v59, 128
    %v61 = vld [vmem:[%s0] sm:$0xff]
    %62 = vset.pattern.permute.xlu0 0
    %63 = vperm.xlu0 %62, %v61
    %v64 = vpop.permute.xlu0 %63
    %vm65 = vcmp.eq.s32.totalorder %v64, %v59
    %vm66 = vcmp.eq.s32.totalorder %v64, %v60
    %v67 = vsel %vm65, 1, 0
    %v68 = vsel %vm66, 1, 0
    %v69 = vcvt.s32.f32 %v67
    %v70 = vcvt.s32.f32 %v68
    %v71 = vpack.c.bf16 %v69, %v69
    %v72 = vpack.c.bf16 %v70, %v70
    %v73 = vld [vmem:[#allocation2] sm:$0xff]
    %v74 = vld [vmem:[#allocation2 + $0x8] sm:$0xff]
    %v75 = vld [vmem:[#allocation2 + $0x10] sm:$0xff]
    %v76 = vld [vmem:[#allocation2 + $0x18] sm:$0xff]
    %v77 = vld [vmem:[#allocation2 + $0x20] sm:$0xff]
    %v78 = vld [vmem:[#allocation2 + $0x28] sm:$0xff]
    %v79 = vld [vmem:[#allocation2 + $0x30] sm:$0xff]
    %v80 = vld [vmem:[#allocation2 + $0x38] sm:$0xff]
    %v81 = vld [vmem:[#allocation2 + $0x40] sm:$0xff]
    %v82 = vld [vmem:[#allocation2 + $0x48] sm:$0xff]
    %v83 = vld [vmem:[#allocation2 + $0x50] sm:$0xff]
    %v84 = vld [vmem:[#allocation2 + $0x58] sm:$0xff]
    %v85 = vld [vmem:[#allocation2 + $0x60] sm:$0xff]
    %v86 = vld [vmem:[#allocation2 + $0x68] sm:$0xff]
    %v87 = vld [vmem:[#allocation2 + $0x70] sm:$0xff]
    %v88 = vld [vmem:[#allocation2 + $0x78] sm:$0xff]
    %v89 = vld [vmem:[#allocation2 + $0x80] sm:$0xff]
    %v90 = vld [vmem:[#allocation2 + $0x88] sm:$0xff]
    %v91 = vld [vmem:[#allocation2 + $0x90] sm:$0xff]
    %v92 = vld [vmem:[#allocation2 + $0x98] sm:$0xff]
    %v93 = vld [vmem:[#allocation2 + $0xa0] sm:$0xff]
    %v94 = vld [vmem:[#allocation2 + $0xa8] sm:$0xff]
    %v95 = vld [vmem:[#allocation2 + $0xb0] sm:$0xff]
    %v96 = vld [vmem:[#allocation2 + $0xb8] sm:$0xff]
    %v97 = vld [vmem:[#allocation2 + $0xc0] sm:$0xff]
    %v98 = vld [vmem:[#allocation2 + $0xc8] sm:$0xff]
    %v99 = vld [vmem:[#allocation2 + $0xd0] sm:$0xff]
    %v100 = vld [vmem:[#allocation2 + $0xd8] sm:$0xff]
    %v101 = vld [vmem:[#allocation2 + $0xe0] sm:$0xff]
    %v102 = vld [vmem:[#allocation2 + $0xe8] sm:$0xff]
    %v103 = vld [vmem:[#allocation2 + $0xf0] sm:$0xff]
    %v104 = vld [vmem:[#allocation2 + $0xf8] sm:$0xff]
    %s105 = scalar_lea.vmem %s0, 8
    %v106 = vld [vmem:[%s105] sm:$0xff]
    %107 = vset.pattern.permute.xlu0 0
    %108 = vperm.xlu0 %107, %v106
    %v109 = vpop.permute.xlu0 %108
    %vm110 = vcmp.eq.s32.totalorder %v109, %v59
    %vm111 = vcmp.eq.s32.totalorder %v109, %v60
    %v112 = vsel %vm110, 1, 0
    %v113 = vsel %vm111, 1, 0
    %v114 = vcvt.s32.f32 %v112
    %v115 = vcvt.s32.f32 %v113
    %v116 = vpack.c.bf16 %v114, %v114
    %v117 = vpack.c.bf16 %v115, %v115
    %s118 = scalar_lea.vmem [#allocation2], 256
    %v119 = vld [vmem:[%s118] sm:$0xff]
    %v120 = vld [vmem:[%s118 + $0x8] sm:$0xff]
    %v121 = vld [vmem:[%s118 + $0x10] sm:$0xff]
    %v122 = vld [vmem:[%s118 + $0x18] sm:$0xff]
    %v123 = vld [vmem:[%s118 + $0x20] sm:$0xff]
    %v124 = vld [vmem:[%s118 + $0x28] sm:$0xff]
    %v125 = vld [vmem:[%s118 + $0x30] sm:$0xff]
    %v126 = vld [vmem:[%s118 + $0x38] sm:$0xff]
    %v127 = vld [vmem:[%s118 + $0x40] sm:$0xff]
    %v128 = vld [vmem:[%s118 + $0x48] sm:$0xff]
    %v129 = vld [vmem:[%s118 + $0x50] sm:$0xff]
    %v130 = vld [vmem:[%s118 + $0x58] sm:$0xff]
    %v131 = vld [vmem:[%s118 + $0x60] sm:$0xff]
    %v132 = vld [vmem:[%s118 + $0x68] sm:$0xff]
    %v133 = vld [vmem:[%s118 + $0x70] sm:$0xff]
    %v134 = vld [vmem:[%s118 + $0x78] sm:$0xff]
    %v135 = vld [vmem:[%s118 + $0x80] sm:$0xff]
    %v136 = vld [vmem:[%s118 + $0x88] sm:$0xff]
    %v137 = vld [vmem:[%s118 + $0x90] sm:$0xff]
    %v138 = vld [vmem:[%s118 + $0x98] sm:$0xff]
    %v139 = vld [vmem:[%s118 + $0xa0] sm:$0xff]
    %v140 = vld [vmem:[%s118 + $0xa8] sm:$0xff]
    %v141 = vld [vmem:[%s118 + $0xb0] sm:$0xff]
    %v142 = vld [vmem:[%s118 + $0xb8] sm:$0xff]
    %v143 = vld [vmem:[%s118 + $0xc0] sm:$0xff]
    %v144 = vld [vmem:[%s118 + $0xc8] sm:$0xff]
    %v145 = vld [vmem:[%s118 + $0xd0] sm:$0xff]
    %v146 = vld [vmem:[%s118 + $0xd8] sm:$0xff]
    %v147 = vld [vmem:[%s118 + $0xe0] sm:$0xff]
    %v148 = vld [vmem:[%s118 + $0xe8] sm:$0xff]
    %v149 = vld [vmem:[%s118 + $0xf0] sm:$0xff]
    %v150 = vld [vmem:[%s118 + $0xf8] sm:$0xff]
    %v183 = vunpack.c.l.b16 %v119
    %v184 = vunpack.c.h.b16 %v119
    %v185 = vunpack.c.l.b16 %v120
    %v186 = vunpack.c.h.b16 %v120
    %v187 = vunpack.c.l.b16 %v121
    %v188 = vunpack.c.h.b16 %v121
    %v189 = vunpack.c.l.b16 %v122
    %v190 = vunpack.c.h.b16 %v122
    %v191 = vunpack.c.l.b16 %v123
    %v192 = vunpack.c.h.b16 %v123
    %v193 = vunpack.c.l.b16 %v124
    %v194 = vunpack.c.h.b16 %v124
    %v195 = vunpack.c.l.b16 %v125
    %v196 = vunpack.c.h.b16 %v125
    %v197 = vunpack.c.l.b16 %v126
    %v198 = vunpack.c.h.b16 %v126
    %v199 = vunpack.c.l.b16 %v127
    %v200 = vunpack.c.h.b16 %v127
    %v201 = vunpack.c.l.b16 %v128
    %v202 = vunpack.c.h.b16 %v128
    %v203 = vunpack.c.l.b16 %v129
    %v204 = vunpack.c.h.b16 %v129
    %v205 = vunpack.c.l.b16 %v130
    %v206 = vunpack.c.h.b16 %v130
    %v207 = vunpack.c.l.b16 %v131
    %v208 = vunpack.c.h.b16 %v131
    %v209 = vunpack.c.l.b16 %v132
    %v210 = vunpack.c.h.b16 %v132
    %v211 = vunpack.c.l.b16 %v133
    %v212 = vunpack.c.h.b16 %v133
    %v213 = vunpack.c.l.b16 %v134
    %v214 = vunpack.c.h.b16 %v134
    %v215 = vunpack.c.l.b16 %v135
    %v216 = vunpack.c.h.b16 %v135
    %v217 = vunpack.c.l.b16 %v136
    %v218 = vunpack.c.h.b16 %v136
    %v219 = vunpack.c.l.b16 %v137
    %v220 = vunpack.c.h.b16 %v137
    %v221 = vunpack.c.l.b16 %v138
    %v222 = vunpack.c.h.b16 %v138
    %v223 = vunpack.c.l.b16 %v139
    %v224 = vunpack.c.h.b16 %v139
    %v225 = vunpack.c.l.b16 %v140
    %v226 = vunpack.c.h.b16 %v140
    %v227 = vunpack.c.l.b16 %v141
    %v228 = vunpack.c.h.b16 %v141
    %v229 = vunpack.c.l.b16 %v142
    %v230 = vunpack.c.h.b16 %v142
    %v231 = vunpack.c.l.b16 %v143
    %v232 = vunpack.c.h.b16 %v143
    %v233 = vunpack.c.l.b16 %v144
    %v234 = vunpack.c.h.b16 %v144
    %v235 = vunpack.c.l.b16 %v145
    %v236 = vunpack.c.h.b16 %v145
    %v237 = vunpack.c.l.b16 %v146
    %v238 = vunpack.c.h.b16 %v146
    %v239 = vunpack.c.l.b16 %v147
    %v240 = vunpack.c.h.b16 %v147
    %v241 = vunpack.c.l.b16 %v148
    %v242 = vunpack.c.h.b16 %v148
    %v243 = vunpack.c.l.b16 %v149
    %v244 = vunpack.c.h.b16 %v149
    %v245 = vunpack.c.l.b16 %v150
    %v246 = vunpack.c.h.b16 %v150
    %v247 = vpack.c.b16 %v185, %v183
    %v248 = vpack.c.b16 %v186, %v184
    %v249 = vpack.c.b16 %v189, %v187
    %v250 = vpack.c.b16 %v190, %v188
    %v251 = vpack.c.b16 %v193, %v191
    %v252 = vpack.c.b16 %v194, %v192
    %v253 = vpack.c.b16 %v197, %v195
    %v254 = vpack.c.b16 %v198, %v196
    %v255 = vpack.c.b16 %v201, %v199
    %v256 = vpack.c.b16 %v202, %v200
    %v257 = vpack.c.b16 %v205, %v203
    %v258 = vpack.c.b16 %v206, %v204
    %v259 = vpack.c.b16 %v209, %v207
    %v260 = vpack.c.b16 %v210, %v208
    %v261 = vpack.c.b16 %v213, %v211
    %v262 = vpack.c.b16 %v214, %v212
    %v263 = vpack.c.b16 %v217, %v215
    %v264 = vpack.c.b16 %v218, %v216
    %v265 = vpack.c.b16 %v221, %v219
    %v266 = vpack.c.b16 %v222, %v220
    %v267 = vpack.c.b16 %v225, %v223
    %v268 = vpack.c.b16 %v226, %v224
    %v269 = vpack.c.b16 %v229, %v227
    %v270 = vpack.c.b16 %v230, %v228
    %v271 = vpack.c.b16 %v233, %v231
    %v272 = vpack.c.b16 %v234, %v232
    %v273 = vpack.c.b16 %v237, %v235
    %v274 = vpack.c.b16 %v238, %v236
    %v275 = vpack.c.b16 %v241, %v239
    %v276 = vpack.c.b16 %v242, %v240
    %v277 = vpack.c.b16 %v245, %v243
    %v278 = vpack.c.b16 %v246, %v244
    %311 = vmatprep.subr.bf16.mxu0 %v248
    %312 = vmatpush1.bf16.msra.mxu0 %v247
    %313 = vmatprep.subr.bf16.mxu0 %v250
    %314 = vmatpush1.bf16.msra.mxu0 %v249
    %315 = vmatprep.subr.bf16.mxu0 %v252
    %316 = vmatpush1.bf16.msra.mxu0 %v251
    %317 = vmatprep.subr.bf16.mxu0 %v254
    %318 = vmatpush1.bf16.msra.mxu0 %v253
    %319 = vmatprep.subr.bf16.mxu0 %v256
    %320 = vmatpush1.bf16.msra.mxu0 %v255
    %321 = vmatprep.subr.bf16.mxu0 %v258
    %322 = vmatpush1.bf16.msra.mxu0 %v257
    %323 = vmatprep.subr.bf16.mxu0 %v260
    %324 = vmatpush1.bf16.msra.mxu0 %v259
    %325 = vmatprep.subr.bf16.mxu0 %v262
    %326 = vmatpush1.bf16.msra.mxu0 %v261
    %327 = vmatprep.subr.bf16.mxu0 %v264
    %328 = vmatpush1.bf16.msra.mxu0 %v263
    %329 = vmatprep.subr.bf16.mxu0 %v266
    %330 = vmatpush1.bf16.msra.mxu0 %v265
    %331 = vmatprep.subr.bf16.mxu0 %v268
    %332 = vmatpush1.bf16.msra.mxu0 %v267
    %333 = vmatprep.subr.bf16.mxu0 %v270
    %334 = vmatpush1.bf16.msra.mxu0 %v269
    %335 = vmatprep.subr.bf16.mxu0 %v272
    %336 = vmatpush1.bf16.msra.mxu0 %v271
    %337 = vmatprep.subr.bf16.mxu0 %v274
    %338 = vmatpush1.bf16.msra.mxu0 %v273
    %339 = vmatprep.subr.bf16.mxu0 %v276
    %340 = vmatpush1.bf16.msra.mxu0 %v275
    %341 = vmatprep.subr.bf16.mxu0 %v278
    %342 = vmatpush1.bf16.msra.mxu0 %v277
    %343 = vmatprep.mubr.bf16.mxu0 %v117
    %344 = vmatmul.mubr.bf16.gmra.mrb[0].mxu0 %v116
    %v345 = vpop.f32.mrb[0].mxu0
    %v346 = vadd.f32 0.0, %v345
    %v347 = vpop.f32.mrb[0].mxu0
    %v348 = vadd.f32 0.0, %v347
    %v349 = vpop.f32.mrb[0].mxu0
    %v350 = vpop.f32.mrb[0].mxu0
    %351 = vdwg.mxu0
    %v384 = vunpack.c.l.b16 %v73
    %v385 = vunpack.c.h.b16 %v73
    %v386 = vunpack.c.l.b16 %v74
    %v387 = vunpack.c.h.b16 %v74
    %v388 = vunpack.c.l.b16 %v75
    %v389 = vunpack.c.h.b16 %v75
    %v390 = vunpack.c.l.b16 %v76
    %v391 = vunpack.c.h.b16 %v76
    %v392 = vunpack.c.l.b16 %v77
    %v393 = vunpack.c.h.b16 %v77
    %v394 = vunpack.c.l.b16 %v78
    %v395 = vunpack.c.h.b16 %v78
    %v396 = vunpack.c.l.b16 %v79
    %v397 = vunpack.c.h.b16 %v79
    %v398 = vunpack.c.l.b16 %v80
    %v399 = vunpack.c.h.b16 %v80
    %v400 = vunpack.c.l.b16 %v81
    %v401 = vunpack.c.h.b16 %v81
    %v402 = vunpack.c.l.b16 %v82
    %v403 = vunpack.c.h.b16 %v82
    %v404 = vunpack.c.l.b16 %v83
    %v405 = vunpack.c.h.b16 %v83
    %v406 = vunpack.c.l.b16 %v84
    %v407 = vunpack.c.h.b16 %v84
    %v408 = vunpack.c.l.b16 %v85
    %v409 = vunpack.c.h.b16 %v85
    %v410 = vunpack.c.l.b16 %v86
    %v411 = vunpack.c.h.b16 %v86
    %v412 = vunpack.c.l.b16 %v87
    %v413 = vunpack.c.h.b16 %v87
    %v414 = vunpack.c.l.b16 %v88
    %v415 = vunpack.c.h.b16 %v88
    %v416 = vunpack.c.l.b16 %v89
    %v417 = vunpack.c.h.b16 %v89
    %v418 = vunpack.c.l.b16 %v90
    %v419 = vunpack.c.h.b16 %v90
    %v420 = vunpack.c.l.b16 %v91
    %v421 = vunpack.c.h.b16 %v91
    %v422 = vunpack.c.l.b16 %v92
    %v423 = vunpack.c.h.b16 %v92
    %v424 = vunpack.c.l.b16 %v93
    %v425 = vunpack.c.h.b16 %v93
    %v426 = vunpack.c.l.b16 %v94
    %v427 = vunpack.c.h.b16 %v94
    %v428 = vunpack.c.l.b16 %v95
    %v429 = vunpack.c.h.b16 %v95
    %v430 = vunpack.c.l.b16 %v96
    %v431 = vunpack.c.h.b16 %v96
    %v432 = vunpack.c.l.b16 %v97
    %v433 = vunpack.c.h.b16 %v97
    %v434 = vunpack.c.l.b16 %v98
    %v435 = vunpack.c.h.b16 %v98
    %v436 = vunpack.c.l.b16 %v99
    %v437 = vunpack.c.h.b16 %v99
    %v438 = vunpack.c.l.b16 %v100
    %v439 = vunpack.c.h.b16 %v100
    %v440 = vunpack.c.l.b16 %v101
    %v441 = vunpack.c.h.b16 %v101
    %v442 = vunpack.c.l.b16 %v102
    %v443 = vunpack.c.h.b16 %v102
    %v444 = vunpack.c.l.b16 %v103
    %v445 = vunpack.c.h.b16 %v103
    %v446 = vunpack.c.l.b16 %v104
    %v447 = vunpack.c.h.b16 %v104
    %v448 = vpack.c.b16 %v386, %v384
    %v449 = vpack.c.b16 %v387, %v385
    %v450 = vpack.c.b16 %v390, %v388
    %v451 = vpack.c.b16 %v391, %v389
    %v452 = vpack.c.b16 %v394, %v392
    %v453 = vpack.c.b16 %v395, %v393
    %v454 = vpack.c.b16 %v398, %v396
    %v455 = vpack.c.b16 %v399, %v397
    %v456 = vpack.c.b16 %v402, %v400
    %v457 = vpack.c.b16 %v403, %v401
    %v458 = vpack.c.b16 %v406, %v404
    %v459 = vpack.c.b16 %v407, %v405
    %v460 = vpack.c.b16 %v410, %v408
    %v461 = vpack.c.b16 %v411, %v409
    %v462 = vpack.c.b16 %v414, %v412
    %v463 = vpack.c.b16 %v415, %v413
    %v464 = vpack.c.b16 %v418, %v416
    %v465 = vpack.c.b16 %v419, %v417
    %v466 = vpack.c.b16 %v422, %v420
    %v467 = vpack.c.b16 %v423, %v421
    %v468 = vpack.c.b16 %v426, %v424
    %v469 = vpack.c.b16 %v427, %v425
    %v470 = vpack.c.b16 %v430, %v428
    %v471 = vpack.c.b16 %v431, %v429
    %v472 = vpack.c.b16 %v434, %v432
    %v473 = vpack.c.b16 %v435, %v433
    %v474 = vpack.c.b16 %v438, %v436
    %v475 = vpack.c.b16 %v439, %v437
    %v476 = vpack.c.b16 %v442, %v440
    %v477 = vpack.c.b16 %v443, %v441
    %v478 = vpack.c.b16 %v446, %v444
    %v479 = vpack.c.b16 %v447, %v445
    %512 = vmatprep.subr.bf16.mxu0 %v449
    %513 = vmatpush1.bf16.msra.mxu0 %v448
    %514 = vmatprep.subr.bf16.mxu0 %v451
    %515 = vmatpush1.bf16.msra.mxu0 %v450
    %516 = vmatprep.subr.bf16.mxu0 %v453
    %517 = vmatpush1.bf16.msra.mxu0 %v452
    %518 = vmatprep.subr.bf16.mxu0 %v455
    %519 = vmatpush1.bf16.msra.mxu0 %v454
    %520 = vmatprep.subr.bf16.mxu0 %v457
    %521 = vmatpush1.bf16.msra.mxu0 %v456
    %522 = vmatprep.subr.bf16.mxu0 %v459
    %523 = vmatpush1.bf16.msra.mxu0 %v458
    %524 = vmatprep.subr.bf16.mxu0 %v461
    %525 = vmatpush1.bf16.msra.mxu0 %v460
    %526 = vmatprep.subr.bf16.mxu0 %v463
    %527 = vmatpush1.bf16.msra.mxu0 %v462
    %528 = vmatprep.subr.bf16.mxu0 %v465
    %529 = vmatpush1.bf16.msra.mxu0 %v464
    %530 = vmatprep.subr.bf16.mxu0 %v467
    %531 = vmatpush1.bf16.msra.mxu0 %v466
    %532 = vmatprep.subr.bf16.mxu0 %v469
    %533 = vmatpush1.bf16.msra.mxu0 %v468
    %534 = vmatprep.subr.bf16.mxu0 %v471
    %535 = vmatpush1.bf16.msra.mxu0 %v470
    %536 = vmatprep.subr.bf16.mxu0 %v473
    %537 = vmatpush1.bf16.msra.mxu0 %v472
    %538 = vmatprep.subr.bf16.mxu0 %v475
    %539 = vmatpush1.bf16.msra.mxu0 %v474
    %540 = vmatprep.subr.bf16.mxu0 %v477
    %541 = vmatpush1.bf16.msra.mxu0 %v476
    %542 = vmatprep.subr.bf16.mxu0 %v479
    %543 = vmatpush1.bf16.msra.mxu0 %v478
    %544 = vmatprep.mubr.bf16.mxu0 %v72
    %545 = vmatmul.mubr.bf16.gmra.mrb[0].mxu0 %v71
    %v546 = vpop.f32.mrb[0].mxu0
    %v547 = vadd.f32 %v346, %v546
    %v548 = vpop.f32.mrb[0].mxu0
    %v549 = vadd.f32 %v348, %v548
    %v550 = vpop.f32.mrb[0].mxu0
    %v551 = vpop.f32.mrb[0].mxu0
    %552 = vdwg.mxu0
    %s553 = scalar_lea.vmem %s0, 16
    %v554 = vld [vmem:[%s553] sm:$0xff]
    %555 = vset.pattern.permute.xlu0 0
    %556 = vperm.xlu0 %555, %v554
    %v557 = vpop.permute.xlu0 %556
    %vm558 = vcmp.eq.s32.totalorder %v557, %v59
    %vm559 = vcmp.eq.s32.totalorder %v557, %v60
    %v560 = vsel %vm558, 1, 0
    %v561 = vsel %vm559, 1, 0
    %v562 = vcvt.s32.f32 %v560
    %v563 = vcvt.s32.f32 %v561
    %v564 = vpack.c.bf16 %v562, %v562
    %v565 = vpack.c.bf16 %v563, %v563
    %s566 = scalar_lea.vmem [#allocation2], 512
    %v567 = vld [vmem:[%s566] sm:$0xff]
    %v568 = vld [vmem:[%s566 + $0x8] sm:$0xff]
    %v569 = vld [vmem:[%s566 + $0x10] sm:$0xff]
    %v570 = vld [vmem:[%s566 + $0x18] sm:$0xff]
    %v571 = vld [vmem:[%s566 + $0x20] sm:$0xff]
    %v572 = vld [vmem:[%s566 + $0x28] sm:$0xff]
    %v573 = vld [vmem:[%s566 + $0x30] sm:$0xff]
    %v574 = vld [vmem:[%s566 + $0x38] sm:$0xff]
    %v575 = vld [vmem:[%s566 + $0x40] sm:$0xff]
    %v576 = vld [vmem:[%s566 + $0x48] sm:$0xff]
    %v577 = vld [vmem:[%s566 + $0x50] sm:$0xff]
    %v578 = vld [vmem:[%s566 + $0x58] sm:$0xff]
    %v579 = vld [vmem:[%s566 + $0x60] sm:$0xff]
    %v580 = vld [vmem:[%s566 + $0x68] sm:$0xff]
    %v581 = vld [vmem:[%s566 + $0x70] sm:$0xff]
    %v582 = vld [vmem:[%s566 + $0x78] sm:$0xff]
    %v583 = vld [vmem:[%s566 + $0x80] sm:$0xff]
    %v584 = vld [vmem:[%s566 + $0x88] sm:$0xff]
    %v585 = vld [vmem:[%s566 + $0x90] sm:$0xff]
    %v586 = vld [vmem:[%s566 + $0x98] sm:$0xff]
    %v587 = vld [vmem:[%s566 + $0xa0] sm:$0xff]
    %v588 = vld [vmem:[%s566 + $0xa8] sm:$0xff]
    %v589 = vld [vmem:[%s566 + $0xb0] sm:$0xff]
    %v590 = vld [vmem:[%s566 + $0xb8] sm:$0xff]
    %v591 = vld [vmem:[%s566 + $0xc0] sm:$0xff]
    %v592 = vld [vmem:[%s566 + $0xc8] sm:$0xff]
    %v593 = vld [vmem:[%s566 + $0xd0] sm:$0xff]
    %v594 = vld [vmem:[%s566 + $0xd8] sm:$0xff]
    %v595 = vld [vmem:[%s566 + $0xe0] sm:$0xff]
    %v596 = vld [vmem:[%s566 + $0xe8] sm:$0xff]
    %v597 = vld [vmem:[%s566 + $0xf0] sm:$0xff]
    %v598 = vld [vmem:[%s566 + $0xf8] sm:$0xff]
    %v631 = vunpack.c.l.b16 %v567
    %v632 = vunpack.c.h.b16 %v567
    %v633 = vunpack.c.l.b16 %v568
    %v634 = vunpack.c.h.b16 %v568
    %v635 = vunpack.c.l.b16 %v569
    %v636 = vunpack.c.h.b16 %v569
    %v637 = vunpack.c.l.b16 %v570
    %v638 = vunpack.c.h.b16 %v570
    %v639 = vunpack.c.l.b16 %v571
    %v640 = vunpack.c.h.b16 %v571
    %v641 = vunpack.c.l.b16 %v572
    %v642 = vunpack.c.h.b16 %v572
    %v643 = vunpack.c.l.b16 %v573
    %v644 = vunpack.c.h.b16 %v573
    %v645 = vunpack.c.l.b16 %v574
    %v646 = vunpack.c.h.b16 %v574
    %v647 = vunpack.c.l.b16 %v575
    %v648 = vunpack.c.h.b16 %v575
    %v649 = vunpack.c.l.b16 %v576
    %v650 = vunpack.c.h.b16 %v576
    %v651 = vunpack.c.l.b16 %v577
    %v652 = vunpack.c.h.b16 %v577
    %v653 = vunpack.c.l.b16 %v578
    %v654 = vunpack.c.h.b16 %v578
    %v655 = vunpack.c.l.b16 %v579
    %v656 = vunpack.c.h.b16 %v579
    %v657 = vunpack.c.l.b16 %v580
    %v658 = vunpack.c.h.b16 %v580
    %v659 = vunpack.c.l.b16 %v581
    %v660 = vunpack.c.h.b16 %v581
    %v661 = vunpack.c.l.b16 %v582
    %v662 = vunpack.c.h.b16 %v582
    %v663 = vunpack.c.l.b16 %v583
    %v664 = vunpack.c.h.b16 %v583
    %v665 = vunpack.c.l.b16 %v584
    %v666 = vunpack.c.h.b16 %v584
    %v667 = vunpack.c.l.b16 %v585
    %v668 = vunpack.c.h.b16 %v585
    %v669 = vunpack.c.l.b16 %v586
    %v670 = vunpack.c.h.b16 %v586
    %v671 = vunpack.c.l.b16 %v587
    %v672 = vunpack.c.h.b16 %v587
    %v673 = vunpack.c.l.b16 %v588
    %v674 = vunpack.c.h.b16 %v588
    %v675 = vunpack.c.l.b16 %v589
    %v676 = vunpack.c.h.b16 %v589
    %v677 = vunpack.c.l.b16 %v590
    %v678 = vunpack.c.h.b16 %v590
    %v679 = vunpack.c.l.b16 %v591
    %v680 = vunpack.c.h.b16 %v591
    %v681 = vunpack.c.l.b16 %v592
    %v682 = vunpack.c.h.b16 %v592
    %v683 = vunpack.c.l.b16 %v593
    %v684 = vunpack.c.h.b16 %v593
    %v685 = vunpack.c.l.b16 %v594
    %v686 = vunpack.c.h.b16 %v594
    %v687 = vunpack.c.l.b16 %v595
    %v688 = vunpack.c.h.b16 %v595
    %v689 = vunpack.c.l.b16 %v596
    %v690 = vunpack.c.h.b16 %v596
    %v691 = vunpack.c.l.b16 %v597
    %v692 = vunpack.c.h.b16 %v597
    %v693 = vunpack.c.l.b16 %v598
    %v694 = vunpack.c.h.b16 %v598
    %v695 = vpack.c.b16 %v633, %v631
    %v696 = vpack.c.b16 %v634, %v632
    %v697 = vpack.c.b16 %v637, %v635
    %v698 = vpack.c.b16 %v638, %v636
    %v699 = vpack.c.b16 %v641, %v639
    %v700 = vpack.c.b16 %v642, %v640
    %v701 = vpack.c.b16 %v645, %v643
    %v702 = vpack.c.b16 %v646, %v644
    %v703 = vpack.c.b16 %v649, %v647
    %v704 = vpack.c.b16 %v650, %v648
    %v705 = vpack.c.b16 %v653, %v651
    %v706 = vpack.c.b16 %v654, %v652
    %v707 = vpack.c.b16 %v657, %v655
    %v708 = vpack.c.b16 %v658, %v656
    %v709 = vpack.c.b16 %v661, %v659
    %v710 = vpack.c.b16 %v662, %v660
    %v711 = vpack.c.b16 %v665, %v663
    %v712 = vpack.c.b16 %v666, %v664
    %v713 = vpack.c.b16 %v669, %v667
    %v714 = vpack.c.b16 %v670, %v668
    %v715 = vpack.c.b16 %v673, %v671
    %v716 = vpack.c.b16 %v674, %v672
    %v717 = vpack.c.b16 %v677, %v675
    %v718 = vpack.c.b16 %v678, %v676
    %v719 = vpack.c.b16 %v681, %v679
    %v720 = vpack.c.b16 %v682, %v680
    %v721 = vpack.c.b16 %v685, %v683
    %v722 = vpack.c.b16 %v686, %v684
    %v723 = vpack.c.b16 %v689, %v687
    %v724 = vpack.c.b16 %v690, %v688
    %v725 = vpack.c.b16 %v693, %v691
    %v726 = vpack.c.b16 %v694, %v692
    %759 = vmatprep.subr.bf16.mxu0 %v696
    %760 = vmatpush1.bf16.msra.mxu0 %v695
    %761 = vmatprep.subr.bf16.mxu0 %v698
    %762 = vmatpush1.bf16.msra.mxu0 %v697
    %763 = vmatprep.subr.bf16.mxu0 %v700
    %764 = vmatpush1.bf16.msra.mxu0 %v699
    %765 = vmatprep.subr.bf16.mxu0 %v702
    %766 = vmatpush1.bf16.msra.mxu0 %v701
    %767 = vmatprep.subr.bf16.mxu0 %v704
    %768 = vmatpush1.bf16.msra.mxu0 %v703
    %769 = vmatprep.subr.bf16.mxu0 %v706
    %770 = vmatpush1.bf16.msra.mxu0 %v705
    %771 = vmatprep.subr.bf16.mxu0 %v708
    %772 = vmatpush1.bf16.msra.mxu0 %v707
    %773 = vmatprep.subr.bf16.mxu0 %v710
    %774 = vmatpush1.bf16.msra.mxu0 %v709
    %775 = vmatprep.subr.bf16.mxu0 %v712
    %776 = vmatpush1.bf16.msra.mxu0 %v711
    %777 = vmatprep.subr.bf16.mxu0 %v714
    %778 = vmatpush1.bf16.msra.mxu0 %v713
    %779 = vmatprep.subr.bf16.mxu0 %v716
    %780 = vmatpush1.bf16.msra.mxu0 %v715
    %781 = vmatprep.subr.bf16.mxu0 %v718
    %782 = vmatpush1.bf16.msra.mxu0 %v717
    %783 = vmatprep.subr.bf16.mxu0 %v720
    %784 = vmatpush1.bf16.msra.mxu0 %v719
    %785 = vmatprep.subr.bf16.mxu0 %v722
    %786 = vmatpush1.bf16.msra.mxu0 %v721
    %787 = vmatprep.subr.bf16.mxu0 %v724
    %788 = vmatpush1.bf16.msra.mxu0 %v723
    %789 = vmatprep.subr.bf16.mxu0 %v726
    %790 = vmatpush1.bf16.msra.mxu0 %v725
    %791 = vmatprep.mubr.bf16.mxu0 %v565
    %792 = vmatmul.mubr.bf16.gmra.mrb[0].mxu0 %v564
    %v793 = vpop.f32.mrb[0].mxu0
    %v794 = vadd.f32 0.0, %v793
    %v795 = vpop.f32.mrb[0].mxu0
    %v796 = vadd.f32 0.0, %v795
    %v797 = vpop.f32.mrb[0].mxu0
    %v798 = vpop.f32.mrb[0].mxu0
    %799 = vdwg.mxu0
    %v800 = vadd.f32 %v547, %v794
    %v801 = vadd.f32 %v549, %v796
    %s802 = scalar_lea.vmem %s0, 24
    %v803 = vld [vmem:[%s802] sm:$0xff]
    %804 = vset.pattern.permute.xlu0 0
    %805 = vperm.xlu0 %804, %v803
    %v806 = vpop.permute.xlu0 %805
    %vm807 = vcmp.eq.s32.totalorder %v806, %v59
    %vm808 = vcmp.eq.s32.totalorder %v806, %v60
    %v809 = vsel %vm807, 1, 0
    %v810 = vsel %vm808, 1, 0
    %v811 = vcvt.s32.f32 %v809
    %v812 = vcvt.s32.f32 %v810
    %v813 = vpack.c.bf16 %v811, %v811
    %v814 = vpack.c.bf16 %v812, %v812
    %s815 = scalar_lea.vmem [#allocation2], 768
    %v816 = vld [vmem:[%s815] sm:$0xff]
    %v817 = vld [vmem:[%s815 + $0x8] sm:$0xff]
    %v818 = vld [vmem:[%s815 + $0x10] sm:$0xff]
    %v819 = vld [vmem:[%s815 + $0x18] sm:$0xff]
    %v820 = vld [vmem:[%s815 + $0x20] sm:$0xff]
    %v821 = vld [vmem:[%s815 + $0x28] sm:$0xff]
    %v822 = vld [vmem:[%s815 + $0x30] sm:$0xff]
    %v823 = vld [vmem:[%s815 + $0x38] sm:$0xff]
    %v824 = vld [vmem:[%s815 + $0x40] sm:$0xff]
    %v825 = vld [vmem:[%s815 + $0x48] sm:$0xff]
    %v826 = vld [vmem:[%s815 + $0x50] sm:$0xff]
    %v827 = vld [vmem:[%s815 + $0x58] sm:$0xff]
    %v828 = vld [vmem:[%s815 + $0x60] sm:$0xff]
    %v829 = vld [vmem:[%s815 + $0x68] sm:$0xff]
    %v830 = vld [vmem:[%s815 + $0x70] sm:$0xff]
    %v831 = vld [vmem:[%s815 + $0x78] sm:$0xff]
    %v832 = vld [vmem:[%s815 + $0x80] sm:$0xff]
    %v833 = vld [vmem:[%s815 + $0x88] sm:$0xff]
    %v834 = vld [vmem:[%s815 + $0x90] sm:$0xff]
    %v835 = vld [vmem:[%s815 + $0x98] sm:$0xff]
    %v836 = vld [vmem:[%s815 + $0xa0] sm:$0xff]
    %v837 = vld [vmem:[%s815 + $0xa8] sm:$0xff]
    %v838 = vld [vmem:[%s815 + $0xb0] sm:$0xff]
    %v839 = vld [vmem:[%s815 + $0xb8] sm:$0xff]
    %v840 = vld [vmem:[%s815 + $0xc0] sm:$0xff]
    %v841 = vld [vmem:[%s815 + $0xc8] sm:$0xff]
    %v842 = vld [vmem:[%s815 + $0xd0] sm:$0xff]
    %v843 = vld [vmem:[%s815 + $0xd8] sm:$0xff]
    %v844 = vld [vmem:[%s815 + $0xe0] sm:$0xff]
    %v845 = vld [vmem:[%s815 + $0xe8] sm:$0xff]
    %v846 = vld [vmem:[%s815 + $0xf0] sm:$0xff]
    %v847 = vld [vmem:[%s815 + $0xf8] sm:$0xff]
    %v880 = vunpack.c.l.b16 %v816
    %v881 = vunpack.c.h.b16 %v816
    %v882 = vunpack.c.l.b16 %v817
    %v883 = vunpack.c.h.b16 %v817
    %v884 = vunpack.c.l.b16 %v818
    %v885 = vunpack.c.h.b16 %v818
    %v886 = vunpack.c.l.b16 %v819
    %v887 = vunpack.c.h.b16 %v819
    %v888 = vunpack.c.l.b16 %v820
    %v889 = vunpack.c.h.b16 %v820
    %v890 = vunpack.c.l.b16 %v821
    %v891 = vunpack.c.h.b16 %v821
    %v892 = vunpack.c.l.b16 %v822
    %v893 = vunpack.c.h.b16 %v822
    %v894 = vunpack.c.l.b16 %v823
    %v895 = vunpack.c.h.b16 %v823
    %v896 = vunpack.c.l.b16 %v824
    %v897 = vunpack.c.h.b16 %v824
    %v898 = vunpack.c.l.b16 %v825
    %v899 = vunpack.c.h.b16 %v825
    %v900 = vunpack.c.l.b16 %v826
    %v901 = vunpack.c.h.b16 %v826
    %v902 = vunpack.c.l.b16 %v827
    %v903 = vunpack.c.h.b16 %v827
    %v904 = vunpack.c.l.b16 %v828
    %v905 = vunpack.c.h.b16 %v828
    %v906 = vunpack.c.l.b16 %v829
    %v907 = vunpack.c.h.b16 %v829
    %v908 = vunpack.c.l.b16 %v830
    %v909 = vunpack.c.h.b16 %v830
    %v910 = vunpack.c.l.b16 %v831
    %v911 = vunpack.c.h.b16 %v831
    %v912 = vunpack.c.l.b16 %v832
    %v913 = vunpack.c.h.b16 %v832
    %v914 = vunpack.c.l.b16 %v833
    %v915 = vunpack.c.h.b16 %v833
    %v916 = vunpack.c.l.b16 %v834
    %v917 = vunpack.c.h.b16 %v834
    %v918 = vunpack.c.l.b16 %v835
    %v919 = vunpack.c.h.b16 %v835
    %v920 = vunpack.c.l.b16 %v836
    %v921 = vunpack.c.h.b16 %v836
    %v922 = vunpack.c.l.b16 %v837
    %v923 = vunpack.c.h.b16 %v837
    %v924 = vunpack.c.l.b16 %v838
    %v925 = vunpack.c.h.b16 %v838
    %v926 = vunpack.c.l.b16 %v839
    %v927 = vunpack.c.h.b16 %v839
    %v928 = vunpack.c.l.b16 %v840
    %v929 = vunpack.c.h.b16 %v840
    %v930 = vunpack.c.l.b16 %v841
    %v931 = vunpack.c.h.b16 %v841
    %v932 = vunpack.c.l.b16 %v842
    %v933 = vunpack.c.h.b16 %v842
    %v934 = vunpack.c.l.b16 %v843
    %v935 = vunpack.c.h.b16 %v843
    %v936 = vunpack.c.l.b16 %v844
    %v937 = vunpack.c.h.b16 %v844
    %v938 = vunpack.c.l.b16 %v845
    %v939 = vunpack.c.h.b16 %v845
    %v940 = vunpack.c.l.b16 %v846
    %v941 = vunpack.c.h.b16 %v846
    %v942 = vunpack.c.l.b16 %v847
    %v943 = vunpack.c.h.b16 %v847
    %v944 = vpack.c.b16 %v882, %v880
    %v945 = vpack.c.b16 %v883, %v881
    %v946 = vpack.c.b16 %v886, %v884
    %v947 = vpack.c.b16 %v887, %v885
    %v948 = vpack.c.b16 %v890, %v888
    %v949 = vpack.c.b16 %v891, %v889
    %v950 = vpack.c.b16 %v894, %v892
    %v951 = vpack.c.b16 %v895, %v893
    %v952 = vpack.c.b16 %v898, %v896
    %v953 = vpack.c.b16 %v899, %v897
    %v954 = vpack.c.b16 %v902, %v900
    %v955 = vpack.c.b16 %v903, %v901
    %v956 = vpack.c.b16 %v906, %v904
    %v957 = vpack.c.b16 %v907, %v905
    %v958 = vpack.c.b16 %v910, %v908
    %v959 = vpack.c.b16 %v911, %v909
    %v960 = vpack.c.b16 %v914, %v912
    %v961 = vpack.c.b16 %v915, %v913
    %v962 = vpack.c.b16 %v918, %v916
    %v963 = vpack.c.b16 %v919, %v917
    %v964 = vpack.c.b16 %v922, %v920
    %v965 = vpack.c.b16 %v923, %v921
    %v966 = vpack.c.b16 %v926, %v924
    %v967 = vpack.c.b16 %v927, %v925
    %v968 = vpack.c.b16 %v930, %v928
    %v969 = vpack.c.b16 %v931, %v929
    %v970 = vpack.c.b16 %v934, %v932
    %v971 = vpack.c.b16 %v935, %v933
    %v972 = vpack.c.b16 %v938, %v936
    %v973 = vpack.c.b16 %v939, %v937
    %v974 = vpack.c.b16 %v942, %v940
    %v975 = vpack.c.b16 %v943, %v941
    %1008 = vmatprep.subr.bf16.mxu0 %v945
    %1009 = vmatpush1.bf16.msra.mxu0 %v944
    %1010 = vmatprep.subr.bf16.mxu0 %v947
    %1011 = vmatpush1.bf16.msra.mxu0 %v946
    %1012 = vmatprep.subr.bf16.mxu0 %v949
    %1013 = vmatpush1.bf16.msra.mxu0 %v948
    %1014 = vmatprep.subr.bf16.mxu0 %v951
    %1015 = vmatpush1.bf16.msra.mxu0 %v950
    %1016 = vmatprep.subr.bf16.mxu0 %v953
    %1017 = vmatpush1.bf16.msra.mxu0 %v952
    %1018 = vmatprep.subr.bf16.mxu0 %v955
    %1019 = vmatpush1.bf16.msra.mxu0 %v954
    %1020 = vmatprep.subr.bf16.mxu0 %v957
    %1021 = vmatpush1.bf16.msra.mxu0 %v956
    %1022 = vmatprep.subr.bf16.mxu0 %v959
    %1023 = vmatpush1.bf16.msra.mxu0 %v958
    %1024 = vmatprep.subr.bf16.mxu0 %v961
    %1025 = vmatpush1.bf16.msra.mxu0 %v960
    %1026 = vmatprep.subr.bf16.mxu0 %v963
    %1027 = vmatpush1.bf16.msra.mxu0 %v962
    %1028 = vmatprep.subr.bf16.mxu0 %v965
    %1029 = vmatpush1.bf16.msra.mxu0 %v964
    %1030 = vmatprep.subr.bf16.mxu0 %v967
    %1031 = vmatpush1.bf16.msra.mxu0 %v966
    %1032 = vmatprep.subr.bf16.mxu0 %v969
    %1033 = vmatpush1.bf16.msra.mxu0 %v968
    %1034 = vmatprep.subr.bf16.mxu0 %v971
    %1035 = vmatpush1.bf16.msra.mxu0 %v970
    %1036 = vmatprep.subr.bf16.mxu0 %v973
    %1037 = vmatpush1.bf16.msra.mxu0 %v972
    %1038 = vmatprep.subr.bf16.mxu0 %v975
    %1039 = vmatpush1.bf16.msra.mxu0 %v974
    %1040 = vmatprep.mubr.bf16.mxu0 %v814
    %1041 = vmatmul.mubr.bf16.gmra.mrb[0].mxu0 %v813
    %v1042 = vpop.f32.mrb[0].mxu0
    %v1043 = vadd.f32 0.0, %v1042
    %v1044 = vpop.f32.mrb[0].mxu0
    %v1045 = vadd.f32 0.0, %v1044
    %v1046 = vpop.f32.mrb[0].mxu0
    %v1047 = vpop.f32.mrb[0].mxu0
    %1048 = vdwg.mxu0
    %v1049 = vadd.f32 %v800, %v1043
    %v1050 = vadd.f32 %v801, %v1045
    %s1051 = scalar_lea.vmem %s0, 32
    %v1052 = vld [vmem:[%s1051] sm:$0xff]
    %1053 = vset.pattern.permute.xlu0 0
    %1054 = vperm.xlu0 %1053, %v1052
    %v1055 = vpop.permute.xlu0 %1054
    %vm1056 = vcmp.eq.s32.totalorder %v1055, %v59
    %vm1057 = vcmp.eq.s32.totalorder %v1055, %v60
    %v1058 = vsel %vm1056, 1, 0
    %v1059 = vsel %vm1057, 1, 0
    %v1060 = vcvt.s32.f32 %v1058
    %v1061 = vcvt.s32.f32 %v1059
    %v1062 = vpack.c.bf16 %v1060, %v1060
    %v1063 = vpack.c.bf16 %v1061, %v1061
    %s1064 = scalar_lea.vmem [#allocation2], 1024
    %v1065 = vld [vmem:[%s1064] sm:$0xff]
    %v1066 = vld [vmem:[%s1064 + $0x8] sm:$0xff]
    %v1067 = vld [vmem:[%s1064 + $0x10] sm:$0xff]
    %v1068 = vld [vmem:[%s1064 + $0x18] sm:$0xff]
    %v1069 = vld [vmem:[%s1064 + $0x20] sm:$0xff]
    %v1070 = vld [vmem:[%s1064 + $0x28] sm:$0xff]
    %v1071 = vld [vmem:[%s1064 + $0x30] sm:$0xff]
    %v1072 = vld [vmem:[%s1064 + $0x38] sm:$0xff]
    %v1073 = vld [vmem:[%s1064 + $0x40] sm:$0xff]
    %v1074 = vld [vmem:[%s1064 + $0x48] sm:$0xff]
    %v1075 = vld [vmem:[%s1064 + $0x50] sm:$0xff]
    %v1076 = vld [vmem:[%s1064 + $0x58] sm:$0xff]
    %v1077 = vld [vmem:[%s1064 + $0x60] sm:$0xff]
    %v1078 = vld [vmem:[%s1064 + $0x68] sm:$0xff]
    %v1079 = vld [vmem:[%s1064 + $0x70] sm:$0xff]
    %v1080 = vld [vmem:[%s1064 + $0x78] sm:$0xff]
    %v1081 = vld [vmem:[%s1064 + $0x80] sm:$0xff]
    %v1082 = vld [vmem:[%s1064 + $0x88] sm:$0xff]
    %v1083 = vld [vmem:[%s1064 + $0x90] sm:$0xff]
    %v1084 = vld [vmem:[%s1064 + $0x98] sm:$0xff]
    %v1085 = vld [vmem:[%s1064 + $0xa0] sm:$0xff]
    %v1086 = vld [vmem:[%s1064 + $0xa8] sm:$0xff]
    %v1087 = vld [vmem:[%s1064 + $0xb0] sm:$0xff]
    %v1088 = vld [vmem:[%s1064 + $0xb8] sm:$0xff]
    %v1089 = vld [vmem:[%s1064 + $0xc0] sm:$0xff]
    %v1090 = vld [vmem:[%s1064 + $0xc8] sm:$0xff]
    %v1091 = vld [vmem:[%s1064 + $0xd0] sm:$0xff]
    %v1092 = vld [vmem:[%s1064 + $0xd8] sm:$0xff]
    %v1093 = vld [vmem:[%s1064 + $0xe0] sm:$0xff]
    %v1094 = vld [vmem:[%s1064 + $0xe8] sm:$0xff]
    %v1095 = vld [vmem:[%s1064 + $0xf0] sm:$0xff]
    %v1096 = vld [vmem:[%s1064 + $0xf8] sm:$0xff]
    %v1129 = vunpack.c.l.b16 %v1065
    %v1130 = vunpack.c.h.b16 %v1065
    %v1131 = vunpack.c.l.b16 %v1066
    %v1132 = vunpack.c.h.b16 %v1066
    %v1133 = vunpack.c.l.b16 %v1067
    %v1134 = vunpack.c.h.b16 %v1067
    %v1135 = vunpack.c.l.b16 %v1068
    %v1136 = vunpack.c.h.b16 %v1068
    %v1137 = vunpack.c.l.b16 %v1069
    %v1138 = vunpack.c.h.b16 %v1069
    %v1139 = vunpack.c.l.b16 %v1070
    %v1140 = vunpack.c.h.b16 %v1070
    %v1141 = vunpack.c.l.b16 %v1071
    %v1142 = vunpack.c.h.b16 %v1071
    %v1143 = vunpack.c.l.b16 %v1072
    %v1144 = vunpack.c.h.b16 %v1072
    %v1145 = vunpack.c.l.b16 %v1073
    %v1146 = vunpack.c.h.b16 %v1073
    %v1147 = vunpack.c.l.b16 %v1074
    %v1148 = vunpack.c.h.b16 %v1074
    %v1149 = vunpack.c.l.b16 %v1075
    %v1150 = vunpack.c.h.b16 %v1075
    %v1151 = vunpack.c.l.b16 %v1076
    %v1152 = vunpack.c.h.b16 %v1076
    %v1153 = vunpack.c.l.b16 %v1077
    %v1154 = vunpack.c.h.b16 %v1077
    %v1155 = vunpack.c.l.b16 %v1078
    %v1156 = vunpack.c.h.b16 %v1078
    %v1157 = vunpack.c.l.b16 %v1079
    %v1158 = vunpack.c.h.b16 %v1079
    %v1159 = vunpack.c.l.b16 %v1080
    %v1160 = vunpack.c.h.b16 %v1080
    %v1161 = vunpack.c.l.b16 %v1081
    %v1162 = vunpack.c.h.b16 %v1081
    %v1163 = vunpack.c.l.b16 %v1082
    %v1164 = vunpack.c.h.b16 %v1082
    %v1165 = vunpack.c.l.b16 %v1083
    %v1166 = vunpack.c.h.b16 %v1083
    %v1167 = vunpack.c.l.b16 %v1084
    %v1168 = vunpack.c.h.b16 %v1084
    %v1169 = vunpack.c.l.b16 %v1085
    %v1170 = vunpack.c.h.b16 %v1085
    %v1171 = vunpack.c.l.b16 %v1086
    %v1172 = vunpack.c.h.b16 %v1086
    %v1173 = vunpack.c.l.b16 %v1087
    %v1174 = vunpack.c.h.b16 %v1087
    %v1175 = vunpack.c.l.b16 %v1088
    %v1176 = vunpack.c.h.b16 %v1088
    %v1177 = vunpack.c.l.b16 %v1089
    %v1178 = vunpack.c.h.b16 %v1089
    %v1179 = vunpack.c.l.b16 %v1090
    %v1180 = vunpack.c.h.b16 %v1090
    %v1181 = vunpack.c.l.b16 %v1091
    %v1182 = vunpack.c.h.b16 %v1091
    %v1183 = vunpack.c.l.b16 %v1092
    %v1184 = vunpack.c.h.b16 %v1092
    %v1185 = vunpack.c.l.b16 %v1093
    %v1186 = vunpack.c.h.b16 %v1093
    %v1187 = vunpack.c.l.b16 %v1094
    %v1188 = vunpack.c.h.b16 %v1094
    %v1189 = vunpack.c.l.b16 %v1095
    %v1190 = vunpack.c.h.b16 %v1095
    %v1191 = vunpack.c.l.b16 %v1096
    %v1192 = vunpack.c.h.b16 %v1096
    %v1193 = vpack.c.b16 %v1131, %v1129
    %v1194 = vpack.c.b16 %v1132, %v1130
    %v1195 = vpack.c.b16 %v1135, %v1133
    %v1196 = vpack.c.b16 %v1136, %v1134
    %v1197 = vpack.c.b16 %v1139, %v1137
    %v1198 = vpack.c.b16 %v1140, %v1138
    %v1199 = vpack.c.b16 %v1143, %v1141
    %v1200 = vpack.c.b16 %v1144, %v1142
    %v1201 = vpack.c.b16 %v1147, %v1145
    %v1202 = vpack.c.b16 %v1148, %v1146
    %v1203 = vpack.c.b16 %v1151, %v1149
    %v1204 = vpack.c.b16 %v1152, %v1150
    %v1205 = vpack.c.b16 %v1155, %v1153
    %v1206 = vpack.c.b16 %v1156, %v1154
    %v1207 = vpack.c.b16 %v1159, %v1157
    %v1208 = vpack.c.b16 %v1160, %v1158
    %v1209 = vpack.c.b16 %v1163, %v1161
    %v1210 = vpack.c.b16 %v1164, %v1162
    %v1211 = vpack.c.b16 %v1167, %v1165
    %v1212 = vpack.c.b16 %v1168, %v1166
    %v1213 = vpack.c.b16 %v1171, %v1169
    %v1214 = vpack.c.b16 %v1172, %v1170
    %v1215 = vpack.c.b16 %v1175, %v1173
    %v1216 = vpack.c.b16 %v1176, %v1174
    %v1217 = vpack.c.b16 %v1179, %v1177
    %v1218 = vpack.c.b16 %v1180, %v1178
    %v1219 = vpack.c.b16 %v1183, %v1181
    %v1220 = vpack.c.b16 %v1184, %v1182
    %v1221 = vpack.c.b16 %v1187, %v1185
    %v1222 = vpack.c.b16 %v1188, %v1186
    %v1223 = vpack.c.b16 %v1191, %v1189
    %v1224 = vpack.c.b16 %v1192, %v1190
    %1257 = vmatprep.subr.bf16.mxu0 %v1194
    %1258 = vmatpush1.bf16.msra.mxu0 %v1193
    %1259 = vmatprep.subr.bf16.mxu0 %v1196
    %1260 = vmatpush1.bf16.msra.mxu0 %v1195
    %1261 = vmatprep.subr.bf16.mxu0 %v1198
    %1262 = vmatpush1.bf16.msra.mxu0 %v1197
    %1263 = vmatprep.subr.bf16.mxu0 %v1200
    %1264 = vmatpush1.bf16.msra.mxu0 %v1199
    %1265 = vmatprep.subr.bf16.mxu0 %v1202
    %1266 = vmatpush1.bf16.msra.mxu0 %v1201
    %1267 = vmatprep.subr.bf16.mxu0 %v1204
    %1268 = vmatpush1.bf16.msra.mxu0 %v1203
    %1269 = vmatprep.subr.bf16.mxu0 %v1206
    %1270 = vmatpush1.bf16.msra.mxu0 %v1205
    %1271 = vmatprep.subr.bf16.mxu0 %v1208
    %1272 = vmatpush1.bf16.msra.mxu0 %v1207
    %1273 = vmatprep.subr.bf16.mxu0 %v1210
    %1274 = vmatpush1.bf16.msra.mxu0 %v1209
    %1275 = vmatprep.subr.bf16.mxu0 %v1212
    %1276 = vmatpush1.bf16.msra.mxu0 %v1211
    %1277 = vmatprep.subr.bf16.mxu0 %v1214
    %1278 = vmatpush1.bf16.msra.mxu0 %v1213
    %1279 = vmatprep.subr.bf16.mxu0 %v1216
    %1280 = vmatpush1.bf16.msra.mxu0 %v1215
    %1281 = vmatprep.subr.bf16.mxu0 %v1218
    %1282 = vmatpush1.bf16.msra.mxu0 %v1217
    %1283 = vmatprep.subr.bf16.mxu0 %v1220
    %1284 = vmatpush1.bf16.msra.mxu0 %v1219
    %1285 = vmatprep.subr.bf16.mxu0 %v1222
    %1286 = vmatpush1.bf16.msra.mxu0 %v1221
    %1287 = vmatprep.subr.bf16.mxu0 %v1224
    %1288 = vmatpush1.bf16.msra.mxu0 %v1223
    %1289 = vmatprep.mubr.bf16.mxu0 %v1063
    %1290 = vmatmul.mubr.bf16.gmra.mrb[0].mxu0 %v1062
    %v1291 = vpop.f32.mrb[0].mxu0
    %v1292 = vadd.f32 0.0, %v1291
    %v1293 = vpop.f32.mrb[0].mxu0
    %v1294 = vadd.f32 0.0, %v1293
    %v1295 = vpop.f32.mrb[0].mxu0
    %v1296 = vpop.f32.mrb[0].mxu0
    %1297 = vdwg.mxu0
    %v1298 = vadd.f32 %v1049, %v1292
    %v1299 = vadd.f32 %v1050, %v1294
    %s1300 = scalar_lea.vmem %s0, 40
    %v1301 = vld [vmem:[%s1300] sm:$0xff]
    %1302 = vset.pattern.permute.xlu0 0
    %1303 = vperm.xlu0 %1302, %v1301
    %v1304 = vpop.permute.xlu0 %1303
    %vm1305 = vcmp.eq.s32.totalorder %v1304, %v59
    %vm1306 = vcmp.eq.s32.totalorder %v1304, %v60
    %v1307 = vsel %vm1305, 1, 0
    %v1308 = vsel %vm1306, 1, 0
    %v1309 = vcvt.s32.f32 %v1307
    %v1310 = vcvt.s32.f32 %v1308
    %v1311 = vpack.c.bf16 %v1309, %v1309
    %v1312 = vpack.c.bf16 %v1310, %v1310
    %s1313 = scalar_lea.vmem [#allocation2], 1280
    %v1314 = vld [vmem:[%s1313] sm:$0xff]
    %v1315 = vld [vmem:[%s1313 + $0x8] sm:$0xff]
    %v1316 = vld [vmem:[%s1313 + $0x10] sm:$0xff]
    %v1317 = vld [vmem:[%s1313 + $0x18] sm:$0xff]
    %v1318 = vld [vmem:[%s1313 + $0x20] sm:$0xff]
    %v1319 = vld [vmem:[%s1313 + $0x28] sm:$0xff]
    %v1320 = vld [vmem:[%s1313 + $0x30] sm:$0xff]
    %v1321 = vld [vmem:[%s1313 + $0x38] sm:$0xff]
    %v1322 = vld [vmem:[%s1313 + $0x40] sm:$0xff]
    %v1323 = vld [vmem:[%s1313 + $0x48] sm:$0xff]
    %v1324 = vld [vmem:[%s1313 + $0x50] sm:$0xff]
    %v1325 = vld [vmem:[%s1313 + $0x58] sm:$0xff]
    %v1326 = vld [vmem:[%s1313 + $0x60] sm:$0xff]
    %v1327 = vld [vmem:[%s1313 + $0x68] sm:$0xff]
    %v1328 = vld [vmem:[%s1313 + $0x70] sm:$0xff]
    %v1329 = vld [vmem:[%s1313 + $0x78] sm:$0xff]
    %v1330 = vld [vmem:[%s1313 + $0x80] sm:$0xff]
    %v1331 = vld [vmem:[%s1313 + $0x88] sm:$0xff]
    %v1332 = vld [vmem:[%s1313 + $0x90] sm:$0xff]
    %v1333 = vld [vmem:[%s1313 + $0x98] sm:$0xff]
    %v1334 = vld [vmem:[%s1313 + $0xa0] sm:$0xff]
    %v1335 = vld [vmem:[%s1313 + $0xa8] sm:$0xff]
    %v1336 = vld [vmem:[%s1313 + $0xb0] sm:$0xff]
    %v1337 = vld [vmem:[%s1313 + $0xb8] sm:$0xff]
    %v1338 = vld [vmem:[%s1313 + $0xc0] sm:$0xff]
    %v1339 = vld [vmem:[%s1313 + $0xc8] sm:$0xff]
    %v1340 = vld [vmem:[%s1313 + $0xd0] sm:$0xff]
    %v1341 = vld [vmem:[%s1313 + $0xd8] sm:$0xff]
    %v1342 = vld [vmem:[%s1313 + $0xe0] sm:$0xff]
    %v1343 = vld [vmem:[%s1313 + $0xe8] sm:$0xff]
    %v1344 = vld [vmem:[%s1313 + $0xf0] sm:$0xff]
    %v1345 = vld [vmem:[%s1313 + $0xf8] sm:$0xff]
    %v1378 = vunpack.c.l.b16 %v1314
    %v1379 = vunpack.c.h.b16 %v1314
    %v1380 = vunpack.c.l.b16 %v1315
    %v1381 = vunpack.c.h.b16 %v1315
    %v1382 = vunpack.c.l.b16 %v1316
    %v1383 = vunpack.c.h.b16 %v1316
    %v1384 = vunpack.c.l.b16 %v1317
    %v1385 = vunpack.c.h.b16 %v1317
    %v1386 = vunpack.c.l.b16 %v1318
    %v1387 = vunpack.c.h.b16 %v1318
    %v1388 = vunpack.c.l.b16 %v1319
    %v1389 = vunpack.c.h.b16 %v1319
    %v1390 = vunpack.c.l.b16 %v1320
    %v1391 = vunpack.c.h.b16 %v1320
    %v1392 = vunpack.c.l.b16 %v1321
    %v1393 = vunpack.c.h.b16 %v1321
    %v1394 = vunpack.c.l.b16 %v1322
    %v1395 = vunpack.c.h.b16 %v1322
    %v1396 = vunpack.c.l.b16 %v1323
    %v1397 = vunpack.c.h.b16 %v1323
    %v1398 = vunpack.c.l.b16 %v1324
    %v1399 = vunpack.c.h.b16 %v1324
    %v1400 = vunpack.c.l.b16 %v1325
    %v1401 = vunpack.c.h.b16 %v1325
    %v1402 = vunpack.c.l.b16 %v1326
    %v1403 = vunpack.c.h.b16 %v1326
    %v1404 = vunpack.c.l.b16 %v1327
    %v1405 = vunpack.c.h.b16 %v1327
    %v1406 = vunpack.c.l.b16 %v1328
    %v1407 = vunpack.c.h.b16 %v1328
    %v1408 = vunpack.c.l.b16 %v1329
    %v1409 = vunpack.c.h.b16 %v1329
    %v1410 = vunpack.c.l.b16 %v1330
    %v1411 = vunpack.c.h.b16 %v1330
    %v1412 = vunpack.c.l.b16 %v1331
    %v1413 = vunpack.c.h.b16 %v1331
    %v1414 = vunpack.c.l.b16 %v1332
    %v1415 = vunpack.c.h.b16 %v1332
    %v1416 = vunpack.c.l.b16 %v1333
    %v1417 = vunpack.c.h.b16 %v1333
    %v1418 = vunpack.c.l.b16 %v1334
    %v1419 = vunpack.c.h.b16 %v1334
    %v1420 = vunpack.c.l.b16 %v1335
    %v1421 = vunpack.c.h.b16 %v1335
    %v1422 = vunpack.c.l.b16 %v1336
    %v1423 = vunpack.c.h.b16 %v1336
    %v1424 = vunpack.c.l.b16 %v1337
    %v1425 = vunpack.c.h.b16 %v1337
    %v1426 = vunpack.c.l.b16 %v1338
    %v1427 = vunpack.c.h.b16 %v1338
    %v1428 = vunpack.c.l.b16 %v1339
    %v1429 = vunpack.c.h.b16 %v1339
    %v1430 = vunpack.c.l.b16 %v1340
    %v1431 = vunpack.c.h.b16 %v1340
    %v1432 = vunpack.c.l.b16 %v1341
    %v1433 = vunpack.c.h.b16 %v1341
    %v1434 = vunpack.c.l.b16 %v1342
    %v1435 = vunpack.c.h.b16 %v1342
    %v1436 = vunpack.c.l.b16 %v1343
    %v1437 = vunpack.c.h.b16 %v1343
    %v1438 = vunpack.c.l.b16 %v1344
    %v1439 = vunpack.c.h.b16 %v1344
    %v1440 = vunpack.c.l.b16 %v1345
    %v1441 = vunpack.c.h.b16 %v1345
    %v1442 = vpack.c.b16 %v1380, %v1378
    %v1443 = vpack.c.b16 %v1381, %v1379
    %v1444 = vpack.c.b16 %v1384, %v1382
    %v1445 = vpack.c.b16 %v1385, %v1383
    %v1446 = vpack.c.b16 %v1388, %v1386
    %v1447 = vpack.c.b16 %v1389, %v1387
    %v1448 = vpack.c.b16 %v1392, %v1390
    %v1449 = vpack.c.b16 %v1393, %v1391
    %v1450 = vpack.c.b16 %v1396, %v1394
    %v1451 = vpack.c.b16 %v1397, %v1395
    %v1452 = vpack.c.b16 %v1400, %v1398
    %v1453 = vpack.c.b16 %v1401, %v1399
    %v1454 = vpack.c.b16 %v1404, %v1402
    %v1455 = vpack.c.b16 %v1405, %v1403
    %v1456 = vpack.c.b16 %v1408, %v1406
    %v1457 = vpack.c.b16 %v1409, %v1407
    %v1458 = vpack.c.b16 %v1412, %v1410
    %v1459 = vpack.c.b16 %v1413, %v1411
    %v1460 = vpack.c.b16 %v1416, %v1414
    %v1461 = vpack.c.b16 %v1417, %v1415
    %v1462 = vpack.c.b16 %v1420, %v1418
    %v1463 = vpack.c.b16 %v1421, %v1419
    %v1464 = vpack.c.b16 %v1424, %v1422
    %v1465 = vpack.c.b16 %v1425, %v1423
    %v1466 = vpack.c.b16 %v1428, %v1426
    %v1467 = vpack.c.b16 %v1429, %v1427
    %v1468 = vpack.c.b16 %v1432, %v1430
    %v1469 = vpack.c.b16 %v1433, %v1431
    %v1470 = vpack.c.b16 %v1436, %v1434
    %v1471 = vpack.c.b16 %v1437, %v1435
    %v1472 = vpack.c.b16 %v1440, %v1438
    %v1473 = vpack.c.b16 %v1441, %v1439
    %1506 = vmatprep.subr.bf16.mxu0 %v1443
    %1507 = vmatpush1.bf16.msra.mxu0 %v1442
    %1508 = vmatprep.subr.bf16.mxu0 %v1445
    %1509 = vmatpush1.bf16.msra.mxu0 %v1444
    %1510 = vmatprep.subr.bf16.mxu0 %v1447
    %1511 = vmatpush1.bf16.msra.mxu0 %v1446
    %1512 = vmatprep.subr.bf16.mxu0 %v1449
    %1513 = vmatpush1.bf16.msra.mxu0 %v1448
    %1514 = vmatprep.subr.bf16.mxu0 %v1451
    %1515 = vmatpush1.bf16.msra.mxu0 %v1450
    %1516 = vmatprep.subr.bf16.mxu0 %v1453
    %1517 = vmatpush1.bf16.msra.mxu0 %v1452
    %1518 = vmatprep.subr.bf16.mxu0 %v1455
    %1519 = vmatpush1.bf16.msra.mxu0 %v1454
    %1520 = vmatprep.subr.bf16.mxu0 %v1457
    %1521 = vmatpush1.bf16.msra.mxu0 %v1456
    %1522 = vmatprep.subr.bf16.mxu0 %v1459
    %1523 = vmatpush1.bf16.msra.mxu0 %v1458
    %1524 = vmatprep.subr.bf16.mxu0 %v1461
    %1525 = vmatpush1.bf16.msra.mxu0 %v1460
    %1526 = vmatprep.subr.bf16.mxu0 %v1463
    %1527 = vmatpush1.bf16.msra.mxu0 %v1462
    %1528 = vmatprep.subr.bf16.mxu0 %v1465
    %1529 = vmatpush1.bf16.msra.mxu0 %v1464
    %1530 = vmatprep.subr.bf16.mxu0 %v1467
    %1531 = vmatpush1.bf16.msra.mxu0 %v1466
    %1532 = vmatprep.subr.bf16.mxu0 %v1469
    %1533 = vmatpush1.bf16.msra.mxu0 %v1468
    %1534 = vmatprep.subr.bf16.mxu0 %v1471
    %1535 = vmatpush1.bf16.msra.mxu0 %v1470
    %1536 = vmatprep.subr.bf16.mxu0 %v1473
    %1537 = vmatpush1.bf16.msra.mxu0 %v1472
    %1538 = vmatprep.mubr.bf16.mxu0 %v1312
    %1539 = vmatmul.mubr.bf16.gmra.mrb[0].mxu0 %v1311
    %v1540 = vpop.f32.mrb[0].mxu0
    %v1541 = vadd.f32 0.0, %v1540
    %v1542 = vpop.f32.mrb[0].mxu0
    %v1543 = vadd.f32 0.0, %v1542
    %v1544 = vpop.f32.mrb[0].mxu0
    %v1545 = vpop.f32.mrb[0].mxu0
    %1546 = vdwg.mxu0
    %v1547 = vadd.f32 %v1298, %v1541
    %v1548 = vadd.f32 %v1299, %v1543
    %s1549 = scalar_lea.vmem %s0, 48
    %v1550 = vld [vmem:[%s1549] sm:$0xff]
    %1551 = vset.pattern.permute.xlu0 0
    %1552 = vperm.xlu0 %1551, %v1550
    %v1553 = vpop.permute.xlu0 %1552
    %vm1554 = vcmp.eq.s32.totalorder %v1553, %v59
    %vm1555 = vcmp.eq.s32.totalorder %v1553, %v60
    %v1556 = vsel %vm1554, 1, 0
    %v1557 = vsel %vm1555, 1, 0
    %v1558 = vcvt.s32.f32 %v1556
    %v1559 = vcvt.s32.f32 %v1557
    %v1560 = vpack.c.bf16 %v1558, %v1558
    %v1561 = vpack.c.bf16 %v1559, %v1559
    %s1562 = scalar_lea.vmem [#allocation2], 1536
    %v1563 = vld [vmem:[%s1562] sm:$0xff]
    %v1564 = vld [vmem:[%s1562 + $0x8] sm:$0xff]
    %v1565 = vld [vmem:[%s1562 + $0x10] sm:$0xff]
    %v1566 = vld [vmem:[%s1562 + $0x18] sm:$0xff]
    %v1567 = vld [vmem:[%s1562 + $0x20] sm:$0xff]
    %v1568 = vld [vmem:[%s1562 + $0x28] sm:$0xff]
    %v1569 = vld [vmem:[%s1562 + $0x30] sm:$0xff]
    %v1570 = vld [vmem:[%s1562 + $0x38] sm:$0xff]
    %v1571 = vld [vmem:[%s1562 + $0x40] sm:$0xff]
    %v1572 = vld [vmem:[%s1562 + $0x48] sm:$0xff]
    %v1573 = vld [vmem:[%s1562 + $0x50] sm:$0xff]
    %v1574 = vld [vmem:[%s1562 + $0x58] sm:$0xff]
    %v1575 = vld [vmem:[%s1562 + $0x60] sm:$0xff]
    %v1576 = vld [vmem:[%s1562 + $0x68] sm:$0xff]
    %v1577 = vld [vmem:[%s1562 + $0x70] sm:$0xff]
    %v1578 = vld [vmem:[%s1562 + $0x78] sm:$0xff]
    %v1579 = vld [vmem:[%s1562 + $0x80] sm:$0xff]
    %v1580 = vld [vmem:[%s1562 + $0x88] sm:$0xff]
    %v1581 = vld [vmem:[%s1562 + $0x90] sm:$0xff]
    %v1582 = vld [vmem:[%s1562 + $0x98] sm:$0xff]
    %v1583 = vld [vmem:[%s1562 + $0xa0] sm:$0xff]
    %v1584 = vld [vmem:[%s1562 + $0xa8] sm:$0xff]
    %v1585 = vld [vmem:[%s1562 + $0xb0] sm:$0xff]
    %v1586 = vld [vmem:[%s1562 + $0xb8] sm:$0xff]
    %v1587 = vld [vmem:[%s1562 + $0xc0] sm:$0xff]
    %v1588 = vld [vmem:[%s1562 + $0xc8] sm:$0xff]
    %v1589 = vld [vmem:[%s1562 + $0xd0] sm:$0xff]
    %v1590 = vld [vmem:[%s1562 + $0xd8] sm:$0xff]
    %v1591 = vld [vmem:[%s1562 + $0xe0] sm:$0xff]
    %v1592 = vld [vmem:[%s1562 + $0xe8] sm:$0xff]
    %v1593 = vld [vmem:[%s1562 + $0xf0] sm:$0xff]
    %v1594 = vld [vmem:[%s1562 + $0xf8] sm:$0xff]
    %v1627 = vunpack.c.l.b16 %v1563
    %v1628 = vunpack.c.h.b16 %v1563
    %v1629 = vunpack.c.l.b16 %v1564
    %v1630 = vunpack.c.h.b16 %v1564
    %v1631 = vunpack.c.l.b16 %v1565
    %v1632 = vunpack.c.h.b16 %v1565
    %v1633 = vunpack.c.l.b16 %v1566
    %v1634 = vunpack.c.h.b16 %v1566
    %v1635 = vunpack.c.l.b16 %v1567
    %v1636 = vunpack.c.h.b16 %v1567
    %v1637 = vunpack.c.l.b16 %v1568
    %v1638 = vunpack.c.h.b16 %v1568
    %v1639 = vunpack.c.l.b16 %v1569
    %v1640 = vunpack.c.h.b16 %v1569
    %v1641 = vunpack.c.l.b16 %v1570
    %v1642 = vunpack.c.h.b16 %v1570
    %v1643 = vunpack.c.l.b16 %v1571
    %v1644 = vunpack.c.h.b16 %v1571
    %v1645 = vunpack.c.l.b16 %v1572
    %v1646 = vunpack.c.h.b16 %v1572
    %v1647 = vunpack.c.l.b16 %v1573
    %v1648 = vunpack.c.h.b16 %v1573
    %v1649 = vunpack.c.l.b16 %v1574
    %v1650 = vunpack.c.h.b16 %v1574
    %v1651 = vunpack.c.l.b16 %v1575
    %v1652 = vunpack.c.h.b16 %v1575
    %v1653 = vunpack.c.l.b16 %v1576
    %v1654 = vunpack.c.h.b16 %v1576
    %v1655 = vunpack.c.l.b16 %v1577
    %v1656 = vunpack.c.h.b16 %v1577
    %v1657 = vunpack.c.l.b16 %v1578
    %v1658 = vunpack.c.h.b16 %v1578
    %v1659 = vunpack.c.l.b16 %v1579
    %v1660 = vunpack.c.h.b16 %v1579
    %v1661 = vunpack.c.l.b16 %v1580
    %v1662 = vunpack.c.h.b16 %v1580
    %v1663 = vunpack.c.l.b16 %v1581
    %v1664 = vunpack.c.h.b16 %v1581
    %v1665 = vunpack.c.l.b16 %v1582
    %v1666 = vunpack.c.h.b16 %v1582
    %v1667 = vunpack.c.l.b16 %v1583
    %v1668 = vunpack.c.h.b16 %v1583
    %v1669 = vunpack.c.l.b16 %v1584
    %v1670 = vunpack.c.h.b16 %v1584
    %v1671 = vunpack.c.l.b16 %v1585
    %v1672 = vunpack.c.h.b16 %v1585
    %v1673 = vunpack.c.l.b16 %v1586
    %v1674 = vunpack.c.h.b16 %v1586
    %v1675 = vunpack.c.l.b16 %v1587
    %v1676 = vunpack.c.h.b16 %v1587
    %v1677 = vunpack.c.l.b16 %v1588
    %v1678 = vunpack.c.h.b16 %v1588
    %v1679 = vunpack.c.l.b16 %v1589
    %v1680 = vunpack.c.h.b16 %v1589
    %v1681 = vunpack.c.l.b16 %v1590
    %v1682 = vunpack.c.h.b16 %v1590
    %v1683 = vunpack.c.l.b16 %v1591
    %v1684 = vunpack.c.h.b16 %v1591
    %v1685 = vunpack.c.l.b16 %v1592
    %v1686 = vunpack.c.h.b16 %v1592
    %v1687 = vunpack.c.l.b16 %v1593
    %v1688 = vunpack.c.h.b16 %v1593
    %v1689 = vunpack.c.l.b16 %v1594
    %v1690 = vunpack.c.h.b16 %v1594
    %v1691 = vpack.c.b16 %v1629, %v1627
    %v1692 = vpack.c.b16 %v1630, %v1628
    %v1693 = vpack.c.b16 %v1633, %v1631
    %v1694 = vpack.c.b16 %v1634, %v1632
    %v1695 = vpack.c.b16 %v1637, %v1635
    %v1696 = vpack.c.b16 %v1638, %v1636
    %v1697 = vpack.c.b16 %v1641, %v1639
    %v1698 = vpack.c.b16 %v1642, %v1640
    %v1699 = vpack.c.b16 %v1645, %v1643
    %v1700 = vpack.c.b16 %v1646, %v1644
    %v1701 = vpack.c.b16 %v1649, %v1647
    %v1702 = vpack.c.b16 %v1650, %v1648
    %v1703 = vpack.c.b16 %v1653, %v1651
    %v1704 = vpack.c.b16 %v1654, %v1652
    %v1705 = vpack.c.b16 %v1657, %v1655
    %v1706 = vpack.c.b16 %v1658, %v1656
    %v1707 = vpack.c.b16 %v1661, %v1659
    %v1708 = vpack.c.b16 %v1662, %v1660
    %v1709 = vpack.c.b16 %v1665, %v1663
    %v1710 = vpack.c.b16 %v1666, %v1664
    %v1711 = vpack.c.b16 %v1669, %v1667
    %v1712 = vpack.c.b16 %v1670, %v1668
    %v1713 = vpack.c.b16 %v1673, %v1671
    %v1714 = vpack.c.b16 %v1674, %v1672
    %v1715 = vpack.c.b16 %v1677, %v1675
    %v1716 = vpack.c.b16 %v1678, %v1676
    %v1717 = vpack.c.b16 %v1681, %v1679
    %v1718 = vpack.c.b16 %v1682, %v1680
    %v1719 = vpack.c.b16 %v1685, %v1683
    %v1720 = vpack.c.b16 %v1686, %v1684
    %v1721 = vpack.c.b16 %v1689, %v1687
    %v1722 = vpack.c.b16 %v1690, %v1688
    %1755 = vmatprep.subr.bf16.mxu0 %v1692
    %1756 = vmatpush1.bf16.msra.mxu0 %v1691
    %1757 = vmatprep.subr.bf16.mxu0 %v1694
    %1758 = vmatpush1.bf16.msra.mxu0 %v1693
    %1759 = vmatprep.subr.bf16.mxu0 %v1696
    %1760 = vmatpush1.bf16.msra.mxu0 %v1695
    %1761 = vmatprep.subr.bf16.mxu0 %v1698
    %1762 = vmatpush1.bf16.msra.mxu0 %v1697
    %1763 = vmatprep.subr.bf16.mxu0 %v1700
    %1764 = vmatpush1.bf16.msra.mxu0 %v1699
    %1765 = vmatprep.subr.bf16.mxu0 %v1702
    %1766 = vmatpush1.bf16.msra.mxu0 %v1701
    %1767 = vmatprep.subr.bf16.mxu0 %v1704
    %1768 = vmatpush1.bf16.msra.mxu0 %v1703
    %1769 = vmatprep.subr.bf16.mxu0 %v1706
    %1770 = vmatpush1.bf16.msra.mxu0 %v1705
    %1771 = vmatprep.subr.bf16.mxu0 %v1708
    %1772 = vmatpush1.bf16.msra.mxu0 %v1707
    %1773 = vmatprep.subr.bf16.mxu0 %v1710
    %1774 = vmatpush1.bf16.msra.mxu0 %v1709
    %1775 = vmatprep.subr.bf16.mxu0 %v1712
    %1776 = vmatpush1.bf16.msra.mxu0 %v1711
    %1777 = vmatprep.subr.bf16.mxu0 %v1714
    %1778 = vmatpush1.bf16.msra.mxu0 %v1713
    %1779 = vmatprep.subr.bf16.mxu0 %v1716
    %1780 = vmatpush1.bf16.msra.mxu0 %v1715
    %1781 = vmatprep.subr.bf16.mxu0 %v1718
    %1782 = vmatpush1.bf16.msra.mxu0 %v1717
    %1783 = vmatprep.subr.bf16.mxu0 %v1720
    %1784 = vmatpush1.bf16.msra.mxu0 %v1719
    %1785 = vmatprep.subr.bf16.mxu0 %v1722
    %1786 = vmatpush1.bf16.msra.mxu0 %v1721
    %1787 = vmatprep.mubr.bf16.mxu0 %v1561
    %1788 = vmatmul.mubr.bf16.gmra.mrb[0].mxu0 %v1560
    %v1789 = vpop.f32.mrb[0].mxu0
    %v1790 = vadd.f32 0.0, %v1789
    %v1791 = vpop.f32.mrb[0].mxu0
    %v1792 = vadd.f32 0.0, %v1791
    %v1793 = vpop.f32.mrb[0].mxu0
    %v1794 = vpop.f32.mrb[0].mxu0
    %1795 = vdwg.mxu0
    %v1796 = vadd.f32 %v1547, %v1790
    %v1797 = vadd.f32 %v1548, %v1792
    %s1798 = scalar_lea.vmem %s0, 56
    %v1799 = vld [vmem:[%s1798] sm:$0xff]
    %1800 = vset.pattern.permute.xlu0 0
    %1801 = vperm.xlu0 %1800, %v1799
    %v1802 = vpop.permute.xlu0 %1801
    %vm1803 = vcmp.eq.s32.totalorder %v1802, %v59
    %vm1804 = vcmp.eq.s32.totalorder %v1802, %v60
    %v1805 = vsel %vm1803, 1, 0
    %v1806 = vsel %vm1804, 1, 0
    %v1807 = vcvt.s32.f32 %v1805
    %v1808 = vcvt.s32.f32 %v1806
    %v1809 = vpack.c.bf16 %v1807, %v1807
    %v1810 = vpack.c.bf16 %v1808, %v1808
    %s1811 = scalar_lea.vmem [#allocation2], 1792
    %v1812 = vld [vmem:[%s1811] sm:$0xff]
    %v1813 = vld [vmem:[%s1811 + $0x8] sm:$0xff]
    %v1814 = vld [vmem:[%s1811 + $0x10] sm:$0xff]
    %v1815 = vld [vmem:[%s1811 + $0x18] sm:$0xff]
    %v1816 = vld [vmem:[%s1811 + $0x20] sm:$0xff]
    %v1817 = vld [vmem:[%s1811 + $0x28] sm:$0xff]
    %v1818 = vld [vmem:[%s1811 + $0x30] sm:$0xff]
    %v1819 = vld [vmem:[%s1811 + $0x38] sm:$0xff]
    %v1820 = vld [vmem:[%s1811 + $0x40] sm:$0xff]
    %v1821 = vld [vmem:[%s1811 + $0x48] sm:$0xff]
    %v1822 = vld [vmem:[%s1811 + $0x50] sm:$0xff]
    %v1823 = vld [vmem:[%s1811 + $0x58] sm:$0xff]
    %v1824 = vld [vmem:[%s1811 + $0x60] sm:$0xff]
    %v1825 = vld [vmem:[%s1811 + $0x68] sm:$0xff]
    %v1826 = vld [vmem:[%s1811 + $0x70] sm:$0xff]
    %v1827 = vld [vmem:[%s1811 + $0x78] sm:$0xff]
    %v1828 = vld [vmem:[%s1811 + $0x80] sm:$0xff]
    %v1829 = vld [vmem:[%s1811 + $0x88] sm:$0xff]
    %v1830 = vld [vmem:[%s1811 + $0x90] sm:$0xff]
    %v1831 = vld [vmem:[%s1811 + $0x98] sm:$0xff]
    %v1832 = vld [vmem:[%s1811 + $0xa0] sm:$0xff]
    %v1833 = vld [vmem:[%s1811 + $0xa8] sm:$0xff]
    %v1834 = vld [vmem:[%s1811 + $0xb0] sm:$0xff]
    %v1835 = vld [vmem:[%s1811 + $0xb8] sm:$0xff]
    %v1836 = vld [vmem:[%s1811 + $0xc0] sm:$0xff]
    %v1837 = vld [vmem:[%s1811 + $0xc8] sm:$0xff]
    %v1838 = vld [vmem:[%s1811 + $0xd0] sm:$0xff]
    %v1839 = vld [vmem:[%s1811 + $0xd8] sm:$0xff]
    %v1840 = vld [vmem:[%s1811 + $0xe0] sm:$0xff]
    %v1841 = vld [vmem:[%s1811 + $0xe8] sm:$0xff]
    %v1842 = vld [vmem:[%s1811 + $0xf0] sm:$0xff]
    %v1843 = vld [vmem:[%s1811 + $0xf8] sm:$0xff]
    %v1876 = vunpack.c.l.b16 %v1812
    %v1877 = vunpack.c.h.b16 %v1812
    %v1878 = vunpack.c.l.b16 %v1813
    %v1879 = vunpack.c.h.b16 %v1813
    %v1880 = vunpack.c.l.b16 %v1814
    %v1881 = vunpack.c.h.b16 %v1814
    %v1882 = vunpack.c.l.b16 %v1815
    %v1883 = vunpack.c.h.b16 %v1815
    %v1884 = vunpack.c.l.b16 %v1816
    %v1885 = vunpack.c.h.b16 %v1816
    %v1886 = vunpack.c.l.b16 %v1817
    %v1887 = vunpack.c.h.b16 %v1817
    %v1888 = vunpack.c.l.b16 %v1818
    %v1889 = vunpack.c.h.b16 %v1818
    %v1890 = vunpack.c.l.b16 %v1819
    %v1891 = vunpack.c.h.b16 %v1819
    %v1892 = vunpack.c.l.b16 %v1820
    %v1893 = vunpack.c.h.b16 %v1820
    %v1894 = vunpack.c.l.b16 %v1821
    %v1895 = vunpack.c.h.b16 %v1821
    %v1896 = vunpack.c.l.b16 %v1822
    %v1897 = vunpack.c.h.b16 %v1822
    %v1898 = vunpack.c.l.b16 %v1823
    %v1899 = vunpack.c.h.b16 %v1823
    %v1900 = vunpack.c.l.b16 %v1824
    %v1901 = vunpack.c.h.b16 %v1824
    %v1902 = vunpack.c.l.b16 %v1825
    %v1903 = vunpack.c.h.b16 %v1825
    %v1904 = vunpack.c.l.b16 %v1826
    %v1905 = vunpack.c.h.b16 %v1826
    %v1906 = vunpack.c.l.b16 %v1827
    %v1907 = vunpack.c.h.b16 %v1827
    %v1908 = vunpack.c.l.b16 %v1828
    %v1909 = vunpack.c.h.b16 %v1828
    %v1910 = vunpack.c.l.b16 %v1829
    %v1911 = vunpack.c.h.b16 %v1829
    %v1912 = vunpack.c.l.b16 %v1830
    %v1913 = vunpack.c.h.b16 %v1830
    %v1914 = vunpack.c.l.b16 %v1831
    %v1915 = vunpack.c.h.b16 %v1831
    %v1916 = vunpack.c.l.b16 %v1832
    %v1917 = vunpack.c.h.b16 %v1832
    %v1918 = vunpack.c.l.b16 %v1833
    %v1919 = vunpack.c.h.b16 %v1833
    %v1920 = vunpack.c.l.b16 %v1834
    %v1921 = vunpack.c.h.b16 %v1834
    %v1922 = vunpack.c.l.b16 %v1835
    %v1923 = vunpack.c.h.b16 %v1835
    %v1924 = vunpack.c.l.b16 %v1836
    %v1925 = vunpack.c.h.b16 %v1836
    %v1926 = vunpack.c.l.b16 %v1837
    %v1927 = vunpack.c.h.b16 %v1837
    %v1928 = vunpack.c.l.b16 %v1838
    %v1929 = vunpack.c.h.b16 %v1838
    %v1930 = vunpack.c.l.b16 %v1839
    %v1931 = vunpack.c.h.b16 %v1839
    %v1932 = vunpack.c.l.b16 %v1840
    %v1933 = vunpack.c.h.b16 %v1840
    %v1934 = vunpack.c.l.b16 %v1841
    %v1935 = vunpack.c.h.b16 %v1841
    %v1936 = vunpack.c.l.b16 %v1842
    %v1937 = vunpack.c.h.b16 %v1842
    %v1938 = vunpack.c.l.b16 %v1843
    %v1939 = vunpack.c.h.b16 %v1843
    %v1940 = vpack.c.b16 %v1878, %v1876
    %v1941 = vpack.c.b16 %v1879, %v1877
    %v1942 = vpack.c.b16 %v1882, %v1880
    %v1943 = vpack.c.b16 %v1883, %v1881
    %v1944 = vpack.c.b16 %v1886, %v1884
    %v1945 = vpack.c.b16 %v1887, %v1885
    %v1946 = vpack.c.b16 %v1890, %v1888
    %v1947 = vpack.c.b16 %v1891, %v1889
    %v1948 = vpack.c.b16 %v1894, %v1892
    %v1949 = vpack.c.b16 %v1895, %v1893
    %v1950 = vpack.c.b16 %v1898, %v1896
    %v1951 = vpack.c.b16 %v1899, %v1897
    %v1952 = vpack.c.b16 %v1902, %v1900
    %v1953 = vpack.c.b16 %v1903, %v1901
    %v1954 = vpack.c.b16 %v1906, %v1904
    %v1955 = vpack.c.b16 %v1907, %v1905
    %v1956 = vpack.c.b16 %v1910, %v1908
    %v1957 = vpack.c.b16 %v1911, %v1909
    %v1958 = vpack.c.b16 %v1914, %v1912
    %v1959 = vpack.c.b16 %v1915, %v1913
    %v1960 = vpack.c.b16 %v1918, %v1916
    %v1961 = vpack.c.b16 %v1919, %v1917
    %v1962 = vpack.c.b16 %v1922, %v1920
    %v1963 = vpack.c.b16 %v1923, %v1921
    %v1964 = vpack.c.b16 %v1926, %v1924
    %v1965 = vpack.c.b16 %v1927, %v1925
    %v1966 = vpack.c.b16 %v1930, %v1928
    %v1967 = vpack.c.b16 %v1931, %v1929
    %v1968 = vpack.c.b16 %v1934, %v1932
    %v1969 = vpack.c.b16 %v1935, %v1933
    %v1970 = vpack.c.b16 %v1938, %v1936
    %v1971 = vpack.c.b16 %v1939, %v1937
    %2004 = vmatprep.subr.bf16.mxu0 %v1941
    %2005 = vmatpush1.bf16.msra.mxu0 %v1940
    %2006 = vmatprep.subr.bf16.mxu0 %v1943
    %2007 = vmatpush1.bf16.msra.mxu0 %v1942
    %2008 = vmatprep.subr.bf16.mxu0 %v1945
    %2009 = vmatpush1.bf16.msra.mxu0 %v1944
    %2010 = vmatprep.subr.bf16.mxu0 %v1947
    %2011 = vmatpush1.bf16.msra.mxu0 %v1946
    %2012 = vmatprep.subr.bf16.mxu0 %v1949
    %2013 = vmatpush1.bf16.msra.mxu0 %v1948
    %2014 = vmatprep.subr.bf16.mxu0 %v1951
    %2015 = vmatpush1.bf16.msra.mxu0 %v1950
    %2016 = vmatprep.subr.bf16.mxu0 %v1953
    %2017 = vmatpush1.bf16.msra.mxu0 %v1952
    %2018 = vmatprep.subr.bf16.mxu0 %v1955
    %2019 = vmatpush1.bf16.msra.mxu0 %v1954
    %2020 = vmatprep.subr.bf16.mxu0 %v1957
    %2021 = vmatpush1.bf16.msra.mxu0 %v1956
    %2022 = vmatprep.subr.bf16.mxu0 %v1959
    %2023 = vmatpush1.bf16.msra.mxu0 %v1958
    %2024 = vmatprep.subr.bf16.mxu0 %v1961
    %2025 = vmatpush1.bf16.msra.mxu0 %v1960
    %2026 = vmatprep.subr.bf16.mxu0 %v1963
    %2027 = vmatpush1.bf16.msra.mxu0 %v1962
    %2028 = vmatprep.subr.bf16.mxu0 %v1965
    %2029 = vmatpush1.bf16.msra.mxu0 %v1964
    %2030 = vmatprep.subr.bf16.mxu0 %v1967
    %2031 = vmatpush1.bf16.msra.mxu0 %v1966
    %2032 = vmatprep.subr.bf16.mxu0 %v1969
    %2033 = vmatpush1.bf16.msra.mxu0 %v1968
    %2034 = vmatprep.subr.bf16.mxu0 %v1971
    %2035 = vmatpush1.bf16.msra.mxu0 %v1970
    %2036 = vmatprep.mubr.bf16.mxu0 %v1810
    %2037 = vmatmul.mubr.bf16.gmra.mrb[0].mxu0 %v1809
    %v2038 = vpop.f32.mrb[0].mxu0
    %v2039 = vadd.f32 0.0, %v2038
    %v2040 = vpop.f32.mrb[0].mxu0
    %v2041 = vadd.f32 0.0, %v2040
    %v2042 = vpop.f32.mrb[0].mxu0
    %v2043 = vpop.f32.mrb[0].mxu0
    %2044 = vdwg.mxu0
    %v2045 = vadd.f32 %v1796, %v2039
    %v2046 = vadd.f32 %v1797, %v2041
    %s2047 = scalar_lea.vmem %s0, 64
    %v2048 = vld [vmem:[%s2047] sm:$0xff]
    %2049 = vset.pattern.permute.xlu0 0
    %2050 = vperm.xlu0 %2049, %v2048
    %v2051 = vpop.permute.xlu0 %2050
    %vm2052 = vcmp.eq.s32.totalorder %v2051, %v59
    %vm2053 = vcmp.eq.s32.totalorder %v2051, %v60
    %v2054 = vsel %vm2052, 1, 0
    %v2055 = vsel %vm2053, 1, 0
    %v2056 = vcvt.s32.f32 %v2054
    %v2057 = vcvt.s32.f32 %v2055
    %v2058 = vpack.c.bf16 %v2056, %v2056
    %v2059 = vpack.c.bf16 %v2057, %v2057
    %s2060 = scalar_lea.vmem [#allocation2], 2048
    %v2061 = vld [vmem:[%s2060] sm:$0xff]
    %v2062 = vld [vmem:[%s2060 + $0x8] sm:$0xff]
    %v2063 = vld [vmem:[%s2060 + $0x10] sm:$0xff]
    %v2064 = vld [vmem:[%s2060 + $0x18] sm:$0xff]
    %v2065 = vld [vmem:[%s2060 + $0x20] sm:$0xff]
    %v2066 = vld [vmem:[%s2060 + $0x28] sm:$0xff]
    %v2067 = vld [vmem:[%s2060 + $0x30] sm:$0xff]
    %v2068 = vld [vmem:[%s2060 + $0x38] sm:$0xff]
    %v2069 = vld [vmem:[%s2060 + $0x40] sm:$0xff]
    %v2070 = vld [vmem:[%s2060 + $0x48] sm:$0xff]
    %v2071 = vld [vmem:[%s2060 + $0x50] sm:$0xff]
    %v2072 = vld [vmem:[%s2060 + $0x58] sm:$0xff]
    %v2073 = vld [vmem:[%s2060 + $0x60] sm:$0xff]
    %v2074 = vld [vmem:[%s2060 + $0x68] sm:$0xff]
    %v2075 = vld [vmem:[%s2060 + $0x70] sm:$0xff]
    %v2076 = vld [vmem:[%s2060 + $0x78] sm:$0xff]
    %v2077 = vld [vmem:[%s2060 + $0x80] sm:$0xff]
    %v2078 = vld [vmem:[%s2060 + $0x88] sm:$0xff]
    %v2079 = vld [vmem:[%s2060 + $0x90] sm:$0xff]
    %v2080 = vld [vmem:[%s2060 + $0x98] sm:$0xff]
    %v2081 = vld [vmem:[%s2060 + $0xa0] sm:$0xff]
    %v2082 = vld [vmem:[%s2060 + $0xa8] sm:$0xff]
    %v2083 = vld [vmem:[%s2060 + $0xb0] sm:$0xff]
    %v2084 = vld [vmem:[%s2060 + $0xb8] sm:$0xff]
    %v2085 = vld [vmem:[%s2060 + $0xc0] sm:$0xff]
    %v2086 = vld [vmem:[%s2060 + $0xc8] sm:$0xff]
    %v2087 = vld [vmem:[%s2060 + $0xd0] sm:$0xff]
    %v2088 = vld [vmem:[%s2060 + $0xd8] sm:$0xff]
    %v2089 = vld [vmem:[%s2060 + $0xe0] sm:$0xff]
    %v2090 = vld [vmem:[%s2060 + $0xe8] sm:$0xff]
    %v2091 = vld [vmem:[%s2060 + $0xf0] sm:$0xff]
    %v2092 = vld [vmem:[%s2060 + $0xf8] sm:$0xff]
    %v2125 = vunpack.c.l.b16 %v2061
    %v2126 = vunpack.c.h.b16 %v2061
    %v2127 = vunpack.c.l.b16 %v2062
    %v2128 = vunpack.c.h.b16 %v2062
    %v2129 = vunpack.c.l.b16 %v2063
    %v2130 = vunpack.c.h.b16 %v2063
    %v2131 = vunpack.c.l.b16 %v2064
    %v2132 = vunpack.c.h.b16 %v2064
    %v2133 = vunpack.c.l.b16 %v2065
    %v2134 = vunpack.c.h.b16 %v2065
    %v2135 = vunpack.c.l.b16 %v2066
    %v2136 = vunpack.c.h.b16 %v2066
    %v2137 = vunpack.c.l.b16 %v2067
    %v2138 = vunpack.c.h.b16 %v2067
    %v2139 = vunpack.c.l.b16 %v2068
    %v2140 = vunpack.c.h.b16 %v2068
    %v2141 = vunpack.c.l.b16 %v2069
    %v2142 = vunpack.c.h.b16 %v2069
    %v2143 = vunpack.c.l.b16 %v2070
    %v2144 = vunpack.c.h.b16 %v2070
    %v2145 = vunpack.c.l.b16 %v2071
    %v2146 = vunpack.c.h.b16 %v2071
    %v2147 = vunpack.c.l.b16 %v2072
    %v2148 = vunpack.c.h.b16 %v2072
    %v2149 = vunpack.c.l.b16 %v2073
    %v2150 = vunpack.c.h.b16 %v2073
    %v2151 = vunpack.c.l.b16 %v2074
    %v2152 = vunpack.c.h.b16 %v2074
    %v2153 = vunpack.c.l.b16 %v2075
    %v2154 = vunpack.c.h.b16 %v2075
    %v2155 = vunpack.c.l.b16 %v2076
    %v2156 = vunpack.c.h.b16 %v2076
    %v2157 = vunpack.c.l.b16 %v2077
    %v2158 = vunpack.c.h.b16 %v2077
    %v2159 = vunpack.c.l.b16 %v2078
    %v2160 = vunpack.c.h.b16 %v2078
    %v2161 = vunpack.c.l.b16 %v2079
    %v2162 = vunpack.c.h.b16 %v2079
    %v2163 = vunpack.c.l.b16 %v2080
    %v2164 = vunpack.c.h.b16 %v2080
    %v2165 = vunpack.c.l.b16 %v2081
    %v2166 = vunpack.c.h.b16 %v2081
    %v2167 = vunpack.c.l.b16 %v2082
    %v2168 = vunpack.c.h.b16 %v2082
    %v2169 = vunpack.c.l.b16 %v2083
    %v2170 = vunpack.c.h.b16 %v2083
    %v2171 = vunpack.c.l.b16 %v2084
    %v2172 = vunpack.c.h.b16 %v2084
    %v2173 = vunpack.c.l.b16 %v2085
    %v2174 = vunpack.c.h.b16 %v2085
    %v2175 = vunpack.c.l.b16 %v2086
    %v2176 = vunpack.c.h.b16 %v2086
    %v2177 = vunpack.c.l.b16 %v2087
    %v2178 = vunpack.c.h.b16 %v2087
    %v2179 = vunpack.c.l.b16 %v2088
    %v2180 = vunpack.c.h.b16 %v2088
    %v2181 = vunpack.c.l.b16 %v2089
    %v2182 = vunpack.c.h.b16 %v2089
    %v2183 = vunpack.c.l.b16 %v2090
    %v2184 = vunpack.c.h.b16 %v2090
    %v2185 = vunpack.c.l.b16 %v2091
    %v2186 = vunpack.c.h.b16 %v2091
    %v2187 = vunpack.c.l.b16 %v2092
    %v2188 = vunpack.c.h.b16 %v2092
    %v2189 = vpack.c.b16 %v2127, %v2125
    %v2190 = vpack.c.b16 %v2128, %v2126
    %v2191 = vpack.c.b16 %v2131, %v2129
    %v2192 = vpack.c.b16 %v2132, %v2130
    %v2193 = vpack.c.b16 %v2135, %v2133
    %v2194 = vpack.c.b16 %v2136, %v2134
    %v2195 = vpack.c.b16 %v2139, %v2137
    %v2196 = vpack.c.b16 %v2140, %v2138
    %v2197 = vpack.c.b16 %v2143, %v2141
    %v2198 = vpack.c.b16 %v2144, %v2142
    %v2199 = vpack.c.b16 %v2147, %v2145
    %v2200 = vpack.c.b16 %v2148, %v2146
    %v2201 = vpack.c.b16 %v2151, %v2149
    %v2202 = vpack.c.b16 %v2152, %v2150
    %v2203 = vpack.c.b16 %v2155, %v2153
    %v2204 = vpack.c.b16 %v2156, %v2154
    %v2205 = vpack.c.b16 %v2159, %v2157
    %v2206 = vpack.c.b16 %v2160, %v2158
    %v2207 = vpack.c.b16 %v2163, %v2161
    %v2208 = vpack.c.b16 %v2164, %v2162
    %v2209 = vpack.c.b16 %v2167, %v2165
    %v2210 = vpack.c.b16 %v2168, %v2166
    %v2211 = vpack.c.b16 %v2171, %v2169
    %v2212 = vpack.c.b16 %v2172, %v2170
    %v2213 = vpack.c.b16 %v2175, %v2173
    %v2214 = vpack.c.b16 %v2176, %v2174
    %v2215 = vpack.c.b16 %v2179, %v2177
    %v2216 = vpack.c.b16 %v2180, %v2178
    %v2217 = vpack.c.b16 %v2183, %v2181
    %v2218 = vpack.c.b16 %v2184, %v2182
    %v2219 = vpack.c.b16 %v2187, %v2185
    %v2220 = vpack.c.b16 %v2188, %v2186
    %2253 = vmatprep.subr.bf16.mxu0 %v2190
    %2254 = vmatpush1.bf16.msra.mxu0 %v2189
    %2255 = vmatprep.subr.bf16.mxu0 %v2192
    %2256 = vmatpush1.bf16.msra.mxu0 %v2191
    %2257 = vmatprep.subr.bf16.mxu0 %v2194
    %2258 = vmatpush1.bf16.msra.mxu0 %v2193
    %2259 = vmatprep.subr.bf16.mxu0 %v2196
    %2260 = vmatpush1.bf16.msra.mxu0 %v2195
    %2261 = vmatprep.subr.bf16.mxu0 %v2198
    %2262 = vmatpush1.bf16.msra.mxu0 %v2197
    %2263 = vmatprep.subr.bf16.mxu0 %v2200
    %2264 = vmatpush1.bf16.msra.mxu0 %v2199
    %2265 = vmatprep.subr.bf16.mxu0 %v2202
    %2266 = vmatpush1.bf16.msra.mxu0 %v2201
    %2267 = vmatprep.subr.bf16.mxu0 %v2204
    %2268 = vmatpush1.bf16.msra.mxu0 %v2203
    %2269 = vmatprep.subr.bf16.mxu0 %v2206
    %2270 = vmatpush1.bf16.msra.mxu0 %v2205
    %2271 = vmatprep.subr.bf16.mxu0 %v2208
    %2272 = vmatpush1.bf16.msra.mxu0 %v2207
    %2273 = vmatprep.subr.bf16.mxu0 %v2210
    %2274 = vmatpush1.bf16.msra.mxu0 %v2209
    %2275 = vmatprep.subr.bf16.mxu0 %v2212
    %2276 = vmatpush1.bf16.msra.mxu0 %v2211
    %2277 = vmatprep.subr.bf16.mxu0 %v2214
    %2278 = vmatpush1.bf16.msra.mxu0 %v2213
    %2279 = vmatprep.subr.bf16.mxu0 %v2216
    %2280 = vmatpush1.bf16.msra.mxu0 %v2215
    %2281 = vmatprep.subr.bf16.mxu0 %v2218
    %2282 = vmatpush1.bf16.msra.mxu0 %v2217
    %2283 = vmatprep.subr.bf16.mxu0 %v2220
    %2284 = vmatpush1.bf16.msra.mxu0 %v2219
    %2285 = vmatprep.mubr.bf16.mxu0 %v2059
    %2286 = vmatmul.mubr.bf16.gmra.mrb[0].mxu0 %v2058
    %v2287 = vpop.f32.mrb[0].mxu0
    %v2288 = vadd.f32 0.0, %v2287
    %v2289 = vpop.f32.mrb[0].mxu0
    %v2290 = vadd.f32 0.0, %v2289
    %v2291 = vpop.f32.mrb[0].mxu0
    %v2292 = vpop.f32.mrb[0].mxu0
    %2293 = vdwg.mxu0
    %v2294 = vadd.f32 %v2045, %v2288
    %v2295 = vadd.f32 %v2046, %v2290
    %s2296 = scalar_lea.vmem %s0, 72
    %v2297 = vld [vmem:[%s2296] sm:$0xff]
    %2298 = vset.pattern.permute.xlu0 0
    %2299 = vperm.xlu0 %2298, %v2297
    %v2300 = vpop.permute.xlu0 %2299
    %vm2301 = vcmp.eq.s32.totalorder %v2300, %v59
    %vm2302 = vcmp.eq.s32.totalorder %v2300, %v60
    %v2303 = vsel %vm2301, 1, 0
    %v2304 = vsel %vm2302, 1, 0
    %v2305 = vcvt.s32.f32 %v2303
    %v2306 = vcvt.s32.f32 %v2304
    %v2307 = vpack.c.bf16 %v2305, %v2305
    %v2308 = vpack.c.bf16 %v2306, %v2306
    %s2309 = scalar_lea.vmem [#allocation2], 2304
    %v2310 = vld [vmem:[%s2309] sm:$0xff]
    %v2311 = vld [vmem:[%s2309 + $0x8] sm:$0xff]
    %v2312 = vld [vmem:[%s2309 + $0x10] sm:$0xff]
    %v2313 = vld [vmem:[%s2309 + $0x18] sm:$0xff]
    %v2314 = vld [vmem:[%s2309 + $0x20] sm:$0xff]
    %v2315 = vld [vmem:[%s2309 + $0x28] sm:$0xff]
    %v2316 = vld [vmem:[%s2309 + $0x30] sm:$0xff]
    %v2317 = vld [vmem:[%s2309 + $0x38] sm:$0xff]
    %v2318 = vld [vmem:[%s2309 + $0x40] sm:$0xff]
    %v2319 = vld [vmem:[%s2309 + $0x48] sm:$0xff]
    %v2320 = vld [vmem:[%s2309 + $0x50] sm:$0xff]
    %v2321 = vld [vmem:[%s2309 + $0x58] sm:$0xff]
    %v2322 = vld [vmem:[%s2309 + $0x60] sm:$0xff]
    %v2323 = vld [vmem:[%s2309 + $0x68] sm:$0xff]
    %v2324 = vld [vmem:[%s2309 + $0x70] sm:$0xff]
    %v2325 = vld [vmem:[%s2309 + $0x78] sm:$0xff]
    %v2326 = vld [vmem:[%s2309 + $0x80] sm:$0xff]
    %v2327 = vld [vmem:[%s2309 + $0x88] sm:$0xff]
    %v2328 = vld [vmem:[%s2309 + $0x90] sm:$0xff]
    %v2329 = vld [vmem:[%s2309 + $0x98] sm:$0xff]
    %v2330 = vld [vmem:[%s2309 + $0xa0] sm:$0xff]
    %v2331 = vld [vmem:[%s2309 + $0xa8] sm:$0xff]
    %v2332 = vld [vmem:[%s2309 + $0xb0] sm:$0xff]
    %v2333 = vld [vmem:[%s2309 + $0xb8] sm:$0xff]
    %v2334 = vld [vmem:[%s2309 + $0xc0] sm:$0xff]
    %v2335 = vld [vmem:[%s2309 + $0xc8] sm:$0xff]
    %v2336 = vld [vmem:[%s2309 + $0xd0] sm:$0xff]
    %v2337 = vld [vmem:[%s2309 + $0xd8] sm:$0xff]
    %v2338 = vld [vmem:[%s2309 + $0xe0] sm:$0xff]
    %v2339 = vld [vmem:[%s2309 + $0xe8] sm:$0xff]
    %v2340 = vld [vmem:[%s2309 + $0xf0] sm:$0xff]
    %v2341 = vld [vmem:[%s2309 + $0xf8] sm:$0xff]
    %v2374 = vunpack.c.l.b16 %v2310
    %v2375 = vunpack.c.h.b16 %v2310
    %v2376 = vunpack.c.l.b16 %v2311
    %v2377 = vunpack.c.h.b16 %v2311
    %v2378 = vunpack.c.l.b16 %v2312
    %v2379 = vunpack.c.h.b16 %v2312
    %v2380 = vunpack.c.l.b16 %v2313
    %v2381 = vunpack.c.h.b16 %v2313
    %v2382 = vunpack.c.l.b16 %v2314
    %v2383 = vunpack.c.h.b16 %v2314
    %v2384 = vunpack.c.l.b16 %v2315
    %v2385 = vunpack.c.h.b16 %v2315
    %v2386 = vunpack.c.l.b16 %v2316
    %v2387 = vunpack.c.h.b16 %v2316
    %v2388 = vunpack.c.l.b16 %v2317
    %v2389 = vunpack.c.h.b16 %v2317
    %v2390 = vunpack.c.l.b16 %v2318
    %v2391 = vunpack.c.h.b16 %v2318
    %v2392 = vunpack.c.l.b16 %v2319
    %v2393 = vunpack.c.h.b16 %v2319
    %v2394 = vunpack.c.l.b16 %v2320
    %v2395 = vunpack.c.h.b16 %v2320
    %v2396 = vunpack.c.l.b16 %v2321
    %v2397 = vunpack.c.h.b16 %v2321
    %v2398 = vunpack.c.l.b16 %v2322
    %v2399 = vunpack.c.h.b16 %v2322
    %v2400 = vunpack.c.l.b16 %v2323
    %v2401 = vunpack.c.h.b16 %v2323
    %v2402 = vunpack.c.l.b16 %v2324
    %v2403 = vunpack.c.h.b16 %v2324
    %v2404 = vunpack.c.l.b16 %v2325
    %v2405 = vunpack.c.h.b16 %v2325
    %v2406 = vunpack.c.l.b16 %v2326
    %v2407 = vunpack.c.h.b16 %v2326
    %v2408 = vunpack.c.l.b16 %v2327
    %v2409 = vunpack.c.h.b16 %v2327
    %v2410 = vunpack.c.l.b16 %v2328
    %v2411 = vunpack.c.h.b16 %v2328
    %v2412 = vunpack.c.l.b16 %v2329
    %v2413 = vunpack.c.h.b16 %v2329
    %v2414 = vunpack.c.l.b16 %v2330
    %v2415 = vunpack.c.h.b16 %v2330
    %v2416 = vunpack.c.l.b16 %v2331
    %v2417 = vunpack.c.h.b16 %v2331
    %v2418 = vunpack.c.l.b16 %v2332
    %v2419 = vunpack.c.h.b16 %v2332
    %v2420 = vunpack.c.l.b16 %v2333
    %v2421 = vunpack.c.h.b16 %v2333
    %v2422 = vunpack.c.l.b16 %v2334
    %v2423 = vunpack.c.h.b16 %v2334
    %v2424 = vunpack.c.l.b16 %v2335
    %v2425 = vunpack.c.h.b16 %v2335
    %v2426 = vunpack.c.l.b16 %v2336
    %v2427 = vunpack.c.h.b16 %v2336
    %v2428 = vunpack.c.l.b16 %v2337
    %v2429 = vunpack.c.h.b16 %v2337
    %v2430 = vunpack.c.l.b16 %v2338
    %v2431 = vunpack.c.h.b16 %v2338
    %v2432 = vunpack.c.l.b16 %v2339
    %v2433 = vunpack.c.h.b16 %v2339
    %v2434 = vunpack.c.l.b16 %v2340
    %v2435 = vunpack.c.h.b16 %v2340
    %v2436 = vunpack.c.l.b16 %v2341
    %v2437 = vunpack.c.h.b16 %v2341
    %v2438 = vpack.c.b16 %v2376, %v2374
    %v2439 = vpack.c.b16 %v2377, %v2375
    %v2440 = vpack.c.b16 %v2380, %v2378
    %v2441 = vpack.c.b16 %v2381, %v2379
    %v2442 = vpack.c.b16 %v2384, %v2382
    %v2443 = vpack.c.b16 %v2385, %v2383
    %v2444 = vpack.c.b16 %v2388, %v2386
    %v2445 = vpack.c.b16 %v2389, %v2387
    %v2446 = vpack.c.b16 %v2392, %v2390
    %v2447 = vpack.c.b16 %v2393, %v2391
    %v2448 = vpack.c.b16 %v2396, %v2394
    %v2449 = vpack.c.b16 %v2397, %v2395
    %v2450 = vpack.c.b16 %v2400, %v2398
    %v2451 = vpack.c.b16 %v2401, %v2399
    %v2452 = vpack.c.b16 %v2404, %v2402
    %v2453 = vpack.c.b16 %v2405, %v2403
    %v2454 = vpack.c.b16 %v2408, %v2406
    %v2455 = vpack.c.b16 %v2409, %v2407
    %v2456 = vpack.c.b16 %v2412, %v2410
    %v2457 = vpack.c.b16 %v2413, %v2411
    %v2458 = vpack.c.b16 %v2416, %v2414
    %v2459 = vpack.c.b16 %v2417, %v2415
    %v2460 = vpack.c.b16 %v2420, %v2418
    %v2461 = vpack.c.b16 %v2421, %v2419
    %v2462 = vpack.c.b16 %v2424, %v2422
    %v2463 = vpack.c.b16 %v2425, %v2423
    %v2464 = vpack.c.b16 %v2428, %v2426
    %v2465 = vpack.c.b16 %v2429, %v2427
    %v2466 = vpack.c.b16 %v2432, %v2430
    %v2467 = vpack.c.b16 %v2433, %v2431
    %v2468 = vpack.c.b16 %v2436, %v2434
    %v2469 = vpack.c.b16 %v2437, %v2435
    %2502 = vmatprep.subr.bf16.mxu0 %v2439
    %2503 = vmatpush1.bf16.msra.mxu0 %v2438
    %2504 = vmatprep.subr.bf16.mxu0 %v2441
    %2505 = vmatpush1.bf16.msra.mxu0 %v2440
    %2506 = vmatprep.subr.bf16.mxu0 %v2443
    %2507 = vmatpush1.bf16.msra.mxu0 %v2442
    %2508 = vmatprep.subr.bf16.mxu0 %v2445
    %2509 = vmatpush1.bf16.msra.mxu0 %v2444
    %2510 = vmatprep.subr.bf16.mxu0 %v2447
    %2511 = vmatpush1.bf16.msra.mxu0 %v2446
    %2512 = vmatprep.subr.bf16.mxu0 %v2449
    %2513 = vmatpush1.bf16.msra.mxu0 %v2448
    %2514 = vmatprep.subr.bf16.mxu0 %v2451
    %2515 = vmatpush1.bf16.msra.mxu0 %v2450
    %2516 = vmatprep.subr.bf16.mxu0 %v2453
    %2517 = vmatpush1.bf16.msra.mxu0 %v2452
    %2518 = vmatprep.subr.bf16.mxu0 %v2455
    %2519 = vmatpush1.bf16.msra.mxu0 %v2454
    %2520 = vmatprep.subr.bf16.mxu0 %v2457
    %2521 = vmatpush1.bf16.msra.mxu0 %v2456
    %2522 = vmatprep.subr.bf16.mxu0 %v2459
    %2523 = vmatpush1.bf16.msra.mxu0 %v2458
    %2524 = vmatprep.subr.bf16.mxu0 %v2461
    %2525 = vmatpush1.bf16.msra.mxu0 %v2460
    %2526 = vmatprep.subr.bf16.mxu0 %v2463
    %2527 = vmatpush1.bf16.msra.mxu0 %v2462
    %2528 = vmatprep.subr.bf16.mxu0 %v2465
    %2529 = vmatpush1.bf16.msra.mxu0 %v2464
    %2530 = vmatprep.subr.bf16.mxu0 %v2467
    %2531 = vmatpush1.bf16.msra.mxu0 %v2466
    %2532 = vmatprep.subr.bf16.mxu0 %v2469
    %2533 = vmatpush1.bf16.msra.mxu0 %v2468
    %2534 = vmatprep.mubr.bf16.mxu0 %v2308
    %2535 = vmatmul.mubr.bf16.gmra.mrb[0].mxu0 %v2307
    %v2536 = vpop.f32.mrb[0].mxu0
    %v2537 = vadd.f32 0.0, %v2536
    %v2538 = vpop.f32.mrb[0].mxu0
    %v2539 = vadd.f32 0.0, %v2538
    %v2540 = vpop.f32.mrb[0].mxu0
    %v2541 = vpop.f32.mrb[0].mxu0
    %2542 = vdwg.mxu0
    %v2543 = vadd.f32 %v2294, %v2537
    %v2544 = vadd.f32 %v2295, %v2539
    %s2545 = scalar_lea.vmem %s0, 80
    %v2546 = vld [vmem:[%s2545] sm:$0xff]
    %2547 = vset.pattern.permute.xlu0 0
    %2548 = vperm.xlu0 %2547, %v2546
    %v2549 = vpop.permute.xlu0 %2548
    %vm2550 = vcmp.eq.s32.totalorder %v2549, %v59
    %vm2551 = vcmp.eq.s32.totalorder %v2549, %v60
    %v2552 = vsel %vm2550, 1, 0
    %v2553 = vsel %vm2551, 1, 0
    %v2554 = vcvt.s32.f32 %v2552
    %v2555 = vcvt.s32.f32 %v2553
    %v2556 = vpack.c.bf16 %v2554, %v2554
    %v2557 = vpack.c.bf16 %v2555, %v2555
    %s2558 = scalar_lea.vmem [#allocation2], 2560
    %v2559 = vld [vmem:[%s2558] sm:$0xff]
    %v2560 = vld [vmem:[%s2558 + $0x8] sm:$0xff]
    %v2561 = vld [vmem:[%s2558 + $0x10] sm:$0xff]
    %v2562 = vld [vmem:[%s2558 + $0x18] sm:$0xff]
    %v2563 = vld [vmem:[%s2558 + $0x20] sm:$0xff]
    %v2564 = vld [vmem:[%s2558 + $0x28] sm:$0xff]
    %v2565 = vld [vmem:[%s2558 + $0x30] sm:$0xff]
    %v2566 = vld [vmem:[%s2558 + $0x38] sm:$0xff]
    %v2567 = vld [vmem:[%s2558 + $0x40] sm:$0xff]
    %v2568 = vld [vmem:[%s2558 + $0x48] sm:$0xff]
    %v2569 = vld [vmem:[%s2558 + $0x50] sm:$0xff]
    %v2570 = vld [vmem:[%s2558 + $0x58] sm:$0xff]
    %v2571 = vld [vmem:[%s2558 + $0x60] sm:$0xff]
    %v2572 = vld [vmem:[%s2558 + $0x68] sm:$0xff]
    %v2573 = vld [vmem:[%s2558 + $0x70] sm:$0xff]
    %v2574 = vld [vmem:[%s2558 + $0x78] sm:$0xff]
    %v2575 = vld [vmem:[%s2558 + $0x80] sm:$0xff]
    %v2576 = vld [vmem:[%s2558 + $0x88] sm:$0xff]
    %v2577 = vld [vmem:[%s2558 + $0x90] sm:$0xff]
    %v2578 = vld [vmem:[%s2558 + $0x98] sm:$0xff]
    %v2579 = vld [vmem:[%s2558 + $0xa0] sm:$0xff]
    %v2580 = vld [vmem:[%s2558 + $0xa8] sm:$0xff]
    %v2581 = vld [vmem:[%s2558 + $0xb0] sm:$0xff]
    %v2582 = vld [vmem:[%s2558 + $0xb8] sm:$0xff]
    %v2583 = vld [vmem:[%s2558 + $0xc0] sm:$0xff]
    %v2584 = vld [vmem:[%s2558 + $0xc8] sm:$0xff]
    %v2585 = vld [vmem:[%s2558 + $0xd0] sm:$0xff]
    %v2586 = vld [vmem:[%s2558 + $0xd8] sm:$0xff]
    %v2587 = vld [vmem:[%s2558 + $0xe0] sm:$0xff]
    %v2588 = vld [vmem:[%s2558 + $0xe8] sm:$0xff]
    %v2589 = vld [vmem:[%s2558 + $0xf0] sm:$0xff]
    %v2590 = vld [vmem:[%s2558 + $0xf8] sm:$0xff]
    %v2623 = vunpack.c.l.b16 %v2559
    %v2624 = vunpack.c.h.b16 %v2559
    %v2625 = vunpack.c.l.b16 %v2560
    %v2626 = vunpack.c.h.b16 %v2560
    %v2627 = vunpack.c.l.b16 %v2561
    %v2628 = vunpack.c.h.b16 %v2561
    %v2629 = vunpack.c.l.b16 %v2562
    %v2630 = vunpack.c.h.b16 %v2562
    %v2631 = vunpack.c.l.b16 %v2563
    %v2632 = vunpack.c.h.b16 %v2563
    %v2633 = vunpack.c.l.b16 %v2564
    %v2634 = vunpack.c.h.b16 %v2564
    %v2635 = vunpack.c.l.b16 %v2565
    %v2636 = vunpack.c.h.b16 %v2565
    %v2637 = vunpack.c.l.b16 %v2566
    %v2638 = vunpack.c.h.b16 %v2566
    %v2639 = vunpack.c.l.b16 %v2567
    %v2640 = vunpack.c.h.b16 %v2567
    %v2641 = vunpack.c.l.b16 %v2568
    %v2642 = vunpack.c.h.b16 %v2568
    %v2643 = vunpack.c.l.b16 %v2569
    %v2644 = vunpack.c.h.b16 %v2569
    %v2645 = vunpack.c.l.b16 %v2570
    %v2646 = vunpack.c.h.b16 %v2570
    %v2647 = vunpack.c.l.b16 %v2571
    %v2648 = vunpack.c.h.b16 %v2571
    %v2649 = vunpack.c.l.b16 %v2572
    %v2650 = vunpack.c.h.b16 %v2572
    %v2651 = vunpack.c.l.b16 %v2573
    %v2652 = vunpack.c.h.b16 %v2573
    %v2653 = vunpack.c.l.b16 %v2574
    %v2654 = vunpack.c.h.b16 %v2574
    %v2655 = vunpack.c.l.b16 %v2575
    %v2656 = vunpack.c.h.b16 %v2575
    %v2657 = vunpack.c.l.b16 %v2576
    %v2658 = vunpack.c.h.b16 %v2576
    %v2659 = vunpack.c.l.b16 %v2577
    %v2660 = vunpack.c.h.b16 %v2577
    %v2661 = vunpack.c.l.b16 %v2578
    %v2662 = vunpack.c.h.b16 %v2578
    %v2663 = vunpack.c.l.b16 %v2579
    %v2664 = vunpack.c.h.b16 %v2579
    %v2665 = vunpack.c.l.b16 %v2580
    %v2666 = vunpack.c.h.b16 %v2580
    %v2667 = vunpack.c.l.b16 %v2581
    %v2668 = vunpack.c.h.b16 %v2581
    %v2669 = vunpack.c.l.b16 %v2582
    %v2670 = vunpack.c.h.b16 %v2582
    %v2671 = vunpack.c.l.b16 %v2583
    %v2672 = vunpack.c.h.b16 %v2583
    %v2673 = vunpack.c.l.b16 %v2584
    %v2674 = vunpack.c.h.b16 %v2584
    %v2675 = vunpack.c.l.b16 %v2585
    %v2676 = vunpack.c.h.b16 %v2585
    %v2677 = vunpack.c.l.b16 %v2586
    %v2678 = vunpack.c.h.b16 %v2586
    %v2679 = vunpack.c.l.b16 %v2587
    %v2680 = vunpack.c.h.b16 %v2587
    %v2681 = vunpack.c.l.b16 %v2588
    %v2682 = vunpack.c.h.b16 %v2588
    %v2683 = vunpack.c.l.b16 %v2589
    %v2684 = vunpack.c.h.b16 %v2589
    %v2685 = vunpack.c.l.b16 %v2590
    %v2686 = vunpack.c.h.b16 %v2590
    %v2687 = vpack.c.b16 %v2625, %v2623
    %v2688 = vpack.c.b16 %v2626, %v2624
    %v2689 = vpack.c.b16 %v2629, %v2627
    %v2690 = vpack.c.b16 %v2630, %v2628
    %v2691 = vpack.c.b16 %v2633, %v2631
    %v2692 = vpack.c.b16 %v2634, %v2632
    %v2693 = vpack.c.b16 %v2637, %v2635
    %v2694 = vpack.c.b16 %v2638, %v2636
    %v2695 = vpack.c.b16 %v2641, %v2639
    %v2696 = vpack.c.b16 %v2642, %v2640
    %v2697 = vpack.c.b16 %v2645, %v2643
    %v2698 = vpack.c.b16 %v2646, %v2644
    %v2699 = vpack.c.b16 %v2649, %v2647
    %v2700 = vpack.c.b16 %v2650, %v2648
    %v2701 = vpack.c.b16 %v2653, %v2651
    %v2702 = vpack.c.b16 %v2654, %v2652
    %v2703 = vpack.c.b16 %v2657, %v2655
    %v2704 = vpack.c.b16 %v2658, %v2656
    %v2705 = vpack.c.b16 %v2661, %v2659
    %v2706 = vpack.c.b16 %v2662, %v2660
    %v2707 = vpack.c.b16 %v2665, %v2663
    %v2708 = vpack.c.b16 %v2666, %v2664
    %v2709 = vpack.c.b16 %v2669, %v2667
    %v2710 = vpack.c.b16 %v2670, %v2668
    %v2711 = vpack.c.b16 %v2673, %v2671
    %v2712 = vpack.c.b16 %v2674, %v2672
    %v2713 = vpack.c.b16 %v2677, %v2675
    %v2714 = vpack.c.b16 %v2678, %v2676
    %v2715 = vpack.c.b16 %v2681, %v2679
    %v2716 = vpack.c.b16 %v2682, %v2680
    %v2717 = vpack.c.b16 %v2685, %v2683
    %v2718 = vpack.c.b16 %v2686, %v2684
    %2751 = vmatprep.subr.bf16.mxu0 %v2688
    %2752 = vmatpush1.bf16.msra.mxu0 %v2687
    %2753 = vmatprep.subr.bf16.mxu0 %v2690
    %2754 = vmatpush1.bf16.msra.mxu0 %v2689
    %2755 = vmatprep.subr.bf16.mxu0 %v2692
    %2756 = vmatpush1.bf16.msra.mxu0 %v2691
    %2757 = vmatprep.subr.bf16.mxu0 %v2694
    %2758 = vmatpush1.bf16.msra.mxu0 %v2693
    %2759 = vmatprep.subr.bf16.mxu0 %v2696
    %2760 = vmatpush1.bf16.msra.mxu0 %v2695
    %2761 = vmatprep.subr.bf16.mxu0 %v2698
    %2762 = vmatpush1.bf16.msra.mxu0 %v2697
    %2763 = vmatprep.subr.bf16.mxu0 %v2700
    %2764 = vmatpush1.bf16.msra.mxu0 %v2699
    %2765 = vmatprep.subr.bf16.mxu0 %v2702
    %2766 = vmatpush1.bf16.msra.mxu0 %v2701
    %2767 = vmatprep.subr.bf16.mxu0 %v2704
    %2768 = vmatpush1.bf16.msra.mxu0 %v2703
    %2769 = vmatprep.subr.bf16.mxu0 %v2706
    %2770 = vmatpush1.bf16.msra.mxu0 %v2705
    %2771 = vmatprep.subr.bf16.mxu0 %v2708
    %2772 = vmatpush1.bf16.msra.mxu0 %v2707
    %2773 = vmatprep.subr.bf16.mxu0 %v2710
    %2774 = vmatpush1.bf16.msra.mxu0 %v2709
    %2775 = vmatprep.subr.bf16.mxu0 %v2712
    %2776 = vmatpush1.bf16.msra.mxu0 %v2711
    %2777 = vmatprep.subr.bf16.mxu0 %v2714
    %2778 = vmatpush1.bf16.msra.mxu0 %v2713
    %2779 = vmatprep.subr.bf16.mxu0 %v2716
    %2780 = vmatpush1.bf16.msra.mxu0 %v2715
    %2781 = vmatprep.subr.bf16.mxu0 %v2718
    %2782 = vmatpush1.bf16.msra.mxu0 %v2717
    %2783 = vmatprep.mubr.bf16.mxu0 %v2557
    %2784 = vmatmul.mubr.bf16.gmra.mrb[0].mxu0 %v2556
    %v2785 = vpop.f32.mrb[0].mxu0
    %v2786 = vadd.f32 0.0, %v2785
    %v2787 = vpop.f32.mrb[0].mxu0
    %v2788 = vadd.f32 0.0, %v2787
    %v2789 = vpop.f32.mrb[0].mxu0
    %v2790 = vpop.f32.mrb[0].mxu0
    %2791 = vdwg.mxu0
    %v2792 = vadd.f32 %v2543, %v2786
    %v2793 = vadd.f32 %v2544, %v2788
    %s2794 = scalar_lea.vmem %s0, 88
    %v2795 = vld [vmem:[%s2794] sm:$0xff]
    %2796 = vset.pattern.permute.xlu0 0
    %2797 = vperm.xlu0 %2796, %v2795
    %v2798 = vpop.permute.xlu0 %2797
    %vm2799 = vcmp.eq.s32.totalorder %v2798, %v59
    %vm2800 = vcmp.eq.s32.totalorder %v2798, %v60
    %v2801 = vsel %vm2799, 1, 0
    %v2802 = vsel %vm2800, 1, 0
    %v2803 = vcvt.s32.f32 %v2801
    %v2804 = vcvt.s32.f32 %v2802
    %v2805 = vpack.c.bf16 %v2803, %v2803
    %v2806 = vpack.c.bf16 %v2804, %v2804
    %s2807 = scalar_lea.vmem [#allocation2], 2816
    %v2808 = vld [vmem:[%s2807] sm:$0xff]
    %v2809 = vld [vmem:[%s2807 + $0x8] sm:$0xff]
    %v2810 = vld [vmem:[%s2807 + $0x10] sm:$0xff]
    %v2811 = vld [vmem:[%s2807 + $0x18] sm:$0xff]
    %v2812 = vld [vmem:[%s2807 + $0x20] sm:$0xff]
    %v2813 = vld [vmem:[%s2807 + $0x28] sm:$0xff]
    %v2814 = vld [vmem:[%s2807 + $0x30] sm:$0xff]
    %v2815 = vld [vmem:[%s2807 + $0x38] sm:$0xff]
    %v2816 = vld [vmem:[%s2807 + $0x40] sm:$0xff]
    %v2817 = vld [vmem:[%s2807 + $0x48] sm:$0xff]
    %v2818 = vld [vmem:[%s2807 + $0x50] sm:$0xff]
    %v2819 = vld [vmem:[%s2807 + $0x58] sm:$0xff]
    %v2820 = vld [vmem:[%s2807 + $0x60] sm:$0xff]
    %v2821 = vld [vmem:[%s2807 + $0x68] sm:$0xff]
    %v2822 = vld [vmem:[%s2807 + $0x70] sm:$0xff]
    %v2823 = vld [vmem:[%s2807 + $0x78] sm:$0xff]
    %v2824 = vld [vmem:[%s2807 + $0x80] sm:$0xff]
    %v2825 = vld [vmem:[%s2807 + $0x88] sm:$0xff]
    %v2826 = vld [vmem:[%s2807 + $0x90] sm:$0xff]
    %v2827 = vld [vmem:[%s2807 + $0x98] sm:$0xff]
    %v2828 = vld [vmem:[%s2807 + $0xa0] sm:$0xff]
    %v2829 = vld [vmem:[%s2807 + $0xa8] sm:$0xff]
    %v2830 = vld [vmem:[%s2807 + $0xb0] sm:$0xff]
    %v2831 = vld [vmem:[%s2807 + $0xb8] sm:$0xff]
    %v2832 = vld [vmem:[%s2807 + $0xc0] sm:$0xff]
    %v2833 = vld [vmem:[%s2807 + $0xc8] sm:$0xff]
    %v2834 = vld [vmem:[%s2807 + $0xd0] sm:$0xff]
    %v2835 = vld [vmem:[%s2807 + $0xd8] sm:$0xff]
    %v2836 = vld [vmem:[%s2807 + $0xe0] sm:$0xff]
    %v2837 = vld [vmem:[%s2807 + $0xe8] sm:$0xff]
    %v2838 = vld [vmem:[%s2807 + $0xf0] sm:$0xff]
    %v2839 = vld [vmem:[%s2807 + $0xf8] sm:$0xff]
    %v2872 = vunpack.c.l.b16 %v2808
    %v2873 = vunpack.c.h.b16 %v2808
    %v2874 = vunpack.c.l.b16 %v2809
    %v2875 = vunpack.c.h.b16 %v2809
    %v2876 = vunpack.c.l.b16 %v2810
    %v2877 = vunpack.c.h.b16 %v2810
    %v2878 = vunpack.c.l.b16 %v2811
    %v2879 = vunpack.c.h.b16 %v2811
    %v2880 = vunpack.c.l.b16 %v2812
    %v2881 = vunpack.c.h.b16 %v2812
    %v2882 = vunpack.c.l.b16 %v2813
    %v2883 = vunpack.c.h.b16 %v2813
    %v2884 = vunpack.c.l.b16 %v2814
    %v2885 = vunpack.c.h.b16 %v2814
    %v2886 = vunpack.c.l.b16 %v2815
    %v2887 = vunpack.c.h.b16 %v2815
    %v2888 = vunpack.c.l.b16 %v2816
    %v2889 = vunpack.c.h.b16 %v2816
    %v2890 = vunpack.c.l.b16 %v2817
    %v2891 = vunpack.c.h.b16 %v2817
    %v2892 = vunpack.c.l.b16 %v2818
    %v2893 = vunpack.c.h.b16 %v2818
    %v2894 = vunpack.c.l.b16 %v2819
    %v2895 = vunpack.c.h.b16 %v2819
    %v2896 = vunpack.c.l.b16 %v2820
    %v2897 = vunpack.c.h.b16 %v2820
    %v2898 = vunpack.c.l.b16 %v2821
    %v2899 = vunpack.c.h.b16 %v2821
    %v2900 = vunpack.c.l.b16 %v2822
    %v2901 = vunpack.c.h.b16 %v2822
    %v2902 = vunpack.c.l.b16 %v2823
    %v2903 = vunpack.c.h.b16 %v2823
    %v2904 = vunpack.c.l.b16 %v2824
    %v2905 = vunpack.c.h.b16 %v2824
    %v2906 = vunpack.c.l.b16 %v2825
    %v2907 = vunpack.c.h.b16 %v2825
    %v2908 = vunpack.c.l.b16 %v2826
    %v2909 = vunpack.c.h.b16 %v2826
    %v2910 = vunpack.c.l.b16 %v2827
    %v2911 = vunpack.c.h.b16 %v2827
    %v2912 = vunpack.c.l.b16 %v2828
    %v2913 = vunpack.c.h.b16 %v2828
    %v2914 = vunpack.c.l.b16 %v2829
    %v2915 = vunpack.c.h.b16 %v2829
    %v2916 = vunpack.c.l.b16 %v2830
    %v2917 = vunpack.c.h.b16 %v2830
    %v2918 = vunpack.c.l.b16 %v2831
    %v2919 = vunpack.c.h.b16 %v2831
    %v2920 = vunpack.c.l.b16 %v2832
    %v2921 = vunpack.c.h.b16 %v2832
    %v2922 = vunpack.c.l.b16 %v2833
    %v2923 = vunpack.c.h.b16 %v2833
    %v2924 = vunpack.c.l.b16 %v2834
    %v2925 = vunpack.c.h.b16 %v2834
    %v2926 = vunpack.c.l.b16 %v2835
    %v2927 = vunpack.c.h.b16 %v2835
    %v2928 = vunpack.c.l.b16 %v2836
    %v2929 = vunpack.c.h.b16 %v2836
    %v2930 = vunpack.c.l.b16 %v2837
    %v2931 = vunpack.c.h.b16 %v2837
    %v2932 = vunpack.c.l.b16 %v2838
    %v2933 = vunpack.c.h.b16 %v2838
    %v2934 = vunpack.c.l.b16 %v2839
    %v2935 = vunpack.c.h.b16 %v2839
    %v2936 = vpack.c.b16 %v2874, %v2872
    %v2937 = vpack.c.b16 %v2875, %v2873
    %v2938 = vpack.c.b16 %v2878, %v2876
    %v2939 = vpack.c.b16 %v2879, %v2877
    %v2940 = vpack.c.b16 %v2882, %v2880
    %v2941 = vpack.c.b16 %v2883, %v2881
    %v2942 = vpack.c.b16 %v2886, %v2884
    %v2943 = vpack.c.b16 %v2887, %v2885
    %v2944 = vpack.c.b16 %v2890, %v2888
    %v2945 = vpack.c.b16 %v2891, %v2889
    %v2946 = vpack.c.b16 %v2894, %v2892
    %v2947 = vpack.c.b16 %v2895, %v2893
    %v2948 = vpack.c.b16 %v2898, %v2896
    %v2949 = vpack.c.b16 %v2899, %v2897
    %v2950 = vpack.c.b16 %v2902, %v2900
    %v2951 = vpack.c.b16 %v2903, %v2901
    %v2952 = vpack.c.b16 %v2906, %v2904
    %v2953 = vpack.c.b16 %v2907, %v2905
    %v2954 = vpack.c.b16 %v2910, %v2908
    %v2955 = vpack.c.b16 %v2911, %v2909
    %v2956 = vpack.c.b16 %v2914, %v2912
    %v2957 = vpack.c.b16 %v2915, %v2913
    %v2958 = vpack.c.b16 %v2918, %v2916
    %v2959 = vpack.c.b16 %v2919, %v2917
    %v2960 = vpack.c.b16 %v2922, %v2920
    %v2961 = vpack.c.b16 %v2923, %v2921
    %v2962 = vpack.c.b16 %v2926, %v2924
    %v2963 = vpack.c.b16 %v2927, %v2925
    %v2964 = vpack.c.b16 %v2930, %v2928
    %v2965 = vpack.c.b16 %v2931, %v2929
    %v2966 = vpack.c.b16 %v2934, %v2932
    %v2967 = vpack.c.b16 %v2935, %v2933
    %3000 = vmatprep.subr.bf16.mxu0 %v2937
    %3001 = vmatpush1.bf16.msra.mxu0 %v2936
    %3002 = vmatprep.subr.bf16.mxu0 %v2939
    %3003 = vmatpush1.bf16.msra.mxu0 %v2938
    %3004 = vmatprep.subr.bf16.mxu0 %v2941
    %3005 = vmatpush1.bf16.msra.mxu0 %v2940
    %3006 = vmatprep.subr.bf16.mxu0 %v2943
    %3007 = vmatpush1.bf16.msra.mxu0 %v2942
    %3008 = vmatprep.subr.bf16.mxu0 %v2945
    %3009 = vmatpush1.bf16.msra.mxu0 %v2944
    %3010 = vmatprep.subr.bf16.mxu0 %v2947
    %3011 = vmatpush1.bf16.msra.mxu0 %v2946
    %3012 = vmatprep.subr.bf16.mxu0 %v2949
    %3013 = vmatpush1.bf16.msra.mxu0 %v2948
    %3014 = vmatprep.subr.bf16.mxu0 %v2951
    %3015 = vmatpush1.bf16.msra.mxu0 %v2950
    %3016 = vmatprep.subr.bf16.mxu0 %v2953
    %3017 = vmatpush1.bf16.msra.mxu0 %v2952
    %3018 = vmatprep.subr.bf16.mxu0 %v2955
    %3019 = vmatpush1.bf16.msra.mxu0 %v2954
    %3020 = vmatprep.subr.bf16.mxu0 %v2957
    %3021 = vmatpush1.bf16.msra.mxu0 %v2956
    %3022 = vmatprep.subr.bf16.mxu0 %v2959
    %3023 = vmatpush1.bf16.msra.mxu0 %v2958
    %3024 = vmatprep.subr.bf16.mxu0 %v2961
    %3025 = vmatpush1.bf16.msra.mxu0 %v2960
    %3026 = vmatprep.subr.bf16.mxu0 %v2963
    %3027 = vmatpush1.bf16.msra.mxu0 %v2962
    %3028 = vmatprep.subr.bf16.mxu0 %v2965
    %3029 = vmatpush1.bf16.msra.mxu0 %v2964
    %3030 = vmatprep.subr.bf16.mxu0 %v2967
    %3031 = vmatpush1.bf16.msra.mxu0 %v2966
    %3032 = vmatprep.mubr.bf16.mxu0 %v2806
    %3033 = vmatmul.mubr.bf16.gmra.mrb[0].mxu0 %v2805
    %v3034 = vpop.f32.mrb[0].mxu0
    %v3035 = vadd.f32 0.0, %v3034
    %v3036 = vpop.f32.mrb[0].mxu0
    %v3037 = vadd.f32 0.0, %v3036
    %v3038 = vpop.f32.mrb[0].mxu0
    %v3039 = vpop.f32.mrb[0].mxu0
    %3040 = vdwg.mxu0
    %v3041 = vadd.f32 %v2792, %v3035
    %v3042 = vadd.f32 %v2793, %v3037
    %s3043 = scalar_lea.vmem %s0, 96
    %v3044 = vld [vmem:[%s3043] sm:$0xff]
    %3045 = vset.pattern.permute.xlu0 0
    %3046 = vperm.xlu0 %3045, %v3044
    %v3047 = vpop.permute.xlu0 %3046
    %vm3048 = vcmp.eq.s32.totalorder %v3047, %v59
    %vm3049 = vcmp.eq.s32.totalorder %v3047, %v60
    %v3050 = vsel %vm3048, 1, 0
    %v3051 = vsel %vm3049, 1, 0
    %v3052 = vcvt.s32.f32 %v3050
    %v3053 = vcvt.s32.f32 %v3051
    %v3054 = vpack.c.bf16 %v3052, %v3052
    %v3055 = vpack.c.bf16 %v3053, %v3053
    %s3056 = scalar_lea.vmem [#allocation2], 3072
    %v3057 = vld [vmem:[%s3056] sm:$0xff]
    %v3058 = vld [vmem:[%s3056 + $0x8] sm:$0xff]
    %v3059 = vld [vmem:[%s3056 + $0x10] sm:$0xff]
    %v3060 = vld [vmem:[%s3056 + $0x18] sm:$0xff]
    %v3061 = vld [vmem:[%s3056 + $0x20] sm:$0xff]
    %v3062 = vld [vmem:[%s3056 + $0x28] sm:$0xff]
    %v3063 = vld [vmem:[%s3056 + $0x30] sm:$0xff]
    %v3064 = vld [vmem:[%s3056 + $0x38] sm:$0xff]
    %v3065 = vld [vmem:[%s3056 + $0x40] sm:$0xff]
    %v3066 = vld [vmem:[%s3056 + $0x48] sm:$0xff]
    %v3067 = vld [vmem:[%s3056 + $0x50] sm:$0xff]
    %v3068 = vld [vmem:[%s3056 + $0x58] sm:$0xff]
    %v3069 = vld [vmem:[%s3056 + $0x60] sm:$0xff]
    %v3070 = vld [vmem:[%s3056 + $0x68] sm:$0xff]
    %v3071 = vld [vmem:[%s3056 + $0x70] sm:$0xff]
    %v3072 = vld [vmem:[%s3056 + $0x78] sm:$0xff]
    %v3073 = vld [vmem:[%s3056 + $0x80] sm:$0xff]
    %v3074 = vld [vmem:[%s3056 + $0x88] sm:$0xff]
    %v3075 = vld [vmem:[%s3056 + $0x90] sm:$0xff]
    %v3076 = vld [vmem:[%s3056 + $0x98] sm:$0xff]
    %v3077 = vld [vmem:[%s3056 + $0xa0] sm:$0xff]
    %v3078 = vld [vmem:[%s3056 + $0xa8] sm:$0xff]
    %v3079 = vld [vmem:[%s3056 + $0xb0] sm:$0xff]
    %v3080 = vld [vmem:[%s3056 + $0xb8] sm:$0xff]
    %v3081 = vld [vmem:[%s3056 + $0xc0] sm:$0xff]
    %v3082 = vld [vmem:[%s3056 + $0xc8] sm:$0xff]
    %v3083 = vld [vmem:[%s3056 + $0xd0] sm:$0xff]
    %v3084 = vld [vmem:[%s3056 + $0xd8] sm:$0xff]
    %v3085 = vld [vmem:[%s3056 + $0xe0] sm:$0xff]
    %v3086 = vld [vmem:[%s3056 + $0xe8] sm:$0xff]
    %v3087 = vld [vmem:[%s3056 + $0xf0] sm:$0xff]
    %v3088 = vld [vmem:[%s3056 + $0xf8] sm:$0xff]
    %v3121 = vunpack.c.l.b16 %v3057
    %v3122 = vunpack.c.h.b16 %v3057
    %v3123 = vunpack.c.l.b16 %v3058
    %v3124 = vunpack.c.h.b16 %v3058
    %v3125 = vunpack.c.l.b16 %v3059
    %v3126 = vunpack.c.h.b16 %v3059
    %v3127 = vunpack.c.l.b16 %v3060
    %v3128 = vunpack.c.h.b16 %v3060
    %v3129 = vunpack.c.l.b16 %v3061
    %v3130 = vunpack.c.h.b16 %v3061
    %v3131 = vunpack.c.l.b16 %v3062
    %v3132 = vunpack.c.h.b16 %v3062
    %v3133 = vunpack.c.l.b16 %v3063
    %v3134 = vunpack.c.h.b16 %v3063
    %v3135 = vunpack.c.l.b16 %v3064
    %v3136 = vunpack.c.h.b16 %v3064
    %v3137 = vunpack.c.l.b16 %v3065
    %v3138 = vunpack.c.h.b16 %v3065
    %v3139 = vunpack.c.l.b16 %v3066
    %v3140 = vunpack.c.h.b16 %v3066
    %v3141 = vunpack.c.l.b16 %v3067
    %v3142 = vunpack.c.h.b16 %v3067
    %v3143 = vunpack.c.l.b16 %v3068
    %v3144 = vunpack.c.h.b16 %v3068
    %v3145 = vunpack.c.l.b16 %v3069
    %v3146 = vunpack.c.h.b16 %v3069
    %v3147 = vunpack.c.l.b16 %v3070
    %v3148 = vunpack.c.h.b16 %v3070
    %v3149 = vunpack.c.l.b16 %v3071
    %v3150 = vunpack.c.h.b16 %v3071
    %v3151 = vunpack.c.l.b16 %v3072
    %v3152 = vunpack.c.h.b16 %v3072
    %v3153 = vunpack.c.l.b16 %v3073
    %v3154 = vunpack.c.h.b16 %v3073
    %v3155 = vunpack.c.l.b16 %v3074
    %v3156 = vunpack.c.h.b16 %v3074
    %v3157 = vunpack.c.l.b16 %v3075
    %v3158 = vunpack.c.h.b16 %v3075
    %v3159 = vunpack.c.l.b16 %v3076
    %v3160 = vunpack.c.h.b16 %v3076
    %v3161 = vunpack.c.l.b16 %v3077
    %v3162 = vunpack.c.h.b16 %v3077
    %v3163 = vunpack.c.l.b16 %v3078
    %v3164 = vunpack.c.h.b16 %v3078
    %v3165 = vunpack.c.l.b16 %v3079
    %v3166 = vunpack.c.h.b16 %v3079
    %v3167 = vunpack.c.l.b16 %v3080
    %v3168 = vunpack.c.h.b16 %v3080
    %v3169 = vunpack.c.l.b16 %v3081
    %v3170 = vunpack.c.h.b16 %v3081
    %v3171 = vunpack.c.l.b16 %v3082
    %v3172 = vunpack.c.h.b16 %v3082
    %v3173 = vunpack.c.l.b16 %v3083
    %v3174 = vunpack.c.h.b16 %v3083
    %v3175 = vunpack.c.l.b16 %v3084
    %v3176 = vunpack.c.h.b16 %v3084
    %v3177 = vunpack.c.l.b16 %v3085
    %v3178 = vunpack.c.h.b16 %v3085
    %v3179 = vunpack.c.l.b16 %v3086
    %v3180 = vunpack.c.h.b16 %v3086
    %v3181 = vunpack.c.l.b16 %v3087
    %v3182 = vunpack.c.h.b16 %v3087
    %v3183 = vunpack.c.l.b16 %v3088
    %v3184 = vunpack.c.h.b16 %v3088
    %v3185 = vpack.c.b16 %v3123, %v3121
    %v3186 = vpack.c.b16 %v3124, %v3122
    %v3187 = vpack.c.b16 %v3127, %v3125
    %v3188 = vpack.c.b16 %v3128, %v3126
    %v3189 = vpack.c.b16 %v3131, %v3129
    %v3190 = vpack.c.b16 %v3132, %v3130
    %v3191 = vpack.c.b16 %v3135, %v3133
    %v3192 = vpack.c.b16 %v3136, %v3134
    %v3193 = vpack.c.b16 %v3139, %v3137
    %v3194 = vpack.c.b16 %v3140, %v3138
    %v3195 = vpack.c.b16 %v3143, %v3141
    %v3196 = vpack.c.b16 %v3144, %v3142
    %v3197 = vpack.c.b16 %v3147, %v3145
    %v3198 = vpack.c.b16 %v3148, %v3146
    %v3199 = vpack.c.b16 %v3151, %v3149
    %v3200 = vpack.c.b16 %v3152, %v3150
    %v3201 = vpack.c.b16 %v3155, %v3153
    %v3202 = vpack.c.b16 %v3156, %v3154
    %v3203 = vpack.c.b16 %v3159, %v3157
    %v3204 = vpack.c.b16 %v3160, %v3158
    %v3205 = vpack.c.b16 %v3163, %v3161
    %v3206 = vpack.c.b16 %v3164, %v3162
    %v3207 = vpack.c.b16 %v3167, %v3165
    %v3208 = vpack.c.b16 %v3168, %v3166
    %v3209 = vpack.c.b16 %v3171, %v3169
    %v3210 = vpack.c.b16 %v3172, %v3170
    %v3211 = vpack.c.b16 %v3175, %v3173
    %v3212 = vpack.c.b16 %v3176, %v3174
    %v3213 = vpack.c.b16 %v3179, %v3177
    %v3214 = vpack.c.b16 %v3180, %v3178
    %v3215 = vpack.c.b16 %v3183, %v3181
    %v3216 = vpack.c.b16 %v3184, %v3182
    %3249 = vmatprep.subr.bf16.mxu0 %v3186
    %3250 = vmatpush1.bf16.msra.mxu0 %v3185
    %3251 = vmatprep.subr.bf16.mxu0 %v3188
    %3252 = vmatpush1.bf16.msra.mxu0 %v3187
    %3253 = vmatprep.subr.bf16.mxu0 %v3190
    %3254 = vmatpush1.bf16.msra.mxu0 %v3189
    %3255 = vmatprep.subr.bf16.mxu0 %v3192
    %3256 = vmatpush1.bf16.msra.mxu0 %v3191
    %3257 = vmatprep.subr.bf16.mxu0 %v3194
    %3258 = vmatpush1.bf16.msra.mxu0 %v3193
    %3259 = vmatprep.subr.bf16.mxu0 %v3196
    %3260 = vmatpush1.bf16.msra.mxu0 %v3195
    %3261 = vmatprep.subr.bf16.mxu0 %v3198
    %3262 = vmatpush1.bf16.msra.mxu0 %v3197
    %3263 = vmatprep.subr.bf16.mxu0 %v3200
    %3264 = vmatpush1.bf16.msra.mxu0 %v3199
    %3265 = vmatprep.subr.bf16.mxu0 %v3202
    %3266 = vmatpush1.bf16.msra.mxu0 %v3201
    %3267 = vmatprep.subr.bf16.mxu0 %v3204
    %3268 = vmatpush1.bf16.msra.mxu0 %v3203
    %3269 = vmatprep.subr.bf16.mxu0 %v3206
    %3270 = vmatpush1.bf16.msra.mxu0 %v3205
    %3271 = vmatprep.subr.bf16.mxu0 %v3208
    %3272 = vmatpush1.bf16.msra.mxu0 %v3207
    %3273 = vmatprep.subr.bf16.mxu0 %v3210
    %3274 = vmatpush1.bf16.msra.mxu0 %v3209
    %3275 = vmatprep.subr.bf16.mxu0 %v3212
    %3276 = vmatpush1.bf16.msra.mxu0 %v3211
    %3277 = vmatprep.subr.bf16.mxu0 %v3214
    %3278 = vmatpush1.bf16.msra.mxu0 %v3213
    %3279 = vmatprep.subr.bf16.mxu0 %v3216
    %3280 = vmatpush1.bf16.msra.mxu0 %v3215
    %3281 = vmatprep.mubr.bf16.mxu0 %v3055
    %3282 = vmatmul.mubr.bf16.gmra.mrb[0].mxu0 %v3054
    %v3283 = vpop.f32.mrb[0].mxu0
    %v3284 = vadd.f32 0.0, %v3283
    %v3285 = vpop.f32.mrb[0].mxu0
    %v3286 = vadd.f32 0.0, %v3285
    %v3287 = vpop.f32.mrb[0].mxu0
    %v3288 = vpop.f32.mrb[0].mxu0
    %3289 = vdwg.mxu0
    %v3290 = vadd.f32 %v3041, %v3284
    %v3291 = vadd.f32 %v3042, %v3286
    %s3292 = scalar_lea.vmem %s0, 104
    %v3293 = vld [vmem:[%s3292] sm:$0xff]
    %3294 = vset.pattern.permute.xlu0 0
    %3295 = vperm.xlu0 %3294, %v3293
    %v3296 = vpop.permute.xlu0 %3295
    %vm3297 = vcmp.eq.s32.totalorder %v3296, %v59
    %vm3298 = vcmp.eq.s32.totalorder %v3296, %v60
    %v3299 = vsel %vm3297, 1, 0
    %v3300 = vsel %vm3298, 1, 0
    %v3301 = vcvt.s32.f32 %v3299
    %v3302 = vcvt.s32.f32 %v3300
    %v3303 = vpack.c.bf16 %v3301, %v3301
    %v3304 = vpack.c.bf16 %v3302, %v3302
    %s3305 = scalar_lea.vmem [#allocation2], 3328
    %v3306 = vld [vmem:[%s3305] sm:$0xff]
    %v3307 = vld [vmem:[%s3305 + $0x8] sm:$0xff]
    %v3308 = vld [vmem:[%s3305 + $0x10] sm:$0xff]
    %v3309 = vld [vmem:[%s3305 + $0x18] sm:$0xff]
    %v3310 = vld [vmem:[%s3305 + $0x20] sm:$0xff]
    %v3311 = vld [vmem:[%s3305 + $0x28] sm:$0xff]
    %v3312 = vld [vmem:[%s3305 + $0x30] sm:$0xff]
    %v3313 = vld [vmem:[%s3305 + $0x38] sm:$0xff]
    %v3314 = vld [vmem:[%s3305 + $0x40] sm:$0xff]
    %v3315 = vld [vmem:[%s3305 + $0x48] sm:$0xff]
    %v3316 = vld [vmem:[%s3305 + $0x50] sm:$0xff]
    %v3317 = vld [vmem:[%s3305 + $0x58] sm:$0xff]
    %v3318 = vld [vmem:[%s3305 + $0x60] sm:$0xff]
    %v3319 = vld [vmem:[%s3305 + $0x68] sm:$0xff]
    %v3320 = vld [vmem:[%s3305 + $0x70] sm:$0xff]
    %v3321 = vld [vmem:[%s3305 + $0x78] sm:$0xff]
    %v3322 = vld [vmem:[%s3305 + $0x80] sm:$0xff]
    %v3323 = vld [vmem:[%s3305 + $0x88] sm:$0xff]
    %v3324 = vld [vmem:[%s3305 + $0x90] sm:$0xff]
    %v3325 = vld [vmem:[%s3305 + $0x98] sm:$0xff]
    %v3326 = vld [vmem:[%s3305 + $0xa0] sm:$0xff]
    %v3327 = vld [vmem:[%s3305 + $0xa8] sm:$0xff]
    %v3328 = vld [vmem:[%s3305 + $0xb0] sm:$0xff]
    %v3329 = vld [vmem:[%s3305 + $0xb8] sm:$0xff]
    %v3330 = vld [vmem:[%s3305 + $0xc0] sm:$0xff]
    %v3331 = vld [vmem:[%s3305 + $0xc8] sm:$0xff]
    %v3332 = vld [vmem:[%s3305 + $0xd0] sm:$0xff]
    %v3333 = vld [vmem:[%s3305 + $0xd8] sm:$0xff]
    %v3334 = vld [vmem:[%s3305 + $0xe0] sm:$0xff]
    %v3335 = vld [vmem:[%s3305 + $0xe8] sm:$0xff]
    %v3336 = vld [vmem:[%s3305 + $0xf0] sm:$0xff]
    %v3337 = vld [vmem:[%s3305 + $0xf8] sm:$0xff]
    %v3370 = vunpack.c.l.b16 %v3306
    %v3371 = vunpack.c.h.b16 %v3306
    %v3372 = vunpack.c.l.b16 %v3307
    %v3373 = vunpack.c.h.b16 %v3307
    %v3374 = vunpack.c.l.b16 %v3308
    %v3375 = vunpack.c.h.b16 %v3308
    %v3376 = vunpack.c.l.b16 %v3309
    %v3377 = vunpack.c.h.b16 %v3309
    %v3378 = vunpack.c.l.b16 %v3310
    %v3379 = vunpack.c.h.b16 %v3310
    %v3380 = vunpack.c.l.b16 %v3311
    %v3381 = vunpack.c.h.b16 %v3311
    %v3382 = vunpack.c.l.b16 %v3312
    %v3383 = vunpack.c.h.b16 %v3312
    %v3384 = vunpack.c.l.b16 %v3313
    %v3385 = vunpack.c.h.b16 %v3313
    %v3386 = vunpack.c.l.b16 %v3314
    %v3387 = vunpack.c.h.b16 %v3314
    %v3388 = vunpack.c.l.b16 %v3315
    %v3389 = vunpack.c.h.b16 %v3315
    %v3390 = vunpack.c.l.b16 %v3316
    %v3391 = vunpack.c.h.b16 %v3316
    %v3392 = vunpack.c.l.b16 %v3317
    %v3393 = vunpack.c.h.b16 %v3317
    %v3394 = vunpack.c.l.b16 %v3318
    %v3395 = vunpack.c.h.b16 %v3318
    %v3396 = vunpack.c.l.b16 %v3319
    %v3397 = vunpack.c.h.b16 %v3319
    %v3398 = vunpack.c.l.b16 %v3320
    %v3399 = vunpack.c.h.b16 %v3320
    %v3400 = vunpack.c.l.b16 %v3321
    %v3401 = vunpack.c.h.b16 %v3321
    %v3402 = vunpack.c.l.b16 %v3322
    %v3403 = vunpack.c.h.b16 %v3322
    %v3404 = vunpack.c.l.b16 %v3323
    %v3405 = vunpack.c.h.b16 %v3323
    %v3406 = vunpack.c.l.b16 %v3324
    %v3407 = vunpack.c.h.b16 %v3324
    %v3408 = vunpack.c.l.b16 %v3325
    %v3409 = vunpack.c.h.b16 %v3325
    %v3410 = vunpack.c.l.b16 %v3326
    %v3411 = vunpack.c.h.b16 %v3326
    %v3412 = vunpack.c.l.b16 %v3327
    %v3413 = vunpack.c.h.b16 %v3327
    %v3414 = vunpack.c.l.b16 %v3328
    %v3415 = vunpack.c.h.b16 %v3328
    %v3416 = vunpack.c.l.b16 %v3329
    %v3417 = vunpack.c.h.b16 %v3329
    %v3418 = vunpack.c.l.b16 %v3330
    %v3419 = vunpack.c.h.b16 %v3330
    %v3420 = vunpack.c.l.b16 %v3331
    %v3421 = vunpack.c.h.b16 %v3331
    %v3422 = vunpack.c.l.b16 %v3332
    %v3423 = vunpack.c.h.b16 %v3332
    %v3424 = vunpack.c.l.b16 %v3333
    %v3425 = vunpack.c.h.b16 %v3333
    %v3426 = vunpack.c.l.b16 %v3334
    %v3427 = vunpack.c.h.b16 %v3334
    %v3428 = vunpack.c.l.b16 %v3335
    %v3429 = vunpack.c.h.b16 %v3335
    %v3430 = vunpack.c.l.b16 %v3336
    %v3431 = vunpack.c.h.b16 %v3336
    %v3432 = vunpack.c.l.b16 %v3337
    %v3433 = vunpack.c.h.b16 %v3337
    %v3434 = vpack.c.b16 %v3372, %v3370
    %v3435 = vpack.c.b16 %v3373, %v3371
    %v3436 = vpack.c.b16 %v3376, %v3374
    %v3437 = vpack.c.b16 %v3377, %v3375
    %v3438 = vpack.c.b16 %v3380, %v3378
    %v3439 = vpack.c.b16 %v3381, %v3379
    %v3440 = vpack.c.b16 %v3384, %v3382
    %v3441 = vpack.c.b16 %v3385, %v3383
    %v3442 = vpack.c.b16 %v3388, %v3386
    %v3443 = vpack.c.b16 %v3389, %v3387
    %v3444 = vpack.c.b16 %v3392, %v3390
    %v3445 = vpack.c.b16 %v3393, %v3391
    %v3446 = vpack.c.b16 %v3396, %v3394
    %v3447 = vpack.c.b16 %v3397, %v3395
    %v3448 = vpack.c.b16 %v3400, %v3398
    %v3449 = vpack.c.b16 %v3401, %v3399
    %v3450 = vpack.c.b16 %v3404, %v3402
    %v3451 = vpack.c.b16 %v3405, %v3403
    %v3452 = vpack.c.b16 %v3408, %v3406
    %v3453 = vpack.c.b16 %v3409, %v3407
    %v3454 = vpack.c.b16 %v3412, %v3410
    %v3455 = vpack.c.b16 %v3413, %v3411
    %v3456 = vpack.c.b16 %v3416, %v3414
    %v3457 = vpack.c.b16 %v3417, %v3415
    %v3458 = vpack.c.b16 %v3420, %v3418
    %v3459 = vpack.c.b16 %v3421, %v3419
    %v3460 = vpack.c.b16 %v3424, %v3422
    %v3461 = vpack.c.b16 %v3425, %v3423
    %v3462 = vpack.c.b16 %v3428, %v3426
    %v3463 = vpack.c.b16 %v3429, %v3427
    %v3464 = vpack.c.b16 %v3432, %v3430
    %v3465 = vpack.c.b16 %v3433, %v3431
    %3498 = vmatprep.subr.bf16.mxu0 %v3435
    %3499 = vmatpush1.bf16.msra.mxu0 %v3434
    %3500 = vmatprep.subr.bf16.mxu0 %v3437
    %3501 = vmatpush1.bf16.msra.mxu0 %v3436
    %3502 = vmatprep.subr.bf16.mxu0 %v3439
    %3503 = vmatpush1.bf16.msra.mxu0 %v3438
    %3504 = vmatprep.subr.bf16.mxu0 %v3441
    %3505 = vmatpush1.bf16.msra.mxu0 %v3440
    %3506 = vmatprep.subr.bf16.mxu0 %v3443
    %3507 = vmatpush1.bf16.msra.mxu0 %v3442
    %3508 = vmatprep.subr.bf16.mxu0 %v3445
    %3509 = vmatpush1.bf16.msra.mxu0 %v3444
    %3510 = vmatprep.subr.bf16.mxu0 %v3447
    %3511 = vmatpush1.bf16.msra.mxu0 %v3446
    %3512 = vmatprep.subr.bf16.mxu0 %v3449
    %3513 = vmatpush1.bf16.msra.mxu0 %v3448
    %3514 = vmatprep.subr.bf16.mxu0 %v3451
    %3515 = vmatpush1.bf16.msra.mxu0 %v3450
    %3516 = vmatprep.subr.bf16.mxu0 %v3453
    %3517 = vmatpush1.bf16.msra.mxu0 %v3452
    %3518 = vmatprep.subr.bf16.mxu0 %v3455
    %3519 = vmatpush1.bf16.msra.mxu0 %v3454
    %3520 = vmatprep.subr.bf16.mxu0 %v3457
    %3521 = vmatpush1.bf16.msra.mxu0 %v3456
    %3522 = vmatprep.subr.bf16.mxu0 %v3459
    %3523 = vmatpush1.bf16.msra.mxu0 %v3458
    %3524 = vmatprep.subr.bf16.mxu0 %v3461
    %3525 = vmatpush1.bf16.msra.mxu0 %v3460
    %3526 = vmatprep.subr.bf16.mxu0 %v3463
    %3527 = vmatpush1.bf16.msra.mxu0 %v3462
    %3528 = vmatprep.subr.bf16.mxu0 %v3465
    %3529 = vmatpush1.bf16.msra.mxu0 %v3464
    %3530 = vmatprep.mubr.bf16.mxu0 %v3304
    %3531 = vmatmul.mubr.bf16.gmra.mrb[0].mxu0 %v3303
    %v3532 = vpop.f32.mrb[0].mxu0
    %v3533 = vadd.f32 0.0, %v3532
    %v3534 = vpop.f32.mrb[0].mxu0
    %v3535 = vadd.f32 0.0, %v3534
    %v3536 = vpop.f32.mrb[0].mxu0
    %v3537 = vpop.f32.mrb[0].mxu0
    %3538 = vdwg.mxu0
    %v3539 = vadd.f32 %v3290, %v3533
    %v3540 = vadd.f32 %v3291, %v3535
    %s3541 = scalar_lea.vmem %s0, 112
    %v3542 = vld [vmem:[%s3541] sm:$0xff]
    %3543 = vset.pattern.permute.xlu0 0
    %3544 = vperm.xlu0 %3543, %v3542
    %v3545 = vpop.permute.xlu0 %3544
    %vm3546 = vcmp.eq.s32.totalorder %v3545, %v59
    %vm3547 = vcmp.eq.s32.totalorder %v3545, %v60
    %v3548 = vsel %vm3546, 1, 0
    %v3549 = vsel %vm3547, 1, 0
    %v3550 = vcvt.s32.f32 %v3548
    %v3551 = vcvt.s32.f32 %v3549
    %v3552 = vpack.c.bf16 %v3550, %v3550
    %v3553 = vpack.c.bf16 %v3551, %v3551
    %s3554 = scalar_lea.vmem [#allocation2], 3584
    %v3555 = vld [vmem:[%s3554] sm:$0xff]
    %v3556 = vld [vmem:[%s3554 + $0x8] sm:$0xff]
    %v3557 = vld [vmem:[%s3554 + $0x10] sm:$0xff]
    %v3558 = vld [vmem:[%s3554 + $0x18] sm:$0xff]
    %v3559 = vld [vmem:[%s3554 + $0x20] sm:$0xff]
    %v3560 = vld [vmem:[%s3554 + $0x28] sm:$0xff]
    %v3561 = vld [vmem:[%s3554 + $0x30] sm:$0xff]
    %v3562 = vld [vmem:[%s3554 + $0x38] sm:$0xff]
    %v3563 = vld [vmem:[%s3554 + $0x40] sm:$0xff]
    %v3564 = vld [vmem:[%s3554 + $0x48] sm:$0xff]
    %v3565 = vld [vmem:[%s3554 + $0x50] sm:$0xff]
    %v3566 = vld [vmem:[%s3554 + $0x58] sm:$0xff]
    %v3567 = vld [vmem:[%s3554 + $0x60] sm:$0xff]
    %v3568 = vld [vmem:[%s3554 + $0x68] sm:$0xff]
    %v3569 = vld [vmem:[%s3554 + $0x70] sm:$0xff]
    %v3570 = vld [vmem:[%s3554 + $0x78] sm:$0xff]
    %v3571 = vld [vmem:[%s3554 + $0x80] sm:$0xff]
    %v3572 = vld [vmem:[%s3554 + $0x88] sm:$0xff]
    %v3573 = vld [vmem:[%s3554 + $0x90] sm:$0xff]
    %v3574 = vld [vmem:[%s3554 + $0x98] sm:$0xff]
    %v3575 = vld [vmem:[%s3554 + $0xa0] sm:$0xff]
    %v3576 = vld [vmem:[%s3554 + $0xa8] sm:$0xff]
    %v3577 = vld [vmem:[%s3554 + $0xb0] sm:$0xff]
    %v3578 = vld [vmem:[%s3554 + $0xb8] sm:$0xff]
    %v3579 = vld [vmem:[%s3554 + $0xc0] sm:$0xff]
    %v3580 = vld [vmem:[%s3554 + $0xc8] sm:$0xff]
    %v3581 = vld [vmem:[%s3554 + $0xd0] sm:$0xff]
    %v3582 = vld [vmem:[%s3554 + $0xd8] sm:$0xff]
    %v3583 = vld [vmem:[%s3554 + $0xe0] sm:$0xff]
    %v3584 = vld [vmem:[%s3554 + $0xe8] sm:$0xff]
    %v3585 = vld [vmem:[%s3554 + $0xf0] sm:$0xff]
    %v3586 = vld [vmem:[%s3554 + $0xf8] sm:$0xff]
    %v3619 = vunpack.c.l.b16 %v3555
    %v3620 = vunpack.c.h.b16 %v3555
    %v3621 = vunpack.c.l.b16 %v3556
    %v3622 = vunpack.c.h.b16 %v3556
    %v3623 = vunpack.c.l.b16 %v3557
    %v3624 = vunpack.c.h.b16 %v3557
    %v3625 = vunpack.c.l.b16 %v3558
    %v3626 = vunpack.c.h.b16 %v3558
    %v3627 = vunpack.c.l.b16 %v3559
    %v3628 = vunpack.c.h.b16 %v3559
    %v3629 = vunpack.c.l.b16 %v3560
    %v3630 = vunpack.c.h.b16 %v3560
    %v3631 = vunpack.c.l.b16 %v3561
    %v3632 = vunpack.c.h.b16 %v3561
    %v3633 = vunpack.c.l.b16 %v3562
    %v3634 = vunpack.c.h.b16 %v3562
    %v3635 = vunpack.c.l.b16 %v3563
    %v3636 = vunpack.c.h.b16 %v3563
    %v3637 = vunpack.c.l.b16 %v3564
    %v3638 = vunpack.c.h.b16 %v3564
    %v3639 = vunpack.c.l.b16 %v3565
    %v3640 = vunpack.c.h.b16 %v3565
    %v3641 = vunpack.c.l.b16 %v3566
    %v3642 = vunpack.c.h.b16 %v3566
    %v3643 = vunpack.c.l.b16 %v3567
    %v3644 = vunpack.c.h.b16 %v3567
    %v3645 = vunpack.c.l.b16 %v3568
    %v3646 = vunpack.c.h.b16 %v3568
    %v3647 = vunpack.c.l.b16 %v3569
    %v3648 = vunpack.c.h.b16 %v3569
    %v3649 = vunpack.c.l.b16 %v3570
    %v3650 = vunpack.c.h.b16 %v3570
    %v3651 = vunpack.c.l.b16 %v3571
    %v3652 = vunpack.c.h.b16 %v3571
    %v3653 = vunpack.c.l.b16 %v3572
    %v3654 = vunpack.c.h.b16 %v3572
    %v3655 = vunpack.c.l.b16 %v3573
    %v3656 = vunpack.c.h.b16 %v3573
    %v3657 = vunpack.c.l.b16 %v3574
    %v3658 = vunpack.c.h.b16 %v3574
    %v3659 = vunpack.c.l.b16 %v3575
    %v3660 = vunpack.c.h.b16 %v3575
    %v3661 = vunpack.c.l.b16 %v3576
    %v3662 = vunpack.c.h.b16 %v3576
    %v3663 = vunpack.c.l.b16 %v3577
    %v3664 = vunpack.c.h.b16 %v3577
    %v3665 = vunpack.c.l.b16 %v3578
    %v3666 = vunpack.c.h.b16 %v3578
    %v3667 = vunpack.c.l.b16 %v3579
    %v3668 = vunpack.c.h.b16 %v3579
    %v3669 = vunpack.c.l.b16 %v3580
    %v3670 = vunpack.c.h.b16 %v3580
    %v3671 = vunpack.c.l.b16 %v3581
    %v3672 = vunpack.c.h.b16 %v3581
    %v3673 = vunpack.c.l.b16 %v3582
    %v3674 = vunpack.c.h.b16 %v3582
    %v3675 = vunpack.c.l.b16 %v3583
    %v3676 = vunpack.c.h.b16 %v3583
    %v3677 = vunpack.c.l.b16 %v3584
    %v3678 = vunpack.c.h.b16 %v3584
    %v3679 = vunpack.c.l.b16 %v3585
    %v3680 = vunpack.c.h.b16 %v3585
    %v3681 = vunpack.c.l.b16 %v3586
    %v3682 = vunpack.c.h.b16 %v3586
    %v3683 = vpack.c.b16 %v3621, %v3619
    %v3684 = vpack.c.b16 %v3622, %v3620
    %v3685 = vpack.c.b16 %v3625, %v3623
    %v3686 = vpack.c.b16 %v3626, %v3624
    %v3687 = vpack.c.b16 %v3629, %v3627
    %v3688 = vpack.c.b16 %v3630, %v3628
    %v3689 = vpack.c.b16 %v3633, %v3631
    %v3690 = vpack.c.b16 %v3634, %v3632
    %v3691 = vpack.c.b16 %v3637, %v3635
    %v3692 = vpack.c.b16 %v3638, %v3636
    %v3693 = vpack.c.b16 %v3641, %v3639
    %v3694 = vpack.c.b16 %v3642, %v3640
    %v3695 = vpack.c.b16 %v3645, %v3643
    %v3696 = vpack.c.b16 %v3646, %v3644
    %v3697 = vpack.c.b16 %v3649, %v3647
    %v3698 = vpack.c.b16 %v3650, %v3648
    %v3699 = vpack.c.b16 %v3653, %v3651
    %v3700 = vpack.c.b16 %v3654, %v3652
    %v3701 = vpack.c.b16 %v3657, %v3655
    %v3702 = vpack.c.b16 %v3658, %v3656
    %v3703 = vpack.c.b16 %v3661, %v3659
    %v3704 = vpack.c.b16 %v3662, %v3660
    %v3705 = vpack.c.b16 %v3665, %v3663
    %v3706 = vpack.c.b16 %v3666, %v3664
    %v3707 = vpack.c.b16 %v3669, %v3667
    %v3708 = vpack.c.b16 %v3670, %v3668
    %v3709 = vpack.c.b16 %v3673, %v3671
    %v3710 = vpack.c.b16 %v3674, %v3672
    %v3711 = vpack.c.b16 %v3677, %v3675
    %v3712 = vpack.c.b16 %v3678, %v3676
    %v3713 = vpack.c.b16 %v3681, %v3679
    %v3714 = vpack.c.b16 %v3682, %v3680
    %3747 = vmatprep.subr.bf16.mxu0 %v3684
    %3748 = vmatpush1.bf16.msra.mxu0 %v3683
    %3749 = vmatprep.subr.bf16.mxu0 %v3686
    %3750 = vmatpush1.bf16.msra.mxu0 %v3685
    %3751 = vmatprep.subr.bf16.mxu0 %v3688
    %3752 = vmatpush1.bf16.msra.mxu0 %v3687
    %3753 = vmatprep.subr.bf16.mxu0 %v3690
    %3754 = vmatpush1.bf16.msra.mxu0 %v3689
    %3755 = vmatprep.subr.bf16.mxu0 %v3692
    %3756 = vmatpush1.bf16.msra.mxu0 %v3691
    %3757 = vmatprep.subr.bf16.mxu0 %v3694
    %3758 = vmatpush1.bf16.msra.mxu0 %v3693
    %3759 = vmatprep.subr.bf16.mxu0 %v3696
    %3760 = vmatpush1.bf16.msra.mxu0 %v3695
    %3761 = vmatprep.subr.bf16.mxu0 %v3698
    %3762 = vmatpush1.bf16.msra.mxu0 %v3697
    %3763 = vmatprep.subr.bf16.mxu0 %v3700
    %3764 = vmatpush1.bf16.msra.mxu0 %v3699
    %3765 = vmatprep.subr.bf16.mxu0 %v3702
    %3766 = vmatpush1.bf16.msra.mxu0 %v3701
    %3767 = vmatprep.subr.bf16.mxu0 %v3704
    %3768 = vmatpush1.bf16.msra.mxu0 %v3703
    %3769 = vmatprep.subr.bf16.mxu0 %v3706
    %3770 = vmatpush1.bf16.msra.mxu0 %v3705
    %3771 = vmatprep.subr.bf16.mxu0 %v3708
    %3772 = vmatpush1.bf16.msra.mxu0 %v3707
    %3773 = vmatprep.subr.bf16.mxu0 %v3710
    %3774 = vmatpush1.bf16.msra.mxu0 %v3709
    %3775 = vmatprep.subr.bf16.mxu0 %v3712
    %3776 = vmatpush1.bf16.msra.mxu0 %v3711
    %3777 = vmatprep.subr.bf16.mxu0 %v3714
    %3778 = vmatpush1.bf16.msra.mxu0 %v3713
    %3779 = vmatprep.mubr.bf16.mxu0 %v3553
    %3780 = vmatmul.mubr.bf16.gmra.mrb[0].mxu0 %v3552
    %v3781 = vpop.f32.mrb[0].mxu0
    %v3782 = vadd.f32 0.0, %v3781
    %v3783 = vpop.f32.mrb[0].mxu0
    %v3784 = vadd.f32 0.0, %v3783
    %v3785 = vpop.f32.mrb[0].mxu0
    %v3786 = vpop.f32.mrb[0].mxu0
    %3787 = vdwg.mxu0
    %v3788 = vadd.f32 %v3539, %v3782
    %v3789 = vadd.f32 %v3540, %v3784
    %s3790 = scalar_lea.vmem %s0, 120
    %v3791 = vld [vmem:[%s3790] sm:$0xff]
    %3792 = vset.pattern.permute.xlu0 0
    %3793 = vperm.xlu0 %3792, %v3791
    %v3794 = vpop.permute.xlu0 %3793
    %vm3795 = vcmp.eq.s32.totalorder %v3794, %v59
    %vm3796 = vcmp.eq.s32.totalorder %v3794, %v60
    %v3797 = vsel %vm3795, 1, 0
    %v3798 = vsel %vm3796, 1, 0
    %v3799 = vcvt.s32.f32 %v3797
    %v3800 = vcvt.s32.f32 %v3798
    %v3801 = vpack.c.bf16 %v3799, %v3799
    %v3802 = vpack.c.bf16 %v3800, %v3800
    %s3803 = scalar_lea.vmem [#allocation2], 3840
    %v3804 = vld [vmem:[%s3803] sm:$0xff]
    %v3805 = vld [vmem:[%s3803 + $0x8] sm:$0xff]
    %v3806 = vld [vmem:[%s3803 + $0x10] sm:$0xff]
    %v3807 = vld [vmem:[%s3803 + $0x18] sm:$0xff]
    %v3808 = vld [vmem:[%s3803 + $0x20] sm:$0xff]
    %v3809 = vld [vmem:[%s3803 + $0x28] sm:$0xff]
    %v3810 = vld [vmem:[%s3803 + $0x30] sm:$0xff]
    %v3811 = vld [vmem:[%s3803 + $0x38] sm:$0xff]
    %v3812 = vld [vmem:[%s3803 + $0x40] sm:$0xff]
    %v3813 = vld [vmem:[%s3803 + $0x48] sm:$0xff]
    %v3814 = vld [vmem:[%s3803 + $0x50] sm:$0xff]
    %v3815 = vld [vmem:[%s3803 + $0x58] sm:$0xff]
    %v3816 = vld [vmem:[%s3803 + $0x60] sm:$0xff]
    %v3817 = vld [vmem:[%s3803 + $0x68] sm:$0xff]
    %v3818 = vld [vmem:[%s3803 + $0x70] sm:$0xff]
    %v3819 = vld [vmem:[%s3803 + $0x78] sm:$0xff]
    %v3820 = vld [vmem:[%s3803 + $0x80] sm:$0xff]
    %v3821 = vld [vmem:[%s3803 + $0x88] sm:$0xff]
    %v3822 = vld [vmem:[%s3803 + $0x90] sm:$0xff]
    %v3823 = vld [vmem:[%s3803 + $0x98] sm:$0xff]
    %v3824 = vld [vmem:[%s3803 + $0xa0] sm:$0xff]
    %v3825 = vld [vmem:[%s3803 + $0xa8] sm:$0xff]
    %v3826 = vld [vmem:[%s3803 + $0xb0] sm:$0xff]
    %v3827 = vld [vmem:[%s3803 + $0xb8] sm:$0xff]
    %v3828 = vld [vmem:[%s3803 + $0xc0] sm:$0xff]
    %v3829 = vld [vmem:[%s3803 + $0xc8] sm:$0xff]
    %v3830 = vld [vmem:[%s3803 + $0xd0] sm:$0xff]
    %v3831 = vld [vmem:[%s3803 + $0xd8] sm:$0xff]
    %v3832 = vld [vmem:[%s3803 + $0xe0] sm:$0xff]
    %v3833 = vld [vmem:[%s3803 + $0xe8] sm:$0xff]
    %v3834 = vld [vmem:[%s3803 + $0xf0] sm:$0xff]
    %v3835 = vld [vmem:[%s3803 + $0xf8] sm:$0xff]
    %v3868 = vunpack.c.l.b16 %v3804
    %v3869 = vunpack.c.h.b16 %v3804
    %v3870 = vunpack.c.l.b16 %v3805
    %v3871 = vunpack.c.h.b16 %v3805
    %v3872 = vunpack.c.l.b16 %v3806
    %v3873 = vunpack.c.h.b16 %v3806
    %v3874 = vunpack.c.l.b16 %v3807
    %v3875 = vunpack.c.h.b16 %v3807
    %v3876 = vunpack.c.l.b16 %v3808
    %v3877 = vunpack.c.h.b16 %v3808
    %v3878 = vunpack.c.l.b16 %v3809
    %v3879 = vunpack.c.h.b16 %v3809
    %v3880 = vunpack.c.l.b16 %v3810
    %v3881 = vunpack.c.h.b16 %v3810
    %v3882 = vunpack.c.l.b16 %v3811
    %v3883 = vunpack.c.h.b16 %v3811
    %v3884 = vunpack.c.l.b16 %v3812
    %v3885 = vunpack.c.h.b16 %v3812
    %v3886 = vunpack.c.l.b16 %v3813
    %v3887 = vunpack.c.h.b16 %v3813
    %v3888 = vunpack.c.l.b16 %v3814
    %v3889 = vunpack.c.h.b16 %v3814
    %v3890 = vunpack.c.l.b16 %v3815
    %v3891 = vunpack.c.h.b16 %v3815
    %v3892 = vunpack.c.l.b16 %v3816
    %v3893 = vunpack.c.h.b16 %v3816
    %v3894 = vunpack.c.l.b16 %v3817
    %v3895 = vunpack.c.h.b16 %v3817
    %v3896 = vunpack.c.l.b16 %v3818
    %v3897 = vunpack.c.h.b16 %v3818
    %v3898 = vunpack.c.l.b16 %v3819
    %v3899 = vunpack.c.h.b16 %v3819
    %v3900 = vunpack.c.l.b16 %v3820
    %v3901 = vunpack.c.h.b16 %v3820
    %v3902 = vunpack.c.l.b16 %v3821
    %v3903 = vunpack.c.h.b16 %v3821
    %v3904 = vunpack.c.l.b16 %v3822
    %v3905 = vunpack.c.h.b16 %v3822
    %v3906 = vunpack.c.l.b16 %v3823
    %v3907 = vunpack.c.h.b16 %v3823
    %v3908 = vunpack.c.l.b16 %v3824
    %v3909 = vunpack.c.h.b16 %v3824
    %v3910 = vunpack.c.l.b16 %v3825
    %v3911 = vunpack.c.h.b16 %v3825
    %v3912 = vunpack.c.l.b16 %v3826
    %v3913 = vunpack.c.h.b16 %v3826
    %v3914 = vunpack.c.l.b16 %v3827
    %v3915 = vunpack.c.h.b16 %v3827
    %v3916 = vunpack.c.l.b16 %v3828
    %v3917 = vunpack.c.h.b16 %v3828
    %v3918 = vunpack.c.l.b16 %v3829
    %v3919 = vunpack.c.h.b16 %v3829
    %v3920 = vunpack.c.l.b16 %v3830
    %v3921 = vunpack.c.h.b16 %v3830
    %v3922 = vunpack.c.l.b16 %v3831
    %v3923 = vunpack.c.h.b16 %v3831
    %v3924 = vunpack.c.l.b16 %v3832
    %v3925 = vunpack.c.h.b16 %v3832
    %v3926 = vunpack.c.l.b16 %v3833
    %v3927 = vunpack.c.h.b16 %v3833
    %v3928 = vunpack.c.l.b16 %v3834
    %v3929 = vunpack.c.h.b16 %v3834
    %v3930 = vunpack.c.l.b16 %v3835
    %v3931 = vunpack.c.h.b16 %v3835
    %v3932 = vpack.c.b16 %v3870, %v3868
    %v3933 = vpack.c.b16 %v3871, %v3869
    %v3934 = vpack.c.b16 %v3874, %v3872
    %v3935 = vpack.c.b16 %v3875, %v3873
    %v3936 = vpack.c.b16 %v3878, %v3876
    %v3937 = vpack.c.b16 %v3879, %v3877
    %v3938 = vpack.c.b16 %v3882, %v3880
    %v3939 = vpack.c.b16 %v3883, %v3881
    %v3940 = vpack.c.b16 %v3886, %v3884
    %v3941 = vpack.c.b16 %v3887, %v3885
    %v3942 = vpack.c.b16 %v3890, %v3888
    %v3943 = vpack.c.b16 %v3891, %v3889
    %v3944 = vpack.c.b16 %v3894, %v3892
    %v3945 = vpack.c.b16 %v3895, %v3893
    %v3946 = vpack.c.b16 %v3898, %v3896
    %v3947 = vpack.c.b16 %v3899, %v3897
    %v3948 = vpack.c.b16 %v3902, %v3900
    %v3949 = vpack.c.b16 %v3903, %v3901
    %v3950 = vpack.c.b16 %v3906, %v3904
    %v3951 = vpack.c.b16 %v3907, %v3905
    %v3952 = vpack.c.b16 %v3910, %v3908
    %v3953 = vpack.c.b16 %v3911, %v3909
    %v3954 = vpack.c.b16 %v3914, %v3912
    %v3955 = vpack.c.b16 %v3915, %v3913
    %v3956 = vpack.c.b16 %v3918, %v3916
    %v3957 = vpack.c.b16 %v3919, %v3917
    %v3958 = vpack.c.b16 %v3922, %v3920
    %v3959 = vpack.c.b16 %v3923, %v3921
    %v3960 = vpack.c.b16 %v3926, %v3924
    %v3961 = vpack.c.b16 %v3927, %v3925
    %v3962 = vpack.c.b16 %v3930, %v3928
    %v3963 = vpack.c.b16 %v3931, %v3929
    %3996 = vmatprep.subr.bf16.mxu0 %v3933
    %3997 = vmatpush1.bf16.msra.mxu0 %v3932
    %3998 = vmatprep.subr.bf16.mxu0 %v3935
    %3999 = vmatpush1.bf16.msra.mxu0 %v3934
    %4000 = vmatprep.subr.bf16.mxu0 %v3937
    %4001 = vmatpush1.bf16.msra.mxu0 %v3936
    %4002 = vmatprep.subr.bf16.mxu0 %v3939
    %4003 = vmatpush1.bf16.msra.mxu0 %v3938
    %4004 = vmatprep.subr.bf16.mxu0 %v3941
    %4005 = vmatpush1.bf16.msra.mxu0 %v3940
    %4006 = vmatprep.subr.bf16.mxu0 %v3943
    %4007 = vmatpush1.bf16.msra.mxu0 %v3942
    %4008 = vmatprep.subr.bf16.mxu0 %v3945
    %4009 = vmatpush1.bf16.msra.mxu0 %v3944
    %4010 = vmatprep.subr.bf16.mxu0 %v3947
    %4011 = vmatpush1.bf16.msra.mxu0 %v3946
    %4012 = vmatprep.subr.bf16.mxu0 %v3949
    %4013 = vmatpush1.bf16.msra.mxu0 %v3948
    %4014 = vmatprep.subr.bf16.mxu0 %v3951
    %4015 = vmatpush1.bf16.msra.mxu0 %v3950
    %4016 = vmatprep.subr.bf16.mxu0 %v3953
    %4017 = vmatpush1.bf16.msra.mxu0 %v3952
    %4018 = vmatprep.subr.bf16.mxu0 %v3955
    %4019 = vmatpush1.bf16.msra.mxu0 %v3954
    %4020 = vmatprep.subr.bf16.mxu0 %v3957
    %4021 = vmatpush1.bf16.msra.mxu0 %v3956
    %4022 = vmatprep.subr.bf16.mxu0 %v3959
    %4023 = vmatpush1.bf16.msra.mxu0 %v3958
    %4024 = vmatprep.subr.bf16.mxu0 %v3961
    %4025 = vmatpush1.bf16.msra.mxu0 %v3960
    %4026 = vmatprep.subr.bf16.mxu0 %v3963
    %4027 = vmatpush1.bf16.msra.mxu0 %v3962
    %4028 = vmatprep.mubr.bf16.mxu0 %v3802
    %4029 = vmatmul.mubr.bf16.gmra.mrb[0].mxu0 %v3801
    %v4030 = vpop.f32.mrb[0].mxu0
    %v4031 = vadd.f32 0.0, %v4030
    %v4032 = vpop.f32.mrb[0].mxu0
    %v4033 = vadd.f32 0.0, %v4032
    %v4034 = vpop.f32.mrb[0].mxu0
    %v4035 = vpop.f32.mrb[0].mxu0
    %4036 = vdwg.mxu0
    %v4037 = vadd.f32 %v3788, %v4031
    %v4038 = vadd.f32 %v3789, %v4033
    %s4039 = scalar_lea.vmem %s0, 128
    %v4040 = vld [vmem:[%s4039] sm:$0xff]
    %4041 = vset.pattern.permute.xlu0 0
    %4042 = vperm.xlu0 %4041, %v4040
    %v4043 = vpop.permute.xlu0 %4042
    %vm4044 = vcmp.eq.s32.totalorder %v4043, %v59
    %vm4045 = vcmp.eq.s32.totalorder %v4043, %v60
    %v4046 = vsel %vm4044, 1, 0
    %v4047 = vsel %vm4045, 1, 0
    %v4048 = vcvt.s32.f32 %v4046
    %v4049 = vcvt.s32.f32 %v4047
    %v4050 = vpack.c.bf16 %v4048, %v4048
    %v4051 = vpack.c.bf16 %v4049, %v4049
    %s4052 = scalar_lea.vmem [#allocation2], 4096
    %v4053 = vld [vmem:[%s4052] sm:$0xff]
    %v4054 = vld [vmem:[%s4052 + $0x8] sm:$0xff]
    %v4055 = vld [vmem:[%s4052 + $0x10] sm:$0xff]
    %v4056 = vld [vmem:[%s4052 + $0x18] sm:$0xff]
    %v4057 = vld [vmem:[%s4052 + $0x20] sm:$0xff]
    %v4058 = vld [vmem:[%s4052 + $0x28] sm:$0xff]
    %v4059 = vld [vmem:[%s4052 + $0x30] sm:$0xff]
    %v4060 = vld [vmem:[%s4052 + $0x38] sm:$0xff]
    %v4061 = vld [vmem:[%s4052 + $0x40] sm:$0xff]
    %v4062 = vld [vmem:[%s4052 + $0x48] sm:$0xff]
    %v4063 = vld [vmem:[%s4052 + $0x50] sm:$0xff]
    %v4064 = vld [vmem:[%s4052 + $0x58] sm:$0xff]
    %v4065 = vld [vmem:[%s4052 + $0x60] sm:$0xff]
    %v4066 = vld [vmem:[%s4052 + $0x68] sm:$0xff]
    %v4067 = vld [vmem:[%s4052 + $0x70] sm:$0xff]
    %v4068 = vld [vmem:[%s4052 + $0x78] sm:$0xff]
    %v4069 = vld [vmem:[%s4052 + $0x80] sm:$0xff]
    %v4070 = vld [vmem:[%s4052 + $0x88] sm:$0xff]
    %v4071 = vld [vmem:[%s4052 + $0x90] sm:$0xff]
    %v4072 = vld [vmem:[%s4052 + $0x98] sm:$0xff]
    %v4073 = vld [vmem:[%s4052 + $0xa0] sm:$0xff]
    %v4074 = vld [vmem:[%s4052 + $0xa8] sm:$0xff]
    %v4075 = vld [vmem:[%s4052 + $0xb0] sm:$0xff]
    %v4076 = vld [vmem:[%s4052 + $0xb8] sm:$0xff]
    %v4077 = vld [vmem:[%s4052 + $0xc0] sm:$0xff]
    %v4078 = vld [vmem:[%s4052 + $0xc8] sm:$0xff]
    %v4079 = vld [vmem:[%s4052 + $0xd0] sm:$0xff]
    %v4080 = vld [vmem:[%s4052 + $0xd8] sm:$0xff]
    %v4081 = vld [vmem:[%s4052 + $0xe0] sm:$0xff]
    %v4082 = vld [vmem:[%s4052 + $0xe8] sm:$0xff]
    %v4083 = vld [vmem:[%s4052 + $0xf0] sm:$0xff]
    %v4084 = vld [vmem:[%s4052 + $0xf8] sm:$0xff]
    %v4117 = vunpack.c.l.b16 %v4053
    %v4118 = vunpack.c.h.b16 %v4053
    %v4119 = vunpack.c.l.b16 %v4054
    %v4120 = vunpack.c.h.b16 %v4054
    %v4121 = vunpack.c.l.b16 %v4055
    %v4122 = vunpack.c.h.b16 %v4055
    %v4123 = vunpack.c.l.b16 %v4056
    %v4124 = vunpack.c.h.b16 %v4056
    %v4125 = vunpack.c.l.b16 %v4057
    %v4126 = vunpack.c.h.b16 %v4057
    %v4127 = vunpack.c.l.b16 %v4058
    %v4128 = vunpack.c.h.b16 %v4058
    %v4129 = vunpack.c.l.b16 %v4059
    %v4130 = vunpack.c.h.b16 %v4059
    %v4131 = vunpack.c.l.b16 %v4060
    %v4132 = vunpack.c.h.b16 %v4060
    %v4133 = vunpack.c.l.b16 %v4061
    %v4134 = vunpack.c.h.b16 %v4061
    %v4135 = vunpack.c.l.b16 %v4062
    %v4136 = vunpack.c.h.b16 %v4062
    %v4137 = vunpack.c.l.b16 %v4063
    %v4138 = vunpack.c.h.b16 %v4063
    %v4139 = vunpack.c.l.b16 %v4064
    %v4140 = vunpack.c.h.b16 %v4064
    %v4141 = vunpack.c.l.b16 %v4065
    %v4142 = vunpack.c.h.b16 %v4065
    %v4143 = vunpack.c.l.b16 %v4066
    %v4144 = vunpack.c.h.b16 %v4066
    %v4145 = vunpack.c.l.b16 %v4067
    %v4146 = vunpack.c.h.b16 %v4067
    %v4147 = vunpack.c.l.b16 %v4068
    %v4148 = vunpack.c.h.b16 %v4068
    %v4149 = vunpack.c.l.b16 %v4069
    %v4150 = vunpack.c.h.b16 %v4069
    %v4151 = vunpack.c.l.b16 %v4070
    %v4152 = vunpack.c.h.b16 %v4070
    %v4153 = vunpack.c.l.b16 %v4071
    %v4154 = vunpack.c.h.b16 %v4071
    %v4155 = vunpack.c.l.b16 %v4072
    %v4156 = vunpack.c.h.b16 %v4072
    %v4157 = vunpack.c.l.b16 %v4073
    %v4158 = vunpack.c.h.b16 %v4073
    %v4159 = vunpack.c.l.b16 %v4074
    %v4160 = vunpack.c.h.b16 %v4074
    %v4161 = vunpack.c.l.b16 %v4075
    %v4162 = vunpack.c.h.b16 %v4075
    %v4163 = vunpack.c.l.b16 %v4076
    %v4164 = vunpack.c.h.b16 %v4076
    %v4165 = vunpack.c.l.b16 %v4077
    %v4166 = vunpack.c.h.b16 %v4077
    %v4167 = vunpack.c.l.b16 %v4078
    %v4168 = vunpack.c.h.b16 %v4078
    %v4169 = vunpack.c.l.b16 %v4079
    %v4170 = vunpack.c.h.b16 %v4079
    %v4171 = vunpack.c.l.b16 %v4080
    %v4172 = vunpack.c.h.b16 %v4080
    %v4173 = vunpack.c.l.b16 %v4081
    %v4174 = vunpack.c.h.b16 %v4081
    %v4175 = vunpack.c.l.b16 %v4082
    %v4176 = vunpack.c.h.b16 %v4082
    %v4177 = vunpack.c.l.b16 %v4083
    %v4178 = vunpack.c.h.b16 %v4083
    %v4179 = vunpack.c.l.b16 %v4084
    %v4180 = vunpack.c.h.b16 %v4084
    %v4181 = vpack.c.b16 %v4119, %v4117
    %v4182 = vpack.c.b16 %v4120, %v4118
    %v4183 = vpack.c.b16 %v4123, %v4121
    %v4184 = vpack.c.b16 %v4124, %v4122
    %v4185 = vpack.c.b16 %v4127, %v4125
    %v4186 = vpack.c.b16 %v4128, %v4126
    %v4187 = vpack.c.b16 %v4131, %v4129
    %v4188 = vpack.c.b16 %v4132, %v4130
    %v4189 = vpack.c.b16 %v4135, %v4133
    %v4190 = vpack.c.b16 %v4136, %v4134
    %v4191 = vpack.c.b16 %v4139, %v4137
    %v4192 = vpack.c.b16 %v4140, %v4138
    %v4193 = vpack.c.b16 %v4143, %v4141
    %v4194 = vpack.c.b16 %v4144, %v4142
    %v4195 = vpack.c.b16 %v4147, %v4145
    %v4196 = vpack.c.b16 %v4148, %v4146
    %v4197 = vpack.c.b16 %v4151, %v4149
    %v4198 = vpack.c.b16 %v4152, %v4150
    %v4199 = vpack.c.b16 %v4155, %v4153
    %v4200 = vpack.c.b16 %v4156, %v4154
    %v4201 = vpack.c.b16 %v4159, %v4157
    %v4202 = vpack.c.b16 %v4160, %v4158
    %v4203 = vpack.c.b16 %v4163, %v4161
    %v4204 = vpack.c.b16 %v4164, %v4162
    %v4205 = vpack.c.b16 %v4167, %v4165
    %v4206 = vpack.c.b16 %v4168, %v4166
    %v4207 = vpack.c.b16 %v4171, %v4169
    %v4208 = vpack.c.b16 %v4172, %v4170
    %v4209 = vpack.c.b16 %v4175, %v4173
    %v4210 = vpack.c.b16 %v4176, %v4174
    %v4211 = vpack.c.b16 %v4179, %v4177
    %v4212 = vpack.c.b16 %v4180, %v4178
    %4245 = vmatprep.subr.bf16.mxu0 %v4182
    %4246 = vmatpush1.bf16.msra.mxu0 %v4181
    %4247 = vmatprep.subr.bf16.mxu0 %v4184
    %4248 = vmatpush1.bf16.msra.mxu0 %v4183
    %4249 = vmatprep.subr.bf16.mxu0 %v4186
    %4250 = vmatpush1.bf16.msra.mxu0 %v4185
    %4251 = vmatprep.subr.bf16.mxu0 %v4188
    %4252 = vmatpush1.bf16.msra.mxu0 %v4187
    %4253 = vmatprep.subr.bf16.mxu0 %v4190
    %4254 = vmatpush1.bf16.msra.mxu0 %v4189
    %4255 = vmatprep.subr.bf16.mxu0 %v4192
    %4256 = vmatpush1.bf16.msra.mxu0 %v4191
    %4257 = vmatprep.subr.bf16.mxu0 %v4194
    %4258 = vmatpush1.bf16.msra.mxu0 %v4193
    %4259 = vmatprep.subr.bf16.mxu0 %v4196
    %4260 = vmatpush1.bf16.msra.mxu0 %v4195
    %4261 = vmatprep.subr.bf16.mxu0 %v4198
    %4262 = vmatpush1.bf16.msra.mxu0 %v4197
    %4263 = vmatprep.subr.bf16.mxu0 %v4200
    %4264 = vmatpush1.bf16.msra.mxu0 %v4199
    %4265 = vmatprep.subr.bf16.mxu0 %v4202
    %4266 = vmatpush1.bf16.msra.mxu0 %v4201
    %4267 = vmatprep.subr.bf16.mxu0 %v4204
    %4268 = vmatpush1.bf16.msra.mxu0 %v4203
    %4269 = vmatprep.subr.bf16.mxu0 %v4206
    %4270 = vmatpush1.bf16.msra.mxu0 %v4205
    %4271 = vmatprep.subr.bf16.mxu0 %v4208
    %4272 = vmatpush1.bf16.msra.mxu0 %v4207
    %4273 = vmatprep.subr.bf16.mxu0 %v4210
    %4274 = vmatpush1.bf16.msra.mxu0 %v4209
    %4275 = vmatprep.subr.bf16.mxu0 %v4212
    %4276 = vmatpush1.bf16.msra.mxu0 %v4211
    %4277 = vmatprep.mubr.bf16.mxu0 %v4051
    %4278 = vmatmul.mubr.bf16.gmra.mrb[0].mxu0 %v4050
    %v4279 = vpop.f32.mrb[0].mxu0
    %v4280 = vadd.f32 0.0, %v4279
    %v4281 = vpop.f32.mrb[0].mxu0
    %v4282 = vadd.f32 0.0, %v4281
    %v4283 = vpop.f32.mrb[0].mxu0
    %v4284 = vpop.f32.mrb[0].mxu0
    %4285 = vdwg.mxu0
    %v4286 = vadd.f32 %v4037, %v4280
    %v4287 = vadd.f32 %v4038, %v4282
    %s4288 = scalar_lea.vmem %s0, 136
    %v4289 = vld [vmem:[%s4288] sm:$0xff]
    %4290 = vset.pattern.permute.xlu0 0
    %4291 = vperm.xlu0 %4290, %v4289
    %v4292 = vpop.permute.xlu0 %4291
    %vm4293 = vcmp.eq.s32.totalorder %v4292, %v59
    %vm4294 = vcmp.eq.s32.totalorder %v4292, %v60
    %v4295 = vsel %vm4293, 1, 0
    %v4296 = vsel %vm4294, 1, 0
    %v4297 = vcvt.s32.f32 %v4295
    %v4298 = vcvt.s32.f32 %v4296
    %v4299 = vpack.c.bf16 %v4297, %v4297
    %v4300 = vpack.c.bf16 %v4298, %v4298
    %s4301 = scalar_lea.vmem [#allocation2], 4352
    %v4302 = vld [vmem:[%s4301] sm:$0xff]
    %v4303 = vld [vmem:[%s4301 + $0x8] sm:$0xff]
    %v4304 = vld [vmem:[%s4301 + $0x10] sm:$0xff]
    %v4305 = vld [vmem:[%s4301 + $0x18] sm:$0xff]
    %v4306 = vld [vmem:[%s4301 + $0x20] sm:$0xff]
    %v4307 = vld [vmem:[%s4301 + $0x28] sm:$0xff]
    %v4308 = vld [vmem:[%s4301 + $0x30] sm:$0xff]
    %v4309 = vld [vmem:[%s4301 + $0x38] sm:$0xff]
    %v4310 = vld [vmem:[%s4301 + $0x40] sm:$0xff]
    %v4311 = vld [vmem:[%s4301 + $0x48] sm:$0xff]
    %v4312 = vld [vmem:[%s4301 + $0x50] sm:$0xff]
    %v4313 = vld [vmem:[%s4301 + $0x58] sm:$0xff]
    %v4314 = vld [vmem:[%s4301 + $0x60] sm:$0xff]
    %v4315 = vld [vmem:[%s4301 + $0x68] sm:$0xff]
    %v4316 = vld [vmem:[%s4301 + $0x70] sm:$0xff]
    %v4317 = vld [vmem:[%s4301 + $0x78] sm:$0xff]
    %v4318 = vld [vmem:[%s4301 + $0x80] sm:$0xff]
    %v4319 = vld [vmem:[%s4301 + $0x88] sm:$0xff]
    %v4320 = vld [vmem:[%s4301 + $0x90] sm:$0xff]
    %v4321 = vld [vmem:[%s4301 + $0x98] sm:$0xff]
    %v4322 = vld [vmem:[%s4301 + $0xa0] sm:$0xff]
    %v4323 = vld [vmem:[%s4301 + $0xa8] sm:$0xff]
    %v4324 = vld [vmem:[%s4301 + $0xb0] sm:$0xff]
    %v4325 = vld [vmem:[%s4301 + $0xb8] sm:$0xff]
    %v4326 = vld [vmem:[%s4301 + $0xc0] sm:$0xff]
    %v4327 = vld [vmem:[%s4301 + $0xc8] sm:$0xff]
    %v4328 = vld [vmem:[%s4301 + $0xd0] sm:$0xff]
    %v4329 = vld [vmem:[%s4301 + $0xd8] sm:$0xff]
    %v4330 = vld [vmem:[%s4301 + $0xe0] sm:$0xff]
    %v4331 = vld [vmem:[%s4301 + $0xe8] sm:$0xff]
    %v4332 = vld [vmem:[%s4301 + $0xf0] sm:$0xff]
    %v4333 = vld [vmem:[%s4301 + $0xf8] sm:$0xff]
    %v4366 = vunpack.c.l.b16 %v4302
    %v4367 = vunpack.c.h.b16 %v4302
    %v4368 = vunpack.c.l.b16 %v4303
    %v4369 = vunpack.c.h.b16 %v4303
    %v4370 = vunpack.c.l.b16 %v4304
    %v4371 = vunpack.c.h.b16 %v4304
    %v4372 = vunpack.c.l.b16 %v4305
    %v4373 = vunpack.c.h.b16 %v4305
    %v4374 = vunpack.c.l.b16 %v4306
    %v4375 = vunpack.c.h.b16 %v4306
    %v4376 = vunpack.c.l.b16 %v4307
    %v4377 = vunpack.c.h.b16 %v4307
    %v4378 = vunpack.c.l.b16 %v4308
    %v4379 = vunpack.c.h.b16 %v4308
    %v4380 = vunpack.c.l.b16 %v4309
    %v4381 = vunpack.c.h.b16 %v4309
    %v4382 = vunpack.c.l.b16 %v4310
    %v4383 = vunpack.c.h.b16 %v4310
    %v4384 = vunpack.c.l.b16 %v4311
    %v4385 = vunpack.c.h.b16 %v4311
    %v4386 = vunpack.c.l.b16 %v4312
    %v4387 = vunpack.c.h.b16 %v4312
    %v4388 = vunpack.c.l.b16 %v4313
    %v4389 = vunpack.c.h.b16 %v4313
    %v4390 = vunpack.c.l.b16 %v4314
    %v4391 = vunpack.c.h.b16 %v4314
    %v4392 = vunpack.c.l.b16 %v4315
    %v4393 = vunpack.c.h.b16 %v4315
    %v4394 = vunpack.c.l.b16 %v4316
    %v4395 = vunpack.c.h.b16 %v4316
    %v4396 = vunpack.c.l.b16 %v4317
    %v4397 = vunpack.c.h.b16 %v4317
    %v4398 = vunpack.c.l.b16 %v4318
    %v4399 = vunpack.c.h.b16 %v4318
    %v4400 = vunpack.c.l.b16 %v4319
    %v4401 = vunpack.c.h.b16 %v4319
    %v4402 = vunpack.c.l.b16 %v4320
    %v4403 = vunpack.c.h.b16 %v4320
    %v4404 = vunpack.c.l.b16 %v4321
    %v4405 = vunpack.c.h.b16 %v4321
    %v4406 = vunpack.c.l.b16 %v4322
    %v4407 = vunpack.c.h.b16 %v4322
    %v4408 = vunpack.c.l.b16 %v4323
    %v4409 = vunpack.c.h.b16 %v4323
    %v4410 = vunpack.c.l.b16 %v4324
    %v4411 = vunpack.c.h.b16 %v4324
    %v4412 = vunpack.c.l.b16 %v4325
    %v4413 = vunpack.c.h.b16 %v4325
    %v4414 = vunpack.c.l.b16 %v4326
    %v4415 = vunpack.c.h.b16 %v4326
    %v4416 = vunpack.c.l.b16 %v4327
    %v4417 = vunpack.c.h.b16 %v4327
    %v4418 = vunpack.c.l.b16 %v4328
    %v4419 = vunpack.c.h.b16 %v4328
    %v4420 = vunpack.c.l.b16 %v4329
    %v4421 = vunpack.c.h.b16 %v4329
    %v4422 = vunpack.c.l.b16 %v4330
    %v4423 = vunpack.c.h.b16 %v4330
    %v4424 = vunpack.c.l.b16 %v4331
    %v4425 = vunpack.c.h.b16 %v4331
    %v4426 = vunpack.c.l.b16 %v4332
    %v4427 = vunpack.c.h.b16 %v4332
    %v4428 = vunpack.c.l.b16 %v4333
    %v4429 = vunpack.c.h.b16 %v4333
    %v4430 = vpack.c.b16 %v4368, %v4366
    %v4431 = vpack.c.b16 %v4369, %v4367
    %v4432 = vpack.c.b16 %v4372, %v4370
    %v4433 = vpack.c.b16 %v4373, %v4371
    %v4434 = vpack.c.b16 %v4376, %v4374
    %v4435 = vpack.c.b16 %v4377, %v4375
    %v4436 = vpack.c.b16 %v4380, %v4378
    %v4437 = vpack.c.b16 %v4381, %v4379
    %v4438 = vpack.c.b16 %v4384, %v4382
    %v4439 = vpack.c.b16 %v4385, %v4383
    %v4440 = vpack.c.b16 %v4388, %v4386
    %v4441 = vpack.c.b16 %v4389, %v4387
    %v4442 = vpack.c.b16 %v4392, %v4390
    %v4443 = vpack.c.b16 %v4393, %v4391
    %v4444 = vpack.c.b16 %v4396, %v4394
    %v4445 = vpack.c.b16 %v4397, %v4395
    %v4446 = vpack.c.b16 %v4400, %v4398
    %v4447 = vpack.c.b16 %v4401, %v4399
    %v4448 = vpack.c.b16 %v4404, %v4402
    %v4449 = vpack.c.b16 %v4405, %v4403
    %v4450 = vpack.c.b16 %v4408, %v4406
    %v4451 = vpack.c.b16 %v4409, %v4407
    %v4452 = vpack.c.b16 %v4412, %v4410
    %v4453 = vpack.c.b16 %v4413, %v4411
    %v4454 = vpack.c.b16 %v4416, %v4414
    %v4455 = vpack.c.b16 %v4417, %v4415
    %v4456 = vpack.c.b16 %v4420, %v4418
    %v4457 = vpack.c.b16 %v4421, %v4419
    %v4458 = vpack.c.b16 %v4424, %v4422
    %v4459 = vpack.c.b16 %v4425, %v4423
    %v4460 = vpack.c.b16 %v4428, %v4426
    %v4461 = vpack.c.b16 %v4429, %v4427
    %4494 = vmatprep.subr.bf16.mxu0 %v4431
    %4495 = vmatpush1.bf16.msra.mxu0 %v4430
    %4496 = vmatprep.subr.bf16.mxu0 %v4433
    %4497 = vmatpush1.bf16.msra.mxu0 %v4432
    %4498 = vmatprep.subr.bf16.mxu0 %v4435
    %4499 = vmatpush1.bf16.msra.mxu0 %v4434
    %4500 = vmatprep.subr.bf16.mxu0 %v4437
    %4501 = vmatpush1.bf16.msra.mxu0 %v4436
    %4502 = vmatprep.subr.bf16.mxu0 %v4439
    %4503 = vmatpush1.bf16.msra.mxu0 %v4438
    %4504 = vmatprep.subr.bf16.mxu0 %v4441
    %4505 = vmatpush1.bf16.msra.mxu0 %v4440
    %4506 = vmatprep.subr.bf16.mxu0 %v4443
    %4507 = vmatpush1.bf16.msra.mxu0 %v4442
    %4508 = vmatprep.subr.bf16.mxu0 %v4445
    %4509 = vmatpush1.bf16.msra.mxu0 %v4444
    %4510 = vmatprep.subr.bf16.mxu0 %v4447
    %4511 = vmatpush1.bf16.msra.mxu0 %v4446
    %4512 = vmatprep.subr.bf16.mxu0 %v4449
    %4513 = vmatpush1.bf16.msra.mxu0 %v4448
    %4514 = vmatprep.subr.bf16.mxu0 %v4451
    %4515 = vmatpush1.bf16.msra.mxu0 %v4450
    %4516 = vmatprep.subr.bf16.mxu0 %v4453
    %4517 = vmatpush1.bf16.msra.mxu0 %v4452
    %4518 = vmatprep.subr.bf16.mxu0 %v4455
    %4519 = vmatpush1.bf16.msra.mxu0 %v4454
    %4520 = vmatprep.subr.bf16.mxu0 %v4457
    %4521 = vmatpush1.bf16.msra.mxu0 %v4456
    %4522 = vmatprep.subr.bf16.mxu0 %v4459
    %4523 = vmatpush1.bf16.msra.mxu0 %v4458
    %4524 = vmatprep.subr.bf16.mxu0 %v4461
    %4525 = vmatpush1.bf16.msra.mxu0 %v4460
    %4526 = vmatprep.mubr.bf16.mxu0 %v4300
    %4527 = vmatmul.mubr.bf16.gmra.mrb[0].mxu0 %v4299
    %v4528 = vpop.f32.mrb[0].mxu0
    %v4529 = vadd.f32 0.0, %v4528
    %v4530 = vpop.f32.mrb[0].mxu0
    %v4531 = vadd.f32 0.0, %v4530
    %v4532 = vpop.f32.mrb[0].mxu0
    %v4533 = vpop.f32.mrb[0].mxu0
    %4534 = vdwg.mxu0
    %v4535 = vadd.f32 %v4286, %v4529
    %v4536 = vadd.f32 %v4287, %v4531
    %s4537 = scalar_lea.vmem %s0, 144
    %v4538 = vld [vmem:[%s4537] sm:$0xff]
    %4539 = vset.pattern.permute.xlu0 0
    %4540 = vperm.xlu0 %4539, %v4538
    %v4541 = vpop.permute.xlu0 %4540
    %vm4542 = vcmp.eq.s32.totalorder %v4541, %v59
    %vm4543 = vcmp.eq.s32.totalorder %v4541, %v60
    %v4544 = vsel %vm4542, 1, 0
    %v4545 = vsel %vm4543, 1, 0
    %v4546 = vcvt.s32.f32 %v4544
    %v4547 = vcvt.s32.f32 %v4545
    %v4548 = vpack.c.bf16 %v4546, %v4546
    %v4549 = vpack.c.bf16 %v4547, %v4547
    %s4550 = scalar_lea.vmem [#allocation2], 4608
    %v4551 = vld [vmem:[%s4550] sm:$0xff]
    %v4552 = vld [vmem:[%s4550 + $0x8] sm:$0xff]
    %v4553 = vld [vmem:[%s4550 + $0x10] sm:$0xff]
    %v4554 = vld [vmem:[%s4550 + $0x18] sm:$0xff]
    %v4555 = vld [vmem:[%s4550 + $0x20] sm:$0xff]
    %v4556 = vld [vmem:[%s4550 + $0x28] sm:$0xff]
    %v4557 = vld [vmem:[%s4550 + $0x30] sm:$0xff]
    %v4558 = vld [vmem:[%s4550 + $0x38] sm:$0xff]
    %v4559 = vld [vmem:[%s4550 + $0x40] sm:$0xff]
    %v4560 = vld [vmem:[%s4550 + $0x48] sm:$0xff]
    %v4561 = vld [vmem:[%s4550 + $0x50] sm:$0xff]
    %v4562 = vld [vmem:[%s4550 + $0x58] sm:$0xff]
    %v4563 = vld [vmem:[%s4550 + $0x60] sm:$0xff]
    %v4564 = vld [vmem:[%s4550 + $0x68] sm:$0xff]
    %v4565 = vld [vmem:[%s4550 + $0x70] sm:$0xff]
    %v4566 = vld [vmem:[%s4550 + $0x78] sm:$0xff]
    %v4567 = vld [vmem:[%s4550 + $0x80] sm:$0xff]
    %v4568 = vld [vmem:[%s4550 + $0x88] sm:$0xff]
    %v4569 = vld [vmem:[%s4550 + $0x90] sm:$0xff]
    %v4570 = vld [vmem:[%s4550 + $0x98] sm:$0xff]
    %v4571 = vld [vmem:[%s4550 + $0xa0] sm:$0xff]
    %v4572 = vld [vmem:[%s4550 + $0xa8] sm:$0xff]
    %v4573 = vld [vmem:[%s4550 + $0xb0] sm:$0xff]
    %v4574 = vld [vmem:[%s4550 + $0xb8] sm:$0xff]
    %v4575 = vld [vmem:[%s4550 + $0xc0] sm:$0xff]
    %v4576 = vld [vmem:[%s4550 + $0xc8] sm:$0xff]
    %v4577 = vld [vmem:[%s4550 + $0xd0] sm:$0xff]
    %v4578 = vld [vmem:[%s4550 + $0xd8] sm:$0xff]
    %v4579 = vld [vmem:[%s4550 + $0xe0] sm:$0xff]
    %v4580 = vld [vmem:[%s4550 + $0xe8] sm:$0xff]
    %v4581 = vld [vmem:[%s4550 + $0xf0] sm:$0xff]
    %v4582 = vld [vmem:[%s4550 + $0xf8] sm:$0xff]
    %v4615 = vunpack.c.l.b16 %v4551
    %v4616 = vunpack.c.h.b16 %v4551
    %v4617 = vunpack.c.l.b16 %v4552
    %v4618 = vunpack.c.h.b16 %v4552
    %v4619 = vunpack.c.l.b16 %v4553
    %v4620 = vunpack.c.h.b16 %v4553
    %v4621 = vunpack.c.l.b16 %v4554
    %v4622 = vunpack.c.h.b16 %v4554
    %v4623 = vunpack.c.l.b16 %v4555
    %v4624 = vunpack.c.h.b16 %v4555
    %v4625 = vunpack.c.l.b16 %v4556
    %v4626 = vunpack.c.h.b16 %v4556
    %v4627 = vunpack.c.l.b16 %v4557
    %v4628 = vunpack.c.h.b16 %v4557
    %v4629 = vunpack.c.l.b16 %v4558
    %v4630 = vunpack.c.h.b16 %v4558
    %v4631 = vunpack.c.l.b16 %v4559
    %v4632 = vunpack.c.h.b16 %v4559
    %v4633 = vunpack.c.l.b16 %v4560
    %v4634 = vunpack.c.h.b16 %v4560
    %v4635 = vunpack.c.l.b16 %v4561
    %v4636 = vunpack.c.h.b16 %v4561
    %v4637 = vunpack.c.l.b16 %v4562
    %v4638 = vunpack.c.h.b16 %v4562
    %v4639 = vunpack.c.l.b16 %v4563
    %v4640 = vunpack.c.h.b16 %v4563
    %v4641 = vunpack.c.l.b16 %v4564
    %v4642 = vunpack.c.h.b16 %v4564
    %v4643 = vunpack.c.l.b16 %v4565
    %v4644 = vunpack.c.h.b16 %v4565
    %v4645 = vunpack.c.l.b16 %v4566
    %v4646 = vunpack.c.h.b16 %v4566
    %v4647 = vunpack.c.l.b16 %v4567
    %v4648 = vunpack.c.h.b16 %v4567
    %v4649 = vunpack.c.l.b16 %v4568
    %v4650 = vunpack.c.h.b16 %v4568
    %v4651 = vunpack.c.l.b16 %v4569
    %v4652 = vunpack.c.h.b16 %v4569
    %v4653 = vunpack.c.l.b16 %v4570
    %v4654 = vunpack.c.h.b16 %v4570
    %v4655 = vunpack.c.l.b16 %v4571
    %v4656 = vunpack.c.h.b16 %v4571
    %v4657 = vunpack.c.l.b16 %v4572
    %v4658 = vunpack.c.h.b16 %v4572
    %v4659 = vunpack.c.l.b16 %v4573
    %v4660 = vunpack.c.h.b16 %v4573
    %v4661 = vunpack.c.l.b16 %v4574
    %v4662 = vunpack.c.h.b16 %v4574
    %v4663 = vunpack.c.l.b16 %v4575
    %v4664 = vunpack.c.h.b16 %v4575
    %v4665 = vunpack.c.l.b16 %v4576
    %v4666 = vunpack.c.h.b16 %v4576
    %v4667 = vunpack.c.l.b16 %v4577
    %v4668 = vunpack.c.h.b16 %v4577
    %v4669 = vunpack.c.l.b16 %v4578
    %v4670 = vunpack.c.h.b16 %v4578
    %v4671 = vunpack.c.l.b16 %v4579
    %v4672 = vunpack.c.h.b16 %v4579
    %v4673 = vunpack.c.l.b16 %v4580
    %v4674 = vunpack.c.h.b16 %v4580
    %v4675 = vunpack.c.l.b16 %v4581
    %v4676 = vunpack.c.h.b16 %v4581
    %v4677 = vunpack.c.l.b16 %v4582
    %v4678 = vunpack.c.h.b16 %v4582
    %v4679 = vpack.c.b16 %v4617, %v4615
    %v4680 = vpack.c.b16 %v4618, %v4616
    %v4681 = vpack.c.b16 %v4621, %v4619
    %v4682 = vpack.c.b16 %v4622, %v4620
    %v4683 = vpack.c.b16 %v4625, %v4623
    %v4684 = vpack.c.b16 %v4626, %v4624
    %v4685 = vpack.c.b16 %v4629, %v4627
    %v4686 = vpack.c.b16 %v4630, %v4628
    %v4687 = vpack.c.b16 %v4633, %v4631
    %v4688 = vpack.c.b16 %v4634, %v4632
    %v4689 = vpack.c.b16 %v4637, %v4635
    %v4690 = vpack.c.b16 %v4638, %v4636
    %v4691 = vpack.c.b16 %v4641, %v4639
    %v4692 = vpack.c.b16 %v4642, %v4640
    %v4693 = vpack.c.b16 %v4645, %v4643
    %v4694 = vpack.c.b16 %v4646, %v4644
    %v4695 = vpack.c.b16 %v4649, %v4647
    %v4696 = vpack.c.b16 %v4650, %v4648
    %v4697 = vpack.c.b16 %v4653, %v4651
    %v4698 = vpack.c.b16 %v4654, %v4652
    %v4699 = vpack.c.b16 %v4657, %v4655
    %v4700 = vpack.c.b16 %v4658, %v4656
    %v4701 = vpack.c.b16 %v4661, %v4659
    %v4702 = vpack.c.b16 %v4662, %v4660
    %v4703 = vpack.c.b16 %v4665, %v4663
    %v4704 = vpack.c.b16 %v4666, %v4664
    %v4705 = vpack.c.b16 %v4669, %v4667
    %v4706 = vpack.c.b16 %v4670, %v4668
    %v4707 = vpack.c.b16 %v4673, %v4671
    %v4708 = vpack.c.b16 %v4674, %v4672
    %v4709 = vpack.c.b16 %v4677, %v4675
    %v4710 = vpack.c.b16 %v4678, %v4676
    %4743 = vmatprep.subr.bf16.mxu0 %v4680
    %4744 = vmatpush1.bf16.msra.mxu0 %v4679
    %4745 = vmatprep.subr.bf16.mxu0 %v4682
    %4746 = vmatpush1.bf16.msra.mxu0 %v4681
    %4747 = vmatprep.subr.bf16.mxu0 %v4684
    %4748 = vmatpush1.bf16.msra.mxu0 %v4683
    %4749 = vmatprep.subr.bf16.mxu0 %v4686
    %4750 = vmatpush1.bf16.msra.mxu0 %v4685
    %4751 = vmatprep.subr.bf16.mxu0 %v4688
    %4752 = vmatpush1.bf16.msra.mxu0 %v4687
    %4753 = vmatprep.subr.bf16.mxu0 %v4690
    %4754 = vmatpush1.bf16.msra.mxu0 %v4689
    %4755 = vmatprep.subr.bf16.mxu0 %v4692
    %4756 = vmatpush1.bf16.msra.mxu0 %v4691
    %4757 = vmatprep.subr.bf16.mxu0 %v4694
    %4758 = vmatpush1.bf16.msra.mxu0 %v4693
    %4759 = vmatprep.subr.bf16.mxu0 %v4696
    %4760 = vmatpush1.bf16.msra.mxu0 %v4695
    %4761 = vmatprep.subr.bf16.mxu0 %v4698
    %4762 = vmatpush1.bf16.msra.mxu0 %v4697
    %4763 = vmatprep.subr.bf16.mxu0 %v4700
    %4764 = vmatpush1.bf16.msra.mxu0 %v4699
    %4765 = vmatprep.subr.bf16.mxu0 %v4702
    %4766 = vmatpush1.bf16.msra.mxu0 %v4701
    %4767 = vmatprep.subr.bf16.mxu0 %v4704
    %4768 = vmatpush1.bf16.msra.mxu0 %v4703
    %4769 = vmatprep.subr.bf16.mxu0 %v4706
    %4770 = vmatpush1.bf16.msra.mxu0 %v4705
    %4771 = vmatprep.subr.bf16.mxu0 %v4708
    %4772 = vmatpush1.bf16.msra.mxu0 %v4707
    %4773 = vmatprep.subr.bf16.mxu0 %v4710
    %4774 = vmatpush1.bf16.msra.mxu0 %v4709
    %4775 = vmatprep.mubr.bf16.mxu0 %v4549
    %4776 = vmatmul.mubr.bf16.gmra.mrb[0].mxu0 %v4548
    %v4777 = vpop.f32.mrb[0].mxu0
    %v4778 = vadd.f32 0.0, %v4777
    %v4779 = vpop.f32.mrb[0].mxu0
    %v4780 = vadd.f32 0.0, %v4779
    %v4781 = vpop.f32.mrb[0].mxu0
    %v4782 = vpop.f32.mrb[0].mxu0
    %4783 = vdwg.mxu0
    %v4784 = vadd.f32 %v4535, %v4778
    %v4785 = vadd.f32 %v4536, %v4780
    %s4786 = scalar_lea.vmem %s0, 152
    %v4787 = vld [vmem:[%s4786] sm:$0xff]
    %4788 = vset.pattern.permute.xlu0 0
    %4789 = vperm.xlu0 %4788, %v4787
    %v4790 = vpop.permute.xlu0 %4789
    %vm4791 = vcmp.eq.s32.totalorder %v4790, %v59
    %vm4792 = vcmp.eq.s32.totalorder %v4790, %v60
    %v4793 = vsel %vm4791, 1, 0
    %v4794 = vsel %vm4792, 1, 0
    %v4795 = vcvt.s32.f32 %v4793
    %v4796 = vcvt.s32.f32 %v4794
    %v4797 = vpack.c.bf16 %v4795, %v4795
    %v4798 = vpack.c.bf16 %v4796, %v4796
    %s4799 = scalar_lea.vmem [#allocation2], 4864
    %v4800 = vld [vmem:[%s4799] sm:$0xff]
    %v4801 = vld [vmem:[%s4799 + $0x8] sm:$0xff]
    %v4802 = vld [vmem:[%s4799 + $0x10] sm:$0xff]
    %v4803 = vld [vmem:[%s4799 + $0x18] sm:$0xff]
    %v4804 = vld [vmem:[%s4799 + $0x20] sm:$0xff]
    %v4805 = vld [vmem:[%s4799 + $0x28] sm:$0xff]
    %v4806 = vld [vmem:[%s4799 + $0x30] sm:$0xff]
    %v4807 = vld [vmem:[%s4799 + $0x38] sm:$0xff]
    %v4808 = vld [vmem:[%s4799 + $0x40] sm:$0xff]
    %v4809 = vld [vmem:[%s4799 + $0x48] sm:$0xff]
    %v4810 = vld [vmem:[%s4799 + $0x50] sm:$0xff]
    %v4811 = vld [vmem:[%s4799 + $0x58] sm:$0xff]
    %v4812 = vld [vmem:[%s4799 + $0x60] sm:$0xff]
    %v4813 = vld [vmem:[%s4799 + $0x68] sm:$0xff]
    %v4814 = vld [vmem:[%s4799 + $0x70] sm:$0xff]
    %v4815 = vld [vmem:[%s4799 + $0x78] sm:$0xff]
    %v4816 = vld [vmem:[%s4799 + $0x80] sm:$0xff]
    %v4817 = vld [vmem:[%s4799 + $0x88] sm:$0xff]
    %v4818 = vld [vmem:[%s4799 + $0x90] sm:$0xff]
    %v4819 = vld [vmem:[%s4799 + $0x98] sm:$0xff]
    %v4820 = vld [vmem:[%s4799 + $0xa0] sm:$0xff]
    %v4821 = vld [vmem:[%s4799 + $0xa8] sm:$0xff]
    %v4822 = vld [vmem:[%s4799 + $0xb0] sm:$0xff]
    %v4823 = vld [vmem:[%s4799 + $0xb8] sm:$0xff]
    %v4824 = vld [vmem:[%s4799 + $0xc0] sm:$0xff]
    %v4825 = vld [vmem:[%s4799 + $0xc8] sm:$0xff]
    %v4826 = vld [vmem:[%s4799 + $0xd0] sm:$0xff]
    %v4827 = vld [vmem:[%s4799 + $0xd8] sm:$0xff]
    %v4828 = vld [vmem:[%s4799 + $0xe0] sm:$0xff]
    %v4829 = vld [vmem:[%s4799 + $0xe8] sm:$0xff]
    %v4830 = vld [vmem:[%s4799 + $0xf0] sm:$0xff]
    %v4831 = vld [vmem:[%s4799 + $0xf8] sm:$0xff]
    %v4864 = vunpack.c.l.b16 %v4800
    %v4865 = vunpack.c.h.b16 %v4800
    %v4866 = vunpack.c.l.b16 %v4801
    %v4867 = vunpack.c.h.b16 %v4801
    %v4868 = vunpack.c.l.b16 %v4802
    %v4869 = vunpack.c.h.b16 %v4802
    %v4870 = vunpack.c.l.b16 %v4803
    %v4871 = vunpack.c.h.b16 %v4803
    %v4872 = vunpack.c.l.b16 %v4804
    %v4873 = vunpack.c.h.b16 %v4804
    %v4874 = vunpack.c.l.b16 %v4805
    %v4875 = vunpack.c.h.b16 %v4805
    %v4876 = vunpack.c.l.b16 %v4806
    %v4877 = vunpack.c.h.b16 %v4806
    %v4878 = vunpack.c.l.b16 %v4807
    %v4879 = vunpack.c.h.b16 %v4807
    %v4880 = vunpack.c.l.b16 %v4808
    %v4881 = vunpack.c.h.b16 %v4808
    %v4882 = vunpack.c.l.b16 %v4809
    %v4883 = vunpack.c.h.b16 %v4809
    %v4884 = vunpack.c.l.b16 %v4810
    %v4885 = vunpack.c.h.b16 %v4810
    %v4886 = vunpack.c.l.b16 %v4811
    %v4887 = vunpack.c.h.b16 %v4811
    %v4888 = vunpack.c.l.b16 %v4812
    %v4889 = vunpack.c.h.b16 %v4812
    %v4890 = vunpack.c.l.b16 %v4813
    %v4891 = vunpack.c.h.b16 %v4813
    %v4892 = vunpack.c.l.b16 %v4814
    %v4893 = vunpack.c.h.b16 %v4814
    %v4894 = vunpack.c.l.b16 %v4815
    %v4895 = vunpack.c.h.b16 %v4815
    %v4896 = vunpack.c.l.b16 %v4816
    %v4897 = vunpack.c.h.b16 %v4816
    %v4898 = vunpack.c.l.b16 %v4817
    %v4899 = vunpack.c.h.b16 %v4817
    %v4900 = vunpack.c.l.b16 %v4818
    %v4901 = vunpack.c.h.b16 %v4818
    %v4902 = vunpack.c.l.b16 %v4819
    %v4903 = vunpack.c.h.b16 %v4819
    %v4904 = vunpack.c.l.b16 %v4820
    %v4905 = vunpack.c.h.b16 %v4820
    %v4906 = vunpack.c.l.b16 %v4821
    %v4907 = vunpack.c.h.b16 %v4821
    %v4908 = vunpack.c.l.b16 %v4822
    %v4909 = vunpack.c.h.b16 %v4822
    %v4910 = vunpack.c.l.b16 %v4823
    %v4911 = vunpack.c.h.b16 %v4823
    %v4912 = vunpack.c.l.b16 %v4824
    %v4913 = vunpack.c.h.b16 %v4824
    %v4914 = vunpack.c.l.b16 %v4825
    %v4915 = vunpack.c.h.b16 %v4825
    %v4916 = vunpack.c.l.b16 %v4826
    %v4917 = vunpack.c.h.b16 %v4826
    %v4918 = vunpack.c.l.b16 %v4827
    %v4919 = vunpack.c.h.b16 %v4827
    %v4920 = vunpack.c.l.b16 %v4828
    %v4921 = vunpack.c.h.b16 %v4828
    %v4922 = vunpack.c.l.b16 %v4829
    %v4923 = vunpack.c.h.b16 %v4829
    %v4924 = vunpack.c.l.b16 %v4830
    %v4925 = vunpack.c.h.b16 %v4830
    %v4926 = vunpack.c.l.b16 %v4831
    %v4927 = vunpack.c.h.b16 %v4831
    %v4928 = vpack.c.b16 %v4866, %v4864
    %v4929 = vpack.c.b16 %v4867, %v4865
    %v4930 = vpack.c.b16 %v4870, %v4868
    %v4931 = vpack.c.b16 %v4871, %v4869
    %v4932 = vpack.c.b16 %v4874, %v4872
    %v4933 = vpack.c.b16 %v4875, %v4873
    %v4934 = vpack.c.b16 %v4878, %v4876
    %v4935 = vpack.c.b16 %v4879, %v4877
    %v4936 = vpack.c.b16 %v4882, %v4880
    %v4937 = vpack.c.b16 %v4883, %v4881
    %v4938 = vpack.c.b16 %v4886, %v4884
    %v4939 = vpack.c.b16 %v4887, %v4885
    %v4940 = vpack.c.b16 %v4890, %v4888
    %v4941 = vpack.c.b16 %v4891, %v4889
    %v4942 = vpack.c.b16 %v4894, %v4892
    %v4943 = vpack.c.b16 %v4895, %v4893
    %v4944 = vpack.c.b16 %v4898, %v4896
    %v4945 = vpack.c.b16 %v4899, %v4897
    %v4946 = vpack.c.b16 %v4902, %v4900
    %v4947 = vpack.c.b16 %v4903, %v4901
    %v4948 = vpack.c.b16 %v4906, %v4904
    %v4949 = vpack.c.b16 %v4907, %v4905
    %v4950 = vpack.c.b16 %v4910, %v4908
    %v4951 = vpack.c.b16 %v4911, %v4909
    %v4952 = vpack.c.b16 %v4914, %v4912
    %v4953 = vpack.c.b16 %v4915, %v4913
    %v4954 = vpack.c.b16 %v4918, %v4916
    %v4955 = vpack.c.b16 %v4919, %v4917
    %v4956 = vpack.c.b16 %v4922, %v4920
    %v4957 = vpack.c.b16 %v4923, %v4921
    %v4958 = vpack.c.b16 %v4926, %v4924
    %v4959 = vpack.c.b16 %v4927, %v4925
    %4992 = vmatprep.subr.bf16.mxu0 %v4929
    %4993 = vmatpush1.bf16.msra.mxu0 %v4928
    %4994 = vmatprep.subr.bf16.mxu0 %v4931
    %4995 = vmatpush1.bf16.msra.mxu0 %v4930
    %4996 = vmatprep.subr.bf16.mxu0 %v4933
    %4997 = vmatpush1.bf16.msra.mxu0 %v4932
    %4998 = vmatprep.subr.bf16.mxu0 %v4935
    %4999 = vmatpush1.bf16.msra.mxu0 %v4934
    %5000 = vmatprep.subr.bf16.mxu0 %v4937
    %5001 = vmatpush1.bf16.msra.mxu0 %v4936
    %5002 = vmatprep.subr.bf16.mxu0 %v4939
    %5003 = vmatpush1.bf16.msra.mxu0 %v4938
    %5004 = vmatprep.subr.bf16.mxu0 %v4941
    %5005 = vmatpush1.bf16.msra.mxu0 %v4940
    %5006 = vmatprep.subr.bf16.mxu0 %v4943
    %5007 = vmatpush1.bf16.msra.mxu0 %v4942
    %5008 = vmatprep.subr.bf16.mxu0 %v4945
    %5009 = vmatpush1.bf16.msra.mxu0 %v4944
    %5010 = vmatprep.subr.bf16.mxu0 %v4947
    %5011 = vmatpush1.bf16.msra.mxu0 %v4946
    %5012 = vmatprep.subr.bf16.mxu0 %v4949
    %5013 = vmatpush1.bf16.msra.mxu0 %v4948
    %5014 = vmatprep.subr.bf16.mxu0 %v4951
    %5015 = vmatpush1.bf16.msra.mxu0 %v4950
    %5016 = vmatprep.subr.bf16.mxu0 %v4953
    %5017 = vmatpush1.bf16.msra.mxu0 %v4952
    %5018 = vmatprep.subr.bf16.mxu0 %v4955
    %5019 = vmatpush1.bf16.msra.mxu0 %v4954
    %5020 = vmatprep.subr.bf16.mxu0 %v4957
    %5021 = vmatpush1.bf16.msra.mxu0 %v4956
    %5022 = vmatprep.subr.bf16.mxu0 %v4959
    %5023 = vmatpush1.bf16.msra.mxu0 %v4958
    %5024 = vmatprep.mubr.bf16.mxu0 %v4798
    %5025 = vmatmul.mubr.bf16.gmra.mrb[0].mxu0 %v4797
    %v5026 = vpop.f32.mrb[0].mxu0
    %v5027 = vadd.f32 0.0, %v5026
    %v5028 = vpop.f32.mrb[0].mxu0
    %v5029 = vadd.f32 0.0, %v5028
    %v5030 = vpop.f32.mrb[0].mxu0
    %v5031 = vpop.f32.mrb[0].mxu0
    %5032 = vdwg.mxu0
    %v5033 = vadd.f32 %v4784, %v5027
    %v5034 = vadd.f32 %v4785, %v5029
    %s5035 = scalar_lea.vmem %s0, 160
    %v5036 = vld [vmem:[%s5035] sm:$0xff]
    %5037 = vset.pattern.permute.xlu0 0
    %5038 = vperm.xlu0 %5037, %v5036
    %v5039 = vpop.permute.xlu0 %5038
    %vm5040 = vcmp.eq.s32.totalorder %v5039, %v59
    %vm5041 = vcmp.eq.s32.totalorder %v5039, %v60
    %v5042 = vsel %vm5040, 1, 0
    %v5043 = vsel %vm5041, 1, 0
    %v5044 = vcvt.s32.f32 %v5042
    %v5045 = vcvt.s32.f32 %v5043
    %v5046 = vpack.c.bf16 %v5044, %v5044
    %v5047 = vpack.c.bf16 %v5045, %v5045
    %s5048 = scalar_lea.vmem [#allocation2], 5120
    %v5049 = vld [vmem:[%s5048] sm:$0xff]
    %v5050 = vld [vmem:[%s5048 + $0x8] sm:$0xff]
    %v5051 = vld [vmem:[%s5048 + $0x10] sm:$0xff]
    %v5052 = vld [vmem:[%s5048 + $0x18] sm:$0xff]
    %v5053 = vld [vmem:[%s5048 + $0x20] sm:$0xff]
    %v5054 = vld [vmem:[%s5048 + $0x28] sm:$0xff]
    %v5055 = vld [vmem:[%s5048 + $0x30] sm:$0xff]
    %v5056 = vld [vmem:[%s5048 + $0x38] sm:$0xff]
    %v5057 = vld [vmem:[%s5048 + $0x40] sm:$0xff]
    %v5058 = vld [vmem:[%s5048 + $0x48] sm:$0xff]
    %v5059 = vld [vmem:[%s5048 + $0x50] sm:$0xff]
    %v5060 = vld [vmem:[%s5048 + $0x58] sm:$0xff]
    %v5061 = vld [vmem:[%s5048 + $0x60] sm:$0xff]
    %v5062 = vld [vmem:[%s5048 + $0x68] sm:$0xff]
    %v5063 = vld [vmem:[%s5048 + $0x70] sm:$0xff]
    %v5064 = vld [vmem:[%s5048 + $0x78] sm:$0xff]
    %v5065 = vld [vmem:[%s5048 + $0x80] sm:$0xff]
    %v5066 = vld [vmem:[%s5048 + $0x88] sm:$0xff]
    %v5067 = vld [vmem:[%s5048 + $0x90] sm:$0xff]
    %v5068 = vld [vmem:[%s5048 + $0x98] sm:$0xff]
    %v5069 = vld [vmem:[%s5048 + $0xa0] sm:$0xff]
    %v5070 = vld [vmem:[%s5048 + $0xa8] sm:$0xff]
    %v5071 = vld [vmem:[%s5048 + $0xb0] sm:$0xff]
    %v5072 = vld [vmem:[%s5048 + $0xb8] sm:$0xff]
    %v5073 = vld [vmem:[%s5048 + $0xc0] sm:$0xff]
    %v5074 = vld [vmem:[%s5048 + $0xc8] sm:$0xff]
    %v5075 = vld [vmem:[%s5048 + $0xd0] sm:$0xff]
    %v5076 = vld [vmem:[%s5048 + $0xd8] sm:$0xff]
    %v5077 = vld [vmem:[%s5048 + $0xe0] sm:$0xff]
    %v5078 = vld [vmem:[%s5048 + $0xe8] sm:$0xff]
    %v5079 = vld [vmem:[%s5048 + $0xf0] sm:$0xff]
    %v5080 = vld [vmem:[%s5048 + $0xf8] sm:$0xff]
    %v5113 = vunpack.c.l.b16 %v5049
    %v5114 = vunpack.c.h.b16 %v5049
    %v5115 = vunpack.c.l.b16 %v5050
    %v5116 = vunpack.c.h.b16 %v5050
    %v5117 = vunpack.c.l.b16 %v5051
    %v5118 = vunpack.c.h.b16 %v5051
    %v5119 = vunpack.c.l.b16 %v5052
    %v5120 = vunpack.c.h.b16 %v5052
    %v5121 = vunpack.c.l.b16 %v5053
    %v5122 = vunpack.c.h.b16 %v5053
    %v5123 = vunpack.c.l.b16 %v5054
    %v5124 = vunpack.c.h.b16 %v5054
    %v5125 = vunpack.c.l.b16 %v5055
    %v5126 = vunpack.c.h.b16 %v5055
    %v5127 = vunpack.c.l.b16 %v5056
    %v5128 = vunpack.c.h.b16 %v5056
    %v5129 = vunpack.c.l.b16 %v5057
    %v5130 = vunpack.c.h.b16 %v5057
    %v5131 = vunpack.c.l.b16 %v5058
    %v5132 = vunpack.c.h.b16 %v5058
    %v5133 = vunpack.c.l.b16 %v5059
    %v5134 = vunpack.c.h.b16 %v5059
    %v5135 = vunpack.c.l.b16 %v5060
    %v5136 = vunpack.c.h.b16 %v5060
    %v5137 = vunpack.c.l.b16 %v5061
    %v5138 = vunpack.c.h.b16 %v5061
    %v5139 = vunpack.c.l.b16 %v5062
    %v5140 = vunpack.c.h.b16 %v5062
    %v5141 = vunpack.c.l.b16 %v5063
    %v5142 = vunpack.c.h.b16 %v5063
    %v5143 = vunpack.c.l.b16 %v5064
    %v5144 = vunpack.c.h.b16 %v5064
    %v5145 = vunpack.c.l.b16 %v5065
    %v5146 = vunpack.c.h.b16 %v5065
    %v5147 = vunpack.c.l.b16 %v5066
    %v5148 = vunpack.c.h.b16 %v5066
    %v5149 = vunpack.c.l.b16 %v5067
    %v5150 = vunpack.c.h.b16 %v5067
    %v5151 = vunpack.c.l.b16 %v5068
    %v5152 = vunpack.c.h.b16 %v5068
    %v5153 = vunpack.c.l.b16 %v5069
    %v5154 = vunpack.c.h.b16 %v5069
    %v5155 = vunpack.c.l.b16 %v5070
    %v5156 = vunpack.c.h.b16 %v5070
    %v5157 = vunpack.c.l.b16 %v5071
    %v5158 = vunpack.c.h.b16 %v5071
    %v5159 = vunpack.c.l.b16 %v5072
    %v5160 = vunpack.c.h.b16 %v5072
    %v5161 = vunpack.c.l.b16 %v5073
    %v5162 = vunpack.c.h.b16 %v5073
    %v5163 = vunpack.c.l.b16 %v5074
    %v5164 = vunpack.c.h.b16 %v5074
    %v5165 = vunpack.c.l.b16 %v5075
    %v5166 = vunpack.c.h.b16 %v5075
    %v5167 = vunpack.c.l.b16 %v5076
    %v5168 = vunpack.c.h.b16 %v5076
    %v5169 = vunpack.c.l.b16 %v5077
    %v5170 = vunpack.c.h.b16 %v5077
    %v5171 = vunpack.c.l.b16 %v5078
    %v5172 = vunpack.c.h.b16 %v5078
    %v5173 = vunpack.c.l.b16 %v5079
    %v5174 = vunpack.c.h.b16 %v5079
    %v5175 = vunpack.c.l.b16 %v5080
    %v5176 = vunpack.c.h.b16 %v5080
    %v5177 = vpack.c.b16 %v5115, %v5113
    %v5178 = vpack.c.b16 %v5116, %v5114
    %v5179 = vpack.c.b16 %v5119, %v5117
    %v5180 = vpack.c.b16 %v5120, %v5118
    %v5181 = vpack.c.b16 %v5123, %v5121
    %v5182 = vpack.c.b16 %v5124, %v5122
    %v5183 = vpack.c.b16 %v5127, %v5125
    %v5184 = vpack.c.b16 %v5128, %v5126
    %v5185 = vpack.c.b16 %v5131, %v5129
    %v5186 = vpack.c.b16 %v5132, %v5130
    %v5187 = vpack.c.b16 %v5135, %v5133
    %v5188 = vpack.c.b16 %v5136, %v5134
    %v5189 = vpack.c.b16 %v5139, %v5137
    %v5190 = vpack.c.b16 %v5140, %v5138
    %v5191 = vpack.c.b16 %v5143, %v5141
    %v5192 = vpack.c.b16 %v5144, %v5142
    %v5193 = vpack.c.b16 %v5147, %v5145
    %v5194 = vpack.c.b16 %v5148, %v5146
    %v5195 = vpack.c.b16 %v5151, %v5149
    %v5196 = vpack.c.b16 %v5152, %v5150
    %v5197 = vpack.c.b16 %v5155, %v5153
    %v5198 = vpack.c.b16 %v5156, %v5154
    %v5199 = vpack.c.b16 %v5159, %v5157
    %v5200 = vpack.c.b16 %v5160, %v5158
    %v5201 = vpack.c.b16 %v5163, %v5161
    %v5202 = vpack.c.b16 %v5164, %v5162
    %v5203 = vpack.c.b16 %v5167, %v5165
    %v5204 = vpack.c.b16 %v5168, %v5166
    %v5205 = vpack.c.b16 %v5171, %v5169
    %v5206 = vpack.c.b16 %v5172, %v5170
    %v5207 = vpack.c.b16 %v5175, %v5173
    %v5208 = vpack.c.b16 %v5176, %v5174
    %5241 = vmatprep.subr.bf16.mxu0 %v5178
    %5242 = vmatpush1.bf16.msra.mxu0 %v5177
    %5243 = vmatprep.subr.bf16.mxu0 %v5180
    %5244 = vmatpush1.bf16.msra.mxu0 %v5179
    %5245 = vmatprep.subr.bf16.mxu0 %v5182
    %5246 = vmatpush1.bf16.msra.mxu0 %v5181
    %5247 = vmatprep.subr.bf16.mxu0 %v5184
    %5248 = vmatpush1.bf16.msra.mxu0 %v5183
    %5249 = vmatprep.subr.bf16.mxu0 %v5186
    %5250 = vmatpush1.bf16.msra.mxu0 %v5185
    %5251 = vmatprep.subr.bf16.mxu0 %v5188
    %5252 = vmatpush1.bf16.msra.mxu0 %v5187
    %5253 = vmatprep.subr.bf16.mxu0 %v5190
    %5254 = vmatpush1.bf16.msra.mxu0 %v5189
    %5255 = vmatprep.subr.bf16.mxu0 %v5192
    %5256 = vmatpush1.bf16.msra.mxu0 %v5191
    %5257 = vmatprep.subr.bf16.mxu0 %v5194
    %5258 = vmatpush1.bf16.msra.mxu0 %v5193
    %5259 = vmatprep.subr.bf16.mxu0 %v5196
    %5260 = vmatpush1.bf16.msra.mxu0 %v5195
    %5261 = vmatprep.subr.bf16.mxu0 %v5198
    %5262 = vmatpush1.bf16.msra.mxu0 %v5197
    %5263 = vmatprep.subr.bf16.mxu0 %v5200
    %5264 = vmatpush1.bf16.msra.mxu0 %v5199
    %5265 = vmatprep.subr.bf16.mxu0 %v5202
    %5266 = vmatpush1.bf16.msra.mxu0 %v5201
    %5267 = vmatprep.subr.bf16.mxu0 %v5204
    %5268 = vmatpush1.bf16.msra.mxu0 %v5203
    %5269 = vmatprep.subr.bf16.mxu0 %v5206
    %5270 = vmatpush1.bf16.msra.mxu0 %v5205
    %5271 = vmatprep.subr.bf16.mxu0 %v5208
    %5272 = vmatpush1.bf16.msra.mxu0 %v5207
    %5273 = vmatprep.mubr.bf16.mxu0 %v5047
    %5274 = vmatmul.mubr.bf16.gmra.mrb[0].mxu0 %v5046
    %v5275 = vpop.f32.mrb[0].mxu0
    %v5276 = vadd.f32 0.0, %v5275
    %v5277 = vpop.f32.mrb[0].mxu0
    %v5278 = vadd.f32 0.0, %v5277
    %v5279 = vpop.f32.mrb[0].mxu0
    %v5280 = vpop.f32.mrb[0].mxu0
    %5281 = vdwg.mxu0
    %v5282 = vadd.f32 %v5033, %v5276
    %v5283 = vadd.f32 %v5034, %v5278
    %s5284 = scalar_lea.vmem %s0, 168
    %v5285 = vld [vmem:[%s5284] sm:$0xff]
    %5286 = vset.pattern.permute.xlu0 0
    %5287 = vperm.xlu0 %5286, %v5285
    %v5288 = vpop.permute.xlu0 %5287
    %vm5289 = vcmp.eq.s32.totalorder %v5288, %v59
    %vm5290 = vcmp.eq.s32.totalorder %v5288, %v60
    %v5291 = vsel %vm5289, 1, 0
    %v5292 = vsel %vm5290, 1, 0
    %v5293 = vcvt.s32.f32 %v5291
    %v5294 = vcvt.s32.f32 %v5292
    %v5295 = vpack.c.bf16 %v5293, %v5293
    %v5296 = vpack.c.bf16 %v5294, %v5294
    %s5297 = scalar_lea.vmem [#allocation2], 5376
    %v5298 = vld [vmem:[%s5297] sm:$0xff]
    %v5299 = vld [vmem:[%s5297 + $0x8] sm:$0xff]
    %v5300 = vld [vmem:[%s5297 + $0x10] sm:$0xff]
    %v5301 = vld [vmem:[%s5297 + $0x18] sm:$0xff]
    %v5302 = vld [vmem:[%s5297 + $0x20] sm:$0xff]
    %v5303 = vld [vmem:[%s5297 + $0x28] sm:$0xff]
    %v5304 = vld [vmem:[%s5297 + $0x30] sm:$0xff]
    %v5305 = vld [vmem:[%s5297 + $0x38] sm:$0xff]
    %v5306 = vld [vmem:[%s5297 + $0x40] sm:$0xff]
    %v5307 = vld [vmem:[%s5297 + $0x48] sm:$0xff]
    %v5308 = vld [vmem:[%s5297 + $0x50] sm:$0xff]
    %v5309 = vld [vmem:[%s5297 + $0x58] sm:$0xff]
    %v5310 = vld [vmem:[%s5297 + $0x60] sm:$0xff]
    %v5311 = vld [vmem:[%s5297 + $0x68] sm:$0xff]
    %v5312 = vld [vmem:[%s5297 + $0x70] sm:$0xff]
    %v5313 = vld [vmem:[%s5297 + $0x78] sm:$0xff]
    %v5314 = vld [vmem:[%s5297 + $0x80] sm:$0xff]
    %v5315 = vld [vmem:[%s5297 + $0x88] sm:$0xff]
    %v5316 = vld [vmem:[%s5297 + $0x90] sm:$0xff]
    %v5317 = vld [vmem:[%s5297 + $0x98] sm:$0xff]
    %v5318 = vld [vmem:[%s5297 + $0xa0] sm:$0xff]
    %v5319 = vld [vmem:[%s5297 + $0xa8] sm:$0xff]
    %v5320 = vld [vmem:[%s5297 + $0xb0] sm:$0xff]
    %v5321 = vld [vmem:[%s5297 + $0xb8] sm:$0xff]
    %v5322 = vld [vmem:[%s5297 + $0xc0] sm:$0xff]
    %v5323 = vld [vmem:[%s5297 + $0xc8] sm:$0xff]
    %v5324 = vld [vmem:[%s5297 + $0xd0] sm:$0xff]
    %v5325 = vld [vmem:[%s5297 + $0xd8] sm:$0xff]
    %v5326 = vld [vmem:[%s5297 + $0xe0] sm:$0xff]
    %v5327 = vld [vmem:[%s5297 + $0xe8] sm:$0xff]
    %v5328 = vld [vmem:[%s5297 + $0xf0] sm:$0xff]
    %v5329 = vld [vmem:[%s5297 + $0xf8] sm:$0xff]
    %v5362 = vunpack.c.l.b16 %v5298
    %v5363 = vunpack.c.h.b16 %v5298
    %v5364 = vunpack.c.l.b16 %v5299
    %v5365 = vunpack.c.h.b16 %v5299
    %v5366 = vunpack.c.l.b16 %v5300
    %v5367 = vunpack.c.h.b16 %v5300
    %v5368 = vunpack.c.l.b16 %v5301
    %v5369 = vunpack.c.h.b16 %v5301
    %v5370 = vunpack.c.l.b16 %v5302
    %v5371 = vunpack.c.h.b16 %v5302
    %v5372 = vunpack.c.l.b16 %v5303
    %v5373 = vunpack.c.h.b16 %v5303
    %v5374 = vunpack.c.l.b16 %v5304
    %v5375 = vunpack.c.h.b16 %v5304
    %v5376 = vunpack.c.l.b16 %v5305
    %v5377 = vunpack.c.h.b16 %v5305
    %v5378 = vunpack.c.l.b16 %v5306
    %v5379 = vunpack.c.h.b16 %v5306
    %v5380 = vunpack.c.l.b16 %v5307
    %v5381 = vunpack.c.h.b16 %v5307
    %v5382 = vunpack.c.l.b16 %v5308
    %v5383 = vunpack.c.h.b16 %v5308
    %v5384 = vunpack.c.l.b16 %v5309
    %v5385 = vunpack.c.h.b16 %v5309
    %v5386 = vunpack.c.l.b16 %v5310
    %v5387 = vunpack.c.h.b16 %v5310
    %v5388 = vunpack.c.l.b16 %v5311
    %v5389 = vunpack.c.h.b16 %v5311
    %v5390 = vunpack.c.l.b16 %v5312
    %v5391 = vunpack.c.h.b16 %v5312
    %v5392 = vunpack.c.l.b16 %v5313
    %v5393 = vunpack.c.h.b16 %v5313
    %v5394 = vunpack.c.l.b16 %v5314
    %v5395 = vunpack.c.h.b16 %v5314
    %v5396 = vunpack.c.l.b16 %v5315
    %v5397 = vunpack.c.h.b16 %v5315
    %v5398 = vunpack.c.l.b16 %v5316
    %v5399 = vunpack.c.h.b16 %v5316
    %v5400 = vunpack.c.l.b16 %v5317
    %v5401 = vunpack.c.h.b16 %v5317
    %v5402 = vunpack.c.l.b16 %v5318
    %v5403 = vunpack.c.h.b16 %v5318
    %v5404 = vunpack.c.l.b16 %v5319
    %v5405 = vunpack.c.h.b16 %v5319
    %v5406 = vunpack.c.l.b16 %v5320
    %v5407 = vunpack.c.h.b16 %v5320
    %v5408 = vunpack.c.l.b16 %v5321
    %v5409 = vunpack.c.h.b16 %v5321
    %v5410 = vunpack.c.l.b16 %v5322
    %v5411 = vunpack.c.h.b16 %v5322
    %v5412 = vunpack.c.l.b16 %v5323
    %v5413 = vunpack.c.h.b16 %v5323
    %v5414 = vunpack.c.l.b16 %v5324
    %v5415 = vunpack.c.h.b16 %v5324
    %v5416 = vunpack.c.l.b16 %v5325
    %v5417 = vunpack.c.h.b16 %v5325
    %v5418 = vunpack.c.l.b16 %v5326
    %v5419 = vunpack.c.h.b16 %v5326
    %v5420 = vunpack.c.l.b16 %v5327
    %v5421 = vunpack.c.h.b16 %v5327
    %v5422 = vunpack.c.l.b16 %v5328
    %v5423 = vunpack.c.h.b16 %v5328
    %v5424 = vunpack.c.l.b16 %v5329
    %v5425 = vunpack.c.h.b16 %v5329
    %v5426 = vpack.c.b16 %v5364, %v5362
    %v5427 = vpack.c.b16 %v5365, %v5363
    %v5428 = vpack.c.b16 %v5368, %v5366
    %v5429 = vpack.c.b16 %v5369, %v5367
    %v5430 = vpack.c.b16 %v5372, %v5370
    %v5431 = vpack.c.b16 %v5373, %v5371
    %v5432 = vpack.c.b16 %v5376, %v5374
    %v5433 = vpack.c.b16 %v5377, %v5375
    %v5434 = vpack.c.b16 %v5380, %v5378
    %v5435 = vpack.c.b16 %v5381, %v5379
    %v5436 = vpack.c.b16 %v5384, %v5382
    %v5437 = vpack.c.b16 %v5385, %v5383
    %v5438 = vpack.c.b16 %v5388, %v5386
    %v5439 = vpack.c.b16 %v5389, %v5387
    %v5440 = vpack.c.b16 %v5392, %v5390
    %v5441 = vpack.c.b16 %v5393, %v5391
    %v5442 = vpack.c.b16 %v5396, %v5394
    %v5443 = vpack.c.b16 %v5397, %v5395
    %v5444 = vpack.c.b16 %v5400, %v5398
    %v5445 = vpack.c.b16 %v5401, %v5399
    %v5446 = vpack.c.b16 %v5404, %v5402
    %v5447 = vpack.c.b16 %v5405, %v5403
    %v5448 = vpack.c.b16 %v5408, %v5406
    %v5449 = vpack.c.b16 %v5409, %v5407
    %v5450 = vpack.c.b16 %v5412, %v5410
    %v5451 = vpack.c.b16 %v5413, %v5411
    %v5452 = vpack.c.b16 %v5416, %v5414
    %v5453 = vpack.c.b16 %v5417, %v5415
    %v5454 = vpack.c.b16 %v5420, %v5418
    %v5455 = vpack.c.b16 %v5421, %v5419
    %v5456 = vpack.c.b16 %v5424, %v5422
    %v5457 = vpack.c.b16 %v5425, %v5423
    %5490 = vmatprep.subr.bf16.mxu0 %v5427
    %5491 = vmatpush1.bf16.msra.mxu0 %v5426
    %5492 = vmatprep.subr.bf16.mxu0 %v5429
    %5493 = vmatpush1.bf16.msra.mxu0 %v5428
    %5494 = vmatprep.subr.bf16.mxu0 %v5431
    %5495 = vmatpush1.bf16.msra.mxu0 %v5430
    %5496 = vmatprep.subr.bf16.mxu0 %v5433
    %5497 = vmatpush1.bf16.msra.mxu0 %v5432
    %5498 = vmatprep.subr.bf16.mxu0 %v5435
    %5499 = vmatpush1.bf16.msra.mxu0 %v5434
    %5500 = vmatprep.subr.bf16.mxu0 %v5437
    %5501 = vmatpush1.bf16.msra.mxu0 %v5436
    %5502 = vmatprep.subr.bf16.mxu0 %v5439
    %5503 = vmatpush1.bf16.msra.mxu0 %v5438
    %5504 = vmatprep.subr.bf16.mxu0 %v5441
    %5505 = vmatpush1.bf16.msra.mxu0 %v5440
    %5506 = vmatprep.subr.bf16.mxu0 %v5443
    %5507 = vmatpush1.bf16.msra.mxu0 %v5442
    %5508 = vmatprep.subr.bf16.mxu0 %v5445
    %5509 = vmatpush1.bf16.msra.mxu0 %v5444
    %5510 = vmatprep.subr.bf16.mxu0 %v5447
    %5511 = vmatpush1.bf16.msra.mxu0 %v5446
    %5512 = vmatprep.subr.bf16.mxu0 %v5449
    %5513 = vmatpush1.bf16.msra.mxu0 %v5448
    %5514 = vmatprep.subr.bf16.mxu0 %v5451
    %5515 = vmatpush1.bf16.msra.mxu0 %v5450
    %5516 = vmatprep.subr.bf16.mxu0 %v5453
    %5517 = vmatpush1.bf16.msra.mxu0 %v5452
    %5518 = vmatprep.subr.bf16.mxu0 %v5455
    %5519 = vmatpush1.bf16.msra.mxu0 %v5454
    %5520 = vmatprep.subr.bf16.mxu0 %v5457
    %5521 = vmatpush1.bf16.msra.mxu0 %v5456
    %5522 = vmatprep.mubr.bf16.mxu0 %v5296
    %5523 = vmatmul.mubr.bf16.gmra.mrb[0].mxu0 %v5295
    %v5524 = vpop.f32.mrb[0].mxu0
    %v5525 = vadd.f32 0.0, %v5524
    %v5526 = vpop.f32.mrb[0].mxu0
    %v5527 = vadd.f32 0.0, %v5526
    %v5528 = vpop.f32.mrb[0].mxu0
    %v5529 = vpop.f32.mrb[0].mxu0
    %5530 = vdwg.mxu0
    %v5531 = vadd.f32 %v5282, %v5525
    %v5532 = vadd.f32 %v5283, %v5527
    %s5533 = scalar_lea.vmem %s0, 176
    %v5534 = vld [vmem:[%s5533] sm:$0xff]
    %5535 = vset.pattern.permute.xlu0 0
    %5536 = vperm.xlu0 %5535, %v5534
    %v5537 = vpop.permute.xlu0 %5536
    %vm5538 = vcmp.eq.s32.totalorder %v5537, %v59
    %vm5539 = vcmp.eq.s32.totalorder %v5537, %v60
    %v5540 = vsel %vm5538, 1, 0
    %v5541 = vsel %vm5539, 1, 0
    %v5542 = vcvt.s32.f32 %v5540
    %v5543 = vcvt.s32.f32 %v5541
    %v5544 = vpack.c.bf16 %v5542, %v5542
    %v5545 = vpack.c.bf16 %v5543, %v5543
    %s5546 = scalar_lea.vmem [#allocation2], 5632
    %v5547 = vld [vmem:[%s5546] sm:$0xff]
    %v5548 = vld [vmem:[%s5546 + $0x8] sm:$0xff]
    %v5549 = vld [vmem:[%s5546 + $0x10] sm:$0xff]
    %v5550 = vld [vmem:[%s5546 + $0x18] sm:$0xff]
    %v5551 = vld [vmem:[%s5546 + $0x20] sm:$0xff]
    %v5552 = vld [vmem:[%s5546 + $0x28] sm:$0xff]
    %v5553 = vld [vmem:[%s5546 + $0x30] sm:$0xff]
    %v5554 = vld [vmem:[%s5546 + $0x38] sm:$0xff]
    %v5555 = vld [vmem:[%s5546 + $0x40] sm:$0xff]
    %v5556 = vld [vmem:[%s5546 + $0x48] sm:$0xff]
    %v5557 = vld [vmem:[%s5546 + $0x50] sm:$0xff]
    %v5558 = vld [vmem:[%s5546 + $0x58] sm:$0xff]
    %v5559 = vld [vmem:[%s5546 + $0x60] sm:$0xff]
    %v5560 = vld [vmem:[%s5546 + $0x68] sm:$0xff]
    %v5561 = vld [vmem:[%s5546 + $0x70] sm:$0xff]
    %v5562 = vld [vmem:[%s5546 + $0x78] sm:$0xff]
    %v5563 = vld [vmem:[%s5546 + $0x80] sm:$0xff]
    %v5564 = vld [vmem:[%s5546 + $0x88] sm:$0xff]
    %v5565 = vld [vmem:[%s5546 + $0x90] sm:$0xff]
    %v5566 = vld [vmem:[%s5546 + $0x98] sm:$0xff]
    %v5567 = vld [vmem:[%s5546 + $0xa0] sm:$0xff]
    %v5568 = vld [vmem:[%s5546 + $0xa8] sm:$0xff]
    %v5569 = vld [vmem:[%s5546 + $0xb0] sm:$0xff]
    %v5570 = vld [vmem:[%s5546 + $0xb8] sm:$0xff]
    %v5571 = vld [vmem:[%s5546 + $0xc0] sm:$0xff]
    %v5572 = vld [vmem:[%s5546 + $0xc8] sm:$0xff]
    %v5573 = vld [vmem:[%s5546 + $0xd0] sm:$0xff]
    %v5574 = vld [vmem:[%s5546 + $0xd8] sm:$0xff]
    %v5575 = vld [vmem:[%s5546 + $0xe0] sm:$0xff]
    %v5576 = vld [vmem:[%s5546 + $0xe8] sm:$0xff]
    %v5577 = vld [vmem:[%s5546 + $0xf0] sm:$0xff]
    %v5578 = vld [vmem:[%s5546 + $0xf8] sm:$0xff]
    %v5611 = vunpack.c.l.b16 %v5547
    %v5612 = vunpack.c.h.b16 %v5547
    %v5613 = vunpack.c.l.b16 %v5548
    %v5614 = vunpack.c.h.b16 %v5548
    %v5615 = vunpack.c.l.b16 %v5549
    %v5616 = vunpack.c.h.b16 %v5549
    %v5617 = vunpack.c.l.b16 %v5550
    %v5618 = vunpack.c.h.b16 %v5550
    %v5619 = vunpack.c.l.b16 %v5551
    %v5620 = vunpack.c.h.b16 %v5551
    %v5621 = vunpack.c.l.b16 %v5552
    %v5622 = vunpack.c.h.b16 %v5552
    %v5623 = vunpack.c.l.b16 %v5553
    %v5624 = vunpack.c.h.b16 %v5553
    %v5625 = vunpack.c.l.b16 %v5554
    %v5626 = vunpack.c.h.b16 %v5554
    %v5627 = vunpack.c.l.b16 %v5555
    %v5628 = vunpack.c.h.b16 %v5555
    %v5629 = vunpack.c.l.b16 %v5556
    %v5630 = vunpack.c.h.b16 %v5556
    %v5631 = vunpack.c.l.b16 %v5557
    %v5632 = vunpack.c.h.b16 %v5557
    %v5633 = vunpack.c.l.b16 %v5558
    %v5634 = vunpack.c.h.b16 %v5558
    %v5635 = vunpack.c.l.b16 %v5559
    %v5636 = vunpack.c.h.b16 %v5559
    %v5637 = vunpack.c.l.b16 %v5560
    %v5638 = vunpack.c.h.b16 %v5560
    %v5639 = vunpack.c.l.b16 %v5561
    %v5640 = vunpack.c.h.b16 %v5561
    %v5641 = vunpack.c.l.b16 %v5562
    %v5642 = vunpack.c.h.b16 %v5562
    %v5643 = vunpack.c.l.b16 %v5563
    %v5644 = vunpack.c.h.b16 %v5563
    %v5645 = vunpack.c.l.b16 %v5564
    %v5646 = vunpack.c.h.b16 %v5564
    %v5647 = vunpack.c.l.b16 %v5565
    %v5648 = vunpack.c.h.b16 %v5565
    %v5649 = vunpack.c.l.b16 %v5566
    %v5650 = vunpack.c.h.b16 %v5566
    %v5651 = vunpack.c.l.b16 %v5567
    %v5652 = vunpack.c.h.b16 %v5567
    %v5653 = vunpack.c.l.b16 %v5568
    %v5654 = vunpack.c.h.b16 %v5568
    %v5655 = vunpack.c.l.b16 %v5569
    %v5656 = vunpack.c.h.b16 %v5569
    %v5657 = vunpack.c.l.b16 %v5570
    %v5658 = vunpack.c.h.b16 %v5570
    %v5659 = vunpack.c.l.b16 %v5571
    %v5660 = vunpack.c.h.b16 %v5571
    %v5661 = vunpack.c.l.b16 %v5572
    %v5662 = vunpack.c.h.b16 %v5572
    %v5663 = vunpack.c.l.b16 %v5573
    %v5664 = vunpack.c.h.b16 %v5573
    %v5665 = vunpack.c.l.b16 %v5574
    %v5666 = vunpack.c.h.b16 %v5574
    %v5667 = vunpack.c.l.b16 %v5575
    %v5668 = vunpack.c.h.b16 %v5575
    %v5669 = vunpack.c.l.b16 %v5576
    %v5670 = vunpack.c.h.b16 %v5576
    %v5671 = vunpack.c.l.b16 %v5577
    %v5672 = vunpack.c.h.b16 %v5577
    %v5673 = vunpack.c.l.b16 %v5578
    %v5674 = vunpack.c.h.b16 %v5578
    %v5675 = vpack.c.b16 %v5613, %v5611
    %v5676 = vpack.c.b16 %v5614, %v5612
    %v5677 = vpack.c.b16 %v5617, %v5615
    %v5678 = vpack.c.b16 %v5618, %v5616
    %v5679 = vpack.c.b16 %v5621, %v5619
    %v5680 = vpack.c.b16 %v5622, %v5620
    %v5681 = vpack.c.b16 %v5625, %v5623
    %v5682 = vpack.c.b16 %v5626, %v5624
    %v5683 = vpack.c.b16 %v5629, %v5627
    %v5684 = vpack.c.b16 %v5630, %v5628
    %v5685 = vpack.c.b16 %v5633, %v5631
    %v5686 = vpack.c.b16 %v5634, %v5632
    %v5687 = vpack.c.b16 %v5637, %v5635
    %v5688 = vpack.c.b16 %v5638, %v5636
    %v5689 = vpack.c.b16 %v5641, %v5639
    %v5690 = vpack.c.b16 %v5642, %v5640
    %v5691 = vpack.c.b16 %v5645, %v5643
    %v5692 = vpack.c.b16 %v5646, %v5644
    %v5693 = vpack.c.b16 %v5649, %v5647
    %v5694 = vpack.c.b16 %v5650, %v5648
    %v5695 = vpack.c.b16 %v5653, %v5651
    %v5696 = vpack.c.b16 %v5654, %v5652
    %v5697 = vpack.c.b16 %v5657, %v5655
    %v5698 = vpack.c.b16 %v5658, %v5656
    %v5699 = vpack.c.b16 %v5661, %v5659
    %v5700 = vpack.c.b16 %v5662, %v5660
    %v5701 = vpack.c.b16 %v5665, %v5663
    %v5702 = vpack.c.b16 %v5666, %v5664
    %v5703 = vpack.c.b16 %v5669, %v5667
    %v5704 = vpack.c.b16 %v5670, %v5668
    %v5705 = vpack.c.b16 %v5673, %v5671
    %v5706 = vpack.c.b16 %v5674, %v5672
    %5739 = vmatprep.subr.bf16.mxu0 %v5676
    %5740 = vmatpush1.bf16.msra.mxu0 %v5675
    %5741 = vmatprep.subr.bf16.mxu0 %v5678
    %5742 = vmatpush1.bf16.msra.mxu0 %v5677
    %5743 = vmatprep.subr.bf16.mxu0 %v5680
    %5744 = vmatpush1.bf16.msra.mxu0 %v5679
    %5745 = vmatprep.subr.bf16.mxu0 %v5682
    %5746 = vmatpush1.bf16.msra.mxu0 %v5681
    %5747 = vmatprep.subr.bf16.mxu0 %v5684
    %5748 = vmatpush1.bf16.msra.mxu0 %v5683
    %5749 = vmatprep.subr.bf16.mxu0 %v5686
    %5750 = vmatpush1.bf16.msra.mxu0 %v5685
    %5751 = vmatprep.subr.bf16.mxu0 %v5688
    %5752 = vmatpush1.bf16.msra.mxu0 %v5687
    %5753 = vmatprep.subr.bf16.mxu0 %v5690
    %5754 = vmatpush1.bf16.msra.mxu0 %v5689
    %5755 = vmatprep.subr.bf16.mxu0 %v5692
    %5756 = vmatpush1.bf16.msra.mxu0 %v5691
    %5757 = vmatprep.subr.bf16.mxu0 %v5694
    %5758 = vmatpush1.bf16.msra.mxu0 %v5693
    %5759 = vmatprep.subr.bf16.mxu0 %v5696
    %5760 = vmatpush1.bf16.msra.mxu0 %v5695
    %5761 = vmatprep.subr.bf16.mxu0 %v5698
    %5762 = vmatpush1.bf16.msra.mxu0 %v5697
    %5763 = vmatprep.subr.bf16.mxu0 %v5700
    %5764 = vmatpush1.bf16.msra.mxu0 %v5699
    %5765 = vmatprep.subr.bf16.mxu0 %v5702
    %5766 = vmatpush1.bf16.msra.mxu0 %v5701
    %5767 = vmatprep.subr.bf16.mxu0 %v5704
    %5768 = vmatpush1.bf16.msra.mxu0 %v5703
    %5769 = vmatprep.subr.bf16.mxu0 %v5706
    %5770 = vmatpush1.bf16.msra.mxu0 %v5705
    %5771 = vmatprep.mubr.bf16.mxu0 %v5545
    %5772 = vmatmul.mubr.bf16.gmra.mrb[0].mxu0 %v5544
    %v5773 = vpop.f32.mrb[0].mxu0
    %v5774 = vadd.f32 0.0, %v5773
    %v5775 = vpop.f32.mrb[0].mxu0
    %v5776 = vadd.f32 0.0, %v5775
    %v5777 = vpop.f32.mrb[0].mxu0
    %v5778 = vpop.f32.mrb[0].mxu0
    %5779 = vdwg.mxu0
    %v5780 = vadd.f32 %v5531, %v5774
    %v5781 = vadd.f32 %v5532, %v5776
    %s5782 = scalar_lea.vmem %s0, 184
    %v5783 = vld [vmem:[%s5782] sm:$0xff]
    %5784 = vset.pattern.permute.xlu0 0
    %5785 = vperm.xlu0 %5784, %v5783
    %v5786 = vpop.permute.xlu0 %5785
    %vm5787 = vcmp.eq.s32.totalorder %v5786, %v59
    %vm5788 = vcmp.eq.s32.totalorder %v5786, %v60
    %v5789 = vsel %vm5787, 1, 0
    %v5790 = vsel %vm5788, 1, 0
    %v5791 = vcvt.s32.f32 %v5789
    %v5792 = vcvt.s32.f32 %v5790
    %v5793 = vpack.c.bf16 %v5791, %v5791
    %v5794 = vpack.c.bf16 %v5792, %v5792
    %s5795 = scalar_lea.vmem [#allocation2], 5888
    %v5796 = vld [vmem:[%s5795] sm:$0xff]
    %v5797 = vld [vmem:[%s5795 + $0x8] sm:$0xff]
    %v5798 = vld [vmem:[%s5795 + $0x10] sm:$0xff]
    %v5799 = vld [vmem:[%s5795 + $0x18] sm:$0xff]
    %v5800 = vld [vmem:[%s5795 + $0x20] sm:$0xff]
    %v5801 = vld [vmem:[%s5795 + $0x28] sm:$0xff]
    %v5802 = vld [vmem:[%s5795 + $0x30] sm:$0xff]
    %v5803 = vld [vmem:[%s5795 + $0x38] sm:$0xff]
    %v5804 = vld [vmem:[%s5795 + $0x40] sm:$0xff]
    %v5805 = vld [vmem:[%s5795 + $0x48] sm:$0xff]
    %v5806 = vld [vmem:[%s5795 + $0x50] sm:$0xff]
    %v5807 = vld [vmem:[%s5795 + $0x58] sm:$0xff]
    %v5808 = vld [vmem:[%s5795 + $0x60] sm:$0xff]
    %v5809 = vld [vmem:[%s5795 + $0x68] sm:$0xff]
    %v5810 = vld [vmem:[%s5795 + $0x70] sm:$0xff]
    %v5811 = vld [vmem:[%s5795 + $0x78] sm:$0xff]
    %v5812 = vld [vmem:[%s5795 + $0x80] sm:$0xff]
    %v5813 = vld [vmem:[%s5795 + $0x88] sm:$0xff]
    %v5814 = vld [vmem:[%s5795 + $0x90] sm:$0xff]
    %v5815 = vld [vmem:[%s5795 + $0x98] sm:$0xff]
    %v5816 = vld [vmem:[%s5795 + $0xa0] sm:$0xff]
    %v5817 = vld [vmem:[%s5795 + $0xa8] sm:$0xff]
    %v5818 = vld [vmem:[%s5795 + $0xb0] sm:$0xff]
    %v5819 = vld [vmem:[%s5795 + $0xb8] sm:$0xff]
    %v5820 = vld [vmem:[%s5795 + $0xc0] sm:$0xff]
    %v5821 = vld [vmem:[%s5795 + $0xc8] sm:$0xff]
    %v5822 = vld [vmem:[%s5795 + $0xd0] sm:$0xff]
    %v5823 = vld [vmem:[%s5795 + $0xd8] sm:$0xff]
    %v5824 = vld [vmem:[%s5795 + $0xe0] sm:$0xff]
    %v5825 = vld [vmem:[%s5795 + $0xe8] sm:$0xff]
    %v5826 = vld [vmem:[%s5795 + $0xf0] sm:$0xff]
    %v5827 = vld [vmem:[%s5795 + $0xf8] sm:$0xff]
    %v5860 = vunpack.c.l.b16 %v5796
    %v5861 = vunpack.c.h.b16 %v5796
    %v5862 = vunpack.c.l.b16 %v5797
    %v5863 = vunpack.c.h.b16 %v5797
    %v5864 = vunpack.c.l.b16 %v5798
    %v5865 = vunpack.c.h.b16 %v5798
    %v5866 = vunpack.c.l.b16 %v5799
    %v5867 = vunpack.c.h.b16 %v5799
    %v5868 = vunpack.c.l.b16 %v5800
    %v5869 = vunpack.c.h.b16 %v5800
    %v5870 = vunpack.c.l.b16 %v5801
    %v5871 = vunpack.c.h.b16 %v5801
    %v5872 = vunpack.c.l.b16 %v5802
    %v5873 = vunpack.c.h.b16 %v5802
    %v5874 = vunpack.c.l.b16 %v5803
    %v5875 = vunpack.c.h.b16 %v5803
    %v5876 = vunpack.c.l.b16 %v5804
    %v5877 = vunpack.c.h.b16 %v5804
    %v5878 = vunpack.c.l.b16 %v5805
    %v5879 = vunpack.c.h.b16 %v5805
    %v5880 = vunpack.c.l.b16 %v5806
    %v5881 = vunpack.c.h.b16 %v5806
    %v5882 = vunpack.c.l.b16 %v5807
    %v5883 = vunpack.c.h.b16 %v5807
    %v5884 = vunpack.c.l.b16 %v5808
    %v5885 = vunpack.c.h.b16 %v5808
    %v5886 = vunpack.c.l.b16 %v5809
    %v5887 = vunpack.c.h.b16 %v5809
    %v5888 = vunpack.c.l.b16 %v5810
    %v5889 = vunpack.c.h.b16 %v5810
    %v5890 = vunpack.c.l.b16 %v5811
    %v5891 = vunpack.c.h.b16 %v5811
    %v5892 = vunpack.c.l.b16 %v5812
    %v5893 = vunpack.c.h.b16 %v5812
    %v5894 = vunpack.c.l.b16 %v5813
    %v5895 = vunpack.c.h.b16 %v5813
    %v5896 = vunpack.c.l.b16 %v5814
    %v5897 = vunpack.c.h.b16 %v5814
    %v5898 = vunpack.c.l.b16 %v5815
    %v5899 = vunpack.c.h.b16 %v5815
    %v5900 = vunpack.c.l.b16 %v5816
    %v5901 = vunpack.c.h.b16 %v5816
    %v5902 = vunpack.c.l.b16 %v5817
    %v5903 = vunpack.c.h.b16 %v5817
    %v5904 = vunpack.c.l.b16 %v5818
    %v5905 = vunpack.c.h.b16 %v5818
    %v5906 = vunpack.c.l.b16 %v5819
    %v5907 = vunpack.c.h.b16 %v5819
    %v5908 = vunpack.c.l.b16 %v5820
    %v5909 = vunpack.c.h.b16 %v5820
    %v5910 = vunpack.c.l.b16 %v5821
    %v5911 = vunpack.c.h.b16 %v5821
    %v5912 = vunpack.c.l.b16 %v5822
    %v5913 = vunpack.c.h.b16 %v5822
    %v5914 = vunpack.c.l.b16 %v5823
    %v5915 = vunpack.c.h.b16 %v5823
    %v5916 = vunpack.c.l.b16 %v5824
    %v5917 = vunpack.c.h.b16 %v5824
    %v5918 = vunpack.c.l.b16 %v5825
    %v5919 = vunpack.c.h.b16 %v5825
    %v5920 = vunpack.c.l.b16 %v5826
    %v5921 = vunpack.c.h.b16 %v5826
    %v5922 = vunpack.c.l.b16 %v5827
    %v5923 = vunpack.c.h.b16 %v5827
    %v5924 = vpack.c.b16 %v5862, %v5860
    %v5925 = vpack.c.b16 %v5863, %v5861
    %v5926 = vpack.c.b16 %v5866, %v5864
    %v5927 = vpack.c.b16 %v5867, %v5865
    %v5928 = vpack.c.b16 %v5870, %v5868
    %v5929 = vpack.c.b16 %v5871, %v5869
    %v5930 = vpack.c.b16 %v5874, %v5872
    %v5931 = vpack.c.b16 %v5875, %v5873
    %v5932 = vpack.c.b16 %v5878, %v5876
    %v5933 = vpack.c.b16 %v5879, %v5877
    %v5934 = vpack.c.b16 %v5882, %v5880
    %v5935 = vpack.c.b16 %v5883, %v5881
    %v5936 = vpack.c.b16 %v5886, %v5884
    %v5937 = vpack.c.b16 %v5887, %v5885
    %v5938 = vpack.c.b16 %v5890, %v5888
    %v5939 = vpack.c.b16 %v5891, %v5889
    %v5940 = vpack.c.b16 %v5894, %v5892
    %v5941 = vpack.c.b16 %v5895, %v5893
    %v5942 = vpack.c.b16 %v5898, %v5896
    %v5943 = vpack.c.b16 %v5899, %v5897
    %v5944 = vpack.c.b16 %v5902, %v5900
    %v5945 = vpack.c.b16 %v5903, %v5901
    %v5946 = vpack.c.b16 %v5906, %v5904
    %v5947 = vpack.c.b16 %v5907, %v5905
    %v5948 = vpack.c.b16 %v5910, %v5908
    %v5949 = vpack.c.b16 %v5911, %v5909
    %v5950 = vpack.c.b16 %v5914, %v5912
    %v5951 = vpack.c.b16 %v5915, %v5913
    %v5952 = vpack.c.b16 %v5918, %v5916
    %v5953 = vpack.c.b16 %v5919, %v5917
    %v5954 = vpack.c.b16 %v5922, %v5920
    %v5955 = vpack.c.b16 %v5923, %v5921
    %5988 = vmatprep.subr.bf16.mxu0 %v5925
    %5989 = vmatpush1.bf16.msra.mxu0 %v5924
    %5990 = vmatprep.subr.bf16.mxu0 %v5927
    %5991 = vmatpush1.bf16.msra.mxu0 %v5926
    %5992 = vmatprep.subr.bf16.mxu0 %v5929
    %5993 = vmatpush1.bf16.msra.mxu0 %v5928
    %5994 = vmatprep.subr.bf16.mxu0 %v5931
    %5995 = vmatpush1.bf16.msra.mxu0 %v5930
    %5996 = vmatprep.subr.bf16.mxu0 %v5933
    %5997 = vmatpush1.bf16.msra.mxu0 %v5932
    %5998 = vmatprep.subr.bf16.mxu0 %v5935
    %5999 = vmatpush1.bf16.msra.mxu0 %v5934
    %6000 = vmatprep.subr.bf16.mxu0 %v5937
    %6001 = vmatpush1.bf16.msra.mxu0 %v5936
    %6002 = vmatprep.subr.bf16.mxu0 %v5939
    %6003 = vmatpush1.bf16.msra.mxu0 %v5938
    %6004 = vmatprep.subr.bf16.mxu0 %v5941
    %6005 = vmatpush1.bf16.msra.mxu0 %v5940
    %6006 = vmatprep.subr.bf16.mxu0 %v5943
    %6007 = vmatpush1.bf16.msra.mxu0 %v5942
    %6008 = vmatprep.subr.bf16.mxu0 %v5945
    %6009 = vmatpush1.bf16.msra.mxu0 %v5944
    %6010 = vmatprep.subr.bf16.mxu0 %v5947
    %6011 = vmatpush1.bf16.msra.mxu0 %v5946
    %6012 = vmatprep.subr.bf16.mxu0 %v5949
    %6013 = vmatpush1.bf16.msra.mxu0 %v5948
    %6014 = vmatprep.subr.bf16.mxu0 %v5951
    %6015 = vmatpush1.bf16.msra.mxu0 %v5950
    %6016 = vmatprep.subr.bf16.mxu0 %v5953
    %6017 = vmatpush1.bf16.msra.mxu0 %v5952
    %6018 = vmatprep.subr.bf16.mxu0 %v5955
    %6019 = vmatpush1.bf16.msra.mxu0 %v5954
    %6020 = vmatprep.mubr.bf16.mxu0 %v5794
    %6021 = vmatmul.mubr.bf16.gmra.mrb[0].mxu0 %v5793
    %v6022 = vpop.f32.mrb[0].mxu0
    %v6023 = vadd.f32 0.0, %v6022
    %v6024 = vpop.f32.mrb[0].mxu0
    %v6025 = vadd.f32 0.0, %v6024
    %v6026 = vpop.f32.mrb[0].mxu0
    %v6027 = vpop.f32.mrb[0].mxu0
    %6028 = vdwg.mxu0
    %v6029 = vadd.f32 %v5780, %v6023
    %v6030 = vadd.f32 %v5781, %v6025
    %s6031 = scalar_lea.vmem %s0, 192
    %v6032 = vld [vmem:[%s6031] sm:$0xff]
    %6033 = vset.pattern.permute.xlu0 0
    %6034 = vperm.xlu0 %6033, %v6032
    %v6035 = vpop.permute.xlu0 %6034
    %vm6036 = vcmp.eq.s32.totalorder %v6035, %v59
    %vm6037 = vcmp.eq.s32.totalorder %v6035, %v60
    %v6038 = vsel %vm6036, 1, 0
    %v6039 = vsel %vm6037, 1, 0
    %v6040 = vcvt.s32.f32 %v6038
    %v6041 = vcvt.s32.f32 %v6039
    %v6042 = vpack.c.bf16 %v6040, %v6040
    %v6043 = vpack.c.bf16 %v6041, %v6041
    %s6044 = scalar_lea.vmem [#allocation2], 6144
    %v6045 = vld [vmem:[%s6044] sm:$0xff]
    %v6046 = vld [vmem:[%s6044 + $0x8] sm:$0xff]
    %v6047 = vld [vmem:[%s6044 + $0x10] sm:$0xff]
    %v6048 = vld [vmem:[%s6044 + $0x18] sm:$0xff]
    %v6049 = vld [vmem:[%s6044 + $0x20] sm:$0xff]
    %v6050 = vld [vmem:[%s6044 + $0x28] sm:$0xff]
    %v6051 = vld [vmem:[%s6044 + $0x30] sm:$0xff]
    %v6052 = vld [vmem:[%s6044 + $0x38] sm:$0xff]
    %v6053 = vld [vmem:[%s6044 + $0x40] sm:$0xff]
    %v6054 = vld [vmem:[%s6044 + $0x48] sm:$0xff]
    %v6055 = vld [vmem:[%s6044 + $0x50] sm:$0xff]
    %v6056 = vld [vmem:[%s6044 + $0x58] sm:$0xff]
    %v6057 = vld [vmem:[%s6044 + $0x60] sm:$0xff]
    %v6058 = vld [vmem:[%s6044 + $0x68] sm:$0xff]
    %v6059 = vld [vmem:[%s6044 + $0x70] sm:$0xff]
    %v6060 = vld [vmem:[%s6044 + $0x78] sm:$0xff]
    %v6061 = vld [vmem:[%s6044 + $0x80] sm:$0xff]
    %v6062 = vld [vmem:[%s6044 + $0x88] sm:$0xff]
    %v6063 = vld [vmem:[%s6044 + $0x90] sm:$0xff]
    %v6064 = vld [vmem:[%s6044 + $0x98] sm:$0xff]
    %v6065 = vld [vmem:[%s6044 + $0xa0] sm:$0xff]
    %v6066 = vld [vmem:[%s6044 + $0xa8] sm:$0xff]
    %v6067 = vld [vmem:[%s6044 + $0xb0] sm:$0xff]
    %v6068 = vld [vmem:[%s6044 + $0xb8] sm:$0xff]
    %v6069 = vld [vmem:[%s6044 + $0xc0] sm:$0xff]
    %v6070 = vld [vmem:[%s6044 + $0xc8] sm:$0xff]
    %v6071 = vld [vmem:[%s6044 + $0xd0] sm:$0xff]
    %v6072 = vld [vmem:[%s6044 + $0xd8] sm:$0xff]
    %v6073 = vld [vmem:[%s6044 + $0xe0] sm:$0xff]
    %v6074 = vld [vmem:[%s6044 + $0xe8] sm:$0xff]
    %v6075 = vld [vmem:[%s6044 + $0xf0] sm:$0xff]
    %v6076 = vld [vmem:[%s6044 + $0xf8] sm:$0xff]
    %v6109 = vunpack.c.l.b16 %v6045
    %v6110 = vunpack.c.h.b16 %v6045
    %v6111 = vunpack.c.l.b16 %v6046
    %v6112 = vunpack.c.h.b16 %v6046
    %v6113 = vunpack.c.l.b16 %v6047
    %v6114 = vunpack.c.h.b16 %v6047
    %v6115 = vunpack.c.l.b16 %v6048
    %v6116 = vunpack.c.h.b16 %v6048
    %v6117 = vunpack.c.l.b16 %v6049
    %v6118 = vunpack.c.h.b16 %v6049
    %v6119 = vunpack.c.l.b16 %v6050
    %v6120 = vunpack.c.h.b16 %v6050
    %v6121 = vunpack.c.l.b16 %v6051
    %v6122 = vunpack.c.h.b16 %v6051
    %v6123 = vunpack.c.l.b16 %v6052
    %v6124 = vunpack.c.h.b16 %v6052
    %v6125 = vunpack.c.l.b16 %v6053
    %v6126 = vunpack.c.h.b16 %v6053
    %v6127 = vunpack.c.l.b16 %v6054
    %v6128 = vunpack.c.h.b16 %v6054
    %v6129 = vunpack.c.l.b16 %v6055
    %v6130 = vunpack.c.h.b16 %v6055
    %v6131 = vunpack.c.l.b16 %v6056
    %v6132 = vunpack.c.h.b16 %v6056
    %v6133 = vunpack.c.l.b16 %v6057
    %v6134 = vunpack.c.h.b16 %v6057
    %v6135 = vunpack.c.l.b16 %v6058
    %v6136 = vunpack.c.h.b16 %v6058
    %v6137 = vunpack.c.l.b16 %v6059
    %v6138 = vunpack.c.h.b16 %v6059
    %v6139 = vunpack.c.l.b16 %v6060
    %v6140 = vunpack.c.h.b16 %v6060
    %v6141 = vunpack.c.l.b16 %v6061
    %v6142 = vunpack.c.h.b16 %v6061
    %v6143 = vunpack.c.l.b16 %v6062
    %v6144 = vunpack.c.h.b16 %v6062
    %v6145 = vunpack.c.l.b16 %v6063
    %v6146 = vunpack.c.h.b16 %v6063
    %v6147 = vunpack.c.l.b16 %v6064
    %v6148 = vunpack.c.h.b16 %v6064
    %v6149 = vunpack.c.l.b16 %v6065
    %v6150 = vunpack.c.h.b16 %v6065
    %v6151 = vunpack.c.l.b16 %v6066
    %v6152 = vunpack.c.h.b16 %v6066
    %v6153 = vunpack.c.l.b16 %v6067
    %v6154 = vunpack.c.h.b16 %v6067
    %v6155 = vunpack.c.l.b16 %v6068
    %v6156 = vunpack.c.h.b16 %v6068
    %v6157 = vunpack.c.l.b16 %v6069
    %v6158 = vunpack.c.h.b16 %v6069
    %v6159 = vunpack.c.l.b16 %v6070
    %v6160 = vunpack.c.h.b16 %v6070
    %v6161 = vunpack.c.l.b16 %v6071
    %v6162 = vunpack.c.h.b16 %v6071
    %v6163 = vunpack.c.l.b16 %v6072
    %v6164 = vunpack.c.h.b16 %v6072
    %v6165 = vunpack.c.l.b16 %v6073
    %v6166 = vunpack.c.h.b16 %v6073
    %v6167 = vunpack.c.l.b16 %v6074
    %v6168 = vunpack.c.h.b16 %v6074
    %v6169 = vunpack.c.l.b16 %v6075
    %v6170 = vunpack.c.h.b16 %v6075
    %v6171 = vunpack.c.l.b16 %v6076
    %v6172 = vunpack.c.h.b16 %v6076
    %v6173 = vpack.c.b16 %v6111, %v6109
    %v6174 = vpack.c.b16 %v6112, %v6110
    %v6175 = vpack.c.b16 %v6115, %v6113
    %v6176 = vpack.c.b16 %v6116, %v6114
    %v6177 = vpack.c.b16 %v6119, %v6117
    %v6178 = vpack.c.b16 %v6120, %v6118
    %v6179 = vpack.c.b16 %v6123, %v6121
    %v6180 = vpack.c.b16 %v6124, %v6122
    %v6181 = vpack.c.b16 %v6127, %v6125
    %v6182 = vpack.c.b16 %v6128, %v6126
    %v6183 = vpack.c.b16 %v6131, %v6129
    %v6184 = vpack.c.b16 %v6132, %v6130
    %v6185 = vpack.c.b16 %v6135, %v6133
    %v6186 = vpack.c.b16 %v6136, %v6134
    %v6187 = vpack.c.b16 %v6139, %v6137
    %v6188 = vpack.c.b16 %v6140, %v6138
    %v6189 = vpack.c.b16 %v6143, %v6141
    %v6190 = vpack.c.b16 %v6144, %v6142
    %v6191 = vpack.c.b16 %v6147, %v6145
    %v6192 = vpack.c.b16 %v6148, %v6146
    %v6193 = vpack.c.b16 %v6151, %v6149
    %v6194 = vpack.c.b16 %v6152, %v6150
    %v6195 = vpack.c.b16 %v6155, %v6153
    %v6196 = vpack.c.b16 %v6156, %v6154
    %v6197 = vpack.c.b16 %v6159, %v6157
    %v6198 = vpack.c.b16 %v6160, %v6158
    %v6199 = vpack.c.b16 %v6163, %v6161
    %v6200 = vpack.c.b16 %v6164, %v6162
    %v6201 = vpack.c.b16 %v6167, %v6165
    %v6202 = vpack.c.b16 %v6168, %v6166
    %v6203 = vpack.c.b16 %v6171, %v6169
    %v6204 = vpack.c.b16 %v6172, %v6170
    %6237 = vmatprep.subr.bf16.mxu0 %v6174
    %6238 = vmatpush1.bf16.msra.mxu0 %v6173
    %6239 = vmatprep.subr.bf16.mxu0 %v6176
    %6240 = vmatpush1.bf16.msra.mxu0 %v6175
    %6241 = vmatprep.subr.bf16.mxu0 %v6178
    %6242 = vmatpush1.bf16.msra.mxu0 %v6177
    %6243 = vmatprep.subr.bf16.mxu0 %v6180
    %6244 = vmatpush1.bf16.msra.mxu0 %v6179
    %6245 = vmatprep.subr.bf16.mxu0 %v6182
    %6246 = vmatpush1.bf16.msra.mxu0 %v6181
    %6247 = vmatprep.subr.bf16.mxu0 %v6184
    %6248 = vmatpush1.bf16.msra.mxu0 %v6183
    %6249 = vmatprep.subr.bf16.mxu0 %v6186
    %6250 = vmatpush1.bf16.msra.mxu0 %v6185
    %6251 = vmatprep.subr.bf16.mxu0 %v6188
    %6252 = vmatpush1.bf16.msra.mxu0 %v6187
    %6253 = vmatprep.subr.bf16.mxu0 %v6190
    %6254 = vmatpush1.bf16.msra.mxu0 %v6189
    %6255 = vmatprep.subr.bf16.mxu0 %v6192
    %6256 = vmatpush1.bf16.msra.mxu0 %v6191
    %6257 = vmatprep.subr.bf16.mxu0 %v6194
    %6258 = vmatpush1.bf16.msra.mxu0 %v6193
    %6259 = vmatprep.subr.bf16.mxu0 %v6196
    %6260 = vmatpush1.bf16.msra.mxu0 %v6195
    %6261 = vmatprep.subr.bf16.mxu0 %v6198
    %6262 = vmatpush1.bf16.msra.mxu0 %v6197
    %6263 = vmatprep.subr.bf16.mxu0 %v6200
    %6264 = vmatpush1.bf16.msra.mxu0 %v6199
    %6265 = vmatprep.subr.bf16.mxu0 %v6202
    %6266 = vmatpush1.bf16.msra.mxu0 %v6201
    %6267 = vmatprep.subr.bf16.mxu0 %v6204
    %6268 = vmatpush1.bf16.msra.mxu0 %v6203
    %6269 = vmatprep.mubr.bf16.mxu0 %v6043
    %6270 = vmatmul.mubr.bf16.gmra.mrb[0].mxu0 %v6042
    %v6271 = vpop.f32.mrb[0].mxu0
    %v6272 = vadd.f32 0.0, %v6271
    %v6273 = vpop.f32.mrb[0].mxu0
    %v6274 = vadd.f32 0.0, %v6273
    %v6275 = vpop.f32.mrb[0].mxu0
    %v6276 = vpop.f32.mrb[0].mxu0
    %6277 = vdwg.mxu0
    %v6278 = vadd.f32 %v6029, %v6272
    %v6279 = vadd.f32 %v6030, %v6274
    %s6280 = scalar_lea.vmem %s0, 200
    %v6281 = vld [vmem:[%s6280] sm:$0xff]
    %6282 = vset.pattern.permute.xlu0 0
    %6283 = vperm.xlu0 %6282, %v6281
    %v6284 = vpop.permute.xlu0 %6283
    %vm6285 = vcmp.eq.s32.totalorder %v6284, %v59
    %vm6286 = vcmp.eq.s32.totalorder %v6284, %v60
    %v6287 = vsel %vm6285, 1, 0
    %v6288 = vsel %vm6286, 1, 0
    %v6289 = vcvt.s32.f32 %v6287
    %v6290 = vcvt.s32.f32 %v6288
    %v6291 = vpack.c.bf16 %v6289, %v6289
    %v6292 = vpack.c.bf16 %v6290, %v6290
    %s6293 = scalar_lea.vmem [#allocation2], 6400
    %v6294 = vld [vmem:[%s6293] sm:$0xff]
    %v6295 = vld [vmem:[%s6293 + $0x8] sm:$0xff]
    %v6296 = vld [vmem:[%s6293 + $0x10] sm:$0xff]
    %v6297 = vld [vmem:[%s6293 + $0x18] sm:$0xff]
    %v6298 = vld [vmem:[%s6293 + $0x20] sm:$0xff]
    %v6299 = vld [vmem:[%s6293 + $0x28] sm:$0xff]
    %v6300 = vld [vmem:[%s6293 + $0x30] sm:$0xff]
    %v6301 = vld [vmem:[%s6293 + $0x38] sm:$0xff]
    %v6302 = vld [vmem:[%s6293 + $0x40] sm:$0xff]
    %v6303 = vld [vmem:[%s6293 + $0x48] sm:$0xff]
    %v6304 = vld [vmem:[%s6293 + $0x50] sm:$0xff]
    %v6305 = vld [vmem:[%s6293 + $0x58] sm:$0xff]
    %v6306 = vld [vmem:[%s6293 + $0x60] sm:$0xff]
    %v6307 = vld [vmem:[%s6293 + $0x68] sm:$0xff]
    %v6308 = vld [vmem:[%s6293 + $0x70] sm:$0xff]
    %v6309 = vld [vmem:[%s6293 + $0x78] sm:$0xff]
    %v6310 = vld [vmem:[%s6293 + $0x80] sm:$0xff]
    %v6311 = vld [vmem:[%s6293 + $0x88] sm:$0xff]
    %v6312 = vld [vmem:[%s6293 + $0x90] sm:$0xff]
    %v6313 = vld [vmem:[%s6293 + $0x98] sm:$0xff]
    %v6314 = vld [vmem:[%s6293 + $0xa0] sm:$0xff]
    %v6315 = vld [vmem:[%s6293 + $0xa8] sm:$0xff]
    %v6316 = vld [vmem:[%s6293 + $0xb0] sm:$0xff]
    %v6317 = vld [vmem:[%s6293 + $0xb8] sm:$0xff]
    %v6318 = vld [vmem:[%s6293 + $0xc0] sm:$0xff]
    %v6319 = vld [vmem:[%s6293 + $0xc8] sm:$0xff]
    %v6320 = vld [vmem:[%s6293 + $0xd0] sm:$0xff]
    %v6321 = vld [vmem:[%s6293 + $0xd8] sm:$0xff]
    %v6322 = vld [vmem:[%s6293 + $0xe0] sm:$0xff]
    %v6323 = vld [vmem:[%s6293 + $0xe8] sm:$0xff]
    %v6324 = vld [vmem:[%s6293 + $0xf0] sm:$0xff]
    %v6325 = vld [vmem:[%s6293 + $0xf8] sm:$0xff]
    %v6358 = vunpack.c.l.b16 %v6294
    %v6359 = vunpack.c.h.b16 %v6294
    %v6360 = vunpack.c.l.b16 %v6295
    %v6361 = vunpack.c.h.b16 %v6295
    %v6362 = vunpack.c.l.b16 %v6296
    %v6363 = vunpack.c.h.b16 %v6296
    %v6364 = vunpack.c.l.b16 %v6297
    %v6365 = vunpack.c.h.b16 %v6297
    %v6366 = vunpack.c.l.b16 %v6298
    %v6367 = vunpack.c.h.b16 %v6298
    %v6368 = vunpack.c.l.b16 %v6299
    %v6369 = vunpack.c.h.b16 %v6299
    %v6370 = vunpack.c.l.b16 %v6300
    %v6371 = vunpack.c.h.b16 %v6300
    %v6372 = vunpack.c.l.b16 %v6301
    %v6373 = vunpack.c.h.b16 %v6301
    %v6374 = vunpack.c.l.b16 %v6302
    %v6375 = vunpack.c.h.b16 %v6302
    %v6376 = vunpack.c.l.b16 %v6303
    %v6377 = vunpack.c.h.b16 %v6303
    %v6378 = vunpack.c.l.b16 %v6304
    %v6379 = vunpack.c.h.b16 %v6304
    %v6380 = vunpack.c.l.b16 %v6305
    %v6381 = vunpack.c.h.b16 %v6305
    %v6382 = vunpack.c.l.b16 %v6306
    %v6383 = vunpack.c.h.b16 %v6306
    %v6384 = vunpack.c.l.b16 %v6307
    %v6385 = vunpack.c.h.b16 %v6307
    %v6386 = vunpack.c.l.b16 %v6308
    %v6387 = vunpack.c.h.b16 %v6308
    %v6388 = vunpack.c.l.b16 %v6309
    %v6389 = vunpack.c.h.b16 %v6309
    %v6390 = vunpack.c.l.b16 %v6310
    %v6391 = vunpack.c.h.b16 %v6310
    %v6392 = vunpack.c.l.b16 %v6311
    %v6393 = vunpack.c.h.b16 %v6311
    %v6394 = vunpack.c.l.b16 %v6312
    %v6395 = vunpack.c.h.b16 %v6312
    %v6396 = vunpack.c.l.b16 %v6313
    %v6397 = vunpack.c.h.b16 %v6313
    %v6398 = vunpack.c.l.b16 %v6314
    %v6399 = vunpack.c.h.b16 %v6314
    %v6400 = vunpack.c.l.b16 %v6315
    %v6401 = vunpack.c.h.b16 %v6315
    %v6402 = vunpack.c.l.b16 %v6316
    %v6403 = vunpack.c.h.b16 %v6316
    %v6404 = vunpack.c.l.b16 %v6317
    %v6405 = vunpack.c.h.b16 %v6317
    %v6406 = vunpack.c.l.b16 %v6318
    %v6407 = vunpack.c.h.b16 %v6318
    %v6408 = vunpack.c.l.b16 %v6319
    %v6409 = vunpack.c.h.b16 %v6319
    %v6410 = vunpack.c.l.b16 %v6320
    %v6411 = vunpack.c.h.b16 %v6320
    %v6412 = vunpack.c.l.b16 %v6321
    %v6413 = vunpack.c.h.b16 %v6321
    %v6414 = vunpack.c.l.b16 %v6322
    %v6415 = vunpack.c.h.b16 %v6322
    %v6416 = vunpack.c.l.b16 %v6323
    %v6417 = vunpack.c.h.b16 %v6323
    %v6418 = vunpack.c.l.b16 %v6324
    %v6419 = vunpack.c.h.b16 %v6324
    %v6420 = vunpack.c.l.b16 %v6325
    %v6421 = vunpack.c.h.b16 %v6325
    %v6422 = vpack.c.b16 %v6360, %v6358
    %v6423 = vpack.c.b16 %v6361, %v6359
    %v6424 = vpack.c.b16 %v6364, %v6362
    %v6425 = vpack.c.b16 %v6365, %v6363
    %v6426 = vpack.c.b16 %v6368, %v6366
    %v6427 = vpack.c.b16 %v6369, %v6367
    %v6428 = vpack.c.b16 %v6372, %v6370
    %v6429 = vpack.c.b16 %v6373, %v6371
    %v6430 = vpack.c.b16 %v6376, %v6374
    %v6431 = vpack.c.b16 %v6377, %v6375
    %v6432 = vpack.c.b16 %v6380, %v6378
    %v6433 = vpack.c.b16 %v6381, %v6379
    %v6434 = vpack.c.b16 %v6384, %v6382
    %v6435 = vpack.c.b16 %v6385, %v6383
    %v6436 = vpack.c.b16 %v6388, %v6386
    %v6437 = vpack.c.b16 %v6389, %v6387
    %v6438 = vpack.c.b16 %v6392, %v6390
    %v6439 = vpack.c.b16 %v6393, %v6391
    %v6440 = vpack.c.b16 %v6396, %v6394
    %v6441 = vpack.c.b16 %v6397, %v6395
    %v6442 = vpack.c.b16 %v6400, %v6398
    %v6443 = vpack.c.b16 %v6401, %v6399
    %v6444 = vpack.c.b16 %v6404, %v6402
    %v6445 = vpack.c.b16 %v6405, %v6403
    %v6446 = vpack.c.b16 %v6408, %v6406
    %v6447 = vpack.c.b16 %v6409, %v6407
    %v6448 = vpack.c.b16 %v6412, %v6410
    %v6449 = vpack.c.b16 %v6413, %v6411
    %v6450 = vpack.c.b16 %v6416, %v6414
    %v6451 = vpack.c.b16 %v6417, %v6415
    %v6452 = vpack.c.b16 %v6420, %v6418
    %v6453 = vpack.c.b16 %v6421, %v6419
    %6486 = vmatprep.subr.bf16.mxu0 %v6423
    %6487 = vmatpush1.bf16.msra.mxu0 %v6422
    %6488 = vmatprep.subr.bf16.mxu0 %v6425
    %6489 = vmatpush1.bf16.msra.mxu0 %v6424
    %6490 = vmatprep.subr.bf16.mxu0 %v6427
    %6491 = vmatpush1.bf16.msra.mxu0 %v6426
    %6492 = vmatprep.subr.bf16.mxu0 %v6429
    %6493 = vmatpush1.bf16.msra.mxu0 %v6428
    %6494 = vmatprep.subr.bf16.mxu0 %v6431
    %6495 = vmatpush1.bf16.msra.mxu0 %v6430
    %6496 = vmatprep.subr.bf16.mxu0 %v6433
    %6497 = vmatpush1.bf16.msra.mxu0 %v6432
    %6498 = vmatprep.subr.bf16.mxu0 %v6435
    %6499 = vmatpush1.bf16.msra.mxu0 %v6434
    %6500 = vmatprep.subr.bf16.mxu0 %v6437
    %6501 = vmatpush1.bf16.msra.mxu0 %v6436
    %6502 = vmatprep.subr.bf16.mxu0 %v6439
    %6503 = vmatpush1.bf16.msra.mxu0 %v6438
    %6504 = vmatprep.subr.bf16.mxu0 %v6441
    %6505 = vmatpush1.bf16.msra.mxu0 %v6440
    %6506 = vmatprep.subr.bf16.mxu0 %v6443
    %6507 = vmatpush1.bf16.msra.mxu0 %v6442
    %6508 = vmatprep.subr.bf16.mxu0 %v6445
    %6509 = vmatpush1.bf16.msra.mxu0 %v6444
    %6510 = vmatprep.subr.bf16.mxu0 %v6447
    %6511 = vmatpush1.bf16.msra.mxu0 %v6446
    %6512 = vmatprep.subr.bf16.mxu0 %v6449
    %6513 = vmatpush1.bf16.msra.mxu0 %v6448
    %6514 = vmatprep.subr.bf16.mxu0 %v6451
    %6515 = vmatpush1.bf16.msra.mxu0 %v6450
    %6516 = vmatprep.subr.bf16.mxu0 %v6453
    %6517 = vmatpush1.bf16.msra.mxu0 %v6452
    %6518 = vmatprep.mubr.bf16.mxu0 %v6292
    %6519 = vmatmul.mubr.bf16.gmra.mrb[0].mxu0 %v6291
    %v6520 = vpop.f32.mrb[0].mxu0
    %v6521 = vadd.f32 0.0, %v6520
    %v6522 = vpop.f32.mrb[0].mxu0
    %v6523 = vadd.f32 0.0, %v6522
    %v6524 = vpop.f32.mrb[0].mxu0
    %v6525 = vpop.f32.mrb[0].mxu0
    %6526 = vdwg.mxu0
    %v6527 = vadd.f32 %v6278, %v6521
    %v6528 = vadd.f32 %v6279, %v6523
    %s6529 = scalar_lea.vmem %s0, 208
    %v6530 = vld [vmem:[%s6529] sm:$0xff]
    %6531 = vset.pattern.permute.xlu0 0
    %6532 = vperm.xlu0 %6531, %v6530
    %v6533 = vpop.permute.xlu0 %6532
    %vm6534 = vcmp.eq.s32.totalorder %v6533, %v59
    %vm6535 = vcmp.eq.s32.totalorder %v6533, %v60
    %v6536 = vsel %vm6534, 1, 0
    %v6537 = vsel %vm6535, 1, 0
    %v6538 = vcvt.s32.f32 %v6536
    %v6539 = vcvt.s32.f32 %v6537
    %v6540 = vpack.c.bf16 %v6538, %v6538
    %v6541 = vpack.c.bf16 %v6539, %v6539
    %s6542 = scalar_lea.vmem [#allocation2], 6656
    %v6543 = vld [vmem:[%s6542] sm:$0xff]
    %v6544 = vld [vmem:[%s6542 + $0x8] sm:$0xff]
    %v6545 = vld [vmem:[%s6542 + $0x10] sm:$0xff]
    %v6546 = vld [vmem:[%s6542 + $0x18] sm:$0xff]
    %v6547 = vld [vmem:[%s6542 + $0x20] sm:$0xff]
    %v6548 = vld [vmem:[%s6542 + $0x28] sm:$0xff]
    %v6549 = vld [vmem:[%s6542 + $0x30] sm:$0xff]
    %v6550 = vld [vmem:[%s6542 + $0x38] sm:$0xff]
    %v6551 = vld [vmem:[%s6542 + $0x40] sm:$0xff]
    %v6552 = vld [vmem:[%s6542 + $0x48] sm:$0xff]
    %v6553 = vld [vmem:[%s6542 + $0x50] sm:$0xff]
    %v6554 = vld [vmem:[%s6542 + $0x58] sm:$0xff]
    %v6555 = vld [vmem:[%s6542 + $0x60] sm:$0xff]
    %v6556 = vld [vmem:[%s6542 + $0x68] sm:$0xff]
    %v6557 = vld [vmem:[%s6542 + $0x70] sm:$0xff]
    %v6558 = vld [vmem:[%s6542 + $0x78] sm:$0xff]
    %v6559 = vld [vmem:[%s6542 + $0x80] sm:$0xff]
    %v6560 = vld [vmem:[%s6542 + $0x88] sm:$0xff]
    %v6561 = vld [vmem:[%s6542 + $0x90] sm:$0xff]
    %v6562 = vld [vmem:[%s6542 + $0x98] sm:$0xff]
    %v6563 = vld [vmem:[%s6542 + $0xa0] sm:$0xff]
    %v6564 = vld [vmem:[%s6542 + $0xa8] sm:$0xff]
    %v6565 = vld [vmem:[%s6542 + $0xb0] sm:$0xff]
    %v6566 = vld [vmem:[%s6542 + $0xb8] sm:$0xff]
    %v6567 = vld [vmem:[%s6542 + $0xc0] sm:$0xff]
    %v6568 = vld [vmem:[%s6542 + $0xc8] sm:$0xff]
    %v6569 = vld [vmem:[%s6542 + $0xd0] sm:$0xff]
    %v6570 = vld [vmem:[%s6542 + $0xd8] sm:$0xff]
    %v6571 = vld [vmem:[%s6542 + $0xe0] sm:$0xff]
    %v6572 = vld [vmem:[%s6542 + $0xe8] sm:$0xff]
    %v6573 = vld [vmem:[%s6542 + $0xf0] sm:$0xff]
    %v6574 = vld [vmem:[%s6542 + $0xf8] sm:$0xff]
    %v6607 = vunpack.c.l.b16 %v6543
    %v6608 = vunpack.c.h.b16 %v6543
    %v6609 = vunpack.c.l.b16 %v6544
    %v6610 = vunpack.c.h.b16 %v6544
    %v6611 = vunpack.c.l.b16 %v6545
    %v6612 = vunpack.c.h.b16 %v6545
    %v6613 = vunpack.c.l.b16 %v6546
    %v6614 = vunpack.c.h.b16 %v6546
    %v6615 = vunpack.c.l.b16 %v6547
    %v6616 = vunpack.c.h.b16 %v6547
    %v6617 = vunpack.c.l.b16 %v6548
    %v6618 = vunpack.c.h.b16 %v6548
    %v6619 = vunpack.c.l.b16 %v6549
    %v6620 = vunpack.c.h.b16 %v6549
    %v6621 = vunpack.c.l.b16 %v6550
    %v6622 = vunpack.c.h.b16 %v6550
    %v6623 = vunpack.c.l.b16 %v6551
    %v6624 = vunpack.c.h.b16 %v6551
    %v6625 = vunpack.c.l.b16 %v6552
    %v6626 = vunpack.c.h.b16 %v6552
    %v6627 = vunpack.c.l.b16 %v6553
    %v6628 = vunpack.c.h.b16 %v6553
    %v6629 = vunpack.c.l.b16 %v6554
    %v6630 = vunpack.c.h.b16 %v6554
    %v6631 = vunpack.c.l.b16 %v6555
    %v6632 = vunpack.c.h.b16 %v6555
    %v6633 = vunpack.c.l.b16 %v6556
    %v6634 = vunpack.c.h.b16 %v6556
    %v6635 = vunpack.c.l.b16 %v6557
    %v6636 = vunpack.c.h.b16 %v6557
    %v6637 = vunpack.c.l.b16 %v6558
    %v6638 = vunpack.c.h.b16 %v6558
    %v6639 = vunpack.c.l.b16 %v6559
    %v6640 = vunpack.c.h.b16 %v6559
    %v6641 = vunpack.c.l.b16 %v6560
    %v6642 = vunpack.c.h.b16 %v6560
    %v6643 = vunpack.c.l.b16 %v6561
    %v6644 = vunpack.c.h.b16 %v6561
    %v6645 = vunpack.c.l.b16 %v6562
    %v6646 = vunpack.c.h.b16 %v6562
    %v6647 = vunpack.c.l.b16 %v6563
    %v6648 = vunpack.c.h.b16 %v6563
    %v6649 = vunpack.c.l.b16 %v6564
    %v6650 = vunpack.c.h.b16 %v6564
    %v6651 = vunpack.c.l.b16 %v6565
    %v6652 = vunpack.c.h.b16 %v6565
    %v6653 = vunpack.c.l.b16 %v6566
    %v6654 = vunpack.c.h.b16 %v6566
    %v6655 = vunpack.c.l.b16 %v6567
    %v6656 = vunpack.c.h.b16 %v6567
    %v6657 = vunpack.c.l.b16 %v6568
    %v6658 = vunpack.c.h.b16 %v6568
    %v6659 = vunpack.c.l.b16 %v6569
    %v6660 = vunpack.c.h.b16 %v6569
    %v6661 = vunpack.c.l.b16 %v6570
    %v6662 = vunpack.c.h.b16 %v6570
    %v6663 = vunpack.c.l.b16 %v6571
    %v6664 = vunpack.c.h.b16 %v6571
    %v6665 = vunpack.c.l.b16 %v6572
    %v6666 = vunpack.c.h.b16 %v6572
    %v6667 = vunpack.c.l.b16 %v6573
    %v6668 = vunpack.c.h.b16 %v6573
    %v6669 = vunpack.c.l.b16 %v6574
    %v6670 = vunpack.c.h.b16 %v6574
    %v6671 = vpack.c.b16 %v6609, %v6607
    %v6672 = vpack.c.b16 %v6610, %v6608
    %v6673 = vpack.c.b16 %v6613, %v6611
    %v6674 = vpack.c.b16 %v6614, %v6612
    %v6675 = vpack.c.b16 %v6617, %v6615
    %v6676 = vpack.c.b16 %v6618, %v6616
    %v6677 = vpack.c.b16 %v6621, %v6619
    %v6678 = vpack.c.b16 %v6622, %v6620
    %v6679 = vpack.c.b16 %v6625, %v6623
    %v6680 = vpack.c.b16 %v6626, %v6624
    %v6681 = vpack.c.b16 %v6629, %v6627
    %v6682 = vpack.c.b16 %v6630, %v6628
    %v6683 = vpack.c.b16 %v6633, %v6631
    %v6684 = vpack.c.b16 %v6634, %v6632
    %v6685 = vpack.c.b16 %v6637, %v6635
    %v6686 = vpack.c.b16 %v6638, %v6636
    %v6687 = vpack.c.b16 %v6641, %v6639
    %v6688 = vpack.c.b16 %v6642, %v6640
    %v6689 = vpack.c.b16 %v6645, %v6643
    %v6690 = vpack.c.b16 %v6646, %v6644
    %v6691 = vpack.c.b16 %v6649, %v6647
    %v6692 = vpack.c.b16 %v6650, %v6648
    %v6693 = vpack.c.b16 %v6653, %v6651
    %v6694 = vpack.c.b16 %v6654, %v6652
    %v6695 = vpack.c.b16 %v6657, %v6655
    %v6696 = vpack.c.b16 %v6658, %v6656
    %v6697 = vpack.c.b16 %v6661, %v6659
    %v6698 = vpack.c.b16 %v6662, %v6660
    %v6699 = vpack.c.b16 %v6665, %v6663
    %v6700 = vpack.c.b16 %v6666, %v6664
    %v6701 = vpack.c.b16 %v6669, %v6667
    %v6702 = vpack.c.b16 %v6670, %v6668
    %6735 = vmatprep.subr.bf16.mxu0 %v6672
    %6736 = vmatpush1.bf16.msra.mxu0 %v6671
    %6737 = vmatprep.subr.bf16.mxu0 %v6674
    %6738 = vmatpush1.bf16.msra.mxu0 %v6673
    %6739 = vmatprep.subr.bf16.mxu0 %v6676
    %6740 = vmatpush1.bf16.msra.mxu0 %v6675
    %6741 = vmatprep.subr.bf16.mxu0 %v6678
    %6742 = vmatpush1.bf16.msra.mxu0 %v6677
    %6743 = vmatprep.subr.bf16.mxu0 %v6680
    %6744 = vmatpush1.bf16.msra.mxu0 %v6679
    %6745 = vmatprep.subr.bf16.mxu0 %v6682
    %6746 = vmatpush1.bf16.msra.mxu0 %v6681
    %6747 = vmatprep.subr.bf16.mxu0 %v6684
    %6748 = vmatpush1.bf16.msra.mxu0 %v6683
    %6749 = vmatprep.subr.bf16.mxu0 %v6686
    %6750 = vmatpush1.bf16.msra.mxu0 %v6685
    %6751 = vmatprep.subr.bf16.mxu0 %v6688
    %6752 = vmatpush1.bf16.msra.mxu0 %v6687
    %6753 = vmatprep.subr.bf16.mxu0 %v6690
    %6754 = vmatpush1.bf16.msra.mxu0 %v6689
    %6755 = vmatprep.subr.bf16.mxu0 %v6692
    %6756 = vmatpush1.bf16.msra.mxu0 %v6691
    %6757 = vmatprep.subr.bf16.mxu0 %v6694
    %6758 = vmatpush1.bf16.msra.mxu0 %v6693
    %6759 = vmatprep.subr.bf16.mxu0 %v6696
    %6760 = vmatpush1.bf16.msra.mxu0 %v6695
    %6761 = vmatprep.subr.bf16.mxu0 %v6698
    %6762 = vmatpush1.bf16.msra.mxu0 %v6697
    %6763 = vmatprep.subr.bf16.mxu0 %v6700
    %6764 = vmatpush1.bf16.msra.mxu0 %v6699
    %6765 = vmatprep.subr.bf16.mxu0 %v6702
    %6766 = vmatpush1.bf16.msra.mxu0 %v6701
    %6767 = vmatprep.mubr.bf16.mxu0 %v6541
    %6768 = vmatmul.mubr.bf16.gmra.mrb[0].mxu0 %v6540
    %v6769 = vpop.f32.mrb[0].mxu0
    %v6770 = vadd.f32 0.0, %v6769
    %v6771 = vpop.f32.mrb[0].mxu0
    %v6772 = vadd.f32 0.0, %v6771
    %v6773 = vpop.f32.mrb[0].mxu0
    %v6774 = vpop.f32.mrb[0].mxu0
    %6775 = vdwg.mxu0
    %v6776 = vadd.f32 %v6527, %v6770
    %v6777 = vadd.f32 %v6528, %v6772
    %s6778 = scalar_lea.vmem %s0, 216
    %v6779 = vld [vmem:[%s6778] sm:$0xff]
    %6780 = vset.pattern.permute.xlu0 0
    %6781 = vperm.xlu0 %6780, %v6779
    %v6782 = vpop.permute.xlu0 %6781
    %vm6783 = vcmp.eq.s32.totalorder %v6782, %v59
    %vm6784 = vcmp.eq.s32.totalorder %v6782, %v60
    %v6785 = vsel %vm6783, 1, 0
    %v6786 = vsel %vm6784, 1, 0
    %v6787 = vcvt.s32.f32 %v6785
    %v6788 = vcvt.s32.f32 %v6786
    %v6789 = vpack.c.bf16 %v6787, %v6787
    %v6790 = vpack.c.bf16 %v6788, %v6788
    %s6791 = scalar_lea.vmem [#allocation2], 6912
    %v6792 = vld [vmem:[%s6791] sm:$0xff]
    %v6793 = vld [vmem:[%s6791 + $0x8] sm:$0xff]
    %v6794 = vld [vmem:[%s6791 + $0x10] sm:$0xff]
    %v6795 = vld [vmem:[%s6791 + $0x18] sm:$0xff]
    %v6796 = vld [vmem:[%s6791 + $0x20] sm:$0xff]
    %v6797 = vld [vmem:[%s6791 + $0x28] sm:$0xff]
    %v6798 = vld [vmem:[%s6791 + $0x30] sm:$0xff]
    %v6799 = vld [vmem:[%s6791 + $0x38] sm:$0xff]
    %v6800 = vld [vmem:[%s6791 + $0x40] sm:$0xff]
    %v6801 = vld [vmem:[%s6791 + $0x48] sm:$0xff]
    %v6802 = vld [vmem:[%s6791 + $0x50] sm:$0xff]
    %v6803 = vld [vmem:[%s6791 + $0x58] sm:$0xff]
    %v6804 = vld [vmem:[%s6791 + $0x60] sm:$0xff]
    %v6805 = vld [vmem:[%s6791 + $0x68] sm:$0xff]
    %v6806 = vld [vmem:[%s6791 + $0x70] sm:$0xff]
    %v6807 = vld [vmem:[%s6791 + $0x78] sm:$0xff]
    %v6808 = vld [vmem:[%s6791 + $0x80] sm:$0xff]
    %v6809 = vld [vmem:[%s6791 + $0x88] sm:$0xff]
    %v6810 = vld [vmem:[%s6791 + $0x90] sm:$0xff]
    %v6811 = vld [vmem:[%s6791 + $0x98] sm:$0xff]
    %v6812 = vld [vmem:[%s6791 + $0xa0] sm:$0xff]
    %v6813 = vld [vmem:[%s6791 + $0xa8] sm:$0xff]
    %v6814 = vld [vmem:[%s6791 + $0xb0] sm:$0xff]
    %v6815 = vld [vmem:[%s6791 + $0xb8] sm:$0xff]
    %v6816 = vld [vmem:[%s6791 + $0xc0] sm:$0xff]
    %v6817 = vld [vmem:[%s6791 + $0xc8] sm:$0xff]
    %v6818 = vld [vmem:[%s6791 + $0xd0] sm:$0xff]
    %v6819 = vld [vmem:[%s6791 + $0xd8] sm:$0xff]
    %v6820 = vld [vmem:[%s6791 + $0xe0] sm:$0xff]
    %v6821 = vld [vmem:[%s6791 + $0xe8] sm:$0xff]
    %v6822 = vld [vmem:[%s6791 + $0xf0] sm:$0xff]
    %v6823 = vld [vmem:[%s6791 + $0xf8] sm:$0xff]
    %v6856 = vunpack.c.l.b16 %v6792
    %v6857 = vunpack.c.h.b16 %v6792
    %v6858 = vunpack.c.l.b16 %v6793
    %v6859 = vunpack.c.h.b16 %v6793
    %v6860 = vunpack.c.l.b16 %v6794
    %v6861 = vunpack.c.h.b16 %v6794
    %v6862 = vunpack.c.l.b16 %v6795
    %v6863 = vunpack.c.h.b16 %v6795
    %v6864 = vunpack.c.l.b16 %v6796
    %v6865 = vunpack.c.h.b16 %v6796
    %v6866 = vunpack.c.l.b16 %v6797
    %v6867 = vunpack.c.h.b16 %v6797
    %v6868 = vunpack.c.l.b16 %v6798
    %v6869 = vunpack.c.h.b16 %v6798
    %v6870 = vunpack.c.l.b16 %v6799
    %v6871 = vunpack.c.h.b16 %v6799
    %v6872 = vunpack.c.l.b16 %v6800
    %v6873 = vunpack.c.h.b16 %v6800
    %v6874 = vunpack.c.l.b16 %v6801
    %v6875 = vunpack.c.h.b16 %v6801
    %v6876 = vunpack.c.l.b16 %v6802
    %v6877 = vunpack.c.h.b16 %v6802
    %v6878 = vunpack.c.l.b16 %v6803
    %v6879 = vunpack.c.h.b16 %v6803
    %v6880 = vunpack.c.l.b16 %v6804
    %v6881 = vunpack.c.h.b16 %v6804
    %v6882 = vunpack.c.l.b16 %v6805
    %v6883 = vunpack.c.h.b16 %v6805
    %v6884 = vunpack.c.l.b16 %v6806
    %v6885 = vunpack.c.h.b16 %v6806
    %v6886 = vunpack.c.l.b16 %v6807
    %v6887 = vunpack.c.h.b16 %v6807
    %v6888 = vunpack.c.l.b16 %v6808
    %v6889 = vunpack.c.h.b16 %v6808
    %v6890 = vunpack.c.l.b16 %v6809
    %v6891 = vunpack.c.h.b16 %v6809
    %v6892 = vunpack.c.l.b16 %v6810
    %v6893 = vunpack.c.h.b16 %v6810
    %v6894 = vunpack.c.l.b16 %v6811
    %v6895 = vunpack.c.h.b16 %v6811
    %v6896 = vunpack.c.l.b16 %v6812
    %v6897 = vunpack.c.h.b16 %v6812
    %v6898 = vunpack.c.l.b16 %v6813
    %v6899 = vunpack.c.h.b16 %v6813
    %v6900 = vunpack.c.l.b16 %v6814
    %v6901 = vunpack.c.h.b16 %v6814
    %v6902 = vunpack.c.l.b16 %v6815
    %v6903 = vunpack.c.h.b16 %v6815
    %v6904 = vunpack.c.l.b16 %v6816
    %v6905 = vunpack.c.h.b16 %v6816
    %v6906 = vunpack.c.l.b16 %v6817
    %v6907 = vunpack.c.h.b16 %v6817
    %v6908 = vunpack.c.l.b16 %v6818
    %v6909 = vunpack.c.h.b16 %v6818
    %v6910 = vunpack.c.l.b16 %v6819
    %v6911 = vunpack.c.h.b16 %v6819
    %v6912 = vunpack.c.l.b16 %v6820
    %v6913 = vunpack.c.h.b16 %v6820
    %v6914 = vunpack.c.l.b16 %v6821
    %v6915 = vunpack.c.h.b16 %v6821
    %v6916 = vunpack.c.l.b16 %v6822
    %v6917 = vunpack.c.h.b16 %v6822
    %v6918 = vunpack.c.l.b16 %v6823
    %v6919 = vunpack.c.h.b16 %v6823
    %v6920 = vpack.c.b16 %v6858, %v6856
    %v6921 = vpack.c.b16 %v6859, %v6857
    %v6922 = vpack.c.b16 %v6862, %v6860
    %v6923 = vpack.c.b16 %v6863, %v6861
    %v6924 = vpack.c.b16 %v6866, %v6864
    %v6925 = vpack.c.b16 %v6867, %v6865
    %v6926 = vpack.c.b16 %v6870, %v6868
    %v6927 = vpack.c.b16 %v6871, %v6869
    %v6928 = vpack.c.b16 %v6874, %v6872
    %v6929 = vpack.c.b16 %v6875, %v6873
    %v6930 = vpack.c.b16 %v6878, %v6876
    %v6931 = vpack.c.b16 %v6879, %v6877
    %v6932 = vpack.c.b16 %v6882, %v6880
    %v6933 = vpack.c.b16 %v6883, %v6881
    %v6934 = vpack.c.b16 %v6886, %v6884
    %v6935 = vpack.c.b16 %v6887, %v6885
    %v6936 = vpack.c.b16 %v6890, %v6888
    %v6937 = vpack.c.b16 %v6891, %v6889
    %v6938 = vpack.c.b16 %v6894, %v6892
    %v6939 = vpack.c.b16 %v6895, %v6893
    %v6940 = vpack.c.b16 %v6898, %v6896
    %v6941 = vpack.c.b16 %v6899, %v6897
    %v6942 = vpack.c.b16 %v6902, %v6900
    %v6943 = vpack.c.b16 %v6903, %v6901
    %v6944 = vpack.c.b16 %v6906, %v6904
    %v6945 = vpack.c.b16 %v6907, %v6905
    %v6946 = vpack.c.b16 %v6910, %v6908
    %v6947 = vpack.c.b16 %v6911, %v6909
    %v6948 = vpack.c.b16 %v6914, %v6912
    %v6949 = vpack.c.b16 %v6915, %v6913
    %v6950 = vpack.c.b16 %v6918, %v6916
    %v6951 = vpack.c.b16 %v6919, %v6917
    %6984 = vmatprep.subr.bf16.mxu0 %v6921
    %6985 = vmatpush1.bf16.msra.mxu0 %v6920
    %6986 = vmatprep.subr.bf16.mxu0 %v6923
    %6987 = vmatpush1.bf16.msra.mxu0 %v6922
    %6988 = vmatprep.subr.bf16.mxu0 %v6925
    %6989 = vmatpush1.bf16.msra.mxu0 %v6924
    %6990 = vmatprep.subr.bf16.mxu0 %v6927
    %6991 = vmatpush1.bf16.msra.mxu0 %v6926
    %6992 = vmatprep.subr.bf16.mxu0 %v6929
    %6993 = vmatpush1.bf16.msra.mxu0 %v6928
    %6994 = vmatprep.subr.bf16.mxu0 %v6931
    %6995 = vmatpush1.bf16.msra.mxu0 %v6930
    %6996 = vmatprep.subr.bf16.mxu0 %v6933
    %6997 = vmatpush1.bf16.msra.mxu0 %v6932
    %6998 = vmatprep.subr.bf16.mxu0 %v6935
    %6999 = vmatpush1.bf16.msra.mxu0 %v6934
    %7000 = vmatprep.subr.bf16.mxu0 %v6937
    %7001 = vmatpush1.bf16.msra.mxu0 %v6936
    %7002 = vmatprep.subr.bf16.mxu0 %v6939
    %7003 = vmatpush1.bf16.msra.mxu0 %v6938
    %7004 = vmatprep.subr.bf16.mxu0 %v6941
    %7005 = vmatpush1.bf16.msra.mxu0 %v6940
    %7006 = vmatprep.subr.bf16.mxu0 %v6943
    %7007 = vmatpush1.bf16.msra.mxu0 %v6942
    %7008 = vmatprep.subr.bf16.mxu0 %v6945
    %7009 = vmatpush1.bf16.msra.mxu0 %v6944
    %7010 = vmatprep.subr.bf16.mxu0 %v6947
    %7011 = vmatpush1.bf16.msra.mxu0 %v6946
    %7012 = vmatprep.subr.bf16.mxu0 %v6949
    %7013 = vmatpush1.bf16.msra.mxu0 %v6948
    %7014 = vmatprep.subr.bf16.mxu0 %v6951
    %7015 = vmatpush1.bf16.msra.mxu0 %v6950
    %7016 = vmatprep.mubr.bf16.mxu0 %v6790
    %7017 = vmatmul.mubr.bf16.gmra.mrb[0].mxu0 %v6789
    %v7018 = vpop.f32.mrb[0].mxu0
    %v7019 = vadd.f32 0.0, %v7018
    %v7020 = vpop.f32.mrb[0].mxu0
    %v7021 = vadd.f32 0.0, %v7020
    %v7022 = vpop.f32.mrb[0].mxu0
    %v7023 = vpop.f32.mrb[0].mxu0
    %7024 = vdwg.mxu0
    %v7025 = vadd.f32 %v6776, %v7019
    %v7026 = vadd.f32 %v6777, %v7021
    %s7027 = scalar_lea.vmem %s0, 224
    %v7028 = vld [vmem:[%s7027] sm:$0xff]
    %7029 = vset.pattern.permute.xlu0 0
    %7030 = vperm.xlu0 %7029, %v7028
    %v7031 = vpop.permute.xlu0 %7030
    %vm7032 = vcmp.eq.s32.totalorder %v7031, %v59
    %vm7033 = vcmp.eq.s32.totalorder %v7031, %v60
    %v7034 = vsel %vm7032, 1, 0
    %v7035 = vsel %vm7033, 1, 0
    %v7036 = vcvt.s32.f32 %v7034
    %v7037 = vcvt.s32.f32 %v7035
    %v7038 = vpack.c.bf16 %v7036, %v7036
    %v7039 = vpack.c.bf16 %v7037, %v7037
    %s7040 = scalar_lea.vmem [#allocation2], 7168
    %v7041 = vld [vmem:[%s7040] sm:$0xff]
    %v7042 = vld [vmem:[%s7040 + $0x8] sm:$0xff]
    %v7043 = vld [vmem:[%s7040 + $0x10] sm:$0xff]
    %v7044 = vld [vmem:[%s7040 + $0x18] sm:$0xff]
    %v7045 = vld [vmem:[%s7040 + $0x20] sm:$0xff]
    %v7046 = vld [vmem:[%s7040 + $0x28] sm:$0xff]
    %v7047 = vld [vmem:[%s7040 + $0x30] sm:$0xff]
    %v7048 = vld [vmem:[%s7040 + $0x38] sm:$0xff]
    %v7049 = vld [vmem:[%s7040 + $0x40] sm:$0xff]
    %v7050 = vld [vmem:[%s7040 + $0x48] sm:$0xff]
    %v7051 = vld [vmem:[%s7040 + $0x50] sm:$0xff]
    %v7052 = vld [vmem:[%s7040 + $0x58] sm:$0xff]
    %v7053 = vld [vmem:[%s7040 + $0x60] sm:$0xff]
    %v7054 = vld [vmem:[%s7040 + $0x68] sm:$0xff]
    %v7055 = vld [vmem:[%s7040 + $0x70] sm:$0xff]
    %v7056 = vld [vmem:[%s7040 + $0x78] sm:$0xff]
    %v7057 = vld [vmem:[%s7040 + $0x80] sm:$0xff]
    %v7058 = vld [vmem:[%s7040 + $0x88] sm:$0xff]
    %v7059 = vld [vmem:[%s7040 + $0x90] sm:$0xff]
    %v7060 = vld [vmem:[%s7040 + $0x98] sm:$0xff]
    %v7061 = vld [vmem:[%s7040 + $0xa0] sm:$0xff]
    %v7062 = vld [vmem:[%s7040 + $0xa8] sm:$0xff]
    %v7063 = vld [vmem:[%s7040 + $0xb0] sm:$0xff]
    %v7064 = vld [vmem:[%s7040 + $0xb8] sm:$0xff]
    %v7065 = vld [vmem:[%s7040 + $0xc0] sm:$0xff]
    %v7066 = vld [vmem:[%s7040 + $0xc8] sm:$0xff]
    %v7067 = vld [vmem:[%s7040 + $0xd0] sm:$0xff]
    %v7068 = vld [vmem:[%s7040 + $0xd8] sm:$0xff]
    %v7069 = vld [vmem:[%s7040 + $0xe0] sm:$0xff]
    %v7070 = vld [vmem:[%s7040 + $0xe8] sm:$0xff]
    %v7071 = vld [vmem:[%s7040 + $0xf0] sm:$0xff]
    %v7072 = vld [vmem:[%s7040 + $0xf8] sm:$0xff]
    %v7105 = vunpack.c.l.b16 %v7041
    %v7106 = vunpack.c.h.b16 %v7041
    %v7107 = vunpack.c.l.b16 %v7042
    %v7108 = vunpack.c.h.b16 %v7042
    %v7109 = vunpack.c.l.b16 %v7043
    %v7110 = vunpack.c.h.b16 %v7043
    %v7111 = vunpack.c.l.b16 %v7044
    %v7112 = vunpack.c.h.b16 %v7044
    %v7113 = vunpack.c.l.b16 %v7045
    %v7114 = vunpack.c.h.b16 %v7045
    %v7115 = vunpack.c.l.b16 %v7046
    %v7116 = vunpack.c.h.b16 %v7046
    %v7117 = vunpack.c.l.b16 %v7047
    %v7118 = vunpack.c.h.b16 %v7047
    %v7119 = vunpack.c.l.b16 %v7048
    %v7120 = vunpack.c.h.b16 %v7048
    %v7121 = vunpack.c.l.b16 %v7049
    %v7122 = vunpack.c.h.b16 %v7049
    %v7123 = vunpack.c.l.b16 %v7050
    %v7124 = vunpack.c.h.b16 %v7050
    %v7125 = vunpack.c.l.b16 %v7051
    %v7126 = vunpack.c.h.b16 %v7051
    %v7127 = vunpack.c.l.b16 %v7052
    %v7128 = vunpack.c.h.b16 %v7052
    %v7129 = vunpack.c.l.b16 %v7053
    %v7130 = vunpack.c.h.b16 %v7053
    %v7131 = vunpack.c.l.b16 %v7054
    %v7132 = vunpack.c.h.b16 %v7054
    %v7133 = vunpack.c.l.b16 %v7055
    %v7134 = vunpack.c.h.b16 %v7055
    %v7135 = vunpack.c.l.b16 %v7056
    %v7136 = vunpack.c.h.b16 %v7056
    %v7137 = vunpack.c.l.b16 %v7057
    %v7138 = vunpack.c.h.b16 %v7057
    %v7139 = vunpack.c.l.b16 %v7058
    %v7140 = vunpack.c.h.b16 %v7058
    %v7141 = vunpack.c.l.b16 %v7059
    %v7142 = vunpack.c.h.b16 %v7059
    %v7143 = vunpack.c.l.b16 %v7060
    %v7144 = vunpack.c.h.b16 %v7060
    %v7145 = vunpack.c.l.b16 %v7061
    %v7146 = vunpack.c.h.b16 %v7061
    %v7147 = vunpack.c.l.b16 %v7062
    %v7148 = vunpack.c.h.b16 %v7062
    %v7149 = vunpack.c.l.b16 %v7063
    %v7150 = vunpack.c.h.b16 %v7063
    %v7151 = vunpack.c.l.b16 %v7064
    %v7152 = vunpack.c.h.b16 %v7064
    %v7153 = vunpack.c.l.b16 %v7065
    %v7154 = vunpack.c.h.b16 %v7065
    %v7155 = vunpack.c.l.b16 %v7066
    %v7156 = vunpack.c.h.b16 %v7066
    %v7157 = vunpack.c.l.b16 %v7067
    %v7158 = vunpack.c.h.b16 %v7067
    %v7159 = vunpack.c.l.b16 %v7068
    %v7160 = vunpack.c.h.b16 %v7068
    %v7161 = vunpack.c.l.b16 %v7069
    %v7162 = vunpack.c.h.b16 %v7069
    %v7163 = vunpack.c.l.b16 %v7070
    %v7164 = vunpack.c.h.b16 %v7070
    %v7165 = vunpack.c.l.b16 %v7071
    %v7166 = vunpack.c.h.b16 %v7071
    %v7167 = vunpack.c.l.b16 %v7072
    %v7168 = vunpack.c.h.b16 %v7072
    %v7169 = vpack.c.b16 %v7107, %v7105
    %v7170 = vpack.c.b16 %v7108, %v7106
    %v7171 = vpack.c.b16 %v7111, %v7109
    %v7172 = vpack.c.b16 %v7112, %v7110
    %v7173 = vpack.c.b16 %v7115, %v7113
    %v7174 = vpack.c.b16 %v7116, %v7114
    %v7175 = vpack.c.b16 %v7119, %v7117
    %v7176 = vpack.c.b16 %v7120, %v7118
    %v7177 = vpack.c.b16 %v7123, %v7121
    %v7178 = vpack.c.b16 %v7124, %v7122
    %v7179 = vpack.c.b16 %v7127, %v7125
    %v7180 = vpack.c.b16 %v7128, %v7126
    %v7181 = vpack.c.b16 %v7131, %v7129
    %v7182 = vpack.c.b16 %v7132, %v7130
    %v7183 = vpack.c.b16 %v7135, %v7133
    %v7184 = vpack.c.b16 %v7136, %v7134
    %v7185 = vpack.c.b16 %v7139, %v7137
    %v7186 = vpack.c.b16 %v7140, %v7138
    %v7187 = vpack.c.b16 %v7143, %v7141
    %v7188 = vpack.c.b16 %v7144, %v7142
    %v7189 = vpack.c.b16 %v7147, %v7145
    %v7190 = vpack.c.b16 %v7148, %v7146
    %v7191 = vpack.c.b16 %v7151, %v7149
    %v7192 = vpack.c.b16 %v7152, %v7150
    %v7193 = vpack.c.b16 %v7155, %v7153
    %v7194 = vpack.c.b16 %v7156, %v7154
    %v7195 = vpack.c.b16 %v7159, %v7157
    %v7196 = vpack.c.b16 %v7160, %v7158
    %v7197 = vpack.c.b16 %v7163, %v7161
    %v7198 = vpack.c.b16 %v7164, %v7162
    %v7199 = vpack.c.b16 %v7167, %v7165
    %v7200 = vpack.c.b16 %v7168, %v7166
    %7233 = vmatprep.subr.bf16.mxu0 %v7170
    %7234 = vmatpush1.bf16.msra.mxu0 %v7169
    %7235 = vmatprep.subr.bf16.mxu0 %v7172
    %7236 = vmatpush1.bf16.msra.mxu0 %v7171
    %7237 = vmatprep.subr.bf16.mxu0 %v7174
    %7238 = vmatpush1.bf16.msra.mxu0 %v7173
    %7239 = vmatprep.subr.bf16.mxu0 %v7176
    %7240 = vmatpush1.bf16.msra.mxu0 %v7175
    %7241 = vmatprep.subr.bf16.mxu0 %v7178
    %7242 = vmatpush1.bf16.msra.mxu0 %v7177
    %7243 = vmatprep.subr.bf16.mxu0 %v7180
    %7244 = vmatpush1.bf16.msra.mxu0 %v7179
    %7245 = vmatprep.subr.bf16.mxu0 %v7182
    %7246 = vmatpush1.bf16.msra.mxu0 %v7181
    %7247 = vmatprep.subr.bf16.mxu0 %v7184
    %7248 = vmatpush1.bf16.msra.mxu0 %v7183
    %7249 = vmatprep.subr.bf16.mxu0 %v7186
    %7250 = vmatpush1.bf16.msra.mxu0 %v7185
    %7251 = vmatprep.subr.bf16.mxu0 %v7188
    %7252 = vmatpush1.bf16.msra.mxu0 %v7187
    %7253 = vmatprep.subr.bf16.mxu0 %v7190
    %7254 = vmatpush1.bf16.msra.mxu0 %v7189
    %7255 = vmatprep.subr.bf16.mxu0 %v7192
    %7256 = vmatpush1.bf16.msra.mxu0 %v7191
    %7257 = vmatprep.subr.bf16.mxu0 %v7194
    %7258 = vmatpush1.bf16.msra.mxu0 %v7193
    %7259 = vmatprep.subr.bf16.mxu0 %v7196
    %7260 = vmatpush1.bf16.msra.mxu0 %v7195
    %7261 = vmatprep.subr.bf16.mxu0 %v7198
    %7262 = vmatpush1.bf16.msra.mxu0 %v7197
    %7263 = vmatprep.subr.bf16.mxu0 %v7200
    %7264 = vmatpush1.bf16.msra.mxu0 %v7199
    %7265 = vmatprep.mubr.bf16.mxu0 %v7039
    %7266 = vmatmul.mubr.bf16.gmra.mrb[0].mxu0 %v7038
    %v7267 = vpop.f32.mrb[0].mxu0
    %v7268 = vadd.f32 0.0, %v7267
    %v7269 = vpop.f32.mrb[0].mxu0
    %v7270 = vadd.f32 0.0, %v7269
    %v7271 = vpop.f32.mrb[0].mxu0
    %v7272 = vpop.f32.mrb[0].mxu0
    %7273 = vdwg.mxu0
    %v7274 = vadd.f32 %v7025, %v7268
    %v7275 = vadd.f32 %v7026, %v7270
    %s7276 = scalar_lea.vmem %s0, 232
    %v7277 = vld [vmem:[%s7276] sm:$0xff]
    %7278 = vset.pattern.permute.xlu0 0
    %7279 = vperm.xlu0 %7278, %v7277
    %v7280 = vpop.permute.xlu0 %7279
    %vm7281 = vcmp.eq.s32.totalorder %v7280, %v59
    %vm7282 = vcmp.eq.s32.totalorder %v7280, %v60
    %v7283 = vsel %vm7281, 1, 0
    %v7284 = vsel %vm7282, 1, 0
    %v7285 = vcvt.s32.f32 %v7283
    %v7286 = vcvt.s32.f32 %v7284
    %v7287 = vpack.c.bf16 %v7285, %v7285
    %v7288 = vpack.c.bf16 %v7286, %v7286
    %s7289 = scalar_lea.vmem [#allocation2], 7424
    %v7290 = vld [vmem:[%s7289] sm:$0xff]
    %v7291 = vld [vmem:[%s7289 + $0x8] sm:$0xff]
    %v7292 = vld [vmem:[%s7289 + $0x10] sm:$0xff]
    %v7293 = vld [vmem:[%s7289 + $0x18] sm:$0xff]
    %v7294 = vld [vmem:[%s7289 + $0x20] sm:$0xff]
    %v7295 = vld [vmem:[%s7289 + $0x28] sm:$0xff]
    %v7296 = vld [vmem:[%s7289 + $0x30] sm:$0xff]
    %v7297 = vld [vmem:[%s7289 + $0x38] sm:$0xff]
    %v7298 = vld [vmem:[%s7289 + $0x40] sm:$0xff]
    %v7299 = vld [vmem:[%s7289 + $0x48] sm:$0xff]
    %v7300 = vld [vmem:[%s7289 + $0x50] sm:$0xff]
    %v7301 = vld [vmem:[%s7289 + $0x58] sm:$0xff]
    %v7302 = vld [vmem:[%s7289 + $0x60] sm:$0xff]
    %v7303 = vld [vmem:[%s7289 + $0x68] sm:$0xff]
    %v7304 = vld [vmem:[%s7289 + $0x70] sm:$0xff]
    %v7305 = vld [vmem:[%s7289 + $0x78] sm:$0xff]
    %v7306 = vld [vmem:[%s7289 + $0x80] sm:$0xff]
    %v7307 = vld [vmem:[%s7289 + $0x88] sm:$0xff]
    %v7308 = vld [vmem:[%s7289 + $0x90] sm:$0xff]
    %v7309 = vld [vmem:[%s7289 + $0x98] sm:$0xff]
    %v7310 = vld [vmem:[%s7289 + $0xa0] sm:$0xff]
    %v7311 = vld [vmem:[%s7289 + $0xa8] sm:$0xff]
    %v7312 = vld [vmem:[%s7289 + $0xb0] sm:$0xff]
    %v7313 = vld [vmem:[%s7289 + $0xb8] sm:$0xff]
    %v7314 = vld [vmem:[%s7289 + $0xc0] sm:$0xff]
    %v7315 = vld [vmem:[%s7289 + $0xc8] sm:$0xff]
    %v7316 = vld [vmem:[%s7289 + $0xd0] sm:$0xff]
    %v7317 = vld [vmem:[%s7289 + $0xd8] sm:$0xff]
    %v7318 = vld [vmem:[%s7289 + $0xe0] sm:$0xff]
    %v7319 = vld [vmem:[%s7289 + $0xe8] sm:$0xff]
    %v7320 = vld [vmem:[%s7289 + $0xf0] sm:$0xff]
    %v7321 = vld [vmem:[%s7289 + $0xf8] sm:$0xff]
    %v7354 = vunpack.c.l.b16 %v7290
    %v7355 = vunpack.c.h.b16 %v7290
    %v7356 = vunpack.c.l.b16 %v7291
    %v7357 = vunpack.c.h.b16 %v7291
    %v7358 = vunpack.c.l.b16 %v7292
    %v7359 = vunpack.c.h.b16 %v7292
    %v7360 = vunpack.c.l.b16 %v7293
    %v7361 = vunpack.c.h.b16 %v7293
    %v7362 = vunpack.c.l.b16 %v7294
    %v7363 = vunpack.c.h.b16 %v7294
    %v7364 = vunpack.c.l.b16 %v7295
    %v7365 = vunpack.c.h.b16 %v7295
    %v7366 = vunpack.c.l.b16 %v7296
    %v7367 = vunpack.c.h.b16 %v7296
    %v7368 = vunpack.c.l.b16 %v7297
    %v7369 = vunpack.c.h.b16 %v7297
    %v7370 = vunpack.c.l.b16 %v7298
    %v7371 = vunpack.c.h.b16 %v7298
    %v7372 = vunpack.c.l.b16 %v7299
    %v7373 = vunpack.c.h.b16 %v7299
    %v7374 = vunpack.c.l.b16 %v7300
    %v7375 = vunpack.c.h.b16 %v7300
    %v7376 = vunpack.c.l.b16 %v7301
    %v7377 = vunpack.c.h.b16 %v7301
    %v7378 = vunpack.c.l.b16 %v7302
    %v7379 = vunpack.c.h.b16 %v7302
    %v7380 = vunpack.c.l.b16 %v7303
    %v7381 = vunpack.c.h.b16 %v7303
    %v7382 = vunpack.c.l.b16 %v7304
    %v7383 = vunpack.c.h.b16 %v7304
    %v7384 = vunpack.c.l.b16 %v7305
    %v7385 = vunpack.c.h.b16 %v7305
    %v7386 = vunpack.c.l.b16 %v7306
    %v7387 = vunpack.c.h.b16 %v7306
    %v7388 = vunpack.c.l.b16 %v7307
    %v7389 = vunpack.c.h.b16 %v7307
    %v7390 = vunpack.c.l.b16 %v7308
    %v7391 = vunpack.c.h.b16 %v7308
    %v7392 = vunpack.c.l.b16 %v7309
    %v7393 = vunpack.c.h.b16 %v7309
    %v7394 = vunpack.c.l.b16 %v7310
    %v7395 = vunpack.c.h.b16 %v7310
    %v7396 = vunpack.c.l.b16 %v7311
    %v7397 = vunpack.c.h.b16 %v7311
    %v7398 = vunpack.c.l.b16 %v7312
    %v7399 = vunpack.c.h.b16 %v7312
    %v7400 = vunpack.c.l.b16 %v7313
    %v7401 = vunpack.c.h.b16 %v7313
    %v7402 = vunpack.c.l.b16 %v7314
    %v7403 = vunpack.c.h.b16 %v7314
    %v7404 = vunpack.c.l.b16 %v7315
    %v7405 = vunpack.c.h.b16 %v7315
    %v7406 = vunpack.c.l.b16 %v7316
    %v7407 = vunpack.c.h.b16 %v7316
    %v7408 = vunpack.c.l.b16 %v7317
    %v7409 = vunpack.c.h.b16 %v7317
    %v7410 = vunpack.c.l.b16 %v7318
    %v7411 = vunpack.c.h.b16 %v7318
    %v7412 = vunpack.c.l.b16 %v7319
    %v7413 = vunpack.c.h.b16 %v7319
    %v7414 = vunpack.c.l.b16 %v7320
    %v7415 = vunpack.c.h.b16 %v7320
    %v7416 = vunpack.c.l.b16 %v7321
    %v7417 = vunpack.c.h.b16 %v7321
    %v7418 = vpack.c.b16 %v7356, %v7354
    %v7419 = vpack.c.b16 %v7357, %v7355
    %v7420 = vpack.c.b16 %v7360, %v7358
    %v7421 = vpack.c.b16 %v7361, %v7359
    %v7422 = vpack.c.b16 %v7364, %v7362
    %v7423 = vpack.c.b16 %v7365, %v7363
    %v7424 = vpack.c.b16 %v7368, %v7366
    %v7425 = vpack.c.b16 %v7369, %v7367
    %v7426 = vpack.c.b16 %v7372, %v7370
    %v7427 = vpack.c.b16 %v7373, %v7371
    %v7428 = vpack.c.b16 %v7376, %v7374
    %v7429 = vpack.c.b16 %v7377, %v7375
    %v7430 = vpack.c.b16 %v7380, %v7378
    %v7431 = vpack.c.b16 %v7381, %v7379
    %v7432 = vpack.c.b16 %v7384, %v7382
    %v7433 = vpack.c.b16 %v7385, %v7383
    %v7434 = vpack.c.b16 %v7388, %v7386
    %v7435 = vpack.c.b16 %v7389, %v7387
    %v7436 = vpack.c.b16 %v7392, %v7390
    %v7437 = vpack.c.b16 %v7393, %v7391
    %v7438 = vpack.c.b16 %v7396, %v7394
    %v7439 = vpack.c.b16 %v7397, %v7395
    %v7440 = vpack.c.b16 %v7400, %v7398
    %v7441 = vpack.c.b16 %v7401, %v7399
    %v7442 = vpack.c.b16 %v7404, %v7402
    %v7443 = vpack.c.b16 %v7405, %v7403
    %v7444 = vpack.c.b16 %v7408, %v7406
    %v7445 = vpack.c.b16 %v7409, %v7407
    %v7446 = vpack.c.b16 %v7412, %v7410
    %v7447 = vpack.c.b16 %v7413, %v7411
    %v7448 = vpack.c.b16 %v7416, %v7414
    %v7449 = vpack.c.b16 %v7417, %v7415
    %7482 = vmatprep.subr.bf16.mxu0 %v7419
    %7483 = vmatpush1.bf16.msra.mxu0 %v7418
    %7484 = vmatprep.subr.bf16.mxu0 %v7421
    %7485 = vmatpush1.bf16.msra.mxu0 %v7420
    %7486 = vmatprep.subr.bf16.mxu0 %v7423
    %7487 = vmatpush1.bf16.msra.mxu0 %v7422
    %7488 = vmatprep.subr.bf16.mxu0 %v7425
    %7489 = vmatpush1.bf16.msra.mxu0 %v7424
    %7490 = vmatprep.subr.bf16.mxu0 %v7427
    %7491 = vmatpush1.bf16.msra.mxu0 %v7426
    %7492 = vmatprep.subr.bf16.mxu0 %v7429
    %7493 = vmatpush1.bf16.msra.mxu0 %v7428
    %7494 = vmatprep.subr.bf16.mxu0 %v7431
    %7495 = vmatpush1.bf16.msra.mxu0 %v7430
    %7496 = vmatprep.subr.bf16.mxu0 %v7433
    %7497 = vmatpush1.bf16.msra.mxu0 %v7432
    %7498 = vmatprep.subr.bf16.mxu0 %v7435
    %7499 = vmatpush1.bf16.msra.mxu0 %v7434
    %7500 = vmatprep.subr.bf16.mxu0 %v7437
    %7501 = vmatpush1.bf16.msra.mxu0 %v7436
    %7502 = vmatprep.subr.bf16.mxu0 %v7439
    %7503 = vmatpush1.bf16.msra.mxu0 %v7438
    %7504 = vmatprep.subr.bf16.mxu0 %v7441
    %7505 = vmatpush1.bf16.msra.mxu0 %v7440
    %7506 = vmatprep.subr.bf16.mxu0 %v7443
    %7507 = vmatpush1.bf16.msra.mxu0 %v7442
    %7508 = vmatprep.subr.bf16.mxu0 %v7445
    %7509 = vmatpush1.bf16.msra.mxu0 %v7444
    %7510 = vmatprep.subr.bf16.mxu0 %v7447
    %7511 = vmatpush1.bf16.msra.mxu0 %v7446
    %7512 = vmatprep.subr.bf16.mxu0 %v7449
    %7513 = vmatpush1.bf16.msra.mxu0 %v7448
    %7514 = vmatprep.mubr.bf16.mxu0 %v7288
    %7515 = vmatmul.mubr.bf16.gmra.mrb[0].mxu0 %v7287
    %v7516 = vpop.f32.mrb[0].mxu0
    %v7517 = vadd.f32 0.0, %v7516
    %v7518 = vpop.f32.mrb[0].mxu0
    %v7519 = vadd.f32 0.0, %v7518
    %v7520 = vpop.f32.mrb[0].mxu0
    %v7521 = vpop.f32.mrb[0].mxu0
    %7522 = vdwg.mxu0
    %v7523 = vadd.f32 %v7274, %v7517
    %v7524 = vadd.f32 %v7275, %v7519
    %s7525 = scalar_lea.vmem %s0, 240
    %v7526 = vld [vmem:[%s7525] sm:$0xff]
    %7527 = vset.pattern.permute.xlu0 0
    %7528 = vperm.xlu0 %7527, %v7526
    %v7529 = vpop.permute.xlu0 %7528
    %vm7530 = vcmp.eq.s32.totalorder %v7529, %v59
    %vm7531 = vcmp.eq.s32.totalorder %v7529, %v60
    %v7532 = vsel %vm7530, 1, 0
    %v7533 = vsel %vm7531, 1, 0
    %v7534 = vcvt.s32.f32 %v7532
    %v7535 = vcvt.s32.f32 %v7533
    %v7536 = vpack.c.bf16 %v7534, %v7534
    %v7537 = vpack.c.bf16 %v7535, %v7535
    %s7538 = scalar_lea.vmem [#allocation2], 7680
    %v7539 = vld [vmem:[%s7538] sm:$0xff]
    %v7540 = vld [vmem:[%s7538 + $0x8] sm:$0xff]
    %v7541 = vld [vmem:[%s7538 + $0x10] sm:$0xff]
    %v7542 = vld [vmem:[%s7538 + $0x18] sm:$0xff]
    %v7543 = vld [vmem:[%s7538 + $0x20] sm:$0xff]
    %v7544 = vld [vmem:[%s7538 + $0x28] sm:$0xff]
    %v7545 = vld [vmem:[%s7538 + $0x30] sm:$0xff]
    %v7546 = vld [vmem:[%s7538 + $0x38] sm:$0xff]
    %v7547 = vld [vmem:[%s7538 + $0x40] sm:$0xff]
    %v7548 = vld [vmem:[%s7538 + $0x48] sm:$0xff]
    %v7549 = vld [vmem:[%s7538 + $0x50] sm:$0xff]
    %v7550 = vld [vmem:[%s7538 + $0x58] sm:$0xff]
    %v7551 = vld [vmem:[%s7538 + $0x60] sm:$0xff]
    %v7552 = vld [vmem:[%s7538 + $0x68] sm:$0xff]
    %v7553 = vld [vmem:[%s7538 + $0x70] sm:$0xff]
    %v7554 = vld [vmem:[%s7538 + $0x78] sm:$0xff]
    %v7555 = vld [vmem:[%s7538 + $0x80] sm:$0xff]
    %v7556 = vld [vmem:[%s7538 + $0x88] sm:$0xff]
    %v7557 = vld [vmem:[%s7538 + $0x90] sm:$0xff]
    %v7558 = vld [vmem:[%s7538 + $0x98] sm:$0xff]
    %v7559 = vld [vmem:[%s7538 + $0xa0] sm:$0xff]
    %v7560 = vld [vmem:[%s7538 + $0xa8] sm:$0xff]
    %v7561 = vld [vmem:[%s7538 + $0xb0] sm:$0xff]
    %v7562 = vld [vmem:[%s7538 + $0xb8] sm:$0xff]
    %v7563 = vld [vmem:[%s7538 + $0xc0] sm:$0xff]
    %v7564 = vld [vmem:[%s7538 + $0xc8] sm:$0xff]
    %v7565 = vld [vmem:[%s7538 + $0xd0] sm:$0xff]
    %v7566 = vld [vmem:[%s7538 + $0xd8] sm:$0xff]
    %v7567 = vld [vmem:[%s7538 + $0xe0] sm:$0xff]
    %v7568 = vld [vmem:[%s7538 + $0xe8] sm:$0xff]
    %v7569 = vld [vmem:[%s7538 + $0xf0] sm:$0xff]
    %v7570 = vld [vmem:[%s7538 + $0xf8] sm:$0xff]
    %v7603 = vunpack.c.l.b16 %v7539
    %v7604 = vunpack.c.h.b16 %v7539
    %v7605 = vunpack.c.l.b16 %v7540
    %v7606 = vunpack.c.h.b16 %v7540
    %v7607 = vunpack.c.l.b16 %v7541
    %v7608 = vunpack.c.h.b16 %v7541
    %v7609 = vunpack.c.l.b16 %v7542
    %v7610 = vunpack.c.h.b16 %v7542
    %v7611 = vunpack.c.l.b16 %v7543
    %v7612 = vunpack.c.h.b16 %v7543
    %v7613 = vunpack.c.l.b16 %v7544
    %v7614 = vunpack.c.h.b16 %v7544
    %v7615 = vunpack.c.l.b16 %v7545
    %v7616 = vunpack.c.h.b16 %v7545
    %v7617 = vunpack.c.l.b16 %v7546
    %v7618 = vunpack.c.h.b16 %v7546
    %v7619 = vunpack.c.l.b16 %v7547
    %v7620 = vunpack.c.h.b16 %v7547
    %v7621 = vunpack.c.l.b16 %v7548
    %v7622 = vunpack.c.h.b16 %v7548
    %v7623 = vunpack.c.l.b16 %v7549
    %v7624 = vunpack.c.h.b16 %v7549
    %v7625 = vunpack.c.l.b16 %v7550
    %v7626 = vunpack.c.h.b16 %v7550
    %v7627 = vunpack.c.l.b16 %v7551
    %v7628 = vunpack.c.h.b16 %v7551
    %v7629 = vunpack.c.l.b16 %v7552
    %v7630 = vunpack.c.h.b16 %v7552
    %v7631 = vunpack.c.l.b16 %v7553
    %v7632 = vunpack.c.h.b16 %v7553
    %v7633 = vunpack.c.l.b16 %v7554
    %v7634 = vunpack.c.h.b16 %v7554
    %v7635 = vunpack.c.l.b16 %v7555
    %v7636 = vunpack.c.h.b16 %v7555
    %v7637 = vunpack.c.l.b16 %v7556
    %v7638 = vunpack.c.h.b16 %v7556
    %v7639 = vunpack.c.l.b16 %v7557
    %v7640 = vunpack.c.h.b16 %v7557
    %v7641 = vunpack.c.l.b16 %v7558
    %v7642 = vunpack.c.h.b16 %v7558
    %v7643 = vunpack.c.l.b16 %v7559
    %v7644 = vunpack.c.h.b16 %v7559
    %v7645 = vunpack.c.l.b16 %v7560
    %v7646 = vunpack.c.h.b16 %v7560
    %v7647 = vunpack.c.l.b16 %v7561
    %v7648 = vunpack.c.h.b16 %v7561
    %v7649 = vunpack.c.l.b16 %v7562
    %v7650 = vunpack.c.h.b16 %v7562
    %v7651 = vunpack.c.l.b16 %v7563
    %v7652 = vunpack.c.h.b16 %v7563
    %v7653 = vunpack.c.l.b16 %v7564
    %v7654 = vunpack.c.h.b16 %v7564
    %v7655 = vunpack.c.l.b16 %v7565
    %v7656 = vunpack.c.h.b16 %v7565
    %v7657 = vunpack.c.l.b16 %v7566
    %v7658 = vunpack.c.h.b16 %v7566
    %v7659 = vunpack.c.l.b16 %v7567
    %v7660 = vunpack.c.h.b16 %v7567
    %v7661 = vunpack.c.l.b16 %v7568
    %v7662 = vunpack.c.h.b16 %v7568
    %v7663 = vunpack.c.l.b16 %v7569
    %v7664 = vunpack.c.h.b16 %v7569
    %v7665 = vunpack.c.l.b16 %v7570
    %v7666 = vunpack.c.h.b16 %v7570
    %v7667 = vpack.c.b16 %v7605, %v7603
    %v7668 = vpack.c.b16 %v7606, %v7604
    %v7669 = vpack.c.b16 %v7609, %v7607
    %v7670 = vpack.c.b16 %v7610, %v7608
    %v7671 = vpack.c.b16 %v7613, %v7611
    %v7672 = vpack.c.b16 %v7614, %v7612
    %v7673 = vpack.c.b16 %v7617, %v7615
    %v7674 = vpack.c.b16 %v7618, %v7616
    %v7675 = vpack.c.b16 %v7621, %v7619
    %v7676 = vpack.c.b16 %v7622, %v7620
    %v7677 = vpack.c.b16 %v7625, %v7623
    %v7678 = vpack.c.b16 %v7626, %v7624
    %v7679 = vpack.c.b16 %v7629, %v7627
    %v7680 = vpack.c.b16 %v7630, %v7628
    %v7681 = vpack.c.b16 %v7633, %v7631
    %v7682 = vpack.c.b16 %v7634, %v7632
    %v7683 = vpack.c.b16 %v7637, %v7635
    %v7684 = vpack.c.b16 %v7638, %v7636
    %v7685 = vpack.c.b16 %v7641, %v7639
    %v7686 = vpack.c.b16 %v7642, %v7640
    %v7687 = vpack.c.b16 %v7645, %v7643
    %v7688 = vpack.c.b16 %v7646, %v7644
    %v7689 = vpack.c.b16 %v7649, %v7647
    %v7690 = vpack.c.b16 %v7650, %v7648
    %v7691 = vpack.c.b16 %v7653, %v7651
    %v7692 = vpack.c.b16 %v7654, %v7652
    %v7693 = vpack.c.b16 %v7657, %v7655
    %v7694 = vpack.c.b16 %v7658, %v7656
    %v7695 = vpack.c.b16 %v7661, %v7659
    %v7696 = vpack.c.b16 %v7662, %v7660
    %v7697 = vpack.c.b16 %v7665, %v7663
    %v7698 = vpack.c.b16 %v7666, %v7664
    %7731 = vmatprep.subr.bf16.mxu0 %v7668
    %7732 = vmatpush1.bf16.msra.mxu0 %v7667
    %7733 = vmatprep.subr.bf16.mxu0 %v7670
    %7734 = vmatpush1.bf16.msra.mxu0 %v7669
    %7735 = vmatprep.subr.bf16.mxu0 %v7672
    %7736 = vmatpush1.bf16.msra.mxu0 %v7671
    %7737 = vmatprep.subr.bf16.mxu0 %v7674
    %7738 = vmatpush1.bf16.msra.mxu0 %v7673
    %7739 = vmatprep.subr.bf16.mxu0 %v7676
    %7740 = vmatpush1.bf16.msra.mxu0 %v7675
    %7741 = vmatprep.subr.bf16.mxu0 %v7678
    %7742 = vmatpush1.bf16.msra.mxu0 %v7677
    %7743 = vmatprep.subr.bf16.mxu0 %v7680
    %7744 = vmatpush1.bf16.msra.mxu0 %v7679
    %7745 = vmatprep.subr.bf16.mxu0 %v7682
    %7746 = vmatpush1.bf16.msra.mxu0 %v7681
    %7747 = vmatprep.subr.bf16.mxu0 %v7684
    %7748 = vmatpush1.bf16.msra.mxu0 %v7683
    %7749 = vmatprep.subr.bf16.mxu0 %v7686
    %7750 = vmatpush1.bf16.msra.mxu0 %v7685
    %7751 = vmatprep.subr.bf16.mxu0 %v7688
    %7752 = vmatpush1.bf16.msra.mxu0 %v7687
    %7753 = vmatprep.subr.bf16.mxu0 %v7690
    %7754 = vmatpush1.bf16.msra.mxu0 %v7689
    %7755 = vmatprep.subr.bf16.mxu0 %v7692
    %7756 = vmatpush1.bf16.msra.mxu0 %v7691
    %7757 = vmatprep.subr.bf16.mxu0 %v7694
    %7758 = vmatpush1.bf16.msra.mxu0 %v7693
    %7759 = vmatprep.subr.bf16.mxu0 %v7696
    %7760 = vmatpush1.bf16.msra.mxu0 %v7695
    %7761 = vmatprep.subr.bf16.mxu0 %v7698
    %7762 = vmatpush1.bf16.msra.mxu0 %v7697
    %7763 = vmatprep.mubr.bf16.mxu0 %v7537
    %7764 = vmatmul.mubr.bf16.gmra.mrb[0].mxu0 %v7536
    %v7765 = vpop.f32.mrb[0].mxu0
    %v7766 = vadd.f32 0.0, %v7765
    %v7767 = vpop.f32.mrb[0].mxu0
    %v7768 = vadd.f32 0.0, %v7767
    %v7769 = vpop.f32.mrb[0].mxu0
    %v7770 = vpop.f32.mrb[0].mxu0
    %7771 = vdwg.mxu0
    %v7772 = vadd.f32 %v7523, %v7766
    %v7773 = vadd.f32 %v7524, %v7768
    %s7774 = scalar_lea.vmem %s0, 248
    %v7775 = vld [vmem:[%s7774] sm:$0xff]
    %7776 = vset.pattern.permute.xlu0 0
    %7777 = vperm.xlu0 %7776, %v7775
    %v7778 = vpop.permute.xlu0 %7777
    %vm7779 = vcmp.eq.s32.totalorder %v7778, %v59
    %vm7780 = vcmp.eq.s32.totalorder %v7778, %v60
    %v7781 = vsel %vm7779, 1, 0
    %v7782 = vsel %vm7780, 1, 0
    %v7783 = vcvt.s32.f32 %v7781
    %v7784 = vcvt.s32.f32 %v7782
    %v7785 = vpack.c.bf16 %v7783, %v7783
    %v7786 = vpack.c.bf16 %v7784, %v7784
    %s7787 = scalar_lea.vmem [#allocation2], 7936
    %v7788 = vld [vmem:[%s7787] sm:$0xff]
    %v7789 = vld [vmem:[%s7787 + $0x8] sm:$0xff]
    %v7790 = vld [vmem:[%s7787 + $0x10] sm:$0xff]
    %v7791 = vld [vmem:[%s7787 + $0x18] sm:$0xff]
    %v7792 = vld [vmem:[%s7787 + $0x20] sm:$0xff]
    %v7793 = vld [vmem:[%s7787 + $0x28] sm:$0xff]
    %v7794 = vld [vmem:[%s7787 + $0x30] sm:$0xff]
    %v7795 = vld [vmem:[%s7787 + $0x38] sm:$0xff]
    %v7796 = vld [vmem:[%s7787 + $0x40] sm:$0xff]
    %v7797 = vld [vmem:[%s7787 + $0x48] sm:$0xff]
    %v7798 = vld [vmem:[%s7787 + $0x50] sm:$0xff]
    %v7799 = vld [vmem:[%s7787 + $0x58] sm:$0xff]
    %v7800 = vld [vmem:[%s7787 + $0x60] sm:$0xff]
    %v7801 = vld [vmem:[%s7787 + $0x68] sm:$0xff]
    %v7802 = vld [vmem:[%s7787 + $0x70] sm:$0xff]
    %v7803 = vld [vmem:[%s7787 + $0x78] sm:$0xff]
    %v7804 = vld [vmem:[%s7787 + $0x80] sm:$0xff]
    %v7805 = vld [vmem:[%s7787 + $0x88] sm:$0xff]
    %v7806 = vld [vmem:[%s7787 + $0x90] sm:$0xff]
    %v7807 = vld [vmem:[%s7787 + $0x98] sm:$0xff]
    %v7808 = vld [vmem:[%s7787 + $0xa0] sm:$0xff]
    %v7809 = vld [vmem:[%s7787 + $0xa8] sm:$0xff]
    %v7810 = vld [vmem:[%s7787 + $0xb0] sm:$0xff]
    %v7811 = vld [vmem:[%s7787 + $0xb8] sm:$0xff]
    %v7812 = vld [vmem:[%s7787 + $0xc0] sm:$0xff]
    %v7813 = vld [vmem:[%s7787 + $0xc8] sm:$0xff]
    %v7814 = vld [vmem:[%s7787 + $0xd0] sm:$0xff]
    %v7815 = vld [vmem:[%s7787 + $0xd8] sm:$0xff]
    %v7816 = vld [vmem:[%s7787 + $0xe0] sm:$0xff]
    %v7817 = vld [vmem:[%s7787 + $0xe8] sm:$0xff]
    %v7818 = vld [vmem:[%s7787 + $0xf0] sm:$0xff]
    %v7819 = vld [vmem:[%s7787 + $0xf8] sm:$0xff]
    %v7852 = vunpack.c.l.b16 %v7788
    %v7853 = vunpack.c.h.b16 %v7788
    %v7854 = vunpack.c.l.b16 %v7789
    %v7855 = vunpack.c.h.b16 %v7789
    %v7856 = vunpack.c.l.b16 %v7790
    %v7857 = vunpack.c.h.b16 %v7790
    %v7858 = vunpack.c.l.b16 %v7791
    %v7859 = vunpack.c.h.b16 %v7791
    %v7860 = vunpack.c.l.b16 %v7792
    %v7861 = vunpack.c.h.b16 %v7792
    %v7862 = vunpack.c.l.b16 %v7793
    %v7863 = vunpack.c.h.b16 %v7793
    %v7864 = vunpack.c.l.b16 %v7794
    %v7865 = vunpack.c.h.b16 %v7794
    %v7866 = vunpack.c.l.b16 %v7795
    %v7867 = vunpack.c.h.b16 %v7795
    %v7868 = vunpack.c.l.b16 %v7796
    %v7869 = vunpack.c.h.b16 %v7796
    %v7870 = vunpack.c.l.b16 %v7797
    %v7871 = vunpack.c.h.b16 %v7797
    %v7872 = vunpack.c.l.b16 %v7798
    %v7873 = vunpack.c.h.b16 %v7798
    %v7874 = vunpack.c.l.b16 %v7799
    %v7875 = vunpack.c.h.b16 %v7799
    %v7876 = vunpack.c.l.b16 %v7800
    %v7877 = vunpack.c.h.b16 %v7800
    %v7878 = vunpack.c.l.b16 %v7801
    %v7879 = vunpack.c.h.b16 %v7801
    %v7880 = vunpack.c.l.b16 %v7802
    %v7881 = vunpack.c.h.b16 %v7802
    %v7882 = vunpack.c.l.b16 %v7803
    %v7883 = vunpack.c.h.b16 %v7803
    %v7884 = vunpack.c.l.b16 %v7804
    %v7885 = vunpack.c.h.b16 %v7804
    %v7886 = vunpack.c.l.b16 %v7805
    %v7887 = vunpack.c.h.b16 %v7805
    %v7888 = vunpack.c.l.b16 %v7806
    %v7889 = vunpack.c.h.b16 %v7806
    %v7890 = vunpack.c.l.b16 %v7807
    %v7891 = vunpack.c.h.b16 %v7807
    %v7892 = vunpack.c.l.b16 %v7808
    %v7893 = vunpack.c.h.b16 %v7808
    %v7894 = vunpack.c.l.b16 %v7809
    %v7895 = vunpack.c.h.b16 %v7809
    %v7896 = vunpack.c.l.b16 %v7810
    %v7897 = vunpack.c.h.b16 %v7810
    %v7898 = vunpack.c.l.b16 %v7811
    %v7899 = vunpack.c.h.b16 %v7811
    %v7900 = vunpack.c.l.b16 %v7812
    %v7901 = vunpack.c.h.b16 %v7812
    %v7902 = vunpack.c.l.b16 %v7813
    %v7903 = vunpack.c.h.b16 %v7813
    %v7904 = vunpack.c.l.b16 %v7814
    %v7905 = vunpack.c.h.b16 %v7814
    %v7906 = vunpack.c.l.b16 %v7815
    %v7907 = vunpack.c.h.b16 %v7815
    %v7908 = vunpack.c.l.b16 %v7816
    %v7909 = vunpack.c.h.b16 %v7816
    %v7910 = vunpack.c.l.b16 %v7817
    %v7911 = vunpack.c.h.b16 %v7817
    %v7912 = vunpack.c.l.b16 %v7818
    %v7913 = vunpack.c.h.b16 %v7818
    %v7914 = vunpack.c.l.b16 %v7819
    %v7915 = vunpack.c.h.b16 %v7819
    %v7916 = vpack.c.b16 %v7854, %v7852
    %v7917 = vpack.c.b16 %v7855, %v7853
    %v7918 = vpack.c.b16 %v7858, %v7856
    %v7919 = vpack.c.b16 %v7859, %v7857
    %v7920 = vpack.c.b16 %v7862, %v7860
    %v7921 = vpack.c.b16 %v7863, %v7861
    %v7922 = vpack.c.b16 %v7866, %v7864
    %v7923 = vpack.c.b16 %v7867, %v7865
    %v7924 = vpack.c.b16 %v7870, %v7868
    %v7925 = vpack.c.b16 %v7871, %v7869
    %v7926 = vpack.c.b16 %v7874, %v7872
    %v7927 = vpack.c.b16 %v7875, %v7873
    %v7928 = vpack.c.b16 %v7878, %v7876
    %v7929 = vpack.c.b16 %v7879, %v7877
    %v7930 = vpack.c.b16 %v7882, %v7880
    %v7931 = vpack.c.b16 %v7883, %v7881
    %v7932 = vpack.c.b16 %v7886, %v7884
    %v7933 = vpack.c.b16 %v7887, %v7885
    %v7934 = vpack.c.b16 %v7890, %v7888
    %v7935 = vpack.c.b16 %v7891, %v7889
    %v7936 = vpack.c.b16 %v7894, %v7892
    %v7937 = vpack.c.b16 %v7895, %v7893
    %v7938 = vpack.c.b16 %v7898, %v7896
    %v7939 = vpack.c.b16 %v7899, %v7897
    %v7940 = vpack.c.b16 %v7902, %v7900
    %v7941 = vpack.c.b16 %v7903, %v7901
    %v7942 = vpack.c.b16 %v7906, %v7904
    %v7943 = vpack.c.b16 %v7907, %v7905
    %v7944 = vpack.c.b16 %v7910, %v7908
    %v7945 = vpack.c.b16 %v7911, %v7909
    %v7946 = vpack.c.b16 %v7914, %v7912
    %v7947 = vpack.c.b16 %v7915, %v7913
    %7980 = vmatprep.subr.bf16.mxu0 %v7917
    %7981 = vmatpush1.bf16.msra.mxu0 %v7916
    %7982 = vmatprep.subr.bf16.mxu0 %v7919
    %7983 = vmatpush1.bf16.msra.mxu0 %v7918
    %7984 = vmatprep.subr.bf16.mxu0 %v7921
    %7985 = vmatpush1.bf16.msra.mxu0 %v7920
    %7986 = vmatprep.subr.bf16.mxu0 %v7923
    %7987 = vmatpush1.bf16.msra.mxu0 %v7922
    %7988 = vmatprep.subr.bf16.mxu0 %v7925
    %7989 = vmatpush1.bf16.msra.mxu0 %v7924
    %7990 = vmatprep.subr.bf16.mxu0 %v7927
    %7991 = vmatpush1.bf16.msra.mxu0 %v7926
    %7992 = vmatprep.subr.bf16.mxu0 %v7929
    %7993 = vmatpush1.bf16.msra.mxu0 %v7928
    %7994 = vmatprep.subr.bf16.mxu0 %v7931
    %7995 = vmatpush1.bf16.msra.mxu0 %v7930
    %7996 = vmatprep.subr.bf16.mxu0 %v7933
    %7997 = vmatpush1.bf16.msra.mxu0 %v7932
    %7998 = vmatprep.subr.bf16.mxu0 %v7935
    %7999 = vmatpush1.bf16.msra.mxu0 %v7934
    %8000 = vmatprep.subr.bf16.mxu0 %v7937
    %8001 = vmatpush1.bf16.msra.mxu0 %v7936
    %8002 = vmatprep.subr.bf16.mxu0 %v7939
    %8003 = vmatpush1.bf16.msra.mxu0 %v7938
    %8004 = vmatprep.subr.bf16.mxu0 %v7941
    %8005 = vmatpush1.bf16.msra.mxu0 %v7940
    %8006 = vmatprep.subr.bf16.mxu0 %v7943
    %8007 = vmatpush1.bf16.msra.mxu0 %v7942
    %8008 = vmatprep.subr.bf16.mxu0 %v7945
    %8009 = vmatpush1.bf16.msra.mxu0 %v7944
    %8010 = vmatprep.subr.bf16.mxu0 %v7947
    %8011 = vmatpush1.bf16.msra.mxu0 %v7946
    %8012 = vmatprep.mubr.bf16.mxu0 %v7786
    %8013 = vmatmul.mubr.bf16.gmra.mrb[0].mxu0 %v7785
    %v8014 = vpop.f32.mrb[0].mxu0
    %v8015 = vadd.f32 0.0, %v8014
    %v8016 = vpop.f32.mrb[0].mxu0
    %v8017 = vadd.f32 0.0, %v8016
    %v8018 = vpop.f32.mrb[0].mxu0
    %v8019 = vpop.f32.mrb[0].mxu0
    %8020 = vdwg.mxu0
    %v8021 = vadd.f32 %v7772, %v8015
    %v8022 = vadd.f32 %v7773, %v8017
    %v8023 = vld [vmem:[#allocation7] ss:$4 sm:$0x3]
    %v8025 = vlaneseq
    %v8026 = vshrl.u32 %v8025, 7
    %v8027 = vsub.s32 0, %v8026
    %v8028 = vrot.slane %v8023, %v8027
    %v8029 = vlaneseq
    %v8030 = vshrl.u32 %v8029, 7
    %v8031 = vsub.s32 1, %v8030
    %v8032 = vrot.slane %v8023, %v8031
    %v8035 = vadd.f32 %v8021, %v8028
    %v8036 = vadd.f32 %v8022, %v8032
    %v8037 = vmax.f32 %v8035, 0.0
    %v8038 = vmax.f32 %v8036, 0.0
    %v8039 = vpack.c.bf16 %v8037, %v8037
    %v8040 = vpack.c.bf16 %v8038, %v8038
    %v8041 = vld [vmem:[#allocation5] sm:$0xf]
    %v8042 = vld [vmem:[#allocation5 + $0x4] sm:$0xf]
    %v8043 = vld [vmem:[#allocation5 + $0x8] sm:$0xf]
    %v8044 = vld [vmem:[#allocation5 + $0xc] sm:$0xf]
    %v8045 = vld [vmem:[#allocation5 + $0x10] sm:$0xf]
    %v8046 = vld [vmem:[#allocation5 + $0x14] sm:$0xf]
    %v8047 = vld [vmem:[#allocation5 + $0x18] sm:$0xf]
    %v8048 = vld [vmem:[#allocation5 + $0x1c] sm:$0xf]
    %v8049 = vld [vmem:[#allocation5 + $0x20] sm:$0xf]
    %v8050 = vld [vmem:[#allocation5 + $0x24] sm:$0xf]
    %v8051 = vld [vmem:[#allocation5 + $0x28] sm:$0xf]
    %v8052 = vld [vmem:[#allocation5 + $0x2c] sm:$0xf]
    %v8053 = vld [vmem:[#allocation5 + $0x30] sm:$0xf]
    %v8054 = vld [vmem:[#allocation5 + $0x34] sm:$0xf]
    %v8055 = vld [vmem:[#allocation5 + $0x38] sm:$0xf]
    %v8056 = vld [vmem:[#allocation5 + $0x3c] sm:$0xf]
    %v8057 = vld [vmem:[#allocation5 + $0x40] sm:$0xf]
    %v8058 = vld [vmem:[#allocation5 + $0x44] sm:$0xf]
    %v8059 = vld [vmem:[#allocation5 + $0x48] sm:$0xf]
    %v8060 = vld [vmem:[#allocation5 + $0x4c] sm:$0xf]
    %v8061 = vld [vmem:[#allocation5 + $0x50] sm:$0xf]
    %v8062 = vld [vmem:[#allocation5 + $0x54] sm:$0xf]
    %v8063 = vld [vmem:[#allocation5 + $0x58] sm:$0xf]
    %v8064 = vld [vmem:[#allocation5 + $0x5c] sm:$0xf]
    %v8065 = vld [vmem:[#allocation5 + $0x60] sm:$0xf]
    %v8066 = vld [vmem:[#allocation5 + $0x64] sm:$0xf]
    %v8067 = vld [vmem:[#allocation5 + $0x68] sm:$0xf]
    %v8068 = vld [vmem:[#allocation5 + $0x6c] sm:$0xf]
    %v8069 = vld [vmem:[#allocation5 + $0x70] sm:$0xf]
    %v8070 = vld [vmem:[#allocation5 + $0x74] sm:$0xf]
    %v8071 = vld [vmem:[#allocation5 + $0x78] sm:$0xf]
    %v8072 = vld [vmem:[#allocation5 + $0x7c] sm:$0xf]
    %v8073 = vld [vmem:[#allocation7 + $0x1] sm:$0x1]
    %v8074 = vlaneseq
    %v8075 = vshrl.u32 %v8074, 7
    %v8076 = vsub.s32 0, %v8075
    %v8077 = vrot.slane %v8073, %v8076
    %v8110 = vunpack.c.l.b16 %v8041
    %v8111 = vunpack.c.l.b16 %v8042
    %v8112 = vunpack.c.l.b16 %v8043
    %v8113 = vunpack.c.l.b16 %v8044
    %v8114 = vunpack.c.l.b16 %v8045
    %v8115 = vunpack.c.l.b16 %v8046
    %v8116 = vunpack.c.l.b16 %v8047
    %v8117 = vunpack.c.l.b16 %v8048
    %v8118 = vunpack.c.l.b16 %v8049
    %v8119 = vunpack.c.l.b16 %v8050
    %v8120 = vunpack.c.l.b16 %v8051
    %v8121 = vunpack.c.l.b16 %v8052
    %v8122 = vunpack.c.l.b16 %v8053
    %v8123 = vunpack.c.l.b16 %v8054
    %v8124 = vunpack.c.l.b16 %v8055
    %v8125 = vunpack.c.l.b16 %v8056
    %v8126 = vunpack.c.l.b16 %v8057
    %v8127 = vunpack.c.l.b16 %v8058
    %v8128 = vunpack.c.l.b16 %v8059
    %v8129 = vunpack.c.l.b16 %v8060
    %v8130 = vunpack.c.l.b16 %v8061
    %v8131 = vunpack.c.l.b16 %v8062
    %v8132 = vunpack.c.l.b16 %v8063
    %v8133 = vunpack.c.l.b16 %v8064
    %v8134 = vunpack.c.l.b16 %v8065
    %v8135 = vunpack.c.l.b16 %v8066
    %v8136 = vunpack.c.l.b16 %v8067
    %v8137 = vunpack.c.l.b16 %v8068
    %v8138 = vunpack.c.l.b16 %v8069
    %v8139 = vunpack.c.l.b16 %v8070
    %v8140 = vunpack.c.l.b16 %v8071
    %v8141 = vunpack.c.l.b16 %v8072
    %v8142 = vpack.c.b16 %v8111, %v8110
    %v8143 = vpack.c.b16 %v8113, %v8112
    %v8144 = vpack.c.b16 %v8115, %v8114
    %v8145 = vpack.c.b16 %v8117, %v8116
    %v8146 = vpack.c.b16 %v8119, %v8118
    %v8147 = vpack.c.b16 %v8121, %v8120
    %v8148 = vpack.c.b16 %v8123, %v8122
    %v8149 = vpack.c.b16 %v8125, %v8124
    %v8150 = vpack.c.b16 %v8127, %v8126
    %v8151 = vpack.c.b16 %v8129, %v8128
    %v8152 = vpack.c.b16 %v8131, %v8130
    %v8153 = vpack.c.b16 %v8133, %v8132
    %v8154 = vpack.c.b16 %v8135, %v8134
    %v8155 = vpack.c.b16 %v8137, %v8136
    %v8156 = vpack.c.b16 %v8139, %v8138
    %v8157 = vpack.c.b16 %v8141, %v8140
    %8174 = vmatprep.subr.bf16.mxu0 0
    %8175 = vmatpush1.bf16.msra.mxu0 %v8142
    %8176 = vmatprep.subr.bf16.mxu0 0
    %8177 = vmatpush1.bf16.msra.mxu0 %v8143
    %8178 = vmatprep.subr.bf16.mxu0 0
    %8179 = vmatpush1.bf16.msra.mxu0 %v8144
    %8180 = vmatprep.subr.bf16.mxu0 0
    %8181 = vmatpush1.bf16.msra.mxu0 %v8145
    %8182 = vmatprep.subr.bf16.mxu0 0
    %8183 = vmatpush1.bf16.msra.mxu0 %v8146
    %8184 = vmatprep.subr.bf16.mxu0 0
    %8185 = vmatpush1.bf16.msra.mxu0 %v8147
    %8186 = vmatprep.subr.bf16.mxu0 0
    %8187 = vmatpush1.bf16.msra.mxu0 %v8148
    %8188 = vmatprep.subr.bf16.mxu0 0
    %8189 = vmatpush1.bf16.msra.mxu0 %v8149
    %8190 = vmatprep.subr.bf16.mxu0 0
    %8191 = vmatpush1.bf16.msra.mxu0 %v8150
    %8192 = vmatprep.subr.bf16.mxu0 0
    %8193 = vmatpush1.bf16.msra.mxu0 %v8151
    %8194 = vmatprep.subr.bf16.mxu0 0
    %8195 = vmatpush1.bf16.msra.mxu0 %v8152
    %8196 = vmatprep.subr.bf16.mxu0 0
    %8197 = vmatpush1.bf16.msra.mxu0 %v8153
    %8198 = vmatprep.subr.bf16.mxu0 0
    %8199 = vmatpush1.bf16.msra.mxu0 %v8154
    %8200 = vmatprep.subr.bf16.mxu0 0
    %8201 = vmatpush1.bf16.msra.mxu0 %v8155
    %8202 = vmatprep.subr.bf16.mxu0 0
    %8203 = vmatpush1.bf16.msra.mxu0 %v8156
    %8204 = vmatprep.subr.bf16.mxu0 0
    %8205 = vmatpush1.bf16.msra.mxu0 %v8157
    %8206 = vmatprep.mubr.bf16.mxu0 %v8040
    %8207 = vmatmul.mubr.bf16.gmra.mrb[0].mxu0 %v8039
    %v8208 = vpop.f32.mrb[0].mxu0
    %v8209 = vadd.f32 %v8077, %v8208
    %v8210 = vpop.f32.mrb[0].mxu0
    %v8211 = vpop.f32.mrb[0].mxu0
    %v8212 = vpop.f32.mrb[0].mxu0
    %8213 = vdwg.mxu0
    %v8214 = vmax.f32 %v8209, 0.0
    %v8215 = vpack.c.bf16 %v8214, %v8214
    %v8216 = vld [vmem:[#allocation5 + $0x80] sm:$0xf]
    %v8217 = vld [vmem:[#allocation5 + $0x84] sm:$0xf]
    %v8218 = vld [vmem:[#allocation5 + $0x88] sm:$0xf]
    %v8219 = vld [vmem:[#allocation5 + $0x8c] sm:$0xf]
    %v8220 = vld [vmem:[#allocation5 + $0x90] sm:$0xf]
    %v8221 = vld [vmem:[#allocation5 + $0x94] sm:$0xf]
    %v8222 = vld [vmem:[#allocation5 + $0x98] sm:$0xf]
    %v8223 = vld [vmem:[#allocation5 + $0x9c] sm:$0xf]
    %v8224 = vld [vmem:[#allocation5 + $0xa0] sm:$0xf]
    %v8225 = vld [vmem:[#allocation5 + $0xa4] sm:$0xf]
    %v8226 = vld [vmem:[#allocation5 + $0xa8] sm:$0xf]
    %v8227 = vld [vmem:[#allocation5 + $0xac] sm:$0xf]
    %v8228 = vld [vmem:[#allocation5 + $0xb0] sm:$0xf]
    %v8229 = vld [vmem:[#allocation5 + $0xb4] sm:$0xf]
    %v8230 = vld [vmem:[#allocation5 + $0xb8] sm:$0xf]
    %v8231 = vld [vmem:[#allocation5 + $0xbc] sm:$0xf]
    %v8232 = vld [vmem:[#allocation7 + $0x2] sm:$0x1]
    %v8233 = vlaneseq
    %v8234 = vshrl.u32 %v8233, 7
    %v8235 = vsub.s32 0, %v8234
    %v8236 = vrot.slane %v8232, %v8235
    %v8253 = vunpack.c.l.b16 %v8216
    %v8254 = vunpack.c.l.b16 %v8217
    %v8255 = vunpack.c.l.b16 %v8218
    %v8256 = vunpack.c.l.b16 %v8219
    %v8257 = vunpack.c.l.b16 %v8220
    %v8258 = vunpack.c.l.b16 %v8221
    %v8259 = vunpack.c.l.b16 %v8222
    %v8260 = vunpack.c.l.b16 %v8223
    %v8261 = vunpack.c.l.b16 %v8224
    %v8262 = vunpack.c.l.b16 %v8225
    %v8263 = vunpack.c.l.b16 %v8226
    %v8264 = vunpack.c.l.b16 %v8227
    %v8265 = vunpack.c.l.b16 %v8228
    %v8266 = vunpack.c.l.b16 %v8229
    %v8267 = vunpack.c.l.b16 %v8230
    %v8268 = vunpack.c.l.b16 %v8231
    %v8269 = vpack.c.b16 %v8254, %v8253
    %v8270 = vpack.c.b16 %v8256, %v8255
    %v8271 = vpack.c.b16 %v8258, %v8257
    %v8272 = vpack.c.b16 %v8260, %v8259
    %v8273 = vpack.c.b16 %v8262, %v8261
    %v8274 = vpack.c.b16 %v8264, %v8263
    %v8275 = vpack.c.b16 %v8266, %v8265
    %v8276 = vpack.c.b16 %v8268, %v8267
    %8285 = vmatprep.subr.bf16.mxu0 0
    %8286 = vmatpush1.bf16.msra.mxu0 %v8269
    %8287 = vmatprep.subr.bf16.mxu0 0
    %8288 = vmatpush1.bf16.msra.mxu0 %v8270
    %8289 = vmatprep.subr.bf16.mxu0 0
    %8290 = vmatpush1.bf16.msra.mxu0 %v8271
    %8291 = vmatprep.subr.bf16.mxu0 0
    %8292 = vmatpush1.bf16.msra.mxu0 %v8272
    %8293 = vmatprep.subr.bf16.mxu0 0
    %8294 = vmatpush1.bf16.msra.mxu0 %v8273
    %8295 = vmatprep.subr.bf16.mxu0 0
    %8296 = vmatpush1.bf16.msra.mxu0 %v8274
    %8297 = vmatprep.subr.bf16.mxu0 0
    %8298 = vmatpush1.bf16.msra.mxu0 %v8275
    %8299 = vmatprep.subr.bf16.mxu0 0
    %8300 = vmatpush1.bf16.msra.mxu0 %v8276
    %8301 = vmatprep.subr.bf16.mxu0 0
    %8302 = vmatpush1.bf16.msra.mxu0 0
    %8303 = vmatprep.subr.bf16.mxu0 0
    %8304 = vmatpush1.bf16.msra.mxu0 0
    %8305 = vmatprep.subr.bf16.mxu0 0
    %8306 = vmatpush1.bf16.msra.mxu0 0
    %8307 = vmatprep.subr.bf16.mxu0 0
    %8308 = vmatpush1.bf16.msra.mxu0 0
    %8309 = vmatprep.subr.bf16.mxu0 0
    %8310 = vmatpush1.bf16.msra.mxu0 0
    %8311 = vmatprep.subr.bf16.mxu0 0
    %8312 = vmatpush1.bf16.msra.mxu0 0
    %8313 = vmatprep.subr.bf16.mxu0 0
    %8314 = vmatpush1.bf16.msra.mxu0 0
    %8315 = vmatprep.subr.bf16.mxu0 0
    %8316 = vmatpush1.bf16.msra.mxu0 0
    %8317 = vmatprep.mubr.bf16.mxu0 0
    %8318 = vmatmul.mubr.bf16.gmra.mrb[0].mxu0 %v8215
    %v8319 = vpop.f32.mrb[0].mxu0
    %v8320 = vadd.f32 %v8236, %v8319
    %v8321 = vpop.f32.mrb[0].mxu0
    %v8322 = vpop.f32.mrb[0].mxu0
    %v8323 = vpop.f32.mrb[0].mxu0
    %8324 = vdwg.mxu0
    %8325 = vst [vmem:[#allocation8] sm:$0xff] %v8320
    // Predicated region
    $region30: #{tpu_custom_call.1} parent=1 // pred_check
      _
    $region31: #{tpu_custom_call.1} parent=1 // pred_check_branch
      %8327 = sbr.rel (0) target = $region33
    $region32: #{tpu_custom_call.1} parent=1 // pred_region
      %s8329 = ssub.s32 128, 128
      %8330 = vsyncadd [#allocation4], %s8329
      %s8332 = sshll.u32 [#allocation8], 4
      %s8333 = int_to_ptr.vmem [resolvable:$true] %s8332
      %8335 = dma.vmem_to_hbm [thread:$0]  %s8333, 128, %s4, [#allocation4]
    $region33: #{tpu_custom_call.1} parent=1 // pred_fallthru
      _
    // Predicated region
    $region34: #{tpu_custom_call.1} parent=1 // pred_check
      _
    $region35: #{tpu_custom_call.1} parent=1 // pred_check_branch
      %8337 = sbr.rel (0) target = $region37
    $region36: #{tpu_custom_call.1} parent=1 // pred_region
      %8338 = dma.done [#allocation4], 128
    $region37: #{tpu_custom_call.1} parent=1 // pred_fallthru
      _
    %8339 = vsyncpa [#allocation3], 1
    %8340 = vsyncpa [#allocation6], 1
    %8341 = vsyncpa [#allocation4], 1

</llo_original>
